<compile_context>
chip_gen: v5e
topology: v5e:2x2
jax: 0.10.0
libtpu: 0.0.40
codegen_flags: <defaults>
</compile_context>

<pallas_src>
import functools

import numpy as np
import jax
import jax.numpy as jnp
from jax.experimental import pallas as pl
from jax.experimental.pallas import tpu as pltpu

NUM_CLASSES = 10  # MNIST_FASHIONMNIST_CLASSES


def _round_up(x, m):
    return (x + m - 1) // m * m


def _choose_tb(batch, target=64):
    """Pick a batch block size (multiple of 16) and number of grid steps."""
    nb = max(1, -(-batch // target))
    if nb == 1 and batch >= 32:
        nb = 2                      # v7x: keep both TensorCores busy
    tb = _round_up(-(-batch // nb), 16)
    nb = -(-batch // tb)
    return tb, nb


# ------------------------------------------------------------------------------------
# Static (numpy) index maps that scatter the 3x3 conv weights into the "big" matmul
# weights.  Invalid taps point at a trailing zero slot (sentinel index).
# ------------------------------------------------------------------------------------

def _conv1_idx():
    # W1m[(dy,dx)][rr*30+c, s*224+pw*16+co] = w1[co,0,rr-2s-dy, c-2pw-dx]  (or 0)
    dy = np.arange(2).reshape(2, 1, 1, 1, 1, 1, 1)
    dx = np.arange(2).reshape(1, 2, 1, 1, 1, 1, 1)
    rr = np.arange(6).reshape(1, 1, 6, 1, 1, 1, 1)
    c = np.arange(30).reshape(1, 1, 1, 30, 1, 1, 1)
    s = np.arange(2).reshape(1, 1, 1, 1, 2, 1, 1)
    pw = np.arange(14).reshape(1, 1, 1, 1, 1, 14, 1)
    co = np.arange(16).reshape(1, 1, 1, 1, 1, 1, 16)
    ki = rr - 2 * s - dy
    kj = c - 2 * pw - dx
    valid = (ki >= 0) & (ki < 3) & (kj >= 0) & (kj < 3)
    idx = np.where(valid, co * 9 + ki * 3 + kj, 16 * 9)
    idx = np.broadcast_to(idx, (2, 2, 6, 30, 2, 14, 16))
    return np.ascontiguousarray(idx.reshape(4, 180, 448)).astype(np.int32)


def _conv2_idx():
    # W2m[(dy,dx)][rr*224+pw*16+ci, pw2*32+co2] = w2[co2,ci,rr-dy, pw-2pw2-dx+1]  (or 0)
    dy = np.arange(2).reshape(2, 1, 1, 1, 1, 1, 1)
    dx = np.arange(2).reshape(1, 2, 1, 1, 1, 1, 1)
    rr = np.arange(4).reshape(1, 1, 4, 1, 1, 1, 1)
    pw = np.arange(14).reshape(1, 1, 1, 14, 1, 1, 1)
    ci = np.arange(16).reshape(1, 1, 1, 1, 16, 1, 1)
    pw2 = np.arange(7).reshape(1, 1, 1, 1, 1, 7, 1)
    co2 = np.arange(32).reshape(1, 1, 1, 1, 1, 1, 32)
    ki = rr - dy
    kj = pw - 2 * pw2 - dx + 1
    valid = (ki >= 0) & (ki < 3) & (kj >= 0) & (kj < 3)
    idx = np.where(valid, ((co2 * 16 + ci) * 3 + ki) * 3 + kj, 32 * 16 * 9)
    idx = np.broadcast_to(idx, (2, 2, 4, 14, 16, 7, 32))
    return np.ascontiguousarray(idx.reshape(4, 896, 224)).astype(np.int32)


_CONV1_IDX = _conv1_idx()
_CONV2_IDX = _conv2_idx()


# ------------------------------------------------------------------------------------
# Parameters (torch-shaped) and one-time preparation into kernel-friendly operands.
# ------------------------------------------------------------------------------------

def init_params(key):
    ks = jax.random.split(key, 8)
    return dict(
        conv1_w=jax.random.normal(ks[0], (16, 1, 3, 3), jnp.float32) * 0.10,
        conv1_b=jax.random.normal(ks[1], (16,), jnp.float32) * 0.01,
        conv2_w=jax.random.normal(ks[2], (32, 16, 3, 3), jnp.float32) * 0.05,
        conv2_b=jax.random.normal(ks[3], (32,), jnp.float32) * 0.01,
        fc1_w=jax.random.normal(ks[4], (128, 32 * 7 * 7), jnp.float32) * 0.02,
        fc1_b=jax.random.normal(ks[5], (128,), jnp.float32) * 0.01,
        fc2_w=jax.random.normal(ks[6], (NUM_CLASSES, 128), jnp.float32) * 0.05,
        fc2_b=jax.random.normal(ks[7], (NUM_CLASSES,), jnp.float32) * 0.01,
    )


def prepare_params(params):
    """One-time conversion of torch-shaped weights into the fused-kernel operands."""
    dt = jnp.bfloat16
    w1flat = jnp.concatenate([params["conv1_w"].reshape(-1).astype(jnp.float32),
                              jnp.zeros((1,), jnp.float32)])
    w2flat = jnp.concatenate([params["conv2_w"].reshape(-1).astype(jnp.float32),
                              jnp.zeros((1,), jnp.float32)])
    w1m = jnp.take(w1flat, jnp.asarray(_CONV1_IDX)).astype(dt)          # (4, 180, 448)
    w2m = jnp.take(w2flat, jnp.asarray(_CONV2_IDX)).astype(dt)          # (4, 896, 224)
    b1t = jnp.tile(params["conv1_b"].reshape(1, 16), (1, 28)).astype(jnp.float32)   # (1, 448)
    b2t = jnp.tile(params["conv2_b"].reshape(1, 32), (1, 7)).astype(jnp.float32)    # (1, 224)
    # fc1 rows permuted from torch (c, h, w) flatten order to the kernel's (h, w, c).
    w1p = (params["fc1_w"].T.reshape(32, 7, 7, 128)
           .transpose(1, 2, 0, 3).reshape(7, 224, 128).astype(dt))       # (7, 224, 128)
    bfc1 = params["fc1_b"].reshape(1, 128).astype(jnp.float32)
    wfc2p = jnp.pad(params["fc2_w"].T,
                    ((0, 0), (0, 128 - NUM_CLASSES))).astype(dt)         # (128, 128)
    bfc2p = jnp.pad(params["fc2_b"].reshape(1, -1),
                    ((0, 0), (0, 128 - NUM_CLASSES))).astype(jnp.float32)
    return dict(w1m=w1m, w2m=w2m, b1t=b1t, b2t=b2t, w1p=w1p,
                bfc1=bfc1, wfc2p=wfc2p, bfc2p=bfc2p)


# ------------------------------------------------------------------------------------
# Fused Pallas kernel
# ------------------------------------------------------------------------------------

def _fused_kernel(return_features, s1_ref, w1m_ref, b1t_ref, w2m_ref, b2t_ref,
                  w1p_ref, bfc1_ref, wfc2_ref, bfc2_ref, out_ref, *maybe_feat):
    tb = s1_ref.shape[1]
    rows = 7 * tb

    # ---- conv1 + ReLU + 2x2 maxpool (pool members folded into 4 matmuls) -----------
    a1 = s1_ref[...].reshape(rows, 180)                              # (7*tb, 180) bf16
    y1 = jnp.dot(a1, w1m_ref[0], preferred_element_type=jnp.float32)
    for m in range(1, 4):
        y1 = jnp.maximum(y1, jnp.dot(a1, w1m_ref[m],
                                     preferred_element_type=jnp.float32))
    h1 = jnp.maximum(y1 + b1t_ref[...], 0.0)                         # (7*tb, 448) f32
    if return_features:
        maybe_feat[0][...] = h1.reshape(7, tb, 448)

    # ---- build conv2 row-slabs entirely in VMEM (no HBM im2col) --------------------
    even = h1[:, 0:224]          # h1 row 2*pp     ; columns = (pw, c_in)
    odd = h1[:, 224:448]         # h1 row 2*pp + 1
    zrow = jnp.zeros((tb, 224), jnp.float32)
    up = jnp.concatenate([zrow, odd[: 6 * tb, :]], axis=0)           # h1 row 2*p2 - 1
    dn = jnp.concatenate([even[tb:, :], zrow], axis=0)               # h1 row 2*p2 + 2
    slab2 = jnp.concatenate([up, even, odd, dn], axis=-1).astype(jnp.bfloat16)  # (7*tb, 896)

    # ---- conv2 + ReLU + 2x2 maxpool --------------------------------------------------
    y2 = jnp.dot(slab2, w2m_ref[0], preferred_element_type=jnp.float32)
    for m in range(1, 4):
        y2 = jnp.maximum(y2, jnp.dot(slab2, w2m_ref[m],
                                     preferred_element_type=jnp.float32))
    h2 = jnp.maximum(y2 + b2t_ref[...], 0.0)                         # (7*tb, 224) f32

    # ---- fc1 (+ReLU) + fc2; fc1 rows pre-permuted so no flatten/transpose -----------
    acc = jnp.zeros((tb, 128), jnp.float32)
    for p2 in range(7):
        acc = acc + jnp.dot(h2[p2 * tb:(p2 + 1) * tb, :].astype(jnp.bfloat16),
                            w1p_ref[p2], preferred_element_type=jnp.float32)
    hfc = jnp.maximum(acc + bfc1_ref[...], 0.0).astype(jnp.bfloat16)
    out_ref[...] = (jnp.dot(hfc, wfc2_ref[...], preferred_element_type=jnp.float32)
                    + bfc2_ref[...])


def _fused_call(slab, prepped, tb, nb, return_features):
    bp = tb * nb
    kernel = functools.partial(_fused_kernel, return_features)

    out_shape = [jax.ShapeDtypeStruct((bp, 128), jnp.float32)]
    out_specs = [pl.BlockSpec((tb, 128), lambda i: (i, 0))]
    if return_features:
        out_shape.append(jax.ShapeDtypeStruct((7, bp, 448), jnp.float32))
        out_specs.append(pl.BlockSpec((7, tb, 448), lambda i: (0, i, 0)))

    flops = 2 * bp * (7 * 4 * (180 * 448 + 896 * 224) + 7 * 224 * 128 + 128 * 128)
    bytes_acc = (bp * (7 * 180 * 2 + 128 * 4)
                 + (4 * 180 * 448 + 4 * 896 * 224 + 7 * 224 * 128 + 128 * 128) * 2)

    res = pl.pallas_call(
        kernel,
        out_shape=tuple(out_shape) if return_features else out_shape[0],
        grid=(nb,),
        in_specs=[
            pl.BlockSpec((7, tb, 180), lambda i: (0, i, 0)),     # input row-slabs
            pl.BlockSpec((4, 180, 448), lambda i: (0, 0, 0)),    # conv1 member weights
            pl.BlockSpec((1, 448), lambda i: (0, 0)),            # conv1 bias (tiled)
            pl.BlockSpec((4, 896, 224), lambda i: (0, 0, 0)),    # conv2 member weights
            pl.BlockSpec((1, 224), lambda i: (0, 0)),            # conv2 bias (tiled)
            pl.BlockSpec((7, 224, 128), lambda i: (0, 0, 0)),    # fc1 (row-permuted)
            pl.BlockSpec((1, 128), lambda i: (0, 0)),            # fc1 bias
            pl.BlockSpec((128, 128), lambda i: (0, 0)),          # fc2 (zero-padded)
            pl.BlockSpec((1, 128), lambda i: (0, 0)),            # fc2 bias (padded)
        ],
        out_specs=tuple(out_specs) if return_features else out_specs[0],
        compiler_params=pltpu.CompilerParams(
            dimension_semantics=("parallel",),
            vmem_limit_bytes=48 * 1024 * 1024),
        cost_estimate=pl.CostEstimate(flops=int(flops), transcendentals=0,
                                      bytes_accessed=int(bytes_acc)),
    )(slab, prepped["w1m"], prepped["b1t"], prepped["w2m"], prepped["b2t"],
      prepped["w1p"], prepped["bfc1"], prepped["wfc2p"], prepped["bfc2p"])
    return res


# ------------------------------------------------------------------------------------
# Forward pass (lateral1 / lateral2 are nn.Identity in the spec -> omitted).
# ------------------------------------------------------------------------------------

def simple_cnn_forward(x, prepped, return_features=False):
    B = x.shape[0]
    tb, nb = _choose_tb(B)
    bp = tb * nb

    # Padded image -> overlapping 6-row slabs, rows ordered (pooled-row-pair, batch).
    xp = jnp.pad(x.reshape(B, 28, 28).astype(jnp.float32), ((0, 0), (1, 1), (1, 1)))
    slab = jnp.stack([xp[:, rr:rr + 25:4, :] for rr in range(6)], axis=2)   # (B,7,6,30)
    slab = slab.reshape(B, 7, 180).transpose(1, 0, 2).astype(jnp.bfloat16)  # (7,B,180)
    if bp != B:
        slab = jnp.pad(slab, ((0, 0), (0, bp - B), (0, 0)))

    res = _fused_call(slab, prepped, tb, nb, return_features)
    if return_features:
        logits_p, feat_p = res
    else:
        logits_p = res

    logits = logits_p[:B, :NUM_CLASSES]
    if return_features:
        # feature_map = activations after the first pool, torch layout (B, 16, 14, 14)
        fm = feat_p[:, :B, :].reshape(7, B, 2, 14, 16)
        fm = jnp.transpose(fm, (1, 4, 0, 2, 3)).reshape(B, 16, 14, 14)
        return logits, fm
    return logits


if __name__ == "__main__":
    key = jax.random.PRNGKey(0)
    pkey, xkey = jax.random.split(key)
    params = init_params(pkey)
    prepped = prepare_params(params)

    # 28x28 single-channel input implied by fc1 = Linear(32*7*7, 128); batch=2
    x = jax.random.normal(xkey, (2, 1, 28, 28), jnp.float32)

    fwd = jax.jit(simple_cnn_forward, static_argnames=("return_features",))
    logits = fwd(x, prepped)
    jax.block_until_ready(logits)
    assert logits.shape == (2, NUM_CLASSES)
    assert logits.dtype == jnp.float32
    print("KERNEL_OK")
</pallas_src>

<mosaic_0001>
module attributes {stable_mosaic.version = 11 : i64} {
  func.func @_fused_kernel(%arg0: i32, %arg1: memref<7x16x180xbf16, #tpu.memory_space<vmem>>, %arg2: memref<4x180x448xbf16, #tpu.memory_space<vmem>>, %arg3: memref<1x448xf32, #tpu.memory_space<vmem>>, %arg4: memref<4x896x224xbf16, #tpu.memory_space<vmem>>, %arg5: memref<1x224xf32, #tpu.memory_space<vmem>>, %arg6: memref<7x224x128xbf16, #tpu.memory_space<vmem>>, %arg7: memref<1x128xf32, #tpu.memory_space<vmem>>, %arg8: memref<128x128xbf16, #tpu.memory_space<vmem>>, %arg9: memref<1x128xf32, #tpu.memory_space<vmem>>, %arg10: memref<16x128xf32, #tpu.memory_space<vmem>>) attributes {dimension_semantics = [#tpu.dimension_semantics<parallel>], iteration_bounds = array<i64: 1>, scalar_prefetch = 0 : i64, scratch_operands = 0 : i64, tpu.core_type = #tpu.core_type<tc>, window_params = [{transform_indices = @transform_0, window_bounds = array<i64: 7, 16, 180>}, {pipeline_mode = #tpu.pipeline_mode<synchronous>, transform_indices = @transform_1, window_bounds = array<i64: 4, 180, 448>}, {pipeline_mode = #tpu.pipeline_mode<synchronous>, transform_indices = @transform_2, window_bounds = array<i64: 1, 448>}, {pipeline_mode = #tpu.pipeline_mode<synchronous>, transform_indices = @transform_3, window_bounds = array<i64: 4, 896, 224>}, {pipeline_mode = #tpu.pipeline_mode<synchronous>, transform_indices = @transform_4, window_bounds = array<i64: 1, 224>}, {pipeline_mode = #tpu.pipeline_mode<synchronous>, transform_indices = @transform_5, window_bounds = array<i64: 7, 224, 128>}, {pipeline_mode = #tpu.pipeline_mode<synchronous>, transform_indices = @transform_6, window_bounds = array<i64: 1, 128>}, {pipeline_mode = #tpu.pipeline_mode<synchronous>, transform_indices = @transform_7, window_bounds = array<i64: 128, 128>}, {pipeline_mode = #tpu.pipeline_mode<synchronous>, transform_indices = @transform_8, window_bounds = array<i64: 1, 128>}, {transform_indices = @transform_9, window_bounds = array<i64: 16, 128>}]} {
    %c0 = arith.constant 0 : index
    %c0_0 = arith.constant 0 : index
    %c0_1 = arith.constant 0 : index
    %0 = vector.load %arg1[%c0, %c0_0, %c0_1] : memref<7x16x180xbf16, #tpu.memory_space<vmem>>, vector<7x16x180xbf16>
    %1 = vector.shape_cast %0 : vector<7x16x180xbf16> to vector<112x180xbf16>
    %c0_2 = arith.constant 0 : index
    %c0_3 = arith.constant 0 : index
    %c0_4 = arith.constant 0 : index
    %2 = vector.load %arg2[%c0_2, %c0_3, %c0_4] : memref<4x180x448xbf16, #tpu.memory_space<vmem>>, vector<1x180x448xbf16>
    %3 = vector.shape_cast %2 : vector<1x180x448xbf16> to vector<180x448xbf16>
    %cst = arith.constant dense<0.000000e+00> : vector<112x448xf32>
    %4 = tpu.matmul %1, %3, %cst {dimension_numbers = #tpu.dot_dimension_numbers<[1], [0], [0], [1], [0, 0, 1, 1], [], []>} : vector<112x180xbf16>, vector<180x448xbf16>, vector<112x448xf32> -> vector<112x448xf32>
    %c1 = arith.constant 1 : index
    %c0_5 = arith.constant 0 : index
    %c0_6 = arith.constant 0 : index
    %5 = vector.load %arg2[%c1, %c0_5, %c0_6] : memref<4x180x448xbf16, #tpu.memory_space<vmem>>, vector<1x180x448xbf16>
    %6 = vector.shape_cast %5 : vector<1x180x448xbf16> to vector<180x448xbf16>
    %cst_7 = arith.constant dense<0.000000e+00> : vector<112x448xf32>
    %7 = tpu.matmul %1, %6, %cst_7 {dimension_numbers = #tpu.dot_dimension_numbers<[1], [0], [0], [1], [0, 0, 1, 1], [], []>} : vector<112x180xbf16>, vector<180x448xbf16>, vector<112x448xf32> -> vector<112x448xf32>
    %8 = arith.maximumf %4, %7 : vector<112x448xf32>
    %c2 = arith.constant 2 : index
    %c0_8 = arith.constant 0 : index
    %c0_9 = arith.constant 0 : index
    %9 = vector.load %arg2[%c2, %c0_8, %c0_9] : memref<4x180x448xbf16, #tpu.memory_space<vmem>>, vector<1x180x448xbf16>
    %10 = vector.shape_cast %9 : vector<1x180x448xbf16> to vector<180x448xbf16>
    %cst_10 = arith.constant dense<0.000000e+00> : vector<112x448xf32>
    %11 = tpu.matmul %1, %10, %cst_10 {dimension_numbers = #tpu.dot_dimension_numbers<[1], [0], [0], [1], [0, 0, 1, 1], [], []>} : vector<112x180xbf16>, vector<180x448xbf16>, vector<112x448xf32> -> vector<112x448xf32>
    %12 = arith.maximumf %8, %11 : vector<112x448xf32>
    %c3 = arith.constant 3 : index
    %c0_11 = arith.constant 0 : index
    %c0_12 = arith.constant 0 : index
    %13 = vector.load %arg2[%c3, %c0_11, %c0_12] : memref<4x180x448xbf16, #tpu.memory_space<vmem>>, vector<1x180x448xbf16>
    %14 = vector.shape_cast %13 : vector<1x180x448xbf16> to vector<180x448xbf16>
    %cst_13 = arith.constant dense<0.000000e+00> : vector<112x448xf32>
    %15 = tpu.matmul %1, %14, %cst_13 {dimension_numbers = #tpu.dot_dimension_numbers<[1], [0], [0], [1], [0, 0, 1, 1], [], []>} : vector<112x180xbf16>, vector<180x448xbf16>, vector<112x448xf32> -> vector<112x448xf32>
    %16 = arith.maximumf %12, %15 : vector<112x448xf32>
    %c0_14 = arith.constant 0 : index
    %c0_15 = arith.constant 0 : index
    %17 = vector.load %arg3[%c0_14, %c0_15] : memref<1x448xf32, #tpu.memory_space<vmem>>, vector<1x448xf32>
    %18 = vector.broadcast %17 : vector<1x448xf32> to vector<112x448xf32>
    %19 = arith.addf %16, %18 : vector<112x448xf32>
    %cst_16 = arith.constant 0.000000e+00 : f32
    %20 = vector.broadcast %cst_16 : f32 to vector<112x448xf32>
    %21 = arith.maximumf %19, %20 : vector<112x448xf32>
    %22 = vector.extract_strided_slice %21 {offsets = [0, 0], sizes = [112, 224], strides = [1, 1]} : vector<112x448xf32> to vector<112x224xf32>
    %23 = vector.extract_strided_slice %21 {offsets = [0, 224], sizes = [112, 224], strides = [1, 1]} : vector<112x448xf32> to vector<112x224xf32>
    %cst_17 = arith.constant 0.000000e+00 : f32
    %24 = vector.broadcast %cst_17 : f32 to vector<16x224xf32>
    %25 = vector.extract_strided_slice %23 {offsets = [0, 0], sizes = [96, 224], strides = [1, 1]} : vector<112x224xf32> to vector<96x224xf32>
    %26 = tpu.concatenate %24, %25 in 0 : vector<16x224xf32>, vector<96x224xf32> -> vector<112x224xf32>
    %27 = vector.extract_strided_slice %22 {offsets = [16, 0], sizes = [96, 224], strides = [1, 1]} : vector<112x224xf32> to vector<96x224xf32>
    %28 = tpu.concatenate %27, %24 in 0 : vector<96x224xf32>, vector<16x224xf32> -> vector<112x224xf32>
    %29 = tpu.concatenate %26, %22, %23, %28 in 1 : vector<112x224xf32>, vector<112x224xf32>, vector<112x224xf32>, vector<112x224xf32> -> vector<112x896xf32>
    %30 = arith.truncf %29 : vector<112x896xf32> to vector<112x896xbf16>
    %c0_18 = arith.constant 0 : index
    %c0_19 = arith.constant 0 : index
    %c0_20 = arith.constant 0 : index
    %31 = vector.load %arg4[%c0_18, %c0_19, %c0_20] : memref<4x896x224xbf16, #tpu.memory_space<vmem>>, vector<1x896x224xbf16>
    %32 = vector.shape_cast %31 : vector<1x896x224xbf16> to vector<896x224xbf16>
    %cst_21 = arith.constant dense<0.000000e+00> : vector<112x224xf32>
    %33 = tpu.matmul %30, %32, %cst_21 {dimension_numbers = #tpu.dot_dimension_numbers<[1], [0], [0], [1], [0, 0, 1, 1], [], []>} : vector<112x896xbf16>, vector<896x224xbf16>, vector<112x224xf32> -> vector<112x224xf32>
    %c1_22 = arith.constant 1 : index
    %c0_23 = arith.constant 0 : index
    %c0_24 = arith.constant 0 : index
    %34 = vector.load %arg4[%c1_22, %c0_23, %c0_24] : memref<4x896x224xbf16, #tpu.memory_space<vmem>>, vector<1x896x224xbf16>
    %35 = vector.shape_cast %34 : vector<1x896x224xbf16> to vector<896x224xbf16>
    %cst_25 = arith.constant dense<0.000000e+00> : vector<112x224xf32>
    %36 = tpu.matmul %30, %35, %cst_25 {dimension_numbers = #tpu.dot_dimension_numbers<[1], [0], [0], [1], [0, 0, 1, 1], [], []>} : vector<112x896xbf16>, vector<896x224xbf16>, vector<112x224xf32> -> vector<112x224xf32>
    %37 = arith.maximumf %33, %36 : vector<112x224xf32>
    %c2_26 = arith.constant 2 : index
    %c0_27 = arith.constant 0 : index
    %c0_28 = arith.constant 0 : index
    %38 = vector.load %arg4[%c2_26, %c0_27, %c0_28] : memref<4x896x224xbf16, #tpu.memory_space<vmem>>, vector<1x896x224xbf16>
    %39 = vector.shape_cast %38 : vector<1x896x224xbf16> to vector<896x224xbf16>
    %cst_29 = arith.constant dense<0.000000e+00> : vector<112x224xf32>
    %40 = tpu.matmul %30, %39, %cst_29 {dimension_numbers = #tpu.dot_dimension_numbers<[1], [0], [0], [1], [0, 0, 1, 1], [], []>} : vector<112x896xbf16>, vector<896x224xbf16>, vector<112x224xf32> -> vector<112x224xf32>
    %41 = arith.maximumf %37, %40 : vector<112x224xf32>
    %c3_30 = arith.constant 3 : index
    %c0_31 = arith.constant 0 : index
    %c0_32 = arith.constant 0 : index
    %42 = vector.load %arg4[%c3_30, %c0_31, %c0_32] : memref<4x896x224xbf16, #tpu.memory_space<vmem>>, vector<1x896x224xbf16>
    %43 = vector.shape_cast %42 : vector<1x896x224xbf16> to vector<896x224xbf16>
    %cst_33 = arith.constant dense<0.000000e+00> : vector<112x224xf32>
    %44 = tpu.matmul %30, %43, %cst_33 {dimension_numbers = #tpu.dot_dimension_numbers<[1], [0], [0], [1], [0, 0, 1, 1], [], []>} : vector<112x896xbf16>, vector<896x224xbf16>, vector<112x224xf32> -> vector<112x224xf32>
    %45 = arith.maximumf %41, %44 : vector<112x224xf32>
    %c0_34 = arith.constant 0 : index
    %c0_35 = arith.constant 0 : index
    %46 = vector.load %arg5[%c0_34, %c0_35] : memref<1x224xf32, #tpu.memory_space<vmem>>, vector<1x224xf32>
    %47 = vector.broadcast %46 : vector<1x224xf32> to vector<112x224xf32>
    %48 = arith.addf %45, %47 : vector<112x224xf32>
    %cst_36 = arith.constant 0.000000e+00 : f32
    %49 = vector.broadcast %cst_36 : f32 to vector<112x224xf32>
    %50 = arith.maximumf %48, %49 : vector<112x224xf32>
    %cst_37 = arith.constant 0.000000e+00 : f32
    %51 = vector.broadcast %cst_37 : f32 to vector<16x128xf32>
    %52 = vector.extract_strided_slice %50 {offsets = [0, 0], sizes = [16, 224], strides = [1, 1]} : vector<112x224xf32> to vector<16x224xf32>
    %53 = arith.truncf %52 : vector<16x224xf32> to vector<16x224xbf16>
    %c0_38 = arith.constant 0 : index
    %c0_39 = arith.constant 0 : index
    %c0_40 = arith.constant 0 : index
    %54 = vector.load %arg6[%c0_38, %c0_39, %c0_40] : memref<7x224x128xbf16, #tpu.memory_space<vmem>>, vector<1x224x128xbf16>
    %55 = vector.shape_cast %54 : vector<1x224x128xbf16> to vector<224x128xbf16>
    %cst_41 = arith.constant dense<0.000000e+00> : vector<16x128xf32>
    %56 = tpu.matmul %53, %55, %cst_41 {dimension_numbers = #tpu.dot_dimension_numbers<[1], [0], [0], [1], [0, 0, 1, 1], [], []>} : vector<16x224xbf16>, vector<224x128xbf16>, vector<16x128xf32> -> vector<16x128xf32>
    %57 = arith.addf %51, %56 : vector<16x128xf32>
    %58 = vector.extract_strided_slice %50 {offsets = [16, 0], sizes = [16, 224], strides = [1, 1]} : vector<112x224xf32> to vector<16x224xf32>
    %59 = arith.truncf %58 : vector<16x224xf32> to vector<16x224xbf16>
    %c1_42 = arith.constant 1 : index
    %c0_43 = arith.constant 0 : index
    %c0_44 = arith.constant 0 : index
    %60 = vector.load %arg6[%c1_42, %c0_43, %c0_44] : memref<7x224x128xbf16, #tpu.memory_space<vmem>>, vector<1x224x128xbf16>
    %61 = vector.shape_cast %60 : vector<1x224x128xbf16> to vector<224x128xbf16>
    %cst_45 = arith.constant dense<0.000000e+00> : vector<16x128xf32>
    %62 = tpu.matmul %59, %61, %cst_45 {dimension_numbers = #tpu.dot_dimension_numbers<[1], [0], [0], [1], [0, 0, 1, 1], [], []>} : vector<16x224xbf16>, vector<224x128xbf16>, vector<16x128xf32> -> vector<16x128xf32>
    %63 = arith.addf %57, %62 : vector<16x128xf32>
    %64 = vector.extract_strided_slice %50 {offsets = [32, 0], sizes = [16, 224], strides = [1, 1]} : vector<112x224xf32> to vector<16x224xf32>
    %65 = arith.truncf %64 : vector<16x224xf32> to vector<16x224xbf16>
    %c2_46 = arith.constant 2 : index
    %c0_47 = arith.constant 0 : index
    %c0_48 = arith.constant 0 : index
    %66 = vector.load %arg6[%c2_46, %c0_47, %c0_48] : memref<7x224x128xbf16, #tpu.memory_space<vmem>>, vector<1x224x128xbf16>
    %67 = vector.shape_cast %66 : vector<1x224x128xbf16> to vector<224x128xbf16>
    %cst_49 = arith.constant dense<0.000000e+00> : vector<16x128xf32>
    %68 = tpu.matmul %65, %67, %cst_49 {dimension_numbers = #tpu.dot_dimension_numbers<[1], [0], [0], [1], [0, 0, 1, 1], [], []>} : vector<16x224xbf16>, vector<224x128xbf16>, vector<16x128xf32> -> vector<16x128xf32>
    %69 = arith.addf %63, %68 : vector<16x128xf32>
    %70 = vector.extract_strided_slice %50 {offsets = [48, 0], sizes = [16, 224], strides = [1, 1]} : vector<112x224xf32> to vector<16x224xf32>
    %71 = arith.truncf %70 : vector<16x224xf32> to vector<16x224xbf16>
    %c3_50 = arith.constant 3 : index
    %c0_51 = arith.constant 0 : index
    %c0_52 = arith.constant 0 : index
    %72 = vector.load %arg6[%c3_50, %c0_51, %c0_52] : memref<7x224x128xbf16, #tpu.memory_space<vmem>>, vector<1x224x128xbf16>
    %73 = vector.shape_cast %72 : vector<1x224x128xbf16> to vector<224x128xbf16>
    %cst_53 = arith.constant dense<0.000000e+00> : vector<16x128xf32>
    %74 = tpu.matmul %71, %73, %cst_53 {dimension_numbers = #tpu.dot_dimension_numbers<[1], [0], [0], [1], [0, 0, 1, 1], [], []>} : vector<16x224xbf16>, vector<224x128xbf16>, vector<16x128xf32> -> vector<16x128xf32>
    %75 = arith.addf %69, %74 : vector<16x128xf32>
    %76 = vector.extract_strided_slice %50 {offsets = [64, 0], sizes = [16, 224], strides = [1, 1]} : vector<112x224xf32> to vector<16x224xf32>
    %77 = arith.truncf %76 : vector<16x224xf32> to vector<16x224xbf16>
    %c4 = arith.constant 4 : index
    %c0_54 = arith.constant 0 : index
    %c0_55 = arith.constant 0 : index
    %78 = vector.load %arg6[%c4, %c0_54, %c0_55] : memref<7x224x128xbf16, #tpu.memory_space<vmem>>, vector<1x224x128xbf16>
    %79 = vector.shape_cast %78 : vector<1x224x128xbf16> to vector<224x128xbf16>
    %cst_56 = arith.constant dense<0.000000e+00> : vector<16x128xf32>
    %80 = tpu.matmul %77, %79, %cst_56 {dimension_numbers = #tpu.dot_dimension_numbers<[1], [0], [0], [1], [0, 0, 1, 1], [], []>} : vector<16x224xbf16>, vector<224x128xbf16>, vector<16x128xf32> -> vector<16x128xf32>
    %81 = arith.addf %75, %80 : vector<16x128xf32>
    %82 = vector.extract_strided_slice %50 {offsets = [80, 0], sizes = [16, 224], strides = [1, 1]} : vector<112x224xf32> to vector<16x224xf32>
    %83 = arith.truncf %82 : vector<16x224xf32> to vector<16x224xbf16>
    %c5 = arith.constant 5 : index
    %c0_57 = arith.constant 0 : index
    %c0_58 = arith.constant 0 : index
    %84 = vector.load %arg6[%c5, %c0_57, %c0_58] : memref<7x224x128xbf16, #tpu.memory_space<vmem>>, vector<1x224x128xbf16>
    %85 = vector.shape_cast %84 : vector<1x224x128xbf16> to vector<224x128xbf16>
    %cst_59 = arith.constant dense<0.000000e+00> : vector<16x128xf32>
    %86 = tpu.matmul %83, %85, %cst_59 {dimension_numbers = #tpu.dot_dimension_numbers<[1], [0], [0], [1], [0, 0, 1, 1], [], []>} : vector<16x224xbf16>, vector<224x128xbf16>, vector<16x128xf32> -> vector<16x128xf32>
    %87 = arith.addf %81, %86 : vector<16x128xf32>
    %88 = vector.extract_strided_slice %50 {offsets = [96, 0], sizes = [16, 224], strides = [1, 1]} : vector<112x224xf32> to vector<16x224xf32>
    %89 = arith.truncf %88 : vector<16x224xf32> to vector<16x224xbf16>
    %c6 = arith.constant 6 : index
    %c0_60 = arith.constant 0 : index
    %c0_61 = arith.constant 0 : index
    %90 = vector.load %arg6[%c6, %c0_60, %c0_61] : memref<7x224x128xbf16, #tpu.memory_space<vmem>>, vector<1x224x128xbf16>
    %91 = vector.shape_cast %90 : vector<1x224x128xbf16> to vector<224x128xbf16>
    %cst_62 = arith.constant dense<0.000000e+00> : vector<16x128xf32>
    %92 = tpu.matmul %89, %91, %cst_62 {dimension_numbers = #tpu.dot_dimension_numbers<[1], [0], [0], [1], [0, 0, 1, 1], [], []>} : vector<16x224xbf16>, vector<224x128xbf16>, vector<16x128xf32> -> vector<16x128xf32>
    %93 = arith.addf %87, %92 : vector<16x128xf32>
    %c0_63 = arith.constant 0 : index
    %c0_64 = arith.constant 0 : index
    %94 = vector.load %arg7[%c0_63, %c0_64] : memref<1x128xf32, #tpu.memory_space<vmem>>, vector<1x128xf32>
    %95 = vector.broadcast %94 : vector<1x128xf32> to vector<16x128xf32>
    %96 = arith.addf %93, %95 : vector<16x128xf32>
    %cst_65 = arith.constant 0.000000e+00 : f32
    %97 = vector.broadcast %cst_65 : f32 to vector<16x128xf32>
    %98 = arith.maximumf %96, %97 : vector<16x128xf32>
    %99 = arith.truncf %98 : vector<16x128xf32> to vector<16x128xbf16>
    %c0_66 = arith.constant 0 : index
    %c0_67 = arith.constant 0 : index
    %100 = vector.load %arg8[%c0_66, %c0_67] : memref<128x128xbf16, #tpu.memory_space<vmem>>, vector<128x128xbf16>
    %cst_68 = arith.constant dense<0.000000e+00> : vector<16x128xf32>
    %101 = tpu.matmul %99, %100, %cst_68 {dimension_numbers = #tpu.dot_dimension_numbers<[1], [0], [0], [1], [0, 0, 1, 1], [], []>} : vector<16x128xbf16>, vector<128x128xbf16>, vector<16x128xf32> -> vector<16x128xf32>
    %c0_69 = arith.constant 0 : index
    %c0_70 = arith.constant 0 : index
    %102 = vector.load %arg9[%c0_69, %c0_70] : memref<1x128xf32, #tpu.memory_space<vmem>>, vector<1x128xf32>
    %103 = vector.broadcast %102 : vector<1x128xf32> to vector<16x128xf32>
    %104 = arith.addf %101, %103 : vector<16x128xf32>
    %c0_71 = arith.constant 0 : index
    %c0_72 = arith.constant 0 : index
    %105 = vector.load %arg10[%c0_71, %c0_72] : memref<16x128xf32, #tpu.memory_space<vmem>>, vector<16x128xf32>
    tpu.vector_store %arg10[%c0_71, %c0_72], %104 {strides = array<i32>} : memref<16x128xf32, #tpu.memory_space<vmem>>, vector<16x128xf32>,
    return
  }
  func.func @transform_0(%arg0: i32) -> (i32, i32, i32) {
    %c0_i32 = arith.constant 0 : i32
    %c0_i32_0 = arith.constant 0 : i32
    %c0_i32_1 = arith.constant 0 : i32
    return %c0_i32, %arg0, %c0_i32_0 : i32, i32, i32
  }
  func.func @transform_1(%arg0: i32) -> (i32, i32, i32) {
    %c0_i32 = arith.constant 0 : i32
    %c0_i32_0 = arith.constant 0 : i32
    %c0_i32_1 = arith.constant 0 : i32
    %c0_i32_2 = arith.constant 0 : i32
    return %c0_i32, %c0_i32_0, %c0_i32_1 : i32, i32, i32
  }
  func.func @transform_2(%arg0: i32) -> (i32, i32) {
    %c0_i32 = arith.constant 0 : i32
    %c0_i32_0 = arith.constant 0 : i32
    %c0_i32_1 = arith.constant 0 : i32
    return %c0_i32, %c0_i32_0 : i32, i32
  }
  func.func @transform_3(%arg0: i32) -> (i32, i32, i32) {
    %c0_i32 = arith.constant 0 : i32
    %c0_i32_0 = arith.constant 0 : i32
    %c0_i32_1 = arith.constant 0 : i32
    %c0_i32_2 = arith.constant 0 : i32
    return %c0_i32, %c0_i32_0, %c0_i32_1 : i32, i32, i32
  }
  func.func @transform_4(%arg0: i32) -> (i32, i32) {
    %c0_i32 = arith.constant 0 : i32
    %c0_i32_0 = arith.constant 0 : i32
    %c0_i32_1 = arith.constant 0 : i32
    return %c0_i32, %c0_i32_0 : i32, i32
  }
  func.func @transform_5(%arg0: i32) -> (i32, i32, i32) {
    %c0_i32 = arith.constant 0 : i32
    %c0_i32_0 = arith.constant 0 : i32
    %c0_i32_1 = arith.constant 0 : i32
    %c0_i32_2 = arith.constant 0 : i32
    return %c0_i32, %c0_i32_0, %c0_i32_1 : i32, i32, i32
  }
  func.func @transform_6(%arg0: i32) -> (i32, i32) {
    %c0_i32 = arith.constant 0 : i32
    %c0_i32_0 = arith.constant 0 : i32
    %c0_i32_1 = arith.constant 0 : i32
    return %c0_i32, %c0_i32_0 : i32, i32
  }
  func.func @transform_7(%arg0: i32) -> (i32, i32) {
    %c0_i32 = arith.constant 0 : i32
    %c0_i32_0 = arith.constant 0 : i32
    %c0_i32_1 = arith.constant 0 : i32
    return %c0_i32, %c0_i32_0 : i32, i32
  }
  func.func @transform_8(%arg0: i32) -> (i32, i32) {
    %c0_i32 = arith.constant 0 : i32
    %c0_i32_0 = arith.constant 0 : i32
    %c0_i32_1 = arith.constant 0 : i32
    return %c0_i32, %c0_i32_0 : i32, i32
  }
  func.func @transform_9(%arg0: i32) -> (i32, i32) {
    %c0_i32 = arith.constant 0 : i32
    %c0_i32_0 = arith.constant 0 : i32
    return %arg0, %c0_i32 : i32, i32
  }
}

</mosaic_0001>

<llo_original>
// kernel: simple_cnn_forward.1
$region0: #{simple_cnn_forward.1}
  #allocation0 [shape = 'u32[]', space=smem, size = 0x4, offset = 0x4, fixed_abs, tag = 'smem constant byte address 0x4 - core index']
  #allocation1 [shape = 'u32[72,128]{1,0:T(1,128)}', space=vmem, size = 0x9000, scoped, tag = 'internal scratch']
  %s0 = inlined_call_operand.vmem [shape: bf16[7,16,180], index: 0, kind: input, shape index: {}]
  %s1 = inlined_call_operand.vmem [shape: bf16[4,180,448], index: 1, kind: input, shape index: {}]
  %s2 = inlined_call_operand.vmem [shape: f32[1,448], index: 2, kind: input, shape index: {}]
  %s3 = inlined_call_operand.vmem [shape: bf16[4,896,224], index: 3, kind: input, shape index: {}]
  %s4 = inlined_call_operand.vmem [shape: f32[1,224], index: 4, kind: input, shape index: {}]
  %s5 = inlined_call_operand.vmem [shape: bf16[7,224,128], index: 5, kind: input, shape index: {}]
  %s6 = inlined_call_operand.vmem [shape: f32[1,128], index: 6, kind: input, shape index: {}]
  %s7 = inlined_call_operand.vmem [shape: bf16[128,128], index: 7, kind: input, shape index: {}]
  %s8 = inlined_call_operand.vmem [shape: f32[1,128], index: 8, kind: input, shape index: {}]
  %s9 = inlined_call_operand.vmem [shape: f32[16,128], index: 9, kind: output, shape index: {}]
  %s10 = sld [smem:[#allocation0]]
  $region46: #{simple_cnn_forward.1} parent=0
    _
  %s12 = ssub.s32 1, %s10
  %s13 = scalar_select 0, %s12, %s10
  // Predicated region
  $region2: #{simple_cnn_forward.1} parent=0 // pred_check
    _
  $region3: #{simple_cnn_forward.1} parent=0 // pred_check_branch
    %15 = sbr.rel (0) target = $region5
  $region4: #{simple_cnn_forward.1} parent=0 // pred_region
    _
  $region5: #{simple_cnn_forward.1} parent=0 // pred_fallthru
    _
  // Predicated region
  $region6: #{simple_cnn_forward.1} parent=0 // pred_check
    _
  $region7: #{simple_cnn_forward.1} parent=0 // pred_check_branch
    %17 = sbr.rel (0) target = $region9
  $region8: #{simple_cnn_forward.1} parent=0 // pred_region
    _
  $region9: #{simple_cnn_forward.1} parent=0 // pred_fallthru
    _
  // Predicated region
  $region10: #{simple_cnn_forward.1} parent=0 // pred_check
    _
  $region11: #{simple_cnn_forward.1} parent=0 // pred_check_branch
    %19 = sbr.rel (0) target = $region13
  $region12: #{simple_cnn_forward.1} parent=0 // pred_region
    _
  $region13: #{simple_cnn_forward.1} parent=0 // pred_fallthru
    _
  // Predicated region
  $region14: #{simple_cnn_forward.1} parent=0 // pred_check
    _
  $region15: #{simple_cnn_forward.1} parent=0 // pred_check_branch
    %21 = sbr.rel (0) target = $region17
  $region16: #{simple_cnn_forward.1} parent=0 // pred_region
    _
  $region17: #{simple_cnn_forward.1} parent=0 // pred_fallthru
    _
  // Predicated region
  $region18: #{simple_cnn_forward.1} parent=0 // pred_check
    _
  $region19: #{simple_cnn_forward.1} parent=0 // pred_check_branch
    %23 = sbr.rel (0) target = $region21
  $region20: #{simple_cnn_forward.1} parent=0 // pred_region
    _
  $region21: #{simple_cnn_forward.1} parent=0 // pred_fallthru
    _
  // Predicated region
  $region22: #{simple_cnn_forward.1} parent=0 // pred_check
    _
  $region23: #{simple_cnn_forward.1} parent=0 // pred_check_branch
    %25 = sbr.rel (0) target = $region25
  $region24: #{simple_cnn_forward.1} parent=0 // pred_region
    _
  $region25: #{simple_cnn_forward.1} parent=0 // pred_fallthru
    _
  // Predicated region
  $region26: #{simple_cnn_forward.1} parent=0 // pred_check
    _
  $region27: #{simple_cnn_forward.1} parent=0 // pred_check_branch
    %27 = sbr.rel (0) target = $region29
  $region28: #{simple_cnn_forward.1} parent=0 // pred_region
    _
  $region29: #{simple_cnn_forward.1} parent=0 // pred_fallthru
    _
  // Predicated region
  $region30: #{simple_cnn_forward.1} parent=0 // pred_check
    _
  $region31: #{simple_cnn_forward.1} parent=0 // pred_check_branch
    %29 = sbr.rel (0) target = $region33
  $region32: #{simple_cnn_forward.1} parent=0 // pred_region
    _
  $region33: #{simple_cnn_forward.1} parent=0 // pred_fallthru
    _
  // Predicated region
  $region34: #{simple_cnn_forward.1} parent=0 // pred_check
    _
  $region35: #{simple_cnn_forward.1} parent=0 // pred_check_branch
    %31 = sbr.rel (0) target = $region37
  $region36: #{simple_cnn_forward.1} parent=0 // pred_region
    _
  $region37: #{simple_cnn_forward.1} parent=0 // pred_fallthru
    _
  %v33 = vld [vmem:[%s0] sm:$0xff]
  %v34 = vld [vmem:[%s0 + $0x8] sm:$0xff]
  %v35 = vld [vmem:[%s0 + $0x10] sm:$0xff]
  %v36 = vld [vmem:[%s0 + $0x18] sm:$0xff]
  %v37 = vld [vmem:[%s0 + $0x20] sm:$0xff]
  %v38 = vld [vmem:[%s0 + $0x28] sm:$0xff]
  %v39 = vld [vmem:[%s0 + $0x30] sm:$0xff]
  %v40 = vld [vmem:[%s0 + $0x38] sm:$0xff]
  %v41 = vld [vmem:[%s0 + $0x40] sm:$0xff]
  %v42 = vld [vmem:[%s0 + $0x48] sm:$0xff]
  %v43 = vld [vmem:[%s0 + $0x50] sm:$0xff]
  %v44 = vld [vmem:[%s0 + $0x58] sm:$0xff]
  %v45 = vld [vmem:[%s0 + $0x60] sm:$0xff]
  %v46 = vld [vmem:[%s0 + $0x68] sm:$0xff]
  %v47 = vld [vmem:[%s1] sm:$0xff]
  %v48 = vld [vmem:[%s1 + $0x8] sm:$0xff]
  %v49 = vld [vmem:[%s1 + $0x10] sm:$0xff]
  %v50 = vld [vmem:[%s1 + $0x18] sm:$0xff]
  %v51 = vld [vmem:[%s1 + $0x20] sm:$0xff]
  %v52 = vld [vmem:[%s1 + $0x28] sm:$0xff]
  %v53 = vld [vmem:[%s1 + $0x30] sm:$0xff]
  %v54 = vld [vmem:[%s1 + $0x38] sm:$0xff]
  %v55 = vld [vmem:[%s1 + $0x40] sm:$0xff]
  %v56 = vld [vmem:[%s1 + $0x48] sm:$0xff]
  %v57 = vld [vmem:[%s1 + $0x50] sm:$0xff]
  %v58 = vld [vmem:[%s1 + $0x58] sm:$0xff]
  %v59 = vld [vmem:[%s1 + $0x60] sm:$0xff]
  %v60 = vld [vmem:[%s1 + $0x68] sm:$0xff]
  %v61 = vld [vmem:[%s1 + $0x70] sm:$0xff]
  %v62 = vld [vmem:[%s1 + $0x78] sm:$0xff]
  %v63 = vld [vmem:[%s1 + $0x80] sm:$0xff]
  %v64 = vld [vmem:[%s1 + $0x88] sm:$0xff]
  %v65 = vld [vmem:[%s1 + $0x90] sm:$0xff]
  %v66 = vld [vmem:[%s1 + $0x98] sm:$0xff]
  %v67 = vld [vmem:[%s1 + $0xa0] sm:$0xff]
  %v68 = vld [vmem:[%s1 + $0xa8] sm:$0xff]
  %v69 = vld [vmem:[%s1 + $0xb0] sm:$0xff]
  %v70 = vld [vmem:[%s1 + $0xb8] sm:$0xff]
  %v71 = vld [vmem:[%s1 + $0xc0] sm:$0xff]
  %v72 = vld [vmem:[%s1 + $0xc8] sm:$0xff]
  %v73 = vld [vmem:[%s1 + $0xd0] sm:$0xff]
  %v74 = vld [vmem:[%s1 + $0xd8] sm:$0xff]
  %v75 = vld [vmem:[%s1 + $0xe0] sm:$0xff]
  %v76 = vld [vmem:[%s1 + $0xe8] sm:$0xff]
  %v77 = vld [vmem:[%s1 + $0xf0] sm:$0xff]
  %v78 = vld [vmem:[%s1 + $0xf8] sm:$0xff]
  %v79 = vld [vmem:[%s1 + $0x100] sm:$0xff]
  %v80 = vld [vmem:[%s1 + $0x108] sm:$0xff]
  %v81 = vld [vmem:[%s1 + $0x110] sm:$0xff]
  %v82 = vld [vmem:[%s1 + $0x118] sm:$0xff]
  %v83 = vld [vmem:[%s1 + $0x120] sm:$0xff]
  %v84 = vld [vmem:[%s1 + $0x128] sm:$0xff]
  %v85 = vld [vmem:[%s1 + $0x130] sm:$0xff]
  %v86 = vld [vmem:[%s1 + $0x138] sm:$0xff]
  %v87 = vld [vmem:[%s1 + $0x140] sm:$0xff]
  %v88 = vld [vmem:[%s1 + $0x148] sm:$0xff]
  %v89 = vld [vmem:[%s1 + $0x150] sm:$0xff]
  %v90 = vld [vmem:[%s1 + $0x158] sm:$0xff]
  %v91 = vld [vmem:[%s1 + $0x160] sm:$0x33]
  %v92 = vld [vmem:[%s1 + $0x168] sm:$0x33]
  %v107 = vunpack.c.l.b16 %v33
  %v108 = vunpack.c.h.b16 %v33
  %v109 = vunpack.c.l.b16 %v34
  %v110 = vunpack.c.h.b16 %v34
  %v111 = vunpack.c.l.b16 %v35
  %v112 = vunpack.c.h.b16 %v35
  %v113 = vunpack.c.l.b16 %v36
  %v114 = vunpack.c.h.b16 %v36
  %v115 = vunpack.c.l.b16 %v37
  %v116 = vunpack.c.h.b16 %v37
  %v117 = vunpack.c.l.b16 %v38
  %v118 = vunpack.c.h.b16 %v38
  %v119 = vunpack.c.l.b16 %v39
  %v120 = vunpack.c.h.b16 %v39
  %v121 = vunpack.c.l.b16 %v40
  %v122 = vunpack.c.h.b16 %v40
  %v123 = vunpack.c.l.b16 %v41
  %v124 = vunpack.c.h.b16 %v41
  %v125 = vunpack.c.l.b16 %v42
  %v126 = vunpack.c.h.b16 %v42
  %v127 = vunpack.c.l.b16 %v43
  %v128 = vunpack.c.h.b16 %v43
  %v129 = vunpack.c.l.b16 %v44
  %v130 = vunpack.c.h.b16 %v44
  %v131 = vunpack.c.l.b16 %v45
  %v132 = vunpack.c.h.b16 %v45
  %v133 = vunpack.c.l.b16 %v46
  %v134 = vunpack.c.h.b16 %v46
  %v135 = vpack.c.b16 %v109, %v107
  %v136 = vpack.c.b16 %v110, %v108
  %v137 = vpack.c.b16 %v113, %v111
  %v138 = vpack.c.b16 %v114, %v112
  %v139 = vpack.c.b16 %v117, %v115
  %v140 = vpack.c.b16 %v118, %v116
  %v141 = vpack.c.b16 %v121, %v119
  %v142 = vpack.c.b16 %v122, %v120
  %v143 = vpack.c.b16 %v125, %v123
  %v144 = vpack.c.b16 %v126, %v124
  %v145 = vpack.c.b16 %v129, %v127
  %v146 = vpack.c.b16 %v130, %v128
  %v147 = vpack.c.b16 %v133, %v131
  %v148 = vpack.c.b16 %v134, %v132
  %v202 = vunpack.c.l.b16 %v47
  %v203 = vunpack.c.h.b16 %v47
  %v204 = vunpack.c.l.b16 %v48
  %v205 = vunpack.c.h.b16 %v48
  %v206 = vunpack.c.l.b16 %v49
  %v207 = vunpack.c.h.b16 %v49
  %v208 = vunpack.c.l.b16 %v50
  %v209 = vunpack.c.h.b16 %v50
  %v210 = vunpack.c.l.b16 %v51
  %v211 = vunpack.c.h.b16 %v51
  %v212 = vunpack.c.l.b16 %v52
  %v213 = vunpack.c.h.b16 %v52
  %v214 = vunpack.c.l.b16 %v53
  %v215 = vunpack.c.h.b16 %v53
  %v216 = vunpack.c.l.b16 %v54
  %v217 = vunpack.c.h.b16 %v54
  %v218 = vunpack.c.l.b16 %v55
  %v219 = vunpack.c.h.b16 %v55
  %v220 = vunpack.c.l.b16 %v56
  %v221 = vunpack.c.h.b16 %v56
  %v222 = vunpack.c.l.b16 %v57
  %v223 = vunpack.c.h.b16 %v57
  %v224 = vunpack.c.l.b16 %v58
  %v225 = vunpack.c.h.b16 %v58
  %v226 = vunpack.c.l.b16 %v59
  %v227 = vunpack.c.h.b16 %v59
  %v228 = vunpack.c.l.b16 %v60
  %v229 = vunpack.c.h.b16 %v60
  %v230 = vunpack.c.l.b16 %v61
  %v231 = vunpack.c.h.b16 %v61
  %v232 = vunpack.c.l.b16 %v62
  %v233 = vunpack.c.h.b16 %v62
  %v234 = vunpack.c.l.b16 %v63
  %v235 = vunpack.c.h.b16 %v63
  %v236 = vunpack.c.l.b16 %v64
  %v237 = vunpack.c.h.b16 %v64
  %v238 = vunpack.c.l.b16 %v65
  %v239 = vunpack.c.h.b16 %v65
  %v240 = vunpack.c.l.b16 %v66
  %v241 = vunpack.c.h.b16 %v66
  %v242 = vunpack.c.l.b16 %v67
  %v243 = vunpack.c.h.b16 %v67
  %v244 = vunpack.c.l.b16 %v68
  %v245 = vunpack.c.h.b16 %v68
  %v246 = vunpack.c.l.b16 %v69
  %v247 = vunpack.c.h.b16 %v69
  %v248 = vunpack.c.l.b16 %v70
  %v249 = vunpack.c.h.b16 %v70
  %v250 = vunpack.c.l.b16 %v71
  %v251 = vunpack.c.h.b16 %v71
  %v252 = vunpack.c.l.b16 %v72
  %v253 = vunpack.c.h.b16 %v72
  %v254 = vunpack.c.l.b16 %v73
  %v255 = vunpack.c.h.b16 %v73
  %v256 = vunpack.c.l.b16 %v74
  %v257 = vunpack.c.h.b16 %v74
  %v258 = vunpack.c.l.b16 %v75
  %v259 = vunpack.c.h.b16 %v75
  %v260 = vunpack.c.l.b16 %v76
  %v261 = vunpack.c.h.b16 %v76
  %v262 = vunpack.c.l.b16 %v77
  %v263 = vunpack.c.h.b16 %v77
  %v264 = vunpack.c.l.b16 %v78
  %v265 = vunpack.c.h.b16 %v78
  %v266 = vunpack.c.l.b16 %v79
  %v267 = vunpack.c.h.b16 %v79
  %v268 = vunpack.c.l.b16 %v80
  %v269 = vunpack.c.h.b16 %v80
  %v270 = vunpack.c.l.b16 %v81
  %v271 = vunpack.c.h.b16 %v81
  %v272 = vunpack.c.l.b16 %v82
  %v273 = vunpack.c.h.b16 %v82
  %v274 = vunpack.c.l.b16 %v83
  %v275 = vunpack.c.h.b16 %v83
  %v276 = vunpack.c.l.b16 %v84
  %v277 = vunpack.c.h.b16 %v84
  %v278 = vunpack.c.l.b16 %v85
  %v279 = vunpack.c.h.b16 %v85
  %v280 = vunpack.c.l.b16 %v86
  %v281 = vunpack.c.h.b16 %v86
  %v282 = vunpack.c.l.b16 %v87
  %v283 = vunpack.c.h.b16 %v87
  %v284 = vunpack.c.l.b16 %v88
  %v285 = vunpack.c.h.b16 %v88
  %v286 = vunpack.c.l.b16 %v89
  %v287 = vunpack.c.h.b16 %v89
  %v288 = vunpack.c.l.b16 %v90
  %v289 = vunpack.c.h.b16 %v90
  %v290 = vunpack.c.l.b16 %v91
  %v291 = vunpack.c.h.b16 %v91
  %v292 = vunpack.c.l.b16 %v92
  %v293 = vunpack.c.h.b16 %v92
  %v294 = vpack.c.b16 %v206, %v202
  %v295 = vpack.c.b16 %v207, %v203
  %v296 = vpack.c.b16 %v208, %v204
  %v297 = vpack.c.b16 %v209, %v205
  %v298 = vpack.c.b16 %v214, %v210
  %v299 = vpack.c.b16 %v215, %v211
  %v300 = vpack.c.b16 %v216, %v212
  %v301 = vpack.c.b16 %v217, %v213
  %v302 = vpack.c.b16 %v222, %v218
  %v303 = vpack.c.b16 %v223, %v219
  %v304 = vpack.c.b16 %v224, %v220
  %v305 = vpack.c.b16 %v225, %v221
  %v306 = vpack.c.b16 %v230, %v226
  %v307 = vpack.c.b16 %v231, %v227
  %v308 = vpack.c.b16 %v232, %v228
  %v309 = vpack.c.b16 %v233, %v229
  %v310 = vpack.c.b16 %v238, %v234
  %v311 = vpack.c.b16 %v239, %v235
  %v312 = vpack.c.b16 %v240, %v236
  %v313 = vpack.c.b16 %v241, %v237
  %v314 = vpack.c.b16 %v246, %v242
  %v315 = vpack.c.b16 %v247, %v243
  %v316 = vpack.c.b16 %v248, %v244
  %v317 = vpack.c.b16 %v249, %v245
  %v318 = vpack.c.b16 %v254, %v250
  %v319 = vpack.c.b16 %v255, %v251
  %v320 = vpack.c.b16 %v256, %v252
  %v321 = vpack.c.b16 %v257, %v253
  %v322 = vpack.c.b16 %v262, %v258
  %v323 = vpack.c.b16 %v263, %v259
  %v324 = vpack.c.b16 %v264, %v260
  %v325 = vpack.c.b16 %v265, %v261
  %v326 = vpack.c.b16 %v270, %v266
  %v327 = vpack.c.b16 %v271, %v267
  %v328 = vpack.c.b16 %v272, %v268
  %v329 = vpack.c.b16 %v273, %v269
  %v330 = vpack.c.b16 %v278, %v274
  %v331 = vpack.c.b16 %v279, %v275
  %v332 = vpack.c.b16 %v280, %v276
  %v333 = vpack.c.b16 %v281, %v277
  %v334 = vpack.c.b16 %v286, %v282
  %v335 = vpack.c.b16 %v287, %v283
  %v336 = vpack.c.b16 %v288, %v284
  %v337 = vpack.c.b16 %v289, %v285
  %v338 = vpack.c.b16 %v290, %v290
  %v339 = vpack.c.b16 %v291, %v291
  %v340 = vpack.c.b16 %v292, %v292
  %v341 = vpack.c.b16 %v293, %v293
  %vm386 = vcmask 424960
  %v388 = vsel %vm386, %v136, 0
  %v391 = vsel %vm386, %v138, 0
  %v394 = vsel %vm386, %v140, 0
  %v397 = vsel %vm386, %v142, 0
  %v400 = vsel %vm386, %v144, 0
  %v403 = vsel %vm386, %v146, 0
  %v406 = vsel %vm386, %v148, 0
  %vm408 = vcmask 1041408
  %v410 = vsel %vm408, %v338, 0
  %v413 = vsel %vm408, %v339, 0
  %v416 = vsel %vm408, %v340, 0
  %v419 = vsel %vm408, %v341, 0
  %421 = vmatpush.bf16.msra.mxu0 %v322
  %422 = vmatpush.bf16.msra.mxu0 %v318
  %423 = vmatpush.bf16.msra.mxu0 %v314
  %424 = vmatpush.bf16.msra.mxu0 %v310
  %425 = vmatpush.bf16.msra.mxu0 %v306
  %426 = vmatpush.bf16.msra.mxu0 %v302
  %427 = vmatpush.bf16.msra.mxu0 %v298
  %428 = vmatpush.bf16.msra.mxu0 %v294
  %429 = vmatmul.bf16.gmra.mxu0 %v135
  %v430 = vpop.f32.mrf.mxu0
  %v431 = vadd.f32 0.0, %v430
  %v432 = vpop.f32.mrf.mxu0
  %v433 = vadd.f32 0.0, %v432
  %434 = vmatmul.bf16.gmra.mxu0 %v137
  %v435 = vpop.f32.mrf.mxu0
  %v436 = vadd.f32 0.0, %v435
  %v437 = vpop.f32.mrf.mxu0
  %v438 = vadd.f32 0.0, %v437
  %439 = vmatmul.bf16.gmra.mxu0 %v139
  %v440 = vpop.f32.mrf.mxu0
  %v441 = vadd.f32 0.0, %v440
  %v442 = vpop.f32.mrf.mxu0
  %v443 = vadd.f32 0.0, %v442
  %444 = vmatmul.bf16.gmra.mxu0 %v141
  %v445 = vpop.f32.mrf.mxu0
  %v446 = vadd.f32 0.0, %v445
  %v447 = vpop.f32.mrf.mxu0
  %v448 = vadd.f32 0.0, %v447
  %449 = vmatmul.bf16.gmra.mxu0 %v143
  %v450 = vpop.f32.mrf.mxu0
  %v451 = vadd.f32 0.0, %v450
  %v452 = vpop.f32.mrf.mxu0
  %v453 = vadd.f32 0.0, %v452
  %454 = vmatmul.bf16.gmra.mxu0 %v145
  %v455 = vpop.f32.mrf.mxu0
  %v456 = vadd.f32 0.0, %v455
  %v457 = vpop.f32.mrf.mxu0
  %v458 = vadd.f32 0.0, %v457
  %459 = vmatmul.bf16.gmra.mxu0 %v147
  %v460 = vpop.f32.mrf.mxu0
  %v461 = vadd.f32 0.0, %v460
  %v462 = vpop.f32.mrf.mxu0
  %v463 = vadd.f32 0.0, %v462
  %464 = vdwg.mxu0
  %465 = vmatpush.bf16.msra.mxu0 0
  %466 = vmatpush.bf16.msra.mxu0 0
  %467 = vmatpush.bf16.msra.mxu0 0
  %468 = vmatpush.bf16.msra.mxu0 0
  %469 = vmatpush.bf16.msra.mxu0 %v410
  %470 = vmatpush.bf16.msra.mxu0 %v334
  %471 = vmatpush.bf16.msra.mxu0 %v330
  %472 = vmatpush.bf16.msra.mxu0 %v326
  %473 = vmatmul.bf16.gmra.mxu0 %v388
  %v474 = vpop.f32.mrf.mxu0
  %v475 = vadd.f32 %v431, %v474
  %v476 = vpop.f32.mrf.mxu0
  %v477 = vadd.f32 %v433, %v476
  %478 = vmatmul.bf16.gmra.mxu0 %v391
  %v479 = vpop.f32.mrf.mxu0
  %v480 = vadd.f32 %v436, %v479
  %v481 = vpop.f32.mrf.mxu0
  %v482 = vadd.f32 %v438, %v481
  %483 = vmatmul.bf16.gmra.mxu0 %v394
  %v484 = vpop.f32.mrf.mxu0
  %v485 = vadd.f32 %v441, %v484
  %v486 = vpop.f32.mrf.mxu0
  %v487 = vadd.f32 %v443, %v486
  %488 = vmatmul.bf16.gmra.mxu0 %v397
  %v489 = vpop.f32.mrf.mxu0
  %v490 = vadd.f32 %v446, %v489
  %v491 = vpop.f32.mrf.mxu0
  %v492 = vadd.f32 %v448, %v491
  %493 = vmatmul.bf16.gmra.mxu0 %v400
  %v494 = vpop.f32.mrf.mxu0
  %v495 = vadd.f32 %v451, %v494
  %v496 = vpop.f32.mrf.mxu0
  %v497 = vadd.f32 %v453, %v496
  %498 = vmatmul.bf16.gmra.mxu0 %v403
  %v499 = vpop.f32.mrf.mxu0
  %v500 = vadd.f32 %v456, %v499
  %v501 = vpop.f32.mrf.mxu0
  %v502 = vadd.f32 %v458, %v501
  %503 = vmatmul.bf16.gmra.mxu0 %v406
  %v504 = vpop.f32.mrf.mxu0
  %v505 = vadd.f32 %v461, %v504
  %v506 = vpop.f32.mrf.mxu0
  %v507 = vadd.f32 %v463, %v506
  %508 = vdwg.mxu0
  %509 = vmatpush.bf16.msra.mxu0 %v323
  %510 = vmatpush.bf16.msra.mxu0 %v319
  %511 = vmatpush.bf16.msra.mxu0 %v315
  %512 = vmatpush.bf16.msra.mxu0 %v311
  %513 = vmatpush.bf16.msra.mxu0 %v307
  %514 = vmatpush.bf16.msra.mxu0 %v303
  %515 = vmatpush.bf16.msra.mxu0 %v299
  %516 = vmatpush.bf16.msra.mxu0 %v295
  %517 = vmatmul.bf16.gmra.mxu0 %v135
  %v518 = vpop.f32.mrf.mxu0
  %v519 = vadd.f32 0.0, %v518
  %v520 = vpop.f32.mrf.mxu0
  %v521 = vadd.f32 0.0, %v520
  %522 = vmatmul.bf16.gmra.mxu0 %v137
  %v523 = vpop.f32.mrf.mxu0
  %v524 = vadd.f32 0.0, %v523
  %v525 = vpop.f32.mrf.mxu0
  %v526 = vadd.f32 0.0, %v525
  %527 = vmatmul.bf16.gmra.mxu0 %v139
  %v528 = vpop.f32.mrf.mxu0
  %v529 = vadd.f32 0.0, %v528
  %v530 = vpop.f32.mrf.mxu0
  %v531 = vadd.f32 0.0, %v530
  %532 = vmatmul.bf16.gmra.mxu0 %v141
  %v533 = vpop.f32.mrf.mxu0
  %v534 = vadd.f32 0.0, %v533
  %v535 = vpop.f32.mrf.mxu0
  %v536 = vadd.f32 0.0, %v535
  %537 = vmatmul.bf16.gmra.mxu0 %v143
  %v538 = vpop.f32.mrf.mxu0
  %v539 = vadd.f32 0.0, %v538
  %v540 = vpop.f32.mrf.mxu0
  %v541 = vadd.f32 0.0, %v540
  %542 = vmatmul.bf16.gmra.mxu0 %v145
  %v543 = vpop.f32.mrf.mxu0
  %v544 = vadd.f32 0.0, %v543
  %v545 = vpop.f32.mrf.mxu0
  %v546 = vadd.f32 0.0, %v545
  %547 = vmatmul.bf16.gmra.mxu0 %v147
  %v548 = vpop.f32.mrf.mxu0
  %v549 = vadd.f32 0.0, %v548
  %v550 = vpop.f32.mrf.mxu0
  %v551 = vadd.f32 0.0, %v550
  %552 = vdwg.mxu0
  %553 = vmatpush.bf16.msra.mxu0 0
  %554 = vmatpush.bf16.msra.mxu0 0
  %555 = vmatpush.bf16.msra.mxu0 0
  %556 = vmatpush.bf16.msra.mxu0 0
  %557 = vmatpush.bf16.msra.mxu0 %v413
  %558 = vmatpush.bf16.msra.mxu0 %v335
  %559 = vmatpush.bf16.msra.mxu0 %v331
  %560 = vmatpush.bf16.msra.mxu0 %v327
  %561 = vmatmul.bf16.gmra.mxu0 %v388
  %v562 = vpop.f32.mrf.mxu0
  %v563 = vadd.f32 %v519, %v562
  %v564 = vpop.f32.mrf.mxu0
  %v565 = vadd.f32 %v521, %v564
  %566 = vmatmul.bf16.gmra.mxu0 %v391
  %v567 = vpop.f32.mrf.mxu0
  %v568 = vadd.f32 %v524, %v567
  %v569 = vpop.f32.mrf.mxu0
  %v570 = vadd.f32 %v526, %v569
  %571 = vmatmul.bf16.gmra.mxu0 %v394
  %v572 = vpop.f32.mrf.mxu0
  %v573 = vadd.f32 %v529, %v572
  %v574 = vpop.f32.mrf.mxu0
  %v575 = vadd.f32 %v531, %v574
  %576 = vmatmul.bf16.gmra.mxu0 %v397
  %v577 = vpop.f32.mrf.mxu0
  %v578 = vadd.f32 %v534, %v577
  %v579 = vpop.f32.mrf.mxu0
  %v580 = vadd.f32 %v536, %v579
  %581 = vmatmul.bf16.gmra.mxu0 %v400
  %v582 = vpop.f32.mrf.mxu0
  %v583 = vadd.f32 %v539, %v582
  %v584 = vpop.f32.mrf.mxu0
  %v585 = vadd.f32 %v541, %v584
  %586 = vmatmul.bf16.gmra.mxu0 %v403
  %v587 = vpop.f32.mrf.mxu0
  %v588 = vadd.f32 %v544, %v587
  %v589 = vpop.f32.mrf.mxu0
  %v590 = vadd.f32 %v546, %v589
  %591 = vmatmul.bf16.gmra.mxu0 %v406
  %v592 = vpop.f32.mrf.mxu0
  %v593 = vadd.f32 %v549, %v592
  %v594 = vpop.f32.mrf.mxu0
  %v595 = vadd.f32 %v551, %v594
  %596 = vdwg.mxu0
  %597 = vmatpush.bf16.msra.mxu0 %v324
  %598 = vmatpush.bf16.msra.mxu0 %v320
  %599 = vmatpush.bf16.msra.mxu0 %v316
  %600 = vmatpush.bf16.msra.mxu0 %v312
  %601 = vmatpush.bf16.msra.mxu0 %v308
  %602 = vmatpush.bf16.msra.mxu0 %v304
  %603 = vmatpush.bf16.msra.mxu0 %v300
  %604 = vmatpush.bf16.msra.mxu0 %v296
  %605 = vmatmul.bf16.gmra.mxu0 %v135
  %v606 = vpop.f32.mrf.mxu0
  %v607 = vadd.f32 0.0, %v606
  %v608 = vpop.f32.mrf.mxu0
  %v609 = vadd.f32 0.0, %v608
  %610 = vmatmul.bf16.gmra.mxu0 %v137
  %v611 = vpop.f32.mrf.mxu0
  %v612 = vadd.f32 0.0, %v611
  %v613 = vpop.f32.mrf.mxu0
  %v614 = vadd.f32 0.0, %v613
  %615 = vmatmul.bf16.gmra.mxu0 %v139
  %v616 = vpop.f32.mrf.mxu0
  %v617 = vadd.f32 0.0, %v616
  %v618 = vpop.f32.mrf.mxu0
  %v619 = vadd.f32 0.0, %v618
  %620 = vmatmul.bf16.gmra.mxu0 %v141
  %v621 = vpop.f32.mrf.mxu0
  %v622 = vadd.f32 0.0, %v621
  %v623 = vpop.f32.mrf.mxu0
  %v624 = vadd.f32 0.0, %v623
  %625 = vmatmul.bf16.gmra.mxu0 %v143
  %v626 = vpop.f32.mrf.mxu0
  %v627 = vadd.f32 0.0, %v626
  %v628 = vpop.f32.mrf.mxu0
  %v629 = vadd.f32 0.0, %v628
  %630 = vmatmul.bf16.gmra.mxu0 %v145
  %v631 = vpop.f32.mrf.mxu0
  %v632 = vadd.f32 0.0, %v631
  %v633 = vpop.f32.mrf.mxu0
  %v634 = vadd.f32 0.0, %v633
  %635 = vmatmul.bf16.gmra.mxu0 %v147
  %v636 = vpop.f32.mrf.mxu0
  %v637 = vadd.f32 0.0, %v636
  %v638 = vpop.f32.mrf.mxu0
  %v639 = vadd.f32 0.0, %v638
  %640 = vdwg.mxu0
  %641 = vmatpush.bf16.msra.mxu0 0
  %642 = vmatpush.bf16.msra.mxu0 0
  %643 = vmatpush.bf16.msra.mxu0 0
  %644 = vmatpush.bf16.msra.mxu0 0
  %645 = vmatpush.bf16.msra.mxu0 %v416
  %646 = vmatpush.bf16.msra.mxu0 %v336
  %647 = vmatpush.bf16.msra.mxu0 %v332
  %648 = vmatpush.bf16.msra.mxu0 %v328
  %649 = vmatmul.bf16.gmra.mxu0 %v388
  %v650 = vpop.f32.mrf.mxu0
  %v651 = vadd.f32 %v607, %v650
  %v652 = vpop.f32.mrf.mxu0
  %v653 = vadd.f32 %v609, %v652
  %654 = vmatmul.bf16.gmra.mxu0 %v391
  %v655 = vpop.f32.mrf.mxu0
  %v656 = vadd.f32 %v612, %v655
  %v657 = vpop.f32.mrf.mxu0
  %v658 = vadd.f32 %v614, %v657
  %659 = vmatmul.bf16.gmra.mxu0 %v394
  %v660 = vpop.f32.mrf.mxu0
  %v661 = vadd.f32 %v617, %v660
  %v662 = vpop.f32.mrf.mxu0
  %v663 = vadd.f32 %v619, %v662
  %664 = vmatmul.bf16.gmra.mxu0 %v397
  %v665 = vpop.f32.mrf.mxu0
  %v666 = vadd.f32 %v622, %v665
  %v667 = vpop.f32.mrf.mxu0
  %v668 = vadd.f32 %v624, %v667
  %669 = vmatmul.bf16.gmra.mxu0 %v400
  %v670 = vpop.f32.mrf.mxu0
  %v671 = vadd.f32 %v627, %v670
  %v672 = vpop.f32.mrf.mxu0
  %v673 = vadd.f32 %v629, %v672
  %674 = vmatmul.bf16.gmra.mxu0 %v403
  %v675 = vpop.f32.mrf.mxu0
  %v676 = vadd.f32 %v632, %v675
  %v677 = vpop.f32.mrf.mxu0
  %v678 = vadd.f32 %v634, %v677
  %679 = vmatmul.bf16.gmra.mxu0 %v406
  %v680 = vpop.f32.mrf.mxu0
  %v681 = vadd.f32 %v637, %v680
  %v682 = vpop.f32.mrf.mxu0
  %v683 = vadd.f32 %v639, %v682
  %684 = vdwg.mxu0
  %685 = vmatpush.bf16.msra.mxu0 %v325
  %686 = vmatpush.bf16.msra.mxu0 %v321
  %687 = vmatpush.bf16.msra.mxu0 %v317
  %688 = vmatpush.bf16.msra.mxu0 %v313
  %689 = vmatpush.bf16.msra.mxu0 %v309
  %690 = vmatpush.bf16.msra.mxu0 %v305
  %691 = vmatpush.bf16.msra.mxu0 %v301
  %692 = vmatpush.bf16.msra.mxu0 %v297
  %693 = vmatmul.bf16.gmra.mxu0 %v135
  %v694 = vpop.f32.mrf.mxu0
  %v695 = vadd.f32 0.0, %v694
  %v696 = vpop.f32.mrf.mxu0
  %v697 = vadd.f32 0.0, %v696
  %698 = vmatmul.bf16.gmra.mxu0 %v137
  %v699 = vpop.f32.mrf.mxu0
  %v700 = vadd.f32 0.0, %v699
  %v701 = vpop.f32.mrf.mxu0
  %v702 = vadd.f32 0.0, %v701
  %703 = vmatmul.bf16.gmra.mxu0 %v139
  %v704 = vpop.f32.mrf.mxu0
  %v705 = vadd.f32 0.0, %v704
  %v706 = vpop.f32.mrf.mxu0
  %v707 = vadd.f32 0.0, %v706
  %708 = vmatmul.bf16.gmra.mxu0 %v141
  %v709 = vpop.f32.mrf.mxu0
  %v710 = vadd.f32 0.0, %v709
  %v711 = vpop.f32.mrf.mxu0
  %v712 = vadd.f32 0.0, %v711
  %713 = vmatmul.bf16.gmra.mxu0 %v143
  %v714 = vpop.f32.mrf.mxu0
  %v715 = vadd.f32 0.0, %v714
  %v716 = vpop.f32.mrf.mxu0
  %v717 = vadd.f32 0.0, %v716
  %718 = vmatmul.bf16.gmra.mxu0 %v145
  %v719 = vpop.f32.mrf.mxu0
  %v720 = vadd.f32 0.0, %v719
  %v721 = vpop.f32.mrf.mxu0
  %v722 = vadd.f32 0.0, %v721
  %723 = vmatmul.bf16.gmra.mxu0 %v147
  %v724 = vpop.f32.mrf.mxu0
  %v725 = vadd.f32 0.0, %v724
  %v726 = vpop.f32.mrf.mxu0
  %v727 = vadd.f32 0.0, %v726
  %728 = vdwg.mxu0
  %729 = vmatpush.bf16.msra.mxu0 0
  %730 = vmatpush.bf16.msra.mxu0 0
  %731 = vmatpush.bf16.msra.mxu0 0
  %732 = vmatpush.bf16.msra.mxu0 0
  %733 = vmatpush.bf16.msra.mxu0 %v419
  %734 = vmatpush.bf16.msra.mxu0 %v337
  %735 = vmatpush.bf16.msra.mxu0 %v333
  %736 = vmatpush.bf16.msra.mxu0 %v329
  %737 = vmatmul.bf16.gmra.mxu0 %v388
  %v738 = vpop.f32.mrf.mxu0
  %v739 = vadd.f32 %v695, %v738
  %v740 = vpop.f32.mrf.mxu0
  %v741 = vadd.f32 %v697, %v740
  %742 = vmatmul.bf16.gmra.mxu0 %v391
  %v743 = vpop.f32.mrf.mxu0
  %v744 = vadd.f32 %v700, %v743
  %v745 = vpop.f32.mrf.mxu0
  %v746 = vadd.f32 %v702, %v745
  %747 = vmatmul.bf16.gmra.mxu0 %v394
  %v748 = vpop.f32.mrf.mxu0
  %v749 = vadd.f32 %v705, %v748
  %v750 = vpop.f32.mrf.mxu0
  %v751 = vadd.f32 %v707, %v750
  %752 = vmatmul.bf16.gmra.mxu0 %v397
  %v753 = vpop.f32.mrf.mxu0
  %v754 = vadd.f32 %v710, %v753
  %v755 = vpop.f32.mrf.mxu0
  %v756 = vadd.f32 %v712, %v755
  %757 = vmatmul.bf16.gmra.mxu0 %v400
  %v758 = vpop.f32.mrf.mxu0
  %v759 = vadd.f32 %v715, %v758
  %v760 = vpop.f32.mrf.mxu0
  %v761 = vadd.f32 %v717, %v760
  %762 = vmatmul.bf16.gmra.mxu0 %v403
  %v763 = vpop.f32.mrf.mxu0
  %v764 = vadd.f32 %v720, %v763
  %v765 = vpop.f32.mrf.mxu0
  %v766 = vadd.f32 %v722, %v765
  %767 = vmatmul.bf16.gmra.mxu0 %v406
  %v768 = vpop.f32.mrf.mxu0
  %v769 = vadd.f32 %v725, %v768
  %v770 = vpop.f32.mrf.mxu0
  %v771 = vadd.f32 %v727, %v770
  %772 = vdwg.mxu0
  %s773 = scalar_lea.vmem %s1, 368
  %v774 = vld [vmem:[%s773] sm:$0xff]
  %v775 = vld [vmem:[%s773 + $0x8] sm:$0xff]
  %v776 = vld [vmem:[%s773 + $0x10] sm:$0xff]
  %v777 = vld [vmem:[%s773 + $0x18] sm:$0xff]
  %v778 = vld [vmem:[%s773 + $0x20] sm:$0xff]
  %v779 = vld [vmem:[%s773 + $0x28] sm:$0xff]
  %v780 = vld [vmem:[%s773 + $0x30] sm:$0xff]
  %v781 = vld [vmem:[%s773 + $0x38] sm:$0xff]
  %v782 = vld [vmem:[%s773 + $0x40] sm:$0xff]
  %v783 = vld [vmem:[%s773 + $0x48] sm:$0xff]
  %v784 = vld [vmem:[%s773 + $0x50] sm:$0xff]
  %v785 = vld [vmem:[%s773 + $0x58] sm:$0xff]
  %v786 = vld [vmem:[%s773 + $0x60] sm:$0xff]
  %v787 = vld [vmem:[%s773 + $0x68] sm:$0xff]
  %v788 = vld [vmem:[%s773 + $0x70] sm:$0xff]
  %v789 = vld [vmem:[%s773 + $0x78] sm:$0xff]
  %v790 = vld [vmem:[%s773 + $0x80] sm:$0xff]
  %v791 = vld [vmem:[%s773 + $0x88] sm:$0xff]
  %v792 = vld [vmem:[%s773 + $0x90] sm:$0xff]
  %v793 = vld [vmem:[%s773 + $0x98] sm:$0xff]
  %v794 = vld [vmem:[%s773 + $0xa0] sm:$0xff]
  %v795 = vld [vmem:[%s773 + $0xa8] sm:$0xff]
  %v796 = vld [vmem:[%s773 + $0xb0] sm:$0xff]
  %v797 = vld [vmem:[%s773 + $0xb8] sm:$0xff]
  %v798 = vld [vmem:[%s773 + $0xc0] sm:$0xff]
  %v799 = vld [vmem:[%s773 + $0xc8] sm:$0xff]
  %v800 = vld [vmem:[%s773 + $0xd0] sm:$0xff]
  %v801 = vld [vmem:[%s773 + $0xd8] sm:$0xff]
  %v802 = vld [vmem:[%s773 + $0xe0] sm:$0xff]
  %v803 = vld [vmem:[%s773 + $0xe8] sm:$0xff]
  %v804 = vld [vmem:[%s773 + $0xf0] sm:$0xff]
  %v805 = vld [vmem:[%s773 + $0xf8] sm:$0xff]
  %v806 = vld [vmem:[%s773 + $0x100] sm:$0xff]
  %v807 = vld [vmem:[%s773 + $0x108] sm:$0xff]
  %v808 = vld [vmem:[%s773 + $0x110] sm:$0xff]
  %v809 = vld [vmem:[%s773 + $0x118] sm:$0xff]
  %v810 = vld [vmem:[%s773 + $0x120] sm:$0xff]
  %v811 = vld [vmem:[%s773 + $0x128] sm:$0xff]
  %v812 = vld [vmem:[%s773 + $0x130] sm:$0xff]
  %v813 = vld [vmem:[%s773 + $0x138] sm:$0xff]
  %v814 = vld [vmem:[%s773 + $0x140] sm:$0xff]
  %v815 = vld [vmem:[%s773 + $0x148] sm:$0xff]
  %v816 = vld [vmem:[%s773 + $0x150] sm:$0xff]
  %v817 = vld [vmem:[%s773 + $0x158] sm:$0xff]
  %v818 = vld [vmem:[%s773 + $0x160] sm:$0x33]
  %v819 = vld [vmem:[%s773 + $0x168] sm:$0x33]
  %v866 = vunpack.c.l.b16 %v774
  %v867 = vunpack.c.h.b16 %v774
  %v868 = vunpack.c.l.b16 %v775
  %v869 = vunpack.c.h.b16 %v775
  %v870 = vunpack.c.l.b16 %v776
  %v871 = vunpack.c.h.b16 %v776
  %v872 = vunpack.c.l.b16 %v777
  %v873 = vunpack.c.h.b16 %v777
  %v874 = vunpack.c.l.b16 %v778
  %v875 = vunpack.c.h.b16 %v778
  %v876 = vunpack.c.l.b16 %v779
  %v877 = vunpack.c.h.b16 %v779
  %v878 = vunpack.c.l.b16 %v780
  %v879 = vunpack.c.h.b16 %v780
  %v880 = vunpack.c.l.b16 %v781
  %v881 = vunpack.c.h.b16 %v781
  %v882 = vunpack.c.l.b16 %v782
  %v883 = vunpack.c.h.b16 %v782
  %v884 = vunpack.c.l.b16 %v783
  %v885 = vunpack.c.h.b16 %v783
  %v886 = vunpack.c.l.b16 %v784
  %v887 = vunpack.c.h.b16 %v784
  %v888 = vunpack.c.l.b16 %v785
  %v889 = vunpack.c.h.b16 %v785
  %v890 = vunpack.c.l.b16 %v786
  %v891 = vunpack.c.h.b16 %v786
  %v892 = vunpack.c.l.b16 %v787
  %v893 = vunpack.c.h.b16 %v787
  %v894 = vunpack.c.l.b16 %v788
  %v895 = vunpack.c.h.b16 %v788
  %v896 = vunpack.c.l.b16 %v789
  %v897 = vunpack.c.h.b16 %v789
  %v898 = vunpack.c.l.b16 %v790
  %v899 = vunpack.c.h.b16 %v790
  %v900 = vunpack.c.l.b16 %v791
  %v901 = vunpack.c.h.b16 %v791
  %v902 = vunpack.c.l.b16 %v792
  %v903 = vunpack.c.h.b16 %v792
  %v904 = vunpack.c.l.b16 %v793
  %v905 = vunpack.c.h.b16 %v793
  %v906 = vunpack.c.l.b16 %v794
  %v907 = vunpack.c.h.b16 %v794
  %v908 = vunpack.c.l.b16 %v795
  %v909 = vunpack.c.h.b16 %v795
  %v910 = vunpack.c.l.b16 %v796
  %v911 = vunpack.c.h.b16 %v796
  %v912 = vunpack.c.l.b16 %v797
  %v913 = vunpack.c.h.b16 %v797
  %v914 = vunpack.c.l.b16 %v798
  %v915 = vunpack.c.h.b16 %v798
  %v916 = vunpack.c.l.b16 %v799
  %v917 = vunpack.c.h.b16 %v799
  %v918 = vunpack.c.l.b16 %v800
  %v919 = vunpack.c.h.b16 %v800
  %v920 = vunpack.c.l.b16 %v801
  %v921 = vunpack.c.h.b16 %v801
  %v922 = vunpack.c.l.b16 %v802
  %v923 = vunpack.c.h.b16 %v802
  %v924 = vunpack.c.l.b16 %v803
  %v925 = vunpack.c.h.b16 %v803
  %v926 = vunpack.c.l.b16 %v804
  %v927 = vunpack.c.h.b16 %v804
  %v928 = vunpack.c.l.b16 %v805
  %v929 = vunpack.c.h.b16 %v805
  %v930 = vunpack.c.l.b16 %v806
  %v931 = vunpack.c.h.b16 %v806
  %v932 = vunpack.c.l.b16 %v807
  %v933 = vunpack.c.h.b16 %v807
  %v934 = vunpack.c.l.b16 %v808
  %v935 = vunpack.c.h.b16 %v808
  %v936 = vunpack.c.l.b16 %v809
  %v937 = vunpack.c.h.b16 %v809
  %v938 = vunpack.c.l.b16 %v810
  %v939 = vunpack.c.h.b16 %v810
  %v940 = vunpack.c.l.b16 %v811
  %v941 = vunpack.c.h.b16 %v811
  %v942 = vunpack.c.l.b16 %v812
  %v943 = vunpack.c.h.b16 %v812
  %v944 = vunpack.c.l.b16 %v813
  %v945 = vunpack.c.h.b16 %v813
  %v946 = vunpack.c.l.b16 %v814
  %v947 = vunpack.c.h.b16 %v814
  %v948 = vunpack.c.l.b16 %v815
  %v949 = vunpack.c.h.b16 %v815
  %v950 = vunpack.c.l.b16 %v816
  %v951 = vunpack.c.h.b16 %v816
  %v952 = vunpack.c.l.b16 %v817
  %v953 = vunpack.c.h.b16 %v817
  %v954 = vunpack.c.l.b16 %v818
  %v955 = vunpack.c.h.b16 %v818
  %v956 = vunpack.c.l.b16 %v819
  %v957 = vunpack.c.h.b16 %v819
  %v958 = vpack.c.b16 %v870, %v866
  %v959 = vpack.c.b16 %v871, %v867
  %v960 = vpack.c.b16 %v872, %v868
  %v961 = vpack.c.b16 %v873, %v869
  %v962 = vpack.c.b16 %v878, %v874
  %v963 = vpack.c.b16 %v879, %v875
  %v964 = vpack.c.b16 %v880, %v876
  %v965 = vpack.c.b16 %v881, %v877
  %v966 = vpack.c.b16 %v886, %v882
  %v967 = vpack.c.b16 %v887, %v883
  %v968 = vpack.c.b16 %v888, %v884
  %v969 = vpack.c.b16 %v889, %v885
  %v970 = vpack.c.b16 %v894, %v890
  %v971 = vpack.c.b16 %v895, %v891
  %v972 = vpack.c.b16 %v896, %v892
  %v973 = vpack.c.b16 %v897, %v893
  %v974 = vpack.c.b16 %v902, %v898
  %v975 = vpack.c.b16 %v903, %v899
  %v976 = vpack.c.b16 %v904, %v900
  %v977 = vpack.c.b16 %v905, %v901
  %v978 = vpack.c.b16 %v910, %v906
  %v979 = vpack.c.b16 %v911, %v907
  %v980 = vpack.c.b16 %v912, %v908
  %v981 = vpack.c.b16 %v913, %v909
  %v982 = vpack.c.b16 %v918, %v914
  %v983 = vpack.c.b16 %v919, %v915
  %v984 = vpack.c.b16 %v920, %v916
  %v985 = vpack.c.b16 %v921, %v917
  %v986 = vpack.c.b16 %v926, %v922
  %v987 = vpack.c.b16 %v927, %v923
  %v988 = vpack.c.b16 %v928, %v924
  %v989 = vpack.c.b16 %v929, %v925
  %v990 = vpack.c.b16 %v934, %v930
  %v991 = vpack.c.b16 %v935, %v931
  %v992 = vpack.c.b16 %v936, %v932
  %v993 = vpack.c.b16 %v937, %v933
  %v994 = vpack.c.b16 %v942, %v938
  %v995 = vpack.c.b16 %v943, %v939
  %v996 = vpack.c.b16 %v944, %v940
  %v997 = vpack.c.b16 %v945, %v941
  %v998 = vpack.c.b16 %v950, %v946
  %v999 = vpack.c.b16 %v951, %v947
  %v1000 = vpack.c.b16 %v952, %v948
  %v1001 = vpack.c.b16 %v953, %v949
  %v1002 = vpack.c.b16 %v954, %v954
  %v1003 = vpack.c.b16 %v955, %v955
  %v1004 = vpack.c.b16 %v956, %v956
  %v1005 = vpack.c.b16 %v957, %v957
  %v1051 = vsel %vm408, %v1002, 0
  %v1054 = vsel %vm408, %v1003, 0
  %v1057 = vsel %vm408, %v1004, 0
  %v1060 = vsel %vm408, %v1005, 0
  %1062 = vmatpush.bf16.msra.mxu0 %v986
  %1063 = vmatpush.bf16.msra.mxu0 %v982
  %1064 = vmatpush.bf16.msra.mxu0 %v978
  %1065 = vmatpush.bf16.msra.mxu0 %v974
  %1066 = vmatpush.bf16.msra.mxu0 %v970
  %1067 = vmatpush.bf16.msra.mxu0 %v966
  %1068 = vmatpush.bf16.msra.mxu0 %v962
  %1069 = vmatpush.bf16.msra.mxu0 %v958
  %1070 = vmatmul.bf16.gmra.mxu0 %v135
  %v1071 = vpop.f32.mrf.mxu0
  %v1072 = vadd.f32 0.0, %v1071
  %v1073 = vpop.f32.mrf.mxu0
  %v1074 = vadd.f32 0.0, %v1073
  %1075 = vmatmul.bf16.gmra.mxu0 %v137
  %v1076 = vpop.f32.mrf.mxu0
  %v1077 = vadd.f32 0.0, %v1076
  %v1078 = vpop.f32.mrf.mxu0
  %v1079 = vadd.f32 0.0, %v1078
  %1080 = vmatmul.bf16.gmra.mxu0 %v139
  %v1081 = vpop.f32.mrf.mxu0
  %v1082 = vadd.f32 0.0, %v1081
  %v1083 = vpop.f32.mrf.mxu0
  %v1084 = vadd.f32 0.0, %v1083
  %1085 = vmatmul.bf16.gmra.mxu0 %v141
  %v1086 = vpop.f32.mrf.mxu0
  %v1087 = vadd.f32 0.0, %v1086
  %v1088 = vpop.f32.mrf.mxu0
  %v1089 = vadd.f32 0.0, %v1088
  %1090 = vmatmul.bf16.gmra.mxu0 %v143
  %v1091 = vpop.f32.mrf.mxu0
  %v1092 = vadd.f32 0.0, %v1091
  %v1093 = vpop.f32.mrf.mxu0
  %v1094 = vadd.f32 0.0, %v1093
  %1095 = vmatmul.bf16.gmra.mxu0 %v145
  %v1096 = vpop.f32.mrf.mxu0
  %v1097 = vadd.f32 0.0, %v1096
  %v1098 = vpop.f32.mrf.mxu0
  %v1099 = vadd.f32 0.0, %v1098
  %1100 = vmatmul.bf16.gmra.mxu0 %v147
  %v1101 = vpop.f32.mrf.mxu0
  %v1102 = vadd.f32 0.0, %v1101
  %v1103 = vpop.f32.mrf.mxu0
  %v1104 = vadd.f32 0.0, %v1103
  %1105 = vdwg.mxu0
  %1106 = vmatpush.bf16.msra.mxu0 0
  %1107 = vmatpush.bf16.msra.mxu0 0
  %1108 = vmatpush.bf16.msra.mxu0 0
  %1109 = vmatpush.bf16.msra.mxu0 0
  %1110 = vmatpush.bf16.msra.mxu0 %v1051
  %1111 = vmatpush.bf16.msra.mxu0 %v998
  %1112 = vmatpush.bf16.msra.mxu0 %v994
  %1113 = vmatpush.bf16.msra.mxu0 %v990
  %1114 = vmatmul.bf16.gmra.mxu0 %v388
  %v1115 = vpop.f32.mrf.mxu0
  %v1116 = vadd.f32 %v1072, %v1115
  %v1117 = vpop.f32.mrf.mxu0
  %v1118 = vadd.f32 %v1074, %v1117
  %1119 = vmatmul.bf16.gmra.mxu0 %v391
  %v1120 = vpop.f32.mrf.mxu0
  %v1121 = vadd.f32 %v1077, %v1120
  %v1122 = vpop.f32.mrf.mxu0
  %v1123 = vadd.f32 %v1079, %v1122
  %1124 = vmatmul.bf16.gmra.mxu0 %v394
  %v1125 = vpop.f32.mrf.mxu0
  %v1126 = vadd.f32 %v1082, %v1125
  %v1127 = vpop.f32.mrf.mxu0
  %v1128 = vadd.f32 %v1084, %v1127
  %1129 = vmatmul.bf16.gmra.mxu0 %v397
  %v1130 = vpop.f32.mrf.mxu0
  %v1131 = vadd.f32 %v1087, %v1130
  %v1132 = vpop.f32.mrf.mxu0
  %v1133 = vadd.f32 %v1089, %v1132
  %1134 = vmatmul.bf16.gmra.mxu0 %v400
  %v1135 = vpop.f32.mrf.mxu0
  %v1136 = vadd.f32 %v1092, %v1135
  %v1137 = vpop.f32.mrf.mxu0
  %v1138 = vadd.f32 %v1094, %v1137
  %1139 = vmatmul.bf16.gmra.mxu0 %v403
  %v1140 = vpop.f32.mrf.mxu0
  %v1141 = vadd.f32 %v1097, %v1140
  %v1142 = vpop.f32.mrf.mxu0
  %v1143 = vadd.f32 %v1099, %v1142
  %1144 = vmatmul.bf16.gmra.mxu0 %v406
  %v1145 = vpop.f32.mrf.mxu0
  %v1146 = vadd.f32 %v1102, %v1145
  %v1147 = vpop.f32.mrf.mxu0
  %v1148 = vadd.f32 %v1104, %v1147
  %1149 = vdwg.mxu0
  %1150 = vmatpush.bf16.msra.mxu0 %v987
  %1151 = vmatpush.bf16.msra.mxu0 %v983
  %1152 = vmatpush.bf16.msra.mxu0 %v979
  %1153 = vmatpush.bf16.msra.mxu0 %v975
  %1154 = vmatpush.bf16.msra.mxu0 %v971
  %1155 = vmatpush.bf16.msra.mxu0 %v967
  %1156 = vmatpush.bf16.msra.mxu0 %v963
  %1157 = vmatpush.bf16.msra.mxu0 %v959
  %1158 = vmatmul.bf16.gmra.mxu0 %v135
  %v1159 = vpop.f32.mrf.mxu0
  %v1160 = vadd.f32 0.0, %v1159
  %v1161 = vpop.f32.mrf.mxu0
  %v1162 = vadd.f32 0.0, %v1161
  %1163 = vmatmul.bf16.gmra.mxu0 %v137
  %v1164 = vpop.f32.mrf.mxu0
  %v1165 = vadd.f32 0.0, %v1164
  %v1166 = vpop.f32.mrf.mxu0
  %v1167 = vadd.f32 0.0, %v1166
  %1168 = vmatmul.bf16.gmra.mxu0 %v139
  %v1169 = vpop.f32.mrf.mxu0
  %v1170 = vadd.f32 0.0, %v1169
  %v1171 = vpop.f32.mrf.mxu0
  %v1172 = vadd.f32 0.0, %v1171
  %1173 = vmatmul.bf16.gmra.mxu0 %v141
  %v1174 = vpop.f32.mrf.mxu0
  %v1175 = vadd.f32 0.0, %v1174
  %v1176 = vpop.f32.mrf.mxu0
  %v1177 = vadd.f32 0.0, %v1176
  %1178 = vmatmul.bf16.gmra.mxu0 %v143
  %v1179 = vpop.f32.mrf.mxu0
  %v1180 = vadd.f32 0.0, %v1179
  %v1181 = vpop.f32.mrf.mxu0
  %v1182 = vadd.f32 0.0, %v1181
  %1183 = vmatmul.bf16.gmra.mxu0 %v145
  %v1184 = vpop.f32.mrf.mxu0
  %v1185 = vadd.f32 0.0, %v1184
  %v1186 = vpop.f32.mrf.mxu0
  %v1187 = vadd.f32 0.0, %v1186
  %1188 = vmatmul.bf16.gmra.mxu0 %v147
  %v1189 = vpop.f32.mrf.mxu0
  %v1190 = vadd.f32 0.0, %v1189
  %v1191 = vpop.f32.mrf.mxu0
  %v1192 = vadd.f32 0.0, %v1191
  %1193 = vdwg.mxu0
  %1194 = vmatpush.bf16.msra.mxu0 0
  %1195 = vmatpush.bf16.msra.mxu0 0
  %1196 = vmatpush.bf16.msra.mxu0 0
  %1197 = vmatpush.bf16.msra.mxu0 0
  %1198 = vmatpush.bf16.msra.mxu0 %v1054
  %1199 = vmatpush.bf16.msra.mxu0 %v999
  %1200 = vmatpush.bf16.msra.mxu0 %v995
  %1201 = vmatpush.bf16.msra.mxu0 %v991
  %1202 = vmatmul.bf16.gmra.mxu0 %v388
  %v1203 = vpop.f32.mrf.mxu0
  %v1204 = vadd.f32 %v1160, %v1203
  %v1205 = vpop.f32.mrf.mxu0
  %v1206 = vadd.f32 %v1162, %v1205
  %1207 = vmatmul.bf16.gmra.mxu0 %v391
  %v1208 = vpop.f32.mrf.mxu0
  %v1209 = vadd.f32 %v1165, %v1208
  %v1210 = vpop.f32.mrf.mxu0
  %v1211 = vadd.f32 %v1167, %v1210
  %1212 = vmatmul.bf16.gmra.mxu0 %v394
  %v1213 = vpop.f32.mrf.mxu0
  %v1214 = vadd.f32 %v1170, %v1213
  %v1215 = vpop.f32.mrf.mxu0
  %v1216 = vadd.f32 %v1172, %v1215
  %1217 = vmatmul.bf16.gmra.mxu0 %v397
  %v1218 = vpop.f32.mrf.mxu0
  %v1219 = vadd.f32 %v1175, %v1218
  %v1220 = vpop.f32.mrf.mxu0
  %v1221 = vadd.f32 %v1177, %v1220
  %1222 = vmatmul.bf16.gmra.mxu0 %v400
  %v1223 = vpop.f32.mrf.mxu0
  %v1224 = vadd.f32 %v1180, %v1223
  %v1225 = vpop.f32.mrf.mxu0
  %v1226 = vadd.f32 %v1182, %v1225
  %1227 = vmatmul.bf16.gmra.mxu0 %v403
  %v1228 = vpop.f32.mrf.mxu0
  %v1229 = vadd.f32 %v1185, %v1228
  %v1230 = vpop.f32.mrf.mxu0
  %v1231 = vadd.f32 %v1187, %v1230
  %1232 = vmatmul.bf16.gmra.mxu0 %v406
  %v1233 = vpop.f32.mrf.mxu0
  %v1234 = vadd.f32 %v1190, %v1233
  %v1235 = vpop.f32.mrf.mxu0
  %v1236 = vadd.f32 %v1192, %v1235
  %1237 = vdwg.mxu0
  %1238 = vmatpush.bf16.msra.mxu0 %v988
  %1239 = vmatpush.bf16.msra.mxu0 %v984
  %1240 = vmatpush.bf16.msra.mxu0 %v980
  %1241 = vmatpush.bf16.msra.mxu0 %v976
  %1242 = vmatpush.bf16.msra.mxu0 %v972
  %1243 = vmatpush.bf16.msra.mxu0 %v968
  %1244 = vmatpush.bf16.msra.mxu0 %v964
  %1245 = vmatpush.bf16.msra.mxu0 %v960
  %1246 = vmatmul.bf16.gmra.mxu0 %v135
  %v1247 = vpop.f32.mrf.mxu0
  %v1248 = vadd.f32 0.0, %v1247
  %v1249 = vpop.f32.mrf.mxu0
  %v1250 = vadd.f32 0.0, %v1249
  %1251 = vmatmul.bf16.gmra.mxu0 %v137
  %v1252 = vpop.f32.mrf.mxu0
  %v1253 = vadd.f32 0.0, %v1252
  %v1254 = vpop.f32.mrf.mxu0
  %v1255 = vadd.f32 0.0, %v1254
  %1256 = vmatmul.bf16.gmra.mxu0 %v139
  %v1257 = vpop.f32.mrf.mxu0
  %v1258 = vadd.f32 0.0, %v1257
  %v1259 = vpop.f32.mrf.mxu0
  %v1260 = vadd.f32 0.0, %v1259
  %1261 = vmatmul.bf16.gmra.mxu0 %v141
  %v1262 = vpop.f32.mrf.mxu0
  %v1263 = vadd.f32 0.0, %v1262
  %v1264 = vpop.f32.mrf.mxu0
  %v1265 = vadd.f32 0.0, %v1264
  %1266 = vmatmul.bf16.gmra.mxu0 %v143
  %v1267 = vpop.f32.mrf.mxu0
  %v1268 = vadd.f32 0.0, %v1267
  %v1269 = vpop.f32.mrf.mxu0
  %v1270 = vadd.f32 0.0, %v1269
  %1271 = vmatmul.bf16.gmra.mxu0 %v145
  %v1272 = vpop.f32.mrf.mxu0
  %v1273 = vadd.f32 0.0, %v1272
  %v1274 = vpop.f32.mrf.mxu0
  %v1275 = vadd.f32 0.0, %v1274
  %1276 = vmatmul.bf16.gmra.mxu0 %v147
  %v1277 = vpop.f32.mrf.mxu0
  %v1278 = vadd.f32 0.0, %v1277
  %v1279 = vpop.f32.mrf.mxu0
  %v1280 = vadd.f32 0.0, %v1279
  %1281 = vdwg.mxu0
  %1282 = vmatpush.bf16.msra.mxu0 0
  %1283 = vmatpush.bf16.msra.mxu0 0
  %1284 = vmatpush.bf16.msra.mxu0 0
  %1285 = vmatpush.bf16.msra.mxu0 0
  %1286 = vmatpush.bf16.msra.mxu0 %v1057
  %1287 = vmatpush.bf16.msra.mxu0 %v1000
  %1288 = vmatpush.bf16.msra.mxu0 %v996
  %1289 = vmatpush.bf16.msra.mxu0 %v992
  %1290 = vmatmul.bf16.gmra.mxu0 %v388
  %v1291 = vpop.f32.mrf.mxu0
  %v1292 = vadd.f32 %v1248, %v1291
  %v1293 = vpop.f32.mrf.mxu0
  %v1294 = vadd.f32 %v1250, %v1293
  %1295 = vmatmul.bf16.gmra.mxu0 %v391
  %v1296 = vpop.f32.mrf.mxu0
  %v1297 = vadd.f32 %v1253, %v1296
  %v1298 = vpop.f32.mrf.mxu0
  %v1299 = vadd.f32 %v1255, %v1298
  %1300 = vmatmul.bf16.gmra.mxu0 %v394
  %v1301 = vpop.f32.mrf.mxu0
  %v1302 = vadd.f32 %v1258, %v1301
  %v1303 = vpop.f32.mrf.mxu0
  %v1304 = vadd.f32 %v1260, %v1303
  %1305 = vmatmul.bf16.gmra.mxu0 %v397
  %v1306 = vpop.f32.mrf.mxu0
  %v1307 = vadd.f32 %v1263, %v1306
  %v1308 = vpop.f32.mrf.mxu0
  %v1309 = vadd.f32 %v1265, %v1308
  %1310 = vmatmul.bf16.gmra.mxu0 %v400
  %v1311 = vpop.f32.mrf.mxu0
  %v1312 = vadd.f32 %v1268, %v1311
  %v1313 = vpop.f32.mrf.mxu0
  %v1314 = vadd.f32 %v1270, %v1313
  %1315 = vmatmul.bf16.gmra.mxu0 %v403
  %v1316 = vpop.f32.mrf.mxu0
  %v1317 = vadd.f32 %v1273, %v1316
  %v1318 = vpop.f32.mrf.mxu0
  %v1319 = vadd.f32 %v1275, %v1318
  %1320 = vmatmul.bf16.gmra.mxu0 %v406
  %v1321 = vpop.f32.mrf.mxu0
  %v1322 = vadd.f32 %v1278, %v1321
  %v1323 = vpop.f32.mrf.mxu0
  %v1324 = vadd.f32 %v1280, %v1323
  %1325 = vdwg.mxu0
  %1326 = vmatpush.bf16.msra.mxu0 %v989
  %1327 = vmatpush.bf16.msra.mxu0 %v985
  %1328 = vmatpush.bf16.msra.mxu0 %v981
  %1329 = vmatpush.bf16.msra.mxu0 %v977
  %1330 = vmatpush.bf16.msra.mxu0 %v973
  %1331 = vmatpush.bf16.msra.mxu0 %v969
  %1332 = vmatpush.bf16.msra.mxu0 %v965
  %1333 = vmatpush.bf16.msra.mxu0 %v961
  %1334 = vmatmul.bf16.gmra.mxu0 %v135
  %v1335 = vpop.f32.mrf.mxu0
  %v1336 = vadd.f32 0.0, %v1335
  %v1337 = vpop.f32.mrf.mxu0
  %v1338 = vadd.f32 0.0, %v1337
  %1339 = vmatmul.bf16.gmra.mxu0 %v137
  %v1340 = vpop.f32.mrf.mxu0
  %v1341 = vadd.f32 0.0, %v1340
  %v1342 = vpop.f32.mrf.mxu0
  %v1343 = vadd.f32 0.0, %v1342
  %1344 = vmatmul.bf16.gmra.mxu0 %v139
  %v1345 = vpop.f32.mrf.mxu0
  %v1346 = vadd.f32 0.0, %v1345
  %v1347 = vpop.f32.mrf.mxu0
  %v1348 = vadd.f32 0.0, %v1347
  %1349 = vmatmul.bf16.gmra.mxu0 %v141
  %v1350 = vpop.f32.mrf.mxu0
  %v1351 = vadd.f32 0.0, %v1350
  %v1352 = vpop.f32.mrf.mxu0
  %v1353 = vadd.f32 0.0, %v1352
  %1354 = vmatmul.bf16.gmra.mxu0 %v143
  %v1355 = vpop.f32.mrf.mxu0
  %v1356 = vadd.f32 0.0, %v1355
  %v1357 = vpop.f32.mrf.mxu0
  %v1358 = vadd.f32 0.0, %v1357
  %1359 = vmatmul.bf16.gmra.mxu0 %v145
  %v1360 = vpop.f32.mrf.mxu0
  %v1361 = vadd.f32 0.0, %v1360
  %v1362 = vpop.f32.mrf.mxu0
  %v1363 = vadd.f32 0.0, %v1362
  %1364 = vmatmul.bf16.gmra.mxu0 %v147
  %v1365 = vpop.f32.mrf.mxu0
  %v1366 = vadd.f32 0.0, %v1365
  %v1367 = vpop.f32.mrf.mxu0
  %v1368 = vadd.f32 0.0, %v1367
  %1369 = vdwg.mxu0
  %1370 = vmatpush.bf16.msra.mxu0 0
  %1371 = vmatpush.bf16.msra.mxu0 0
  %1372 = vmatpush.bf16.msra.mxu0 0
  %1373 = vmatpush.bf16.msra.mxu0 0
  %1374 = vmatpush.bf16.msra.mxu0 %v1060
  %1375 = vmatpush.bf16.msra.mxu0 %v1001
  %1376 = vmatpush.bf16.msra.mxu0 %v997
  %1377 = vmatpush.bf16.msra.mxu0 %v993
  %1378 = vmatmul.bf16.gmra.mxu0 %v388
  %v1379 = vpop.f32.mrf.mxu0
  %v1380 = vadd.f32 %v1336, %v1379
  %v1381 = vpop.f32.mrf.mxu0
  %v1382 = vadd.f32 %v1338, %v1381
  %1383 = vmatmul.bf16.gmra.mxu0 %v391
  %v1384 = vpop.f32.mrf.mxu0
  %v1385 = vadd.f32 %v1341, %v1384
  %v1386 = vpop.f32.mrf.mxu0
  %v1387 = vadd.f32 %v1343, %v1386
  %1388 = vmatmul.bf16.gmra.mxu0 %v394
  %v1389 = vpop.f32.mrf.mxu0
  %v1390 = vadd.f32 %v1346, %v1389
  %v1391 = vpop.f32.mrf.mxu0
  %v1392 = vadd.f32 %v1348, %v1391
  %1393 = vmatmul.bf16.gmra.mxu0 %v397
  %v1394 = vpop.f32.mrf.mxu0
  %v1395 = vadd.f32 %v1351, %v1394
  %v1396 = vpop.f32.mrf.mxu0
  %v1397 = vadd.f32 %v1353, %v1396
  %1398 = vmatmul.bf16.gmra.mxu0 %v400
  %v1399 = vpop.f32.mrf.mxu0
  %v1400 = vadd.f32 %v1356, %v1399
  %v1401 = vpop.f32.mrf.mxu0
  %v1402 = vadd.f32 %v1358, %v1401
  %1403 = vmatmul.bf16.gmra.mxu0 %v403
  %v1404 = vpop.f32.mrf.mxu0
  %v1405 = vadd.f32 %v1361, %v1404
  %v1406 = vpop.f32.mrf.mxu0
  %v1407 = vadd.f32 %v1363, %v1406
  %1408 = vmatmul.bf16.gmra.mxu0 %v406
  %v1409 = vpop.f32.mrf.mxu0
  %v1410 = vadd.f32 %v1366, %v1409
  %v1411 = vpop.f32.mrf.mxu0
  %v1412 = vadd.f32 %v1368, %v1411
  %1413 = vdwg.mxu0
  %v1414 = vmax.f32 %v475, %v1116
  %v1415 = vmax.f32 %v563, %v1204
  %v1416 = vmax.f32 %v651, %v1292
  %v1417 = vmax.f32 %v739, %v1380
  %v1418 = vmax.f32 %v477, %v1118
  %v1419 = vmax.f32 %v565, %v1206
  %v1420 = vmax.f32 %v653, %v1294
  %v1421 = vmax.f32 %v741, %v1382
  %v1422 = vmax.f32 %v480, %v1121
  %v1423 = vmax.f32 %v568, %v1209
  %v1424 = vmax.f32 %v656, %v1297
  %v1425 = vmax.f32 %v744, %v1385
  %v1426 = vmax.f32 %v482, %v1123
  %v1427 = vmax.f32 %v570, %v1211
  %v1428 = vmax.f32 %v658, %v1299
  %v1429 = vmax.f32 %v746, %v1387
  %v1430 = vmax.f32 %v485, %v1126
  %v1431 = vmax.f32 %v573, %v1214
  %v1432 = vmax.f32 %v661, %v1302
  %v1433 = vmax.f32 %v749, %v1390
  %v1434 = vmax.f32 %v487, %v1128
  %v1435 = vmax.f32 %v575, %v1216
  %v1436 = vmax.f32 %v663, %v1304
  %v1437 = vmax.f32 %v751, %v1392
  %v1438 = vmax.f32 %v490, %v1131
  %v1439 = vmax.f32 %v578, %v1219
  %v1440 = vmax.f32 %v666, %v1307
  %v1441 = vmax.f32 %v754, %v1395
  %v1442 = vmax.f32 %v492, %v1133
  %v1443 = vmax.f32 %v580, %v1221
  %v1444 = vmax.f32 %v668, %v1309
  %v1445 = vmax.f32 %v756, %v1397
  %v1446 = vmax.f32 %v495, %v1136
  %v1447 = vmax.f32 %v583, %v1224
  %v1448 = vmax.f32 %v671, %v1312
  %v1449 = vmax.f32 %v759, %v1400
  %v1450 = vmax.f32 %v497, %v1138
  %v1451 = vmax.f32 %v585, %v1226
  %v1452 = vmax.f32 %v673, %v1314
  %v1453 = vmax.f32 %v761, %v1402
  %v1454 = vmax.f32 %v500, %v1141
  %v1455 = vmax.f32 %v588, %v1229
  %v1456 = vmax.f32 %v676, %v1317
  %v1457 = vmax.f32 %v764, %v1405
  %v1458 = vmax.f32 %v502, %v1143
  %v1459 = vmax.f32 %v590, %v1231
  %v1460 = vmax.f32 %v678, %v1319
  %v1461 = vmax.f32 %v766, %v1407
  %v1462 = vmax.f32 %v505, %v1146
  %v1463 = vmax.f32 %v593, %v1234
  %v1464 = vmax.f32 %v681, %v1322
  %v1465 = vmax.f32 %v769, %v1410
  %v1466 = vmax.f32 %v507, %v1148
  %v1467 = vmax.f32 %v595, %v1236
  %v1468 = vmax.f32 %v683, %v1324
  %v1469 = vmax.f32 %v771, %v1412
  %s1470 = scalar_lea.vmem %s1, 736
  %v1471 = vld [vmem:[%s1470] sm:$0xff]
  %v1472 = vld [vmem:[%s1470 + $0x8] sm:$0xff]
  %v1473 = vld [vmem:[%s1470 + $0x10] sm:$0xff]
  %v1474 = vld [vmem:[%s1470 + $0x18] sm:$0xff]
  %v1475 = vld [vmem:[%s1470 + $0x20] sm:$0xff]
  %v1476 = vld [vmem:[%s1470 + $0x28] sm:$0xff]
  %v1477 = vld [vmem:[%s1470 + $0x30] sm:$0xff]
  %v1478 = vld [vmem:[%s1470 + $0x38] sm:$0xff]
  %v1479 = vld [vmem:[%s1470 + $0x40] sm:$0xff]
  %v1480 = vld [vmem:[%s1470 + $0x48] sm:$0xff]
  %v1481 = vld [vmem:[%s1470 + $0x50] sm:$0xff]
  %v1482 = vld [vmem:[%s1470 + $0x58] sm:$0xff]
  %v1483 = vld [vmem:[%s1470 + $0x60] sm:$0xff]
  %v1484 = vld [vmem:[%s1470 + $0x68] sm:$0xff]
  %v1485 = vld [vmem:[%s1470 + $0x70] sm:$0xff]
  %v1486 = vld [vmem:[%s1470 + $0x78] sm:$0xff]
  %v1487 = vld [vmem:[%s1470 + $0x80] sm:$0xff]
  %v1488 = vld [vmem:[%s1470 + $0x88] sm:$0xff]
  %v1489 = vld [vmem:[%s1470 + $0x90] sm:$0xff]
  %v1490 = vld [vmem:[%s1470 + $0x98] sm:$0xff]
  %v1491 = vld [vmem:[%s1470 + $0xa0] sm:$0xff]
  %v1492 = vld [vmem:[%s1470 + $0xa8] sm:$0xff]
  %v1493 = vld [vmem:[%s1470 + $0xb0] sm:$0xff]
  %v1494 = vld [vmem:[%s1470 + $0xb8] sm:$0xff]
  %v1495 = vld [vmem:[%s1470 + $0xc0] sm:$0xff]
  %v1496 = vld [vmem:[%s1470 + $0xc8] sm:$0xff]
  %v1497 = vld [vmem:[%s1470 + $0xd0] sm:$0xff]
  %v1498 = vld [vmem:[%s1470 + $0xd8] sm:$0xff]
  %v1499 = vld [vmem:[%s1470 + $0xe0] sm:$0xff]
  %v1500 = vld [vmem:[%s1470 + $0xe8] sm:$0xff]
  %v1501 = vld [vmem:[%s1470 + $0xf0] sm:$0xff]
  %v1502 = vld [vmem:[%s1470 + $0xf8] sm:$0xff]
  %v1503 = vld [vmem:[%s1470 + $0x100] sm:$0xff]
  %v1504 = vld [vmem:[%s1470 + $0x108] sm:$0xff]
  %v1505 = vld [vmem:[%s1470 + $0x110] sm:$0xff]
  %v1506 = vld [vmem:[%s1470 + $0x118] sm:$0xff]
  %v1507 = vld [vmem:[%s1470 + $0x120] sm:$0xff]
  %v1508 = vld [vmem:[%s1470 + $0x128] sm:$0xff]
  %v1509 = vld [vmem:[%s1470 + $0x130] sm:$0xff]
  %v1510 = vld [vmem:[%s1470 + $0x138] sm:$0xff]
  %v1511 = vld [vmem:[%s1470 + $0x140] sm:$0xff]
  %v1512 = vld [vmem:[%s1470 + $0x148] sm:$0xff]
  %v1513 = vld [vmem:[%s1470 + $0x150] sm:$0xff]
  %v1514 = vld [vmem:[%s1470 + $0x158] sm:$0xff]
  %v1515 = vld [vmem:[%s1470 + $0x160] sm:$0x33]
  %v1516 = vld [vmem:[%s1470 + $0x168] sm:$0x33]
  %v1563 = vunpack.c.l.b16 %v1471
  %v1564 = vunpack.c.h.b16 %v1471
  %v1565 = vunpack.c.l.b16 %v1472
  %v1566 = vunpack.c.h.b16 %v1472
  %v1567 = vunpack.c.l.b16 %v1473
  %v1568 = vunpack.c.h.b16 %v1473
  %v1569 = vunpack.c.l.b16 %v1474
  %v1570 = vunpack.c.h.b16 %v1474
  %v1571 = vunpack.c.l.b16 %v1475
  %v1572 = vunpack.c.h.b16 %v1475
  %v1573 = vunpack.c.l.b16 %v1476
  %v1574 = vunpack.c.h.b16 %v1476
  %v1575 = vunpack.c.l.b16 %v1477
  %v1576 = vunpack.c.h.b16 %v1477
  %v1577 = vunpack.c.l.b16 %v1478
  %v1578 = vunpack.c.h.b16 %v1478
  %v1579 = vunpack.c.l.b16 %v1479
  %v1580 = vunpack.c.h.b16 %v1479
  %v1581 = vunpack.c.l.b16 %v1480
  %v1582 = vunpack.c.h.b16 %v1480
  %v1583 = vunpack.c.l.b16 %v1481
  %v1584 = vunpack.c.h.b16 %v1481
  %v1585 = vunpack.c.l.b16 %v1482
  %v1586 = vunpack.c.h.b16 %v1482
  %v1587 = vunpack.c.l.b16 %v1483
  %v1588 = vunpack.c.h.b16 %v1483
  %v1589 = vunpack.c.l.b16 %v1484
  %v1590 = vunpack.c.h.b16 %v1484
  %v1591 = vunpack.c.l.b16 %v1485
  %v1592 = vunpack.c.h.b16 %v1485
  %v1593 = vunpack.c.l.b16 %v1486
  %v1594 = vunpack.c.h.b16 %v1486
  %v1595 = vunpack.c.l.b16 %v1487
  %v1596 = vunpack.c.h.b16 %v1487
  %v1597 = vunpack.c.l.b16 %v1488
  %v1598 = vunpack.c.h.b16 %v1488
  %v1599 = vunpack.c.l.b16 %v1489
  %v1600 = vunpack.c.h.b16 %v1489
  %v1601 = vunpack.c.l.b16 %v1490
  %v1602 = vunpack.c.h.b16 %v1490
  %v1603 = vunpack.c.l.b16 %v1491
  %v1604 = vunpack.c.h.b16 %v1491
  %v1605 = vunpack.c.l.b16 %v1492
  %v1606 = vunpack.c.h.b16 %v1492
  %v1607 = vunpack.c.l.b16 %v1493
  %v1608 = vunpack.c.h.b16 %v1493
  %v1609 = vunpack.c.l.b16 %v1494
  %v1610 = vunpack.c.h.b16 %v1494
  %v1611 = vunpack.c.l.b16 %v1495
  %v1612 = vunpack.c.h.b16 %v1495
  %v1613 = vunpack.c.l.b16 %v1496
  %v1614 = vunpack.c.h.b16 %v1496
  %v1615 = vunpack.c.l.b16 %v1497
  %v1616 = vunpack.c.h.b16 %v1497
  %v1617 = vunpack.c.l.b16 %v1498
  %v1618 = vunpack.c.h.b16 %v1498
  %v1619 = vunpack.c.l.b16 %v1499
  %v1620 = vunpack.c.h.b16 %v1499
  %v1621 = vunpack.c.l.b16 %v1500
  %v1622 = vunpack.c.h.b16 %v1500
  %v1623 = vunpack.c.l.b16 %v1501
  %v1624 = vunpack.c.h.b16 %v1501
  %v1625 = vunpack.c.l.b16 %v1502
  %v1626 = vunpack.c.h.b16 %v1502
  %v1627 = vunpack.c.l.b16 %v1503
  %v1628 = vunpack.c.h.b16 %v1503
  %v1629 = vunpack.c.l.b16 %v1504
  %v1630 = vunpack.c.h.b16 %v1504
  %v1631 = vunpack.c.l.b16 %v1505
  %v1632 = vunpack.c.h.b16 %v1505
  %v1633 = vunpack.c.l.b16 %v1506
  %v1634 = vunpack.c.h.b16 %v1506
  %v1635 = vunpack.c.l.b16 %v1507
  %v1636 = vunpack.c.h.b16 %v1507
  %v1637 = vunpack.c.l.b16 %v1508
  %v1638 = vunpack.c.h.b16 %v1508
  %v1639 = vunpack.c.l.b16 %v1509
  %v1640 = vunpack.c.h.b16 %v1509
  %v1641 = vunpack.c.l.b16 %v1510
  %v1642 = vunpack.c.h.b16 %v1510
  %v1643 = vunpack.c.l.b16 %v1511
  %v1644 = vunpack.c.h.b16 %v1511
  %v1645 = vunpack.c.l.b16 %v1512
  %v1646 = vunpack.c.h.b16 %v1512
  %v1647 = vunpack.c.l.b16 %v1513
  %v1648 = vunpack.c.h.b16 %v1513
  %v1649 = vunpack.c.l.b16 %v1514
  %v1650 = vunpack.c.h.b16 %v1514
  %v1651 = vunpack.c.l.b16 %v1515
  %v1652 = vunpack.c.h.b16 %v1515
  %v1653 = vunpack.c.l.b16 %v1516
  %v1654 = vunpack.c.h.b16 %v1516
  %v1655 = vpack.c.b16 %v1567, %v1563
  %v1656 = vpack.c.b16 %v1568, %v1564
  %v1657 = vpack.c.b16 %v1569, %v1565
  %v1658 = vpack.c.b16 %v1570, %v1566
  %v1659 = vpack.c.b16 %v1575, %v1571
  %v1660 = vpack.c.b16 %v1576, %v1572
  %v1661 = vpack.c.b16 %v1577, %v1573
  %v1662 = vpack.c.b16 %v1578, %v1574
  %v1663 = vpack.c.b16 %v1583, %v1579
  %v1664 = vpack.c.b16 %v1584, %v1580
  %v1665 = vpack.c.b16 %v1585, %v1581
  %v1666 = vpack.c.b16 %v1586, %v1582
  %v1667 = vpack.c.b16 %v1591, %v1587
  %v1668 = vpack.c.b16 %v1592, %v1588
  %v1669 = vpack.c.b16 %v1593, %v1589
  %v1670 = vpack.c.b16 %v1594, %v1590
  %v1671 = vpack.c.b16 %v1599, %v1595
  %v1672 = vpack.c.b16 %v1600, %v1596
  %v1673 = vpack.c.b16 %v1601, %v1597
  %v1674 = vpack.c.b16 %v1602, %v1598
  %v1675 = vpack.c.b16 %v1607, %v1603
  %v1676 = vpack.c.b16 %v1608, %v1604
  %v1677 = vpack.c.b16 %v1609, %v1605
  %v1678 = vpack.c.b16 %v1610, %v1606
  %v1679 = vpack.c.b16 %v1615, %v1611
  %v1680 = vpack.c.b16 %v1616, %v1612
  %v1681 = vpack.c.b16 %v1617, %v1613
  %v1682 = vpack.c.b16 %v1618, %v1614
  %v1683 = vpack.c.b16 %v1623, %v1619
  %v1684 = vpack.c.b16 %v1624, %v1620
  %v1685 = vpack.c.b16 %v1625, %v1621
  %v1686 = vpack.c.b16 %v1626, %v1622
  %v1687 = vpack.c.b16 %v1631, %v1627
  %v1688 = vpack.c.b16 %v1632, %v1628
  %v1689 = vpack.c.b16 %v1633, %v1629
  %v1690 = vpack.c.b16 %v1634, %v1630
  %v1691 = vpack.c.b16 %v1639, %v1635
  %v1692 = vpack.c.b16 %v1640, %v1636
  %v1693 = vpack.c.b16 %v1641, %v1637
  %v1694 = vpack.c.b16 %v1642, %v1638
  %v1695 = vpack.c.b16 %v1647, %v1643
  %v1696 = vpack.c.b16 %v1648, %v1644
  %v1697 = vpack.c.b16 %v1649, %v1645
  %v1698 = vpack.c.b16 %v1650, %v1646
  %v1699 = vpack.c.b16 %v1651, %v1651
  %v1700 = vpack.c.b16 %v1652, %v1652
  %v1701 = vpack.c.b16 %v1653, %v1653
  %v1702 = vpack.c.b16 %v1654, %v1654
  %v1748 = vsel %vm408, %v1699, 0
  %v1751 = vsel %vm408, %v1700, 0
  %v1754 = vsel %vm408, %v1701, 0
  %v1757 = vsel %vm408, %v1702, 0
  %1759 = vmatpush.bf16.msra.mxu0 %v1683
  %1760 = vmatpush.bf16.msra.mxu0 %v1679
  %1761 = vmatpush.bf16.msra.mxu0 %v1675
  %1762 = vmatpush.bf16.msra.mxu0 %v1671
  %1763 = vmatpush.bf16.msra.mxu0 %v1667
  %1764 = vmatpush.bf16.msra.mxu0 %v1663
  %1765 = vmatpush.bf16.msra.mxu0 %v1659
  %1766 = vmatpush.bf16.msra.mxu0 %v1655
  %1767 = vmatmul.bf16.gmra.mxu0 %v135
  %v1768 = vpop.f32.mrf.mxu0
  %v1769 = vadd.f32 0.0, %v1768
  %v1770 = vpop.f32.mrf.mxu0
  %v1771 = vadd.f32 0.0, %v1770
  %1772 = vmatmul.bf16.gmra.mxu0 %v137
  %v1773 = vpop.f32.mrf.mxu0
  %v1774 = vadd.f32 0.0, %v1773
  %v1775 = vpop.f32.mrf.mxu0
  %v1776 = vadd.f32 0.0, %v1775
  %1777 = vmatmul.bf16.gmra.mxu0 %v139
  %v1778 = vpop.f32.mrf.mxu0
  %v1779 = vadd.f32 0.0, %v1778
  %v1780 = vpop.f32.mrf.mxu0
  %v1781 = vadd.f32 0.0, %v1780
  %1782 = vmatmul.bf16.gmra.mxu0 %v141
  %v1783 = vpop.f32.mrf.mxu0
  %v1784 = vadd.f32 0.0, %v1783
  %v1785 = vpop.f32.mrf.mxu0
  %v1786 = vadd.f32 0.0, %v1785
  %1787 = vmatmul.bf16.gmra.mxu0 %v143
  %v1788 = vpop.f32.mrf.mxu0
  %v1789 = vadd.f32 0.0, %v1788
  %v1790 = vpop.f32.mrf.mxu0
  %v1791 = vadd.f32 0.0, %v1790
  %1792 = vmatmul.bf16.gmra.mxu0 %v145
  %v1793 = vpop.f32.mrf.mxu0
  %v1794 = vadd.f32 0.0, %v1793
  %v1795 = vpop.f32.mrf.mxu0
  %v1796 = vadd.f32 0.0, %v1795
  %1797 = vmatmul.bf16.gmra.mxu0 %v147
  %v1798 = vpop.f32.mrf.mxu0
  %v1799 = vadd.f32 0.0, %v1798
  %v1800 = vpop.f32.mrf.mxu0
  %v1801 = vadd.f32 0.0, %v1800
  %1802 = vdwg.mxu0
  %1803 = vmatpush.bf16.msra.mxu0 0
  %1804 = vmatpush.bf16.msra.mxu0 0
  %1805 = vmatpush.bf16.msra.mxu0 0
  %1806 = vmatpush.bf16.msra.mxu0 0
  %1807 = vmatpush.bf16.msra.mxu0 %v1748
  %1808 = vmatpush.bf16.msra.mxu0 %v1695
  %1809 = vmatpush.bf16.msra.mxu0 %v1691
  %1810 = vmatpush.bf16.msra.mxu0 %v1687
  %1811 = vmatmul.bf16.gmra.mxu0 %v388
  %v1812 = vpop.f32.mrf.mxu0
  %v1813 = vadd.f32 %v1769, %v1812
  %v1814 = vpop.f32.mrf.mxu0
  %v1815 = vadd.f32 %v1771, %v1814
  %1816 = vmatmul.bf16.gmra.mxu0 %v391
  %v1817 = vpop.f32.mrf.mxu0
  %v1818 = vadd.f32 %v1774, %v1817
  %v1819 = vpop.f32.mrf.mxu0
  %v1820 = vadd.f32 %v1776, %v1819
  %1821 = vmatmul.bf16.gmra.mxu0 %v394
  %v1822 = vpop.f32.mrf.mxu0
  %v1823 = vadd.f32 %v1779, %v1822
  %v1824 = vpop.f32.mrf.mxu0
  %v1825 = vadd.f32 %v1781, %v1824
  %1826 = vmatmul.bf16.gmra.mxu0 %v397
  %v1827 = vpop.f32.mrf.mxu0
  %v1828 = vadd.f32 %v1784, %v1827
  %v1829 = vpop.f32.mrf.mxu0
  %v1830 = vadd.f32 %v1786, %v1829
  %1831 = vmatmul.bf16.gmra.mxu0 %v400
  %v1832 = vpop.f32.mrf.mxu0
  %v1833 = vadd.f32 %v1789, %v1832
  %v1834 = vpop.f32.mrf.mxu0
  %v1835 = vadd.f32 %v1791, %v1834
  %1836 = vmatmul.bf16.gmra.mxu0 %v403
  %v1837 = vpop.f32.mrf.mxu0
  %v1838 = vadd.f32 %v1794, %v1837
  %v1839 = vpop.f32.mrf.mxu0
  %v1840 = vadd.f32 %v1796, %v1839
  %1841 = vmatmul.bf16.gmra.mxu0 %v406
  %v1842 = vpop.f32.mrf.mxu0
  %v1843 = vadd.f32 %v1799, %v1842
  %v1844 = vpop.f32.mrf.mxu0
  %v1845 = vadd.f32 %v1801, %v1844
  %1846 = vdwg.mxu0
  %1847 = vmatpush.bf16.msra.mxu0 %v1684
  %1848 = vmatpush.bf16.msra.mxu0 %v1680
  %1849 = vmatpush.bf16.msra.mxu0 %v1676
  %1850 = vmatpush.bf16.msra.mxu0 %v1672
  %1851 = vmatpush.bf16.msra.mxu0 %v1668
  %1852 = vmatpush.bf16.msra.mxu0 %v1664
  %1853 = vmatpush.bf16.msra.mxu0 %v1660
  %1854 = vmatpush.bf16.msra.mxu0 %v1656
  %1855 = vmatmul.bf16.gmra.mxu0 %v135
  %v1856 = vpop.f32.mrf.mxu0
  %v1857 = vadd.f32 0.0, %v1856
  %v1858 = vpop.f32.mrf.mxu0
  %v1859 = vadd.f32 0.0, %v1858
  %1860 = vmatmul.bf16.gmra.mxu0 %v137
  %v1861 = vpop.f32.mrf.mxu0
  %v1862 = vadd.f32 0.0, %v1861
  %v1863 = vpop.f32.mrf.mxu0
  %v1864 = vadd.f32 0.0, %v1863
  %1865 = vmatmul.bf16.gmra.mxu0 %v139
  %v1866 = vpop.f32.mrf.mxu0
  %v1867 = vadd.f32 0.0, %v1866
  %v1868 = vpop.f32.mrf.mxu0
  %v1869 = vadd.f32 0.0, %v1868
  %1870 = vmatmul.bf16.gmra.mxu0 %v141
  %v1871 = vpop.f32.mrf.mxu0
  %v1872 = vadd.f32 0.0, %v1871
  %v1873 = vpop.f32.mrf.mxu0
  %v1874 = vadd.f32 0.0, %v1873
  %1875 = vmatmul.bf16.gmra.mxu0 %v143
  %v1876 = vpop.f32.mrf.mxu0
  %v1877 = vadd.f32 0.0, %v1876
  %v1878 = vpop.f32.mrf.mxu0
  %v1879 = vadd.f32 0.0, %v1878
  %1880 = vmatmul.bf16.gmra.mxu0 %v145
  %v1881 = vpop.f32.mrf.mxu0
  %v1882 = vadd.f32 0.0, %v1881
  %v1883 = vpop.f32.mrf.mxu0
  %v1884 = vadd.f32 0.0, %v1883
  %1885 = vmatmul.bf16.gmra.mxu0 %v147
  %v1886 = vpop.f32.mrf.mxu0
  %v1887 = vadd.f32 0.0, %v1886
  %v1888 = vpop.f32.mrf.mxu0
  %v1889 = vadd.f32 0.0, %v1888
  %1890 = vdwg.mxu0
  %1891 = vmatpush.bf16.msra.mxu0 0
  %1892 = vmatpush.bf16.msra.mxu0 0
  %1893 = vmatpush.bf16.msra.mxu0 0
  %1894 = vmatpush.bf16.msra.mxu0 0
  %1895 = vmatpush.bf16.msra.mxu0 %v1751
  %1896 = vmatpush.bf16.msra.mxu0 %v1696
  %1897 = vmatpush.bf16.msra.mxu0 %v1692
  %1898 = vmatpush.bf16.msra.mxu0 %v1688
  %1899 = vmatmul.bf16.gmra.mxu0 %v388
  %v1900 = vpop.f32.mrf.mxu0
  %v1901 = vadd.f32 %v1857, %v1900
  %v1902 = vpop.f32.mrf.mxu0
  %v1903 = vadd.f32 %v1859, %v1902
  %1904 = vmatmul.bf16.gmra.mxu0 %v391
  %v1905 = vpop.f32.mrf.mxu0
  %v1906 = vadd.f32 %v1862, %v1905
  %v1907 = vpop.f32.mrf.mxu0
  %v1908 = vadd.f32 %v1864, %v1907
  %1909 = vmatmul.bf16.gmra.mxu0 %v394
  %v1910 = vpop.f32.mrf.mxu0
  %v1911 = vadd.f32 %v1867, %v1910
  %v1912 = vpop.f32.mrf.mxu0
  %v1913 = vadd.f32 %v1869, %v1912
  %1914 = vmatmul.bf16.gmra.mxu0 %v397
  %v1915 = vpop.f32.mrf.mxu0
  %v1916 = vadd.f32 %v1872, %v1915
  %v1917 = vpop.f32.mrf.mxu0
  %v1918 = vadd.f32 %v1874, %v1917
  %1919 = vmatmul.bf16.gmra.mxu0 %v400
  %v1920 = vpop.f32.mrf.mxu0
  %v1921 = vadd.f32 %v1877, %v1920
  %v1922 = vpop.f32.mrf.mxu0
  %v1923 = vadd.f32 %v1879, %v1922
  %1924 = vmatmul.bf16.gmra.mxu0 %v403
  %v1925 = vpop.f32.mrf.mxu0
  %v1926 = vadd.f32 %v1882, %v1925
  %v1927 = vpop.f32.mrf.mxu0
  %v1928 = vadd.f32 %v1884, %v1927
  %1929 = vmatmul.bf16.gmra.mxu0 %v406
  %v1930 = vpop.f32.mrf.mxu0
  %v1931 = vadd.f32 %v1887, %v1930
  %v1932 = vpop.f32.mrf.mxu0
  %v1933 = vadd.f32 %v1889, %v1932
  %1934 = vdwg.mxu0
  %1935 = vmatpush.bf16.msra.mxu0 %v1685
  %1936 = vmatpush.bf16.msra.mxu0 %v1681
  %1937 = vmatpush.bf16.msra.mxu0 %v1677
  %1938 = vmatpush.bf16.msra.mxu0 %v1673
  %1939 = vmatpush.bf16.msra.mxu0 %v1669
  %1940 = vmatpush.bf16.msra.mxu0 %v1665
  %1941 = vmatpush.bf16.msra.mxu0 %v1661
  %1942 = vmatpush.bf16.msra.mxu0 %v1657
  %1943 = vmatmul.bf16.gmra.mxu0 %v135
  %v1944 = vpop.f32.mrf.mxu0
  %v1945 = vadd.f32 0.0, %v1944
  %v1946 = vpop.f32.mrf.mxu0
  %v1947 = vadd.f32 0.0, %v1946
  %1948 = vmatmul.bf16.gmra.mxu0 %v137
  %v1949 = vpop.f32.mrf.mxu0
  %v1950 = vadd.f32 0.0, %v1949
  %v1951 = vpop.f32.mrf.mxu0
  %v1952 = vadd.f32 0.0, %v1951
  %1953 = vmatmul.bf16.gmra.mxu0 %v139
  %v1954 = vpop.f32.mrf.mxu0
  %v1955 = vadd.f32 0.0, %v1954
  %v1956 = vpop.f32.mrf.mxu0
  %v1957 = vadd.f32 0.0, %v1956
  %1958 = vmatmul.bf16.gmra.mxu0 %v141
  %v1959 = vpop.f32.mrf.mxu0
  %v1960 = vadd.f32 0.0, %v1959
  %v1961 = vpop.f32.mrf.mxu0
  %v1962 = vadd.f32 0.0, %v1961
  %1963 = vmatmul.bf16.gmra.mxu0 %v143
  %v1964 = vpop.f32.mrf.mxu0
  %v1965 = vadd.f32 0.0, %v1964
  %v1966 = vpop.f32.mrf.mxu0
  %v1967 = vadd.f32 0.0, %v1966
  %1968 = vmatmul.bf16.gmra.mxu0 %v145
  %v1969 = vpop.f32.mrf.mxu0
  %v1970 = vadd.f32 0.0, %v1969
  %v1971 = vpop.f32.mrf.mxu0
  %v1972 = vadd.f32 0.0, %v1971
  %1973 = vmatmul.bf16.gmra.mxu0 %v147
  %v1974 = vpop.f32.mrf.mxu0
  %v1975 = vadd.f32 0.0, %v1974
  %v1976 = vpop.f32.mrf.mxu0
  %v1977 = vadd.f32 0.0, %v1976
  %1978 = vdwg.mxu0
  %1979 = vmatpush.bf16.msra.mxu0 0
  %1980 = vmatpush.bf16.msra.mxu0 0
  %1981 = vmatpush.bf16.msra.mxu0 0
  %1982 = vmatpush.bf16.msra.mxu0 0
  %1983 = vmatpush.bf16.msra.mxu0 %v1754
  %1984 = vmatpush.bf16.msra.mxu0 %v1697
  %1985 = vmatpush.bf16.msra.mxu0 %v1693
  %1986 = vmatpush.bf16.msra.mxu0 %v1689
  %1987 = vmatmul.bf16.gmra.mxu0 %v388
  %v1988 = vpop.f32.mrf.mxu0
  %v1989 = vadd.f32 %v1945, %v1988
  %v1990 = vpop.f32.mrf.mxu0
  %v1991 = vadd.f32 %v1947, %v1990
  %1992 = vmatmul.bf16.gmra.mxu0 %v391
  %v1993 = vpop.f32.mrf.mxu0
  %v1994 = vadd.f32 %v1950, %v1993
  %v1995 = vpop.f32.mrf.mxu0
  %v1996 = vadd.f32 %v1952, %v1995
  %1997 = vmatmul.bf16.gmra.mxu0 %v394
  %v1998 = vpop.f32.mrf.mxu0
  %v1999 = vadd.f32 %v1955, %v1998
  %v2000 = vpop.f32.mrf.mxu0
  %v2001 = vadd.f32 %v1957, %v2000
  %2002 = vmatmul.bf16.gmra.mxu0 %v397
  %v2003 = vpop.f32.mrf.mxu0
  %v2004 = vadd.f32 %v1960, %v2003
  %v2005 = vpop.f32.mrf.mxu0
  %v2006 = vadd.f32 %v1962, %v2005
  %2007 = vmatmul.bf16.gmra.mxu0 %v400
  %v2008 = vpop.f32.mrf.mxu0
  %v2009 = vadd.f32 %v1965, %v2008
  %v2010 = vpop.f32.mrf.mxu0
  %v2011 = vadd.f32 %v1967, %v2010
  %2012 = vmatmul.bf16.gmra.mxu0 %v403
  %v2013 = vpop.f32.mrf.mxu0
  %v2014 = vadd.f32 %v1970, %v2013
  %v2015 = vpop.f32.mrf.mxu0
  %v2016 = vadd.f32 %v1972, %v2015
  %2017 = vmatmul.bf16.gmra.mxu0 %v406
  %v2018 = vpop.f32.mrf.mxu0
  %v2019 = vadd.f32 %v1975, %v2018
  %v2020 = vpop.f32.mrf.mxu0
  %v2021 = vadd.f32 %v1977, %v2020
  %2022 = vdwg.mxu0
  %2023 = vmatpush.bf16.msra.mxu0 %v1686
  %2024 = vmatpush.bf16.msra.mxu0 %v1682
  %2025 = vmatpush.bf16.msra.mxu0 %v1678
  %2026 = vmatpush.bf16.msra.mxu0 %v1674
  %2027 = vmatpush.bf16.msra.mxu0 %v1670
  %2028 = vmatpush.bf16.msra.mxu0 %v1666
  %2029 = vmatpush.bf16.msra.mxu0 %v1662
  %2030 = vmatpush.bf16.msra.mxu0 %v1658
  %2031 = vmatmul.bf16.gmra.mxu0 %v135
  %v2032 = vpop.f32.mrf.mxu0
  %v2033 = vadd.f32 0.0, %v2032
  %v2034 = vpop.f32.mrf.mxu0
  %v2035 = vadd.f32 0.0, %v2034
  %2036 = vmatmul.bf16.gmra.mxu0 %v137
  %v2037 = vpop.f32.mrf.mxu0
  %v2038 = vadd.f32 0.0, %v2037
  %v2039 = vpop.f32.mrf.mxu0
  %v2040 = vadd.f32 0.0, %v2039
  %2041 = vmatmul.bf16.gmra.mxu0 %v139
  %v2042 = vpop.f32.mrf.mxu0
  %v2043 = vadd.f32 0.0, %v2042
  %v2044 = vpop.f32.mrf.mxu0
  %v2045 = vadd.f32 0.0, %v2044
  %2046 = vmatmul.bf16.gmra.mxu0 %v141
  %v2047 = vpop.f32.mrf.mxu0
  %v2048 = vadd.f32 0.0, %v2047
  %v2049 = vpop.f32.mrf.mxu0
  %v2050 = vadd.f32 0.0, %v2049
  %2051 = vmatmul.bf16.gmra.mxu0 %v143
  %v2052 = vpop.f32.mrf.mxu0
  %v2053 = vadd.f32 0.0, %v2052
  %v2054 = vpop.f32.mrf.mxu0
  %v2055 = vadd.f32 0.0, %v2054
  %2056 = vmatmul.bf16.gmra.mxu0 %v145
  %v2057 = vpop.f32.mrf.mxu0
  %v2058 = vadd.f32 0.0, %v2057
  %v2059 = vpop.f32.mrf.mxu0
  %v2060 = vadd.f32 0.0, %v2059
  %2061 = vmatmul.bf16.gmra.mxu0 %v147
  %v2062 = vpop.f32.mrf.mxu0
  %v2063 = vadd.f32 0.0, %v2062
  %v2064 = vpop.f32.mrf.mxu0
  %v2065 = vadd.f32 0.0, %v2064
  %2066 = vdwg.mxu0
  %2067 = vmatpush.bf16.msra.mxu0 0
  %2068 = vmatpush.bf16.msra.mxu0 0
  %2069 = vmatpush.bf16.msra.mxu0 0
  %2070 = vmatpush.bf16.msra.mxu0 0
  %2071 = vmatpush.bf16.msra.mxu0 %v1757
  %2072 = vmatpush.bf16.msra.mxu0 %v1698
  %2073 = vmatpush.bf16.msra.mxu0 %v1694
  %2074 = vmatpush.bf16.msra.mxu0 %v1690
  %2075 = vmatmul.bf16.gmra.mxu0 %v388
  %v2076 = vpop.f32.mrf.mxu0
  %v2077 = vadd.f32 %v2033, %v2076
  %v2078 = vpop.f32.mrf.mxu0
  %v2079 = vadd.f32 %v2035, %v2078
  %2080 = vmatmul.bf16.gmra.mxu0 %v391
  %v2081 = vpop.f32.mrf.mxu0
  %v2082 = vadd.f32 %v2038, %v2081
  %v2083 = vpop.f32.mrf.mxu0
  %v2084 = vadd.f32 %v2040, %v2083
  %2085 = vmatmul.bf16.gmra.mxu0 %v394
  %v2086 = vpop.f32.mrf.mxu0
  %v2087 = vadd.f32 %v2043, %v2086
  %v2088 = vpop.f32.mrf.mxu0
  %v2089 = vadd.f32 %v2045, %v2088
  %2090 = vmatmul.bf16.gmra.mxu0 %v397
  %v2091 = vpop.f32.mrf.mxu0
  %v2092 = vadd.f32 %v2048, %v2091
  %v2093 = vpop.f32.mrf.mxu0
  %v2094 = vadd.f32 %v2050, %v2093
  %2095 = vmatmul.bf16.gmra.mxu0 %v400
  %v2096 = vpop.f32.mrf.mxu0
  %v2097 = vadd.f32 %v2053, %v2096
  %v2098 = vpop.f32.mrf.mxu0
  %v2099 = vadd.f32 %v2055, %v2098
  %2100 = vmatmul.bf16.gmra.mxu0 %v403
  %v2101 = vpop.f32.mrf.mxu0
  %v2102 = vadd.f32 %v2058, %v2101
  %v2103 = vpop.f32.mrf.mxu0
  %v2104 = vadd.f32 %v2060, %v2103
  %2105 = vmatmul.bf16.gmra.mxu0 %v406
  %v2106 = vpop.f32.mrf.mxu0
  %v2107 = vadd.f32 %v2063, %v2106
  %v2108 = vpop.f32.mrf.mxu0
  %v2109 = vadd.f32 %v2065, %v2108
  %2110 = vdwg.mxu0
  %v2111 = vmax.f32 %v1414, %v1813
  %v2112 = vmax.f32 %v1415, %v1901
  %v2113 = vmax.f32 %v1416, %v1989
  %v2114 = vmax.f32 %v1417, %v2077
  %v2115 = vmax.f32 %v1418, %v1815
  %v2116 = vmax.f32 %v1419, %v1903
  %v2117 = vmax.f32 %v1420, %v1991
  %v2118 = vmax.f32 %v1421, %v2079
  %v2119 = vmax.f32 %v1422, %v1818
  %v2120 = vmax.f32 %v1423, %v1906
  %v2121 = vmax.f32 %v1424, %v1994
  %v2122 = vmax.f32 %v1425, %v2082
  %v2123 = vmax.f32 %v1426, %v1820
  %v2124 = vmax.f32 %v1427, %v1908
  %v2125 = vmax.f32 %v1428, %v1996
  %v2126 = vmax.f32 %v1429, %v2084
  %v2127 = vmax.f32 %v1430, %v1823
  %v2128 = vmax.f32 %v1431, %v1911
  %v2129 = vmax.f32 %v1432, %v1999
  %v2130 = vmax.f32 %v1433, %v2087
  %v2131 = vmax.f32 %v1434, %v1825
  %v2132 = vmax.f32 %v1435, %v1913
  %v2133 = vmax.f32 %v1436, %v2001
  %v2134 = vmax.f32 %v1437, %v2089
  %v2135 = vmax.f32 %v1438, %v1828
  %v2136 = vmax.f32 %v1439, %v1916
  %v2137 = vmax.f32 %v1440, %v2004
  %v2138 = vmax.f32 %v1441, %v2092
  %v2139 = vmax.f32 %v1442, %v1830
  %v2140 = vmax.f32 %v1443, %v1918
  %v2141 = vmax.f32 %v1444, %v2006
  %v2142 = vmax.f32 %v1445, %v2094
  %v2143 = vmax.f32 %v1446, %v1833
  %v2144 = vmax.f32 %v1447, %v1921
  %v2145 = vmax.f32 %v1448, %v2009
  %v2146 = vmax.f32 %v1449, %v2097
  %v2147 = vmax.f32 %v1450, %v1835
  %v2148 = vmax.f32 %v1451, %v1923
  %v2149 = vmax.f32 %v1452, %v2011
  %v2150 = vmax.f32 %v1453, %v2099
  %v2151 = vmax.f32 %v1454, %v1838
  %v2152 = vmax.f32 %v1455, %v1926
  %v2153 = vmax.f32 %v1456, %v2014
  %v2154 = vmax.f32 %v1457, %v2102
  %v2155 = vmax.f32 %v1458, %v1840
  %v2156 = vmax.f32 %v1459, %v1928
  %v2157 = vmax.f32 %v1460, %v2016
  %v2158 = vmax.f32 %v1461, %v2104
  %v2159 = vmax.f32 %v1462, %v1843
  %v2160 = vmax.f32 %v1463, %v1931
  %v2161 = vmax.f32 %v1464, %v2019
  %v2162 = vmax.f32 %v1465, %v2107
  %v2163 = vmax.f32 %v1466, %v1845
  %v2164 = vmax.f32 %v1467, %v1933
  %v2165 = vmax.f32 %v1468, %v2021
  %v2166 = vmax.f32 %v1469, %v2109
  %s2167 = scalar_lea.vmem %s1, 1104
  %v2168 = vld [vmem:[%s2167] sm:$0xff]
  %v2169 = vld [vmem:[%s2167 + $0x8] sm:$0xff]
  %v2170 = vld [vmem:[%s2167 + $0x10] sm:$0xff]
  %v2171 = vld [vmem:[%s2167 + $0x18] sm:$0xff]
  %v2172 = vld [vmem:[%s2167 + $0x20] sm:$0xff]
  %v2173 = vld [vmem:[%s2167 + $0x28] sm:$0xff]
  %v2174 = vld [vmem:[%s2167 + $0x30] sm:$0xff]
  %v2175 = vld [vmem:[%s2167 + $0x38] sm:$0xff]
  %v2176 = vld [vmem:[%s2167 + $0x40] sm:$0xff]
  %v2177 = vld [vmem:[%s2167 + $0x48] sm:$0xff]
  %v2178 = vld [vmem:[%s2167 + $0x50] sm:$0xff]
  %v2179 = vld [vmem:[%s2167 + $0x58] sm:$0xff]
  %v2180 = vld [vmem:[%s2167 + $0x60] sm:$0xff]
  %v2181 = vld [vmem:[%s2167 + $0x68] sm:$0xff]
  %v2182 = vld [vmem:[%s2167 + $0x70] sm:$0xff]
  %v2183 = vld [vmem:[%s2167 + $0x78] sm:$0xff]
  %v2184 = vld [vmem:[%s2167 + $0x80] sm:$0xff]
  %v2185 = vld [vmem:[%s2167 + $0x88] sm:$0xff]
  %v2186 = vld [vmem:[%s2167 + $0x90] sm:$0xff]
  %v2187 = vld [vmem:[%s2167 + $0x98] sm:$0xff]
  %v2188 = vld [vmem:[%s2167 + $0xa0] sm:$0xff]
  %v2189 = vld [vmem:[%s2167 + $0xa8] sm:$0xff]
  %v2190 = vld [vmem:[%s2167 + $0xb0] sm:$0xff]
  %v2191 = vld [vmem:[%s2167 + $0xb8] sm:$0xff]
  %v2192 = vld [vmem:[%s2167 + $0xc0] sm:$0xff]
  %v2193 = vld [vmem:[%s2167 + $0xc8] sm:$0xff]
  %v2194 = vld [vmem:[%s2167 + $0xd0] sm:$0xff]
  %v2195 = vld [vmem:[%s2167 + $0xd8] sm:$0xff]
  %v2196 = vld [vmem:[%s2167 + $0xe0] sm:$0xff]
  %v2197 = vld [vmem:[%s2167 + $0xe8] sm:$0xff]
  %v2198 = vld [vmem:[%s2167 + $0xf0] sm:$0xff]
  %v2199 = vld [vmem:[%s2167 + $0xf8] sm:$0xff]
  %v2200 = vld [vmem:[%s2167 + $0x100] sm:$0xff]
  %v2201 = vld [vmem:[%s2167 + $0x108] sm:$0xff]
  %v2202 = vld [vmem:[%s2167 + $0x110] sm:$0xff]
  %v2203 = vld [vmem:[%s2167 + $0x118] sm:$0xff]
  %v2204 = vld [vmem:[%s2167 + $0x120] sm:$0xff]
  %v2205 = vld [vmem:[%s2167 + $0x128] sm:$0xff]
  %v2206 = vld [vmem:[%s2167 + $0x130] sm:$0xff]
  %v2207 = vld [vmem:[%s2167 + $0x138] sm:$0xff]
  %v2208 = vld [vmem:[%s2167 + $0x140] sm:$0xff]
  %v2209 = vld [vmem:[%s2167 + $0x148] sm:$0xff]
  %v2210 = vld [vmem:[%s2167 + $0x150] sm:$0xff]
  %v2211 = vld [vmem:[%s2167 + $0x158] sm:$0xff]
  %v2212 = vld [vmem:[%s2167 + $0x160] sm:$0x33]
  %v2213 = vld [vmem:[%s2167 + $0x168] sm:$0x33]
  %v2260 = vunpack.c.l.b16 %v2168
  %v2261 = vunpack.c.h.b16 %v2168
  %v2262 = vunpack.c.l.b16 %v2169
  %v2263 = vunpack.c.h.b16 %v2169
  %v2264 = vunpack.c.l.b16 %v2170
  %v2265 = vunpack.c.h.b16 %v2170
  %v2266 = vunpack.c.l.b16 %v2171
  %v2267 = vunpack.c.h.b16 %v2171
  %v2268 = vunpack.c.l.b16 %v2172
  %v2269 = vunpack.c.h.b16 %v2172
  %v2270 = vunpack.c.l.b16 %v2173
  %v2271 = vunpack.c.h.b16 %v2173
  %v2272 = vunpack.c.l.b16 %v2174
  %v2273 = vunpack.c.h.b16 %v2174
  %v2274 = vunpack.c.l.b16 %v2175
  %v2275 = vunpack.c.h.b16 %v2175
  %v2276 = vunpack.c.l.b16 %v2176
  %v2277 = vunpack.c.h.b16 %v2176
  %v2278 = vunpack.c.l.b16 %v2177
  %v2279 = vunpack.c.h.b16 %v2177
  %v2280 = vunpack.c.l.b16 %v2178
  %v2281 = vunpack.c.h.b16 %v2178
  %v2282 = vunpack.c.l.b16 %v2179
  %v2283 = vunpack.c.h.b16 %v2179
  %v2284 = vunpack.c.l.b16 %v2180
  %v2285 = vunpack.c.h.b16 %v2180
  %v2286 = vunpack.c.l.b16 %v2181
  %v2287 = vunpack.c.h.b16 %v2181
  %v2288 = vunpack.c.l.b16 %v2182
  %v2289 = vunpack.c.h.b16 %v2182
  %v2290 = vunpack.c.l.b16 %v2183
  %v2291 = vunpack.c.h.b16 %v2183
  %v2292 = vunpack.c.l.b16 %v2184
  %v2293 = vunpack.c.h.b16 %v2184
  %v2294 = vunpack.c.l.b16 %v2185
  %v2295 = vunpack.c.h.b16 %v2185
  %v2296 = vunpack.c.l.b16 %v2186
  %v2297 = vunpack.c.h.b16 %v2186
  %v2298 = vunpack.c.l.b16 %v2187
  %v2299 = vunpack.c.h.b16 %v2187
  %v2300 = vunpack.c.l.b16 %v2188
  %v2301 = vunpack.c.h.b16 %v2188
  %v2302 = vunpack.c.l.b16 %v2189
  %v2303 = vunpack.c.h.b16 %v2189
  %v2304 = vunpack.c.l.b16 %v2190
  %v2305 = vunpack.c.h.b16 %v2190
  %v2306 = vunpack.c.l.b16 %v2191
  %v2307 = vunpack.c.h.b16 %v2191
  %v2308 = vunpack.c.l.b16 %v2192
  %v2309 = vunpack.c.h.b16 %v2192
  %v2310 = vunpack.c.l.b16 %v2193
  %v2311 = vunpack.c.h.b16 %v2193
  %v2312 = vunpack.c.l.b16 %v2194
  %v2313 = vunpack.c.h.b16 %v2194
  %v2314 = vunpack.c.l.b16 %v2195
  %v2315 = vunpack.c.h.b16 %v2195
  %v2316 = vunpack.c.l.b16 %v2196
  %v2317 = vunpack.c.h.b16 %v2196
  %v2318 = vunpack.c.l.b16 %v2197
  %v2319 = vunpack.c.h.b16 %v2197
  %v2320 = vunpack.c.l.b16 %v2198
  %v2321 = vunpack.c.h.b16 %v2198
  %v2322 = vunpack.c.l.b16 %v2199
  %v2323 = vunpack.c.h.b16 %v2199
  %v2324 = vunpack.c.l.b16 %v2200
  %v2325 = vunpack.c.h.b16 %v2200
  %v2326 = vunpack.c.l.b16 %v2201
  %v2327 = vunpack.c.h.b16 %v2201
  %v2328 = vunpack.c.l.b16 %v2202
  %v2329 = vunpack.c.h.b16 %v2202
  %v2330 = vunpack.c.l.b16 %v2203
  %v2331 = vunpack.c.h.b16 %v2203
  %v2332 = vunpack.c.l.b16 %v2204
  %v2333 = vunpack.c.h.b16 %v2204
  %v2334 = vunpack.c.l.b16 %v2205
  %v2335 = vunpack.c.h.b16 %v2205
  %v2336 = vunpack.c.l.b16 %v2206
  %v2337 = vunpack.c.h.b16 %v2206
  %v2338 = vunpack.c.l.b16 %v2207
  %v2339 = vunpack.c.h.b16 %v2207
  %v2340 = vunpack.c.l.b16 %v2208
  %v2341 = vunpack.c.h.b16 %v2208
  %v2342 = vunpack.c.l.b16 %v2209
  %v2343 = vunpack.c.h.b16 %v2209
  %v2344 = vunpack.c.l.b16 %v2210
  %v2345 = vunpack.c.h.b16 %v2210
  %v2346 = vunpack.c.l.b16 %v2211
  %v2347 = vunpack.c.h.b16 %v2211
  %v2348 = vunpack.c.l.b16 %v2212
  %v2349 = vunpack.c.h.b16 %v2212
  %v2350 = vunpack.c.l.b16 %v2213
  %v2351 = vunpack.c.h.b16 %v2213
  %v2352 = vpack.c.b16 %v2264, %v2260
  %v2353 = vpack.c.b16 %v2265, %v2261
  %v2354 = vpack.c.b16 %v2266, %v2262
  %v2355 = vpack.c.b16 %v2267, %v2263
  %v2356 = vpack.c.b16 %v2272, %v2268
  %v2357 = vpack.c.b16 %v2273, %v2269
  %v2358 = vpack.c.b16 %v2274, %v2270
  %v2359 = vpack.c.b16 %v2275, %v2271
  %v2360 = vpack.c.b16 %v2280, %v2276
  %v2361 = vpack.c.b16 %v2281, %v2277
  %v2362 = vpack.c.b16 %v2282, %v2278
  %v2363 = vpack.c.b16 %v2283, %v2279
  %v2364 = vpack.c.b16 %v2288, %v2284
  %v2365 = vpack.c.b16 %v2289, %v2285
  %v2366 = vpack.c.b16 %v2290, %v2286
  %v2367 = vpack.c.b16 %v2291, %v2287
  %v2368 = vpack.c.b16 %v2296, %v2292
  %v2369 = vpack.c.b16 %v2297, %v2293
  %v2370 = vpack.c.b16 %v2298, %v2294
  %v2371 = vpack.c.b16 %v2299, %v2295
  %v2372 = vpack.c.b16 %v2304, %v2300
  %v2373 = vpack.c.b16 %v2305, %v2301
  %v2374 = vpack.c.b16 %v2306, %v2302
  %v2375 = vpack.c.b16 %v2307, %v2303
  %v2376 = vpack.c.b16 %v2312, %v2308
  %v2377 = vpack.c.b16 %v2313, %v2309
  %v2378 = vpack.c.b16 %v2314, %v2310
  %v2379 = vpack.c.b16 %v2315, %v2311
  %v2380 = vpack.c.b16 %v2320, %v2316
  %v2381 = vpack.c.b16 %v2321, %v2317
  %v2382 = vpack.c.b16 %v2322, %v2318
  %v2383 = vpack.c.b16 %v2323, %v2319
  %v2384 = vpack.c.b16 %v2328, %v2324
  %v2385 = vpack.c.b16 %v2329, %v2325
  %v2386 = vpack.c.b16 %v2330, %v2326
  %v2387 = vpack.c.b16 %v2331, %v2327
  %v2388 = vpack.c.b16 %v2336, %v2332
  %v2389 = vpack.c.b16 %v2337, %v2333
  %v2390 = vpack.c.b16 %v2338, %v2334
  %v2391 = vpack.c.b16 %v2339, %v2335
  %v2392 = vpack.c.b16 %v2344, %v2340
  %v2393 = vpack.c.b16 %v2345, %v2341
  %v2394 = vpack.c.b16 %v2346, %v2342
  %v2395 = vpack.c.b16 %v2347, %v2343
  %v2396 = vpack.c.b16 %v2348, %v2348
  %v2397 = vpack.c.b16 %v2349, %v2349
  %v2398 = vpack.c.b16 %v2350, %v2350
  %v2399 = vpack.c.b16 %v2351, %v2351
  %v2445 = vsel %vm408, %v2396, 0
  %v2448 = vsel %vm408, %v2397, 0
  %v2451 = vsel %vm408, %v2398, 0
  %v2454 = vsel %vm408, %v2399, 0
  %2456 = vmatpush.bf16.msra.mxu0 %v2380
  %2457 = vmatpush.bf16.msra.mxu0 %v2376
  %2458 = vmatpush.bf16.msra.mxu0 %v2372
  %2459 = vmatpush.bf16.msra.mxu0 %v2368
  %2460 = vmatpush.bf16.msra.mxu0 %v2364
  %2461 = vmatpush.bf16.msra.mxu0 %v2360
  %2462 = vmatpush.bf16.msra.mxu0 %v2356
  %2463 = vmatpush.bf16.msra.mxu0 %v2352
  %2464 = vmatmul.bf16.gmra.mxu0 %v135
  %v2465 = vpop.f32.mrf.mxu0
  %v2466 = vadd.f32 0.0, %v2465
  %v2467 = vpop.f32.mrf.mxu0
  %v2468 = vadd.f32 0.0, %v2467
  %2469 = vmatmul.bf16.gmra.mxu0 %v137
  %v2470 = vpop.f32.mrf.mxu0
  %v2471 = vadd.f32 0.0, %v2470
  %v2472 = vpop.f32.mrf.mxu0
  %v2473 = vadd.f32 0.0, %v2472
  %2474 = vmatmul.bf16.gmra.mxu0 %v139
  %v2475 = vpop.f32.mrf.mxu0
  %v2476 = vadd.f32 0.0, %v2475
  %v2477 = vpop.f32.mrf.mxu0
  %v2478 = vadd.f32 0.0, %v2477
  %2479 = vmatmul.bf16.gmra.mxu0 %v141
  %v2480 = vpop.f32.mrf.mxu0
  %v2481 = vadd.f32 0.0, %v2480
  %v2482 = vpop.f32.mrf.mxu0
  %v2483 = vadd.f32 0.0, %v2482
  %2484 = vmatmul.bf16.gmra.mxu0 %v143
  %v2485 = vpop.f32.mrf.mxu0
  %v2486 = vadd.f32 0.0, %v2485
  %v2487 = vpop.f32.mrf.mxu0
  %v2488 = vadd.f32 0.0, %v2487
  %2489 = vmatmul.bf16.gmra.mxu0 %v145
  %v2490 = vpop.f32.mrf.mxu0
  %v2491 = vadd.f32 0.0, %v2490
  %v2492 = vpop.f32.mrf.mxu0
  %v2493 = vadd.f32 0.0, %v2492
  %2494 = vmatmul.bf16.gmra.mxu0 %v147
  %v2495 = vpop.f32.mrf.mxu0
  %v2496 = vadd.f32 0.0, %v2495
  %v2497 = vpop.f32.mrf.mxu0
  %v2498 = vadd.f32 0.0, %v2497
  %2499 = vdwg.mxu0
  %2500 = vmatpush.bf16.msra.mxu0 0
  %2501 = vmatpush.bf16.msra.mxu0 0
  %2502 = vmatpush.bf16.msra.mxu0 0
  %2503 = vmatpush.bf16.msra.mxu0 0
  %2504 = vmatpush.bf16.msra.mxu0 %v2445
  %2505 = vmatpush.bf16.msra.mxu0 %v2392
  %2506 = vmatpush.bf16.msra.mxu0 %v2388
  %2507 = vmatpush.bf16.msra.mxu0 %v2384
  %2508 = vmatmul.bf16.gmra.mxu0 %v388
  %v2509 = vpop.f32.mrf.mxu0
  %v2510 = vadd.f32 %v2466, %v2509
  %v2511 = vpop.f32.mrf.mxu0
  %v2512 = vadd.f32 %v2468, %v2511
  %2513 = vmatmul.bf16.gmra.mxu0 %v391
  %v2514 = vpop.f32.mrf.mxu0
  %v2515 = vadd.f32 %v2471, %v2514
  %v2516 = vpop.f32.mrf.mxu0
  %v2517 = vadd.f32 %v2473, %v2516
  %2518 = vmatmul.bf16.gmra.mxu0 %v394
  %v2519 = vpop.f32.mrf.mxu0
  %v2520 = vadd.f32 %v2476, %v2519
  %v2521 = vpop.f32.mrf.mxu0
  %v2522 = vadd.f32 %v2478, %v2521
  %2523 = vmatmul.bf16.gmra.mxu0 %v397
  %v2524 = vpop.f32.mrf.mxu0
  %v2525 = vadd.f32 %v2481, %v2524
  %v2526 = vpop.f32.mrf.mxu0
  %v2527 = vadd.f32 %v2483, %v2526
  %2528 = vmatmul.bf16.gmra.mxu0 %v400
  %v2529 = vpop.f32.mrf.mxu0
  %v2530 = vadd.f32 %v2486, %v2529
  %v2531 = vpop.f32.mrf.mxu0
  %v2532 = vadd.f32 %v2488, %v2531
  %2533 = vmatmul.bf16.gmra.mxu0 %v403
  %v2534 = vpop.f32.mrf.mxu0
  %v2535 = vadd.f32 %v2491, %v2534
  %v2536 = vpop.f32.mrf.mxu0
  %v2537 = vadd.f32 %v2493, %v2536
  %2538 = vmatmul.bf16.gmra.mxu0 %v406
  %v2539 = vpop.f32.mrf.mxu0
  %v2540 = vadd.f32 %v2496, %v2539
  %v2541 = vpop.f32.mrf.mxu0
  %v2542 = vadd.f32 %v2498, %v2541
  %2543 = vdwg.mxu0
  %2544 = vmatpush.bf16.msra.mxu0 %v2381
  %2545 = vmatpush.bf16.msra.mxu0 %v2377
  %2546 = vmatpush.bf16.msra.mxu0 %v2373
  %2547 = vmatpush.bf16.msra.mxu0 %v2369
  %2548 = vmatpush.bf16.msra.mxu0 %v2365
  %2549 = vmatpush.bf16.msra.mxu0 %v2361
  %2550 = vmatpush.bf16.msra.mxu0 %v2357
  %2551 = vmatpush.bf16.msra.mxu0 %v2353
  %2552 = vmatmul.bf16.gmra.mxu0 %v135
  %v2553 = vpop.f32.mrf.mxu0
  %v2554 = vadd.f32 0.0, %v2553
  %v2555 = vpop.f32.mrf.mxu0
  %v2556 = vadd.f32 0.0, %v2555
  %2557 = vmatmul.bf16.gmra.mxu0 %v137
  %v2558 = vpop.f32.mrf.mxu0
  %v2559 = vadd.f32 0.0, %v2558
  %v2560 = vpop.f32.mrf.mxu0
  %v2561 = vadd.f32 0.0, %v2560
  %2562 = vmatmul.bf16.gmra.mxu0 %v139
  %v2563 = vpop.f32.mrf.mxu0
  %v2564 = vadd.f32 0.0, %v2563
  %v2565 = vpop.f32.mrf.mxu0
  %v2566 = vadd.f32 0.0, %v2565
  %2567 = vmatmul.bf16.gmra.mxu0 %v141
  %v2568 = vpop.f32.mrf.mxu0
  %v2569 = vadd.f32 0.0, %v2568
  %v2570 = vpop.f32.mrf.mxu0
  %v2571 = vadd.f32 0.0, %v2570
  %2572 = vmatmul.bf16.gmra.mxu0 %v143
  %v2573 = vpop.f32.mrf.mxu0
  %v2574 = vadd.f32 0.0, %v2573
  %v2575 = vpop.f32.mrf.mxu0
  %v2576 = vadd.f32 0.0, %v2575
  %2577 = vmatmul.bf16.gmra.mxu0 %v145
  %v2578 = vpop.f32.mrf.mxu0
  %v2579 = vadd.f32 0.0, %v2578
  %v2580 = vpop.f32.mrf.mxu0
  %v2581 = vadd.f32 0.0, %v2580
  %2582 = vmatmul.bf16.gmra.mxu0 %v147
  %v2583 = vpop.f32.mrf.mxu0
  %v2584 = vadd.f32 0.0, %v2583
  %v2585 = vpop.f32.mrf.mxu0
  %v2586 = vadd.f32 0.0, %v2585
  %2587 = vdwg.mxu0
  %2588 = vmatpush.bf16.msra.mxu0 0
  %2589 = vmatpush.bf16.msra.mxu0 0
  %2590 = vmatpush.bf16.msra.mxu0 0
  %2591 = vmatpush.bf16.msra.mxu0 0
  %2592 = vmatpush.bf16.msra.mxu0 %v2448
  %2593 = vmatpush.bf16.msra.mxu0 %v2393
  %2594 = vmatpush.bf16.msra.mxu0 %v2389
  %2595 = vmatpush.bf16.msra.mxu0 %v2385
  %2596 = vmatmul.bf16.gmra.mxu0 %v388
  %v2597 = vpop.f32.mrf.mxu0
  %v2598 = vadd.f32 %v2554, %v2597
  %v2599 = vpop.f32.mrf.mxu0
  %v2600 = vadd.f32 %v2556, %v2599
  %2601 = vmatmul.bf16.gmra.mxu0 %v391
  %v2602 = vpop.f32.mrf.mxu0
  %v2603 = vadd.f32 %v2559, %v2602
  %v2604 = vpop.f32.mrf.mxu0
  %v2605 = vadd.f32 %v2561, %v2604
  %2606 = vmatmul.bf16.gmra.mxu0 %v394
  %v2607 = vpop.f32.mrf.mxu0
  %v2608 = vadd.f32 %v2564, %v2607
  %v2609 = vpop.f32.mrf.mxu0
  %v2610 = vadd.f32 %v2566, %v2609
  %2611 = vmatmul.bf16.gmra.mxu0 %v397
  %v2612 = vpop.f32.mrf.mxu0
  %v2613 = vadd.f32 %v2569, %v2612
  %v2614 = vpop.f32.mrf.mxu0
  %v2615 = vadd.f32 %v2571, %v2614
  %2616 = vmatmul.bf16.gmra.mxu0 %v400
  %v2617 = vpop.f32.mrf.mxu0
  %v2618 = vadd.f32 %v2574, %v2617
  %v2619 = vpop.f32.mrf.mxu0
  %v2620 = vadd.f32 %v2576, %v2619
  %2621 = vmatmul.bf16.gmra.mxu0 %v403
  %v2622 = vpop.f32.mrf.mxu0
  %v2623 = vadd.f32 %v2579, %v2622
  %v2624 = vpop.f32.mrf.mxu0
  %v2625 = vadd.f32 %v2581, %v2624
  %2626 = vmatmul.bf16.gmra.mxu0 %v406
  %v2627 = vpop.f32.mrf.mxu0
  %v2628 = vadd.f32 %v2584, %v2627
  %v2629 = vpop.f32.mrf.mxu0
  %v2630 = vadd.f32 %v2586, %v2629
  %2631 = vdwg.mxu0
  %2632 = vmatpush.bf16.msra.mxu0 %v2382
  %2633 = vmatpush.bf16.msra.mxu0 %v2378
  %2634 = vmatpush.bf16.msra.mxu0 %v2374
  %2635 = vmatpush.bf16.msra.mxu0 %v2370
  %2636 = vmatpush.bf16.msra.mxu0 %v2366
  %2637 = vmatpush.bf16.msra.mxu0 %v2362
  %2638 = vmatpush.bf16.msra.mxu0 %v2358
  %2639 = vmatpush.bf16.msra.mxu0 %v2354
  %2640 = vmatmul.bf16.gmra.mxu0 %v135
  %v2641 = vpop.f32.mrf.mxu0
  %v2642 = vadd.f32 0.0, %v2641
  %v2643 = vpop.f32.mrf.mxu0
  %v2644 = vadd.f32 0.0, %v2643
  %2645 = vmatmul.bf16.gmra.mxu0 %v137
  %v2646 = vpop.f32.mrf.mxu0
  %v2647 = vadd.f32 0.0, %v2646
  %v2648 = vpop.f32.mrf.mxu0
  %v2649 = vadd.f32 0.0, %v2648
  %2650 = vmatmul.bf16.gmra.mxu0 %v139
  %v2651 = vpop.f32.mrf.mxu0
  %v2652 = vadd.f32 0.0, %v2651
  %v2653 = vpop.f32.mrf.mxu0
  %v2654 = vadd.f32 0.0, %v2653
  %2655 = vmatmul.bf16.gmra.mxu0 %v141
  %v2656 = vpop.f32.mrf.mxu0
  %v2657 = vadd.f32 0.0, %v2656
  %v2658 = vpop.f32.mrf.mxu0
  %v2659 = vadd.f32 0.0, %v2658
  %2660 = vmatmul.bf16.gmra.mxu0 %v143
  %v2661 = vpop.f32.mrf.mxu0
  %v2662 = vadd.f32 0.0, %v2661
  %v2663 = vpop.f32.mrf.mxu0
  %v2664 = vadd.f32 0.0, %v2663
  %2665 = vmatmul.bf16.gmra.mxu0 %v145
  %v2666 = vpop.f32.mrf.mxu0
  %v2667 = vadd.f32 0.0, %v2666
  %v2668 = vpop.f32.mrf.mxu0
  %v2669 = vadd.f32 0.0, %v2668
  %2670 = vmatmul.bf16.gmra.mxu0 %v147
  %v2671 = vpop.f32.mrf.mxu0
  %v2672 = vadd.f32 0.0, %v2671
  %v2673 = vpop.f32.mrf.mxu0
  %v2674 = vadd.f32 0.0, %v2673
  %2675 = vdwg.mxu0
  %2676 = vmatpush.bf16.msra.mxu0 0
  %2677 = vmatpush.bf16.msra.mxu0 0
  %2678 = vmatpush.bf16.msra.mxu0 0
  %2679 = vmatpush.bf16.msra.mxu0 0
  %2680 = vmatpush.bf16.msra.mxu0 %v2451
  %2681 = vmatpush.bf16.msra.mxu0 %v2394
  %2682 = vmatpush.bf16.msra.mxu0 %v2390
  %2683 = vmatpush.bf16.msra.mxu0 %v2386
  %2684 = vmatmul.bf16.gmra.mxu0 %v388
  %v2685 = vpop.f32.mrf.mxu0
  %v2686 = vadd.f32 %v2642, %v2685
  %v2687 = vpop.f32.mrf.mxu0
  %v2688 = vadd.f32 %v2644, %v2687
  %2689 = vmatmul.bf16.gmra.mxu0 %v391
  %v2690 = vpop.f32.mrf.mxu0
  %v2691 = vadd.f32 %v2647, %v2690
  %v2692 = vpop.f32.mrf.mxu0
  %v2693 = vadd.f32 %v2649, %v2692
  %2694 = vmatmul.bf16.gmra.mxu0 %v394
  %v2695 = vpop.f32.mrf.mxu0
  %v2696 = vadd.f32 %v2652, %v2695
  %v2697 = vpop.f32.mrf.mxu0
  %v2698 = vadd.f32 %v2654, %v2697
  %2699 = vmatmul.bf16.gmra.mxu0 %v397
  %v2700 = vpop.f32.mrf.mxu0
  %v2701 = vadd.f32 %v2657, %v2700
  %v2702 = vpop.f32.mrf.mxu0
  %v2703 = vadd.f32 %v2659, %v2702
  %2704 = vmatmul.bf16.gmra.mxu0 %v400
  %v2705 = vpop.f32.mrf.mxu0
  %v2706 = vadd.f32 %v2662, %v2705
  %v2707 = vpop.f32.mrf.mxu0
  %v2708 = vadd.f32 %v2664, %v2707
  %2709 = vmatmul.bf16.gmra.mxu0 %v403
  %v2710 = vpop.f32.mrf.mxu0
  %v2711 = vadd.f32 %v2667, %v2710
  %v2712 = vpop.f32.mrf.mxu0
  %v2713 = vadd.f32 %v2669, %v2712
  %2714 = vmatmul.bf16.gmra.mxu0 %v406
  %v2715 = vpop.f32.mrf.mxu0
  %v2716 = vadd.f32 %v2672, %v2715
  %v2717 = vpop.f32.mrf.mxu0
  %v2718 = vadd.f32 %v2674, %v2717
  %2719 = vdwg.mxu0
  %2720 = vmatpush.bf16.msra.mxu0 %v2383
  %2721 = vmatpush.bf16.msra.mxu0 %v2379
  %2722 = vmatpush.bf16.msra.mxu0 %v2375
  %2723 = vmatpush.bf16.msra.mxu0 %v2371
  %2724 = vmatpush.bf16.msra.mxu0 %v2367
  %2725 = vmatpush.bf16.msra.mxu0 %v2363
  %2726 = vmatpush.bf16.msra.mxu0 %v2359
  %2727 = vmatpush.bf16.msra.mxu0 %v2355
  %2728 = vmatmul.bf16.gmra.mxu0 %v135
  %v2729 = vpop.f32.mrf.mxu0
  %v2730 = vadd.f32 0.0, %v2729
  %v2731 = vpop.f32.mrf.mxu0
  %v2732 = vadd.f32 0.0, %v2731
  %2733 = vmatmul.bf16.gmra.mxu0 %v137
  %v2734 = vpop.f32.mrf.mxu0
  %v2735 = vadd.f32 0.0, %v2734
  %v2736 = vpop.f32.mrf.mxu0
  %v2737 = vadd.f32 0.0, %v2736
  %2738 = vmatmul.bf16.gmra.mxu0 %v139
  %v2739 = vpop.f32.mrf.mxu0
  %v2740 = vadd.f32 0.0, %v2739
  %v2741 = vpop.f32.mrf.mxu0
  %v2742 = vadd.f32 0.0, %v2741
  %2743 = vmatmul.bf16.gmra.mxu0 %v141
  %v2744 = vpop.f32.mrf.mxu0
  %v2745 = vadd.f32 0.0, %v2744
  %v2746 = vpop.f32.mrf.mxu0
  %v2747 = vadd.f32 0.0, %v2746
  %2748 = vmatmul.bf16.gmra.mxu0 %v143
  %v2749 = vpop.f32.mrf.mxu0
  %v2750 = vadd.f32 0.0, %v2749
  %v2751 = vpop.f32.mrf.mxu0
  %v2752 = vadd.f32 0.0, %v2751
  %2753 = vmatmul.bf16.gmra.mxu0 %v145
  %v2754 = vpop.f32.mrf.mxu0
  %v2755 = vadd.f32 0.0, %v2754
  %v2756 = vpop.f32.mrf.mxu0
  %v2757 = vadd.f32 0.0, %v2756
  %2758 = vmatmul.bf16.gmra.mxu0 %v147
  %v2759 = vpop.f32.mrf.mxu0
  %v2760 = vadd.f32 0.0, %v2759
  %v2761 = vpop.f32.mrf.mxu0
  %v2762 = vadd.f32 0.0, %v2761
  %2763 = vdwg.mxu0
  %2764 = vmatpush.bf16.msra.mxu0 0
  %2765 = vmatpush.bf16.msra.mxu0 0
  %2766 = vmatpush.bf16.msra.mxu0 0
  %2767 = vmatpush.bf16.msra.mxu0 0
  %2768 = vmatpush.bf16.msra.mxu0 %v2454
  %2769 = vmatpush.bf16.msra.mxu0 %v2395
  %2770 = vmatpush.bf16.msra.mxu0 %v2391
  %2771 = vmatpush.bf16.msra.mxu0 %v2387
  %2772 = vmatmul.bf16.gmra.mxu0 %v388
  %v2773 = vpop.f32.mrf.mxu0
  %v2774 = vadd.f32 %v2730, %v2773
  %v2775 = vpop.f32.mrf.mxu0
  %v2776 = vadd.f32 %v2732, %v2775
  %2777 = vmatmul.bf16.gmra.mxu0 %v391
  %v2778 = vpop.f32.mrf.mxu0
  %v2779 = vadd.f32 %v2735, %v2778
  %v2780 = vpop.f32.mrf.mxu0
  %v2781 = vadd.f32 %v2737, %v2780
  %2782 = vmatmul.bf16.gmra.mxu0 %v394
  %v2783 = vpop.f32.mrf.mxu0
  %v2784 = vadd.f32 %v2740, %v2783
  %v2785 = vpop.f32.mrf.mxu0
  %v2786 = vadd.f32 %v2742, %v2785
  %2787 = vmatmul.bf16.gmra.mxu0 %v397
  %v2788 = vpop.f32.mrf.mxu0
  %v2789 = vadd.f32 %v2745, %v2788
  %v2790 = vpop.f32.mrf.mxu0
  %v2791 = vadd.f32 %v2747, %v2790
  %2792 = vmatmul.bf16.gmra.mxu0 %v400
  %v2793 = vpop.f32.mrf.mxu0
  %v2794 = vadd.f32 %v2750, %v2793
  %v2795 = vpop.f32.mrf.mxu0
  %v2796 = vadd.f32 %v2752, %v2795
  %2797 = vmatmul.bf16.gmra.mxu0 %v403
  %v2798 = vpop.f32.mrf.mxu0
  %v2799 = vadd.f32 %v2755, %v2798
  %v2800 = vpop.f32.mrf.mxu0
  %v2801 = vadd.f32 %v2757, %v2800
  %2802 = vmatmul.bf16.gmra.mxu0 %v406
  %v2803 = vpop.f32.mrf.mxu0
  %v2804 = vadd.f32 %v2760, %v2803
  %v2805 = vpop.f32.mrf.mxu0
  %v2806 = vadd.f32 %v2762, %v2805
  %2807 = vdwg.mxu0
  %v2808 = vmax.f32 %v2111, %v2510
  %v2809 = vmax.f32 %v2112, %v2598
  %v2810 = vmax.f32 %v2113, %v2686
  %v2811 = vmax.f32 %v2114, %v2774
  %v2812 = vmax.f32 %v2115, %v2512
  %v2813 = vmax.f32 %v2116, %v2600
  %v2814 = vmax.f32 %v2117, %v2688
  %v2815 = vmax.f32 %v2118, %v2776
  %v2816 = vmax.f32 %v2119, %v2515
  %v2817 = vmax.f32 %v2120, %v2603
  %v2818 = vmax.f32 %v2121, %v2691
  %v2819 = vmax.f32 %v2122, %v2779
  %v2820 = vmax.f32 %v2123, %v2517
  %v2821 = vmax.f32 %v2124, %v2605
  %v2822 = vmax.f32 %v2125, %v2693
  %v2823 = vmax.f32 %v2126, %v2781
  %v2824 = vmax.f32 %v2127, %v2520
  %v2825 = vmax.f32 %v2128, %v2608
  %v2826 = vmax.f32 %v2129, %v2696
  %v2827 = vmax.f32 %v2130, %v2784
  %v2828 = vmax.f32 %v2131, %v2522
  %v2829 = vmax.f32 %v2132, %v2610
  %v2830 = vmax.f32 %v2133, %v2698
  %v2831 = vmax.f32 %v2134, %v2786
  %v2832 = vmax.f32 %v2135, %v2525
  %v2833 = vmax.f32 %v2136, %v2613
  %v2834 = vmax.f32 %v2137, %v2701
  %v2835 = vmax.f32 %v2138, %v2789
  %v2836 = vmax.f32 %v2139, %v2527
  %v2837 = vmax.f32 %v2140, %v2615
  %v2838 = vmax.f32 %v2141, %v2703
  %v2839 = vmax.f32 %v2142, %v2791
  %v2840 = vmax.f32 %v2143, %v2530
  %v2841 = vmax.f32 %v2144, %v2618
  %v2842 = vmax.f32 %v2145, %v2706
  %v2843 = vmax.f32 %v2146, %v2794
  %v2844 = vmax.f32 %v2147, %v2532
  %v2845 = vmax.f32 %v2148, %v2620
  %v2846 = vmax.f32 %v2149, %v2708
  %v2847 = vmax.f32 %v2150, %v2796
  %v2848 = vmax.f32 %v2151, %v2535
  %v2849 = vmax.f32 %v2152, %v2623
  %v2850 = vmax.f32 %v2153, %v2711
  %v2851 = vmax.f32 %v2154, %v2799
  %v2852 = vmax.f32 %v2155, %v2537
  %v2853 = vmax.f32 %v2156, %v2625
  %v2854 = vmax.f32 %v2157, %v2713
  %v2855 = vmax.f32 %v2158, %v2801
  %v2856 = vmax.f32 %v2159, %v2540
  %v2857 = vmax.f32 %v2160, %v2628
  %v2858 = vmax.f32 %v2161, %v2716
  %v2859 = vmax.f32 %v2162, %v2804
  %v2860 = vmax.f32 %v2163, %v2542
  %v2861 = vmax.f32 %v2164, %v2630
  %v2862 = vmax.f32 %v2165, %v2718
  %v2863 = vmax.f32 %v2166, %v2806
  %v2864 = vld [vmem:[%s2] sm:$0xf]
  %v2866 = vperm.slane %v2864, 0
  %v2867 = vperm.slane %v2864, 1
  %v2868 = vperm.slane %v2864, 2
  %v2869 = vperm.slane %v2864, 3
  %v2874 = vadd.f32 %v2808, %v2866
  %v2875 = vadd.f32 %v2809, %v2867
  %v2876 = vadd.f32 %v2810, %v2868
  %v2877 = vadd.f32 %v2811, %v2869
  %v2878 = vadd.f32 %v2812, %v2866
  %v2879 = vadd.f32 %v2813, %v2867
  %v2880 = vadd.f32 %v2814, %v2868
  %v2881 = vadd.f32 %v2815, %v2869
  %v2882 = vadd.f32 %v2816, %v2866
  %v2883 = vadd.f32 %v2817, %v2867
  %v2884 = vadd.f32 %v2818, %v2868
  %v2885 = vadd.f32 %v2819, %v2869
  %v2886 = vadd.f32 %v2820, %v2866
  %v2887 = vadd.f32 %v2821, %v2867
  %v2888 = vadd.f32 %v2822, %v2868
  %v2889 = vadd.f32 %v2823, %v2869
  %v2890 = vadd.f32 %v2824, %v2866
  %v2891 = vadd.f32 %v2825, %v2867
  %v2892 = vadd.f32 %v2826, %v2868
  %v2893 = vadd.f32 %v2827, %v2869
  %v2894 = vadd.f32 %v2828, %v2866
  %v2895 = vadd.f32 %v2829, %v2867
  %v2896 = vadd.f32 %v2830, %v2868
  %v2897 = vadd.f32 %v2831, %v2869
  %v2898 = vadd.f32 %v2832, %v2866
  %v2899 = vadd.f32 %v2833, %v2867
  %v2900 = vadd.f32 %v2834, %v2868
  %v2901 = vadd.f32 %v2835, %v2869
  %v2902 = vadd.f32 %v2836, %v2866
  %v2903 = vadd.f32 %v2837, %v2867
  %v2904 = vadd.f32 %v2838, %v2868
  %v2905 = vadd.f32 %v2839, %v2869
  %v2906 = vadd.f32 %v2840, %v2866
  %v2907 = vadd.f32 %v2841, %v2867
  %v2908 = vadd.f32 %v2842, %v2868
  %v2909 = vadd.f32 %v2843, %v2869
  %v2910 = vadd.f32 %v2844, %v2866
  %v2911 = vadd.f32 %v2845, %v2867
  %v2912 = vadd.f32 %v2846, %v2868
  %v2913 = vadd.f32 %v2847, %v2869
  %v2914 = vadd.f32 %v2848, %v2866
  %v2915 = vadd.f32 %v2849, %v2867
  %v2916 = vadd.f32 %v2850, %v2868
  %v2917 = vadd.f32 %v2851, %v2869
  %v2918 = vadd.f32 %v2852, %v2866
  %v2919 = vadd.f32 %v2853, %v2867
  %v2920 = vadd.f32 %v2854, %v2868
  %v2921 = vadd.f32 %v2855, %v2869
  %v2922 = vadd.f32 %v2856, %v2866
  %v2923 = vadd.f32 %v2857, %v2867
  %v2924 = vadd.f32 %v2858, %v2868
  %v2925 = vadd.f32 %v2859, %v2869
  %v2926 = vadd.f32 %v2860, %v2866
  %v2927 = vadd.f32 %v2861, %v2867
  %v2928 = vadd.f32 %v2862, %v2868
  %v2929 = vadd.f32 %v2863, %v2869
  %v2930 = vmax.f32 %v2874, 0.0
  %v2931 = vmax.f32 %v2875, 0.0
  %v2932 = vmax.f32 %v2876, 0.0
  %v2933 = vmax.f32 %v2877, 0.0
  %v2934 = vmax.f32 %v2878, 0.0
  %v2935 = vmax.f32 %v2879, 0.0
  %v2936 = vmax.f32 %v2880, 0.0
  %v2937 = vmax.f32 %v2881, 0.0
  %v2938 = vmax.f32 %v2882, 0.0
  %v2939 = vmax.f32 %v2883, 0.0
  %v2940 = vmax.f32 %v2884, 0.0
  %v2941 = vmax.f32 %v2885, 0.0
  %v2942 = vmax.f32 %v2886, 0.0
  %v2943 = vmax.f32 %v2887, 0.0
  %v2944 = vmax.f32 %v2888, 0.0
  %v2945 = vmax.f32 %v2889, 0.0
  %v2946 = vmax.f32 %v2890, 0.0
  %v2947 = vmax.f32 %v2891, 0.0
  %v2948 = vmax.f32 %v2892, 0.0
  %v2949 = vmax.f32 %v2893, 0.0
  %v2950 = vmax.f32 %v2894, 0.0
  %v2951 = vmax.f32 %v2895, 0.0
  %v2952 = vmax.f32 %v2896, 0.0
  %v2953 = vmax.f32 %v2897, 0.0
  %v2954 = vmax.f32 %v2898, 0.0
  %v2955 = vmax.f32 %v2899, 0.0
  %v2956 = vmax.f32 %v2900, 0.0
  %v2957 = vmax.f32 %v2901, 0.0
  %v2958 = vmax.f32 %v2902, 0.0
  %v2959 = vmax.f32 %v2903, 0.0
  %v2960 = vmax.f32 %v2904, 0.0
  %v2961 = vmax.f32 %v2905, 0.0
  %v2962 = vmax.f32 %v2906, 0.0
  %v2963 = vmax.f32 %v2907, 0.0
  %v2964 = vmax.f32 %v2908, 0.0
  %v2965 = vmax.f32 %v2909, 0.0
  %v2966 = vmax.f32 %v2910, 0.0
  %v2967 = vmax.f32 %v2911, 0.0
  %v2968 = vmax.f32 %v2912, 0.0
  %v2969 = vmax.f32 %v2913, 0.0
  %v2970 = vmax.f32 %v2914, 0.0
  %v2971 = vmax.f32 %v2915, 0.0
  %v2972 = vmax.f32 %v2916, 0.0
  %v2973 = vmax.f32 %v2917, 0.0
  %v2974 = vmax.f32 %v2918, 0.0
  %v2975 = vmax.f32 %v2919, 0.0
  %v2976 = vmax.f32 %v2920, 0.0
  %v2977 = vmax.f32 %v2921, 0.0
  %v2978 = vmax.f32 %v2922, 0.0
  %v2979 = vmax.f32 %v2923, 0.0
  %v2980 = vmax.f32 %v2924, 0.0
  %v2981 = vmax.f32 %v2925, 0.0
  %v2982 = vmax.f32 %v2926, 0.0
  %v2983 = vmax.f32 %v2927, 0.0
  %v2984 = vmax.f32 %v2928, 0.0
  %v2985 = vmax.f32 %v2929, 0.0
  %3022 = vrot.lane.b32.xlu0 %v2931, 32
  %v3023 = vpop.permute.xlu0 %3022
  %3024 = vrot.lane.b32.xlu0 %v2932, 32
  %v3025 = vpop.permute.xlu0 %3024
  %3026 = vrot.lane.b32.xlu0 %v2933, 32
  %v3027 = vpop.permute.xlu0 %3026
  %3028 = vrot.lane.b32.xlu0 %v2935, 32
  %v3029 = vpop.permute.xlu0 %3028
  %3030 = vrot.lane.b32.xlu0 %v2936, 32
  %v3031 = vpop.permute.xlu0 %3030
  %3032 = vrot.lane.b32.xlu0 %v2937, 32
  %v3033 = vpop.permute.xlu0 %3032
  %3034 = vrot.lane.b32.xlu0 %v2939, 32
  %v3035 = vpop.permute.xlu0 %3034
  %3036 = vrot.lane.b32.xlu0 %v2940, 32
  %v3037 = vpop.permute.xlu0 %3036
  %3038 = vrot.lane.b32.xlu0 %v2941, 32
  %v3039 = vpop.permute.xlu0 %3038
  %3040 = vrot.lane.b32.xlu0 %v2943, 32
  %v3041 = vpop.permute.xlu0 %3040
  %3042 = vrot.lane.b32.xlu0 %v2944, 32
  %v3043 = vpop.permute.xlu0 %3042
  %3044 = vrot.lane.b32.xlu0 %v2945, 32
  %v3045 = vpop.permute.xlu0 %3044
  %3046 = vrot.lane.b32.xlu0 %v2947, 32
  %v3047 = vpop.permute.xlu0 %3046
  %3048 = vrot.lane.b32.xlu0 %v2948, 32
  %v3049 = vpop.permute.xlu0 %3048
  %3050 = vrot.lane.b32.xlu0 %v2949, 32
  %v3051 = vpop.permute.xlu0 %3050
  %3052 = vrot.lane.b32.xlu0 %v2951, 32
  %v3053 = vpop.permute.xlu0 %3052
  %3054 = vrot.lane.b32.xlu0 %v2952, 32
  %v3055 = vpop.permute.xlu0 %3054
  %3056 = vrot.lane.b32.xlu0 %v2953, 32
  %v3057 = vpop.permute.xlu0 %3056
  %3058 = vrot.lane.b32.xlu0 %v2955, 32
  %v3059 = vpop.permute.xlu0 %3058
  %3060 = vrot.lane.b32.xlu0 %v2956, 32
  %v3061 = vpop.permute.xlu0 %3060
  %3062 = vrot.lane.b32.xlu0 %v2957, 32
  %v3063 = vpop.permute.xlu0 %3062
  %3064 = vrot.lane.b32.xlu0 %v2959, 32
  %v3065 = vpop.permute.xlu0 %3064
  %3066 = vrot.lane.b32.xlu0 %v2960, 32
  %v3067 = vpop.permute.xlu0 %3066
  %3068 = vrot.lane.b32.xlu0 %v2961, 32
  %v3069 = vpop.permute.xlu0 %3068
  %3070 = vrot.lane.b32.xlu0 %v2963, 32
  %v3071 = vpop.permute.xlu0 %3070
  %3072 = vrot.lane.b32.xlu0 %v2964, 32
  %v3073 = vpop.permute.xlu0 %3072
  %3074 = vrot.lane.b32.xlu0 %v2965, 32
  %v3075 = vpop.permute.xlu0 %3074
  %3076 = vrot.lane.b32.xlu0 %v2967, 32
  %v3077 = vpop.permute.xlu0 %3076
  %3078 = vrot.lane.b32.xlu0 %v2968, 32
  %v3079 = vpop.permute.xlu0 %3078
  %3080 = vrot.lane.b32.xlu0 %v2969, 32
  %v3081 = vpop.permute.xlu0 %3080
  %3082 = vrot.lane.b32.xlu0 %v2971, 32
  %v3083 = vpop.permute.xlu0 %3082
  %3084 = vrot.lane.b32.xlu0 %v2972, 32
  %v3085 = vpop.permute.xlu0 %3084
  %3086 = vrot.lane.b32.xlu0 %v2973, 32
  %v3087 = vpop.permute.xlu0 %3086
  %3088 = vrot.lane.b32.xlu0 %v2975, 32
  %v3089 = vpop.permute.xlu0 %3088
  %3090 = vrot.lane.b32.xlu0 %v2976, 32
  %v3091 = vpop.permute.xlu0 %3090
  %3092 = vrot.lane.b32.xlu0 %v2977, 32
  %v3093 = vpop.permute.xlu0 %3092
  %vm3094 = vcmask 261120
  %v3095 = vsel %vm3094, %v3023, %v3025
  %v3096 = vsel %vm3094, %v3025, %v3027
  %v3097 = vsel %vm3094, %v3029, %v3031
  %v3098 = vsel %vm3094, %v3031, %v3033
  %v3099 = vsel %vm3094, %v3035, %v3037
  %v3100 = vsel %vm3094, %v3037, %v3039
  %v3101 = vsel %vm3094, %v3041, %v3043
  %v3102 = vsel %vm3094, %v3043, %v3045
  %v3103 = vsel %vm3094, %v3047, %v3049
  %v3104 = vsel %vm3094, %v3049, %v3051
  %v3105 = vsel %vm3094, %v3053, %v3055
  %v3106 = vsel %vm3094, %v3055, %v3057
  %v3107 = vsel %vm3094, %v3059, %v3061
  %v3108 = vsel %vm3094, %v3061, %v3063
  %v3109 = vsel %vm3094, %v3065, %v3067
  %v3110 = vsel %vm3094, %v3067, %v3069
  %v3111 = vsel %vm3094, %v3071, %v3073
  %v3112 = vsel %vm3094, %v3073, %v3075
  %v3113 = vsel %vm3094, %v3077, %v3079
  %v3114 = vsel %vm3094, %v3079, %v3081
  %v3115 = vsel %vm3094, %v3083, %v3085
  %v3116 = vsel %vm3094, %v3085, %v3087
  %v3117 = vsel %vm3094, %v3089, %v3091
  %v3118 = vsel %vm3094, %v3091, %v3093
  %3159 = vrot.lane.b32.xlu0 %v2930, 96
  %v3160 = vpop.permute.xlu0 %3159
  %3161 = vrot.lane.b32.xlu0 %v2931, 96
  %v3162 = vpop.permute.xlu0 %3161
  %3163 = vrot.lane.b32.xlu0 %v2934, 96
  %v3164 = vpop.permute.xlu0 %3163
  %3165 = vrot.lane.b32.xlu0 %v2935, 96
  %v3166 = vpop.permute.xlu0 %3165
  %3167 = vrot.lane.b32.xlu0 %v2938, 96
  %v3168 = vpop.permute.xlu0 %3167
  %3169 = vrot.lane.b32.xlu0 %v2939, 96
  %v3170 = vpop.permute.xlu0 %3169
  %3171 = vrot.lane.b32.xlu0 %v2942, 96
  %v3172 = vpop.permute.xlu0 %3171
  %3173 = vrot.lane.b32.xlu0 %v2943, 96
  %v3174 = vpop.permute.xlu0 %3173
  %3175 = vrot.lane.b32.xlu0 %v2946, 96
  %v3176 = vpop.permute.xlu0 %3175
  %3177 = vrot.lane.b32.xlu0 %v2947, 96
  %v3178 = vpop.permute.xlu0 %3177
  %3179 = vrot.lane.b32.xlu0 %v2950, 96
  %v3180 = vpop.permute.xlu0 %3179
  %3181 = vrot.lane.b32.xlu0 %v2951, 96
  %v3182 = vpop.permute.xlu0 %3181
  %3183 = vrot.lane.b32.xlu0 %v2954, 96
  %v3184 = vpop.permute.xlu0 %3183
  %3185 = vrot.lane.b32.xlu0 %v2955, 96
  %v3186 = vpop.permute.xlu0 %3185
  %3187 = vrot.lane.b32.xlu0 %v2958, 96
  %v3188 = vpop.permute.xlu0 %3187
  %3189 = vrot.lane.b32.xlu0 %v2959, 96
  %v3190 = vpop.permute.xlu0 %3189
  %3191 = vrot.lane.b32.xlu0 %v2962, 96
  %v3192 = vpop.permute.xlu0 %3191
  %3193 = vrot.lane.b32.xlu0 %v2963, 96
  %v3194 = vpop.permute.xlu0 %3193
  %3195 = vrot.lane.b32.xlu0 %v2966, 96
  %v3196 = vpop.permute.xlu0 %3195
  %3197 = vrot.lane.b32.xlu0 %v2967, 96
  %v3198 = vpop.permute.xlu0 %3197
  %3199 = vrot.lane.b32.xlu0 %v2970, 96
  %v3200 = vpop.permute.xlu0 %3199
  %3201 = vrot.lane.b32.xlu0 %v2971, 96
  %v3202 = vpop.permute.xlu0 %3201
  %3203 = vrot.lane.b32.xlu0 %v2974, 96
  %v3204 = vpop.permute.xlu0 %3203
  %3205 = vrot.lane.b32.xlu0 %v2975, 96
  %v3206 = vpop.permute.xlu0 %3205
  %3207 = vrot.lane.b32.xlu0 %v2978, 96
  %v3208 = vpop.permute.xlu0 %3207
  %3209 = vrot.lane.b32.xlu0 %v2979, 96
  %v3210 = vpop.permute.xlu0 %3209
  %3211 = vrot.lane.b32.xlu0 %v2982, 96
  %v3212 = vpop.permute.xlu0 %3211
  %3213 = vrot.lane.b32.xlu0 %v2983, 96
  %v3214 = vpop.permute.xlu0 %3213
  %vm3215 = vcmask 785408
  %v3216 = vsel %vm3215, %v3160, %v3162
  %v3217 = vsel %vm3215, %v3164, %v3166
  %v3218 = vsel %vm3215, %v3168, %v3170
  %v3219 = vsel %vm3215, %v3172, %v3174
  %v3220 = vsel %vm3215, %v3176, %v3178
  %v3221 = vsel %vm3215, %v3180, %v3182
  %v3222 = vsel %vm3215, %v3184, %v3186
  %v3223 = vsel %vm3215, %v3188, %v3190
  %v3224 = vsel %vm3215, %v3192, %v3194
  %v3225 = vsel %vm3215, %v3196, %v3198
  %v3226 = vsel %vm3215, %v3200, %v3202
  %v3227 = vsel %vm3215, %v3204, %v3206
  %v3228 = vsel %vm3215, %v3208, %v3210
  %v3229 = vsel %vm3215, %v3212, %v3214
  %3276 = vrot.lane.b32.xlu0 %v2932, 96
  %v3277 = vpop.permute.xlu0 %3276
  %3278 = vrot.lane.b32.xlu0 %v2933, 96
  %v3279 = vpop.permute.xlu0 %3278
  %3280 = vrot.lane.b32.xlu0 %v2936, 96
  %v3281 = vpop.permute.xlu0 %3280
  %3282 = vrot.lane.b32.xlu0 %v2937, 96
  %v3283 = vpop.permute.xlu0 %3282
  %3284 = vrot.lane.b32.xlu0 %v2940, 96
  %v3285 = vpop.permute.xlu0 %3284
  %3286 = vrot.lane.b32.xlu0 %v2941, 96
  %v3287 = vpop.permute.xlu0 %3286
  %3288 = vrot.lane.b32.xlu0 %v2944, 96
  %v3289 = vpop.permute.xlu0 %3288
  %3290 = vrot.lane.b32.xlu0 %v2945, 96
  %v3291 = vpop.permute.xlu0 %3290
  %3292 = vrot.lane.b32.xlu0 %v2948, 96
  %v3293 = vpop.permute.xlu0 %3292
  %3294 = vrot.lane.b32.xlu0 %v2949, 96
  %v3295 = vpop.permute.xlu0 %3294
  %3296 = vrot.lane.b32.xlu0 %v2952, 96
  %v3297 = vpop.permute.xlu0 %3296
  %3298 = vrot.lane.b32.xlu0 %v2953, 96
  %v3299 = vpop.permute.xlu0 %3298
  %3300 = vrot.lane.b32.xlu0 %v2956, 96
  %v3301 = vpop.permute.xlu0 %3300
  %3302 = vrot.lane.b32.xlu0 %v2957, 96
  %v3303 = vpop.permute.xlu0 %3302
  %3304 = vrot.lane.b32.xlu0 %v2960, 96
  %v3305 = vpop.permute.xlu0 %3304
  %3306 = vrot.lane.b32.xlu0 %v2961, 96
  %v3307 = vpop.permute.xlu0 %3306
  %3308 = vrot.lane.b32.xlu0 %v2964, 96
  %v3309 = vpop.permute.xlu0 %3308
  %3310 = vrot.lane.b32.xlu0 %v2965, 96
  %v3311 = vpop.permute.xlu0 %3310
  %3312 = vrot.lane.b32.xlu0 %v2968, 96
  %v3313 = vpop.permute.xlu0 %3312
  %3314 = vrot.lane.b32.xlu0 %v2969, 96
  %v3315 = vpop.permute.xlu0 %3314
  %3316 = vrot.lane.b32.xlu0 %v2972, 96
  %v3317 = vpop.permute.xlu0 %3316
  %3318 = vrot.lane.b32.xlu0 %v2973, 96
  %v3319 = vpop.permute.xlu0 %3318
  %3320 = vrot.lane.b32.xlu0 %v2976, 96
  %v3321 = vpop.permute.xlu0 %3320
  %3322 = vrot.lane.b32.xlu0 %v2977, 96
  %v3323 = vpop.permute.xlu0 %3322
  %3324 = vrot.lane.b32.xlu0 %v2980, 96
  %v3325 = vpop.permute.xlu0 %3324
  %3326 = vrot.lane.b32.xlu0 %v2981, 96
  %v3327 = vpop.permute.xlu0 %3326
  %3328 = vrot.lane.b32.xlu0 %v2984, 96
  %v3329 = vpop.permute.xlu0 %3328
  %3330 = vrot.lane.b32.xlu0 %v2985, 96
  %v3331 = vpop.permute.xlu0 %3330
  %v3332 = vsel %vm3215, %v3162, %v3277
  %v3333 = vsel %vm3215, %v3277, %v3279
  %v3334 = vsel %vm3215, %v3166, %v3281
  %v3335 = vsel %vm3215, %v3281, %v3283
  %v3336 = vsel %vm3215, %v3170, %v3285
  %v3337 = vsel %vm3215, %v3285, %v3287
  %v3338 = vsel %vm3215, %v3174, %v3289
  %v3339 = vsel %vm3215, %v3289, %v3291
  %v3340 = vsel %vm3215, %v3178, %v3293
  %v3341 = vsel %vm3215, %v3293, %v3295
  %v3342 = vsel %vm3215, %v3182, %v3297
  %v3343 = vsel %vm3215, %v3297, %v3299
  %v3344 = vsel %vm3215, %v3186, %v3301
  %v3345 = vsel %vm3215, %v3301, %v3303
  %v3346 = vsel %vm3215, %v3190, %v3305
  %v3347 = vsel %vm3215, %v3305, %v3307
  %v3348 = vsel %vm3215, %v3194, %v3309
  %v3349 = vsel %vm3215, %v3309, %v3311
  %v3350 = vsel %vm3215, %v3198, %v3313
  %v3351 = vsel %vm3215, %v3313, %v3315
  %v3352 = vsel %vm3215, %v3202, %v3317
  %v3353 = vsel %vm3215, %v3317, %v3319
  %v3354 = vsel %vm3215, %v3206, %v3321
  %v3355 = vsel %vm3215, %v3321, %v3323
  %v3356 = vsel %vm3215, %v3210, %v3325
  %v3357 = vsel %vm3215, %v3325, %v3327
  %v3358 = vsel %vm3215, %v3214, %v3329
  %v3359 = vsel %vm3215, %v3329, %v3331
  %3403 = vrot.lane.b32.xlu0 %v2938, 32
  %v3404 = vpop.permute.xlu0 %3403
  %3405 = vrot.lane.b32.xlu0 %v2942, 32
  %v3406 = vpop.permute.xlu0 %3405
  %3407 = vrot.lane.b32.xlu0 %v2946, 32
  %v3408 = vpop.permute.xlu0 %3407
  %3409 = vrot.lane.b32.xlu0 %v2950, 32
  %v3410 = vpop.permute.xlu0 %3409
  %3411 = vrot.lane.b32.xlu0 %v2954, 32
  %v3412 = vpop.permute.xlu0 %3411
  %3413 = vrot.lane.b32.xlu0 %v2958, 32
  %v3414 = vpop.permute.xlu0 %3413
  %3415 = vrot.lane.b32.xlu0 %v2962, 32
  %v3416 = vpop.permute.xlu0 %3415
  %3417 = vrot.lane.b32.xlu0 %v2966, 32
  %v3418 = vpop.permute.xlu0 %3417
  %3419 = vrot.lane.b32.xlu0 %v2970, 32
  %v3420 = vpop.permute.xlu0 %3419
  %3421 = vrot.lane.b32.xlu0 %v2974, 32
  %v3422 = vpop.permute.xlu0 %3421
  %3423 = vrot.lane.b32.xlu0 %v2978, 32
  %v3424 = vpop.permute.xlu0 %3423
  %3425 = vrot.lane.b32.xlu0 %v2979, 32
  %v3426 = vpop.permute.xlu0 %3425
  %3427 = vrot.lane.b32.xlu0 %v2982, 32
  %v3428 = vpop.permute.xlu0 %3427
  %3429 = vrot.lane.b32.xlu0 %v2983, 32
  %v3430 = vpop.permute.xlu0 %3429
  %3431 = vrot.lane.b32.xlu0 0.0, 32
  %v3432 = vpop.permute.xlu0 %3431
  %v3433 = vsel %vm3094, %v3404, %v3035
  %v3434 = vsel %vm3094, %v3406, %v3041
  %v3435 = vsel %vm3094, %v3408, %v3047
  %v3436 = vsel %vm3094, %v3410, %v3053
  %v3437 = vsel %vm3094, %v3412, %v3059
  %v3438 = vsel %vm3094, %v3414, %v3065
  %v3439 = vsel %vm3094, %v3416, %v3071
  %v3440 = vsel %vm3094, %v3418, %v3077
  %v3441 = vsel %vm3094, %v3420, %v3083
  %v3442 = vsel %vm3094, %v3422, %v3089
  %v3443 = vsel %vm3094, %v3424, %v3426
  %v3444 = vsel %vm3094, %v3428, %v3430
  %v3470 = vsel %vm3215, 0.0, %v3160
  %v3471 = vsel %vm3215, 0.0, %v3164
  %v3472 = vsel %vm3215, %v3096, %v3168
  %v3473 = vsel %vm3215, %v3098, %v3172
  %v3474 = vsel %vm3215, %v3100, %v3176
  %v3475 = vsel %vm3215, %v3102, %v3180
  %v3476 = vsel %vm3215, %v3104, %v3184
  %v3477 = vsel %vm3215, %v3106, %v3188
  %v3478 = vsel %vm3215, %v3108, %v3192
  %v3479 = vsel %vm3215, %v3110, %v3196
  %v3480 = vsel %vm3215, %v3112, %v3200
  %v3481 = vsel %vm3215, %v3114, %v3204
  %v3482 = vsel %vm3215, %v3116, %v3208
  %v3483 = vsel %vm3215, %v3118, %v3212
  %vm3484 = vcmask 523264
  %v3485 = vsel %vm3484, %v3162, %v3332
  %v3486 = vsel %vm3484, %v3166, %v3334
  %v3487 = vsel %vm3484, %v3170, %v3336
  %v3488 = vsel %vm3484, %v3174, %v3338
  %v3489 = vsel %vm3484, %v3178, %v3340
  %v3490 = vsel %vm3484, %v3182, %v3342
  %v3491 = vsel %vm3484, %v3186, %v3344
  %v3492 = vsel %vm3484, %v3190, %v3346
  %v3493 = vsel %vm3484, %v3194, %v3348
  %v3494 = vsel %vm3484, %v3198, %v3350
  %v3495 = vsel %vm3484, %v3202, %v3352
  %v3496 = vsel %vm3484, %v3206, %v3354
  %v3497 = vsel %vm3484, %v3210, %v3356
  %v3498 = vsel %vm3484, %v3214, %v3358
  %v3499 = vsel %vm3094, %v3279, %v3404
  %v3500 = vsel %vm3094, %v3283, %v3406
  %v3501 = vsel %vm3094, %v3287, %v3408
  %v3502 = vsel %vm3094, %v3291, %v3410
  %v3503 = vsel %vm3094, %v3295, %v3412
  %v3504 = vsel %vm3094, %v3299, %v3414
  %v3505 = vsel %vm3094, %v3303, %v3416
  %v3506 = vsel %vm3094, %v3307, %v3418
  %v3507 = vsel %vm3094, %v3311, %v3420
  %v3508 = vsel %vm3094, %v3315, %v3422
  %v3509 = vsel %vm3094, %v3319, %v3424
  %v3510 = vsel %vm3094, %v3323, %v3428
  %v3511 = vsel %vm3094, %v3327, %v3432
  %v3512 = vsel %vm3094, %v3331, %v3432
  %v3513 = vpack.c.bf16 0.0, 0.0
  %v3514 = vpack.c.bf16 %v3471, %v3470
  %v3515 = vpack.c.bf16 %v3217, %v3216
  %v3516 = vpack.c.bf16 %v3486, %v3485
  %v3517 = vpack.c.bf16 %v3335, %v3333
  %v3518 = vpack.c.bf16 %v3500, %v3499
  %v3519 = vpack.c.bf16 %v3434, %v3433
  %v3520 = vpack.c.bf16 %v3097, %v3095
  %v3521 = vpack.c.bf16 %v3473, %v3472
  %v3522 = vpack.c.bf16 %v3219, %v3218
  %v3523 = vpack.c.bf16 %v3488, %v3487
  %v3524 = vpack.c.bf16 %v3339, %v3337
  %v3525 = vpack.c.bf16 %v3502, %v3501
  %v3526 = vpack.c.bf16 %v3436, %v3435
  %v3527 = vpack.c.bf16 %v3101, %v3099
  %v3528 = vpack.c.bf16 %v3475, %v3474
  %v3529 = vpack.c.bf16 %v3221, %v3220
  %v3530 = vpack.c.bf16 %v3490, %v3489
  %v3531 = vpack.c.bf16 %v3343, %v3341
  %v3532 = vpack.c.bf16 %v3504, %v3503
  %v3533 = vpack.c.bf16 %v3438, %v3437
  %v3534 = vpack.c.bf16 %v3105, %v3103
  %v3535 = vpack.c.bf16 %v3477, %v3476
  %v3536 = vpack.c.bf16 %v3223, %v3222
  %v3537 = vpack.c.bf16 %v3492, %v3491
  %v3538 = vpack.c.bf16 %v3347, %v3345
  %v3539 = vpack.c.bf16 %v3506, %v3505
  %v3540 = vpack.c.bf16 %v3440, %v3439
  %v3541 = vpack.c.bf16 %v3109, %v3107
  %v3542 = vpack.c.bf16 %v3479, %v3478
  %v3543 = vpack.c.bf16 %v3225, %v3224
  %v3544 = vpack.c.bf16 %v3494, %v3493
  %v3545 = vpack.c.bf16 %v3351, %v3349
  %v3546 = vpack.c.bf16 %v3508, %v3507
  %v3547 = vpack.c.bf16 %v3442, %v3441
  %v3548 = vpack.c.bf16 %v3113, %v3111
  %v3549 = vpack.c.bf16 %v3481, %v3480
  %v3550 = vpack.c.bf16 %v3227, %v3226
  %v3551 = vpack.c.bf16 %v3496, %v3495
  %v3552 = vpack.c.bf16 %v3355, %v3353
  %v3553 = vpack.c.bf16 %v3510, %v3509
  %v3554 = vpack.c.bf16 %v3444, %v3443
  %v3555 = vpack.c.bf16 %v3117, %v3115
  %v3556 = vpack.c.bf16 %v3483, %v3482
  %v3557 = vpack.c.bf16 %v3229, %v3228
  %v3558 = vpack.c.bf16 %v3498, %v3497
  %v3559 = vpack.c.bf16 %v3359, %v3357
  %v3560 = vpack.c.bf16 %v3512, %v3511
  %v3561 = vpack.c.bf16 %v3432, %v3432
  %v3562 = vld [vmem:[%s3] sm:$0xff]
  %v3563 = vld [vmem:[%s3 + $0x8] sm:$0xff]
  %v3564 = vld [vmem:[%s3 + $0x10] sm:$0xff]
  %v3565 = vld [vmem:[%s3 + $0x18] sm:$0xff]
  %v3566 = vld [vmem:[%s3 + $0x20] sm:$0xff]
  %v3567 = vld [vmem:[%s3 + $0x28] sm:$0xff]
  %v3568 = vld [vmem:[%s3 + $0x30] sm:$0xff]
  %v3569 = vld [vmem:[%s3 + $0x38] sm:$0xff]
  %v3570 = vld [vmem:[%s3 + $0x40] sm:$0xff]
  %v3571 = vld [vmem:[%s3 + $0x48] sm:$0xff]
  %v3572 = vld [vmem:[%s3 + $0x50] sm:$0xff]
  %v3573 = vld [vmem:[%s3 + $0x58] sm:$0xff]
  %v3574 = vld [vmem:[%s3 + $0x60] sm:$0xff]
  %v3575 = vld [vmem:[%s3 + $0x68] sm:$0xff]
  %v3576 = vld [vmem:[%s3 + $0x70] sm:$0xff]
  %v3577 = vld [vmem:[%s3 + $0x78] sm:$0xff]
  %v3578 = vld [vmem:[%s3 + $0x80] sm:$0xff]
  %v3579 = vld [vmem:[%s3 + $0x88] sm:$0xff]
  %v3580 = vld [vmem:[%s3 + $0x90] sm:$0xff]
  %v3581 = vld [vmem:[%s3 + $0x98] sm:$0xff]
  %v3582 = vld [vmem:[%s3 + $0xa0] sm:$0xff]
  %v3583 = vld [vmem:[%s3 + $0xa8] sm:$0xff]
  %v3584 = vld [vmem:[%s3 + $0xb0] sm:$0xff]
  %v3585 = vld [vmem:[%s3 + $0xb8] sm:$0xff]
  %v3586 = vld [vmem:[%s3 + $0xc0] sm:$0xff]
  %v3587 = vld [vmem:[%s3 + $0xc8] sm:$0xff]
  %v3588 = vld [vmem:[%s3 + $0xd0] sm:$0xff]
  %v3589 = vld [vmem:[%s3 + $0xd8] sm:$0xff]
  %v3590 = vld [vmem:[%s3 + $0xe0] sm:$0xff]
  %v3591 = vld [vmem:[%s3 + $0xe8] sm:$0xff]
  %v3592 = vld [vmem:[%s3 + $0xf0] sm:$0xff]
  %v3593 = vld [vmem:[%s3 + $0xf8] sm:$0xff]
  %v3594 = vld [vmem:[%s3 + $0x100] sm:$0xff]
  %v3595 = vld [vmem:[%s3 + $0x108] sm:$0xff]
  %v3596 = vld [vmem:[%s3 + $0x110] sm:$0xff]
  %v3597 = vld [vmem:[%s3 + $0x118] sm:$0xff]
  %v3598 = vld [vmem:[%s3 + $0x120] sm:$0xff]
  %v3599 = vld [vmem:[%s3 + $0x128] sm:$0xff]
  %v3600 = vld [vmem:[%s3 + $0x130] sm:$0xff]
  %v3601 = vld [vmem:[%s3 + $0x138] sm:$0xff]
  %v3602 = vld [vmem:[%s3 + $0x140] sm:$0xff]
  %v3603 = vld [vmem:[%s3 + $0x148] sm:$0xff]
  %v3604 = vld [vmem:[%s3 + $0x150] sm:$0xff]
  %v3605 = vld [vmem:[%s3 + $0x158] sm:$0xff]
  %v3606 = vld [vmem:[%s3 + $0x160] sm:$0xff]
  %v3607 = vld [vmem:[%s3 + $0x168] sm:$0xff]
  %v3608 = vld [vmem:[%s3 + $0x170] sm:$0xff]
  %v3609 = vld [vmem:[%s3 + $0x178] sm:$0xff]
  %v3610 = vld [vmem:[%s3 + $0x180] sm:$0xff]
  %v3611 = vld [vmem:[%s3 + $0x188] sm:$0xff]
  %v3612 = vld [vmem:[%s3 + $0x190] sm:$0xff]
  %v3613 = vld [vmem:[%s3 + $0x198] sm:$0xff]
  %v3614 = vld [vmem:[%s3 + $0x1a0] sm:$0xff]
  %v3615 = vld [vmem:[%s3 + $0x1a8] sm:$0xff]
  %v3616 = vld [vmem:[%s3 + $0x1b0] sm:$0xff]
  %v3617 = vld [vmem:[%s3 + $0x1b8] sm:$0xff]
  %v3618 = vld [vmem:[%s3 + $0x1c0] sm:$0xff]
  %v3619 = vld [vmem:[%s3 + $0x1c8] sm:$0xff]
  %v3620 = vld [vmem:[%s3 + $0x1d0] sm:$0xff]
  %v3621 = vld [vmem:[%s3 + $0x1d8] sm:$0xff]
  %v3622 = vld [vmem:[%s3 + $0x1e0] sm:$0xff]
  %v3623 = vld [vmem:[%s3 + $0x1e8] sm:$0xff]
  %v3624 = vld [vmem:[%s3 + $0x1f0] sm:$0xff]
  %v3625 = vld [vmem:[%s3 + $0x1f8] sm:$0xff]
  %v3626 = vld [vmem:[%s3 + $0x200] sm:$0xff]
  %v3627 = vld [vmem:[%s3 + $0x208] sm:$0xff]
  %v3628 = vld [vmem:[%s3 + $0x210] sm:$0xff]
  %v3629 = vld [vmem:[%s3 + $0x218] sm:$0xff]
  %v3630 = vld [vmem:[%s3 + $0x220] sm:$0xff]
  %v3631 = vld [vmem:[%s3 + $0x228] sm:$0xff]
  %v3632 = vld [vmem:[%s3 + $0x230] sm:$0xff]
  %v3633 = vld [vmem:[%s3 + $0x238] sm:$0xff]
  %v3634 = vld [vmem:[%s3 + $0x240] sm:$0xff]
  %v3635 = vld [vmem:[%s3 + $0x248] sm:$0xff]
  %v3636 = vld [vmem:[%s3 + $0x250] sm:$0xff]
  %v3637 = vld [vmem:[%s3 + $0x258] sm:$0xff]
  %v3638 = vld [vmem:[%s3 + $0x260] sm:$0xff]
  %v3639 = vld [vmem:[%s3 + $0x268] sm:$0xff]
  %v3640 = vld [vmem:[%s3 + $0x270] sm:$0xff]
  %v3641 = vld [vmem:[%s3 + $0x278] sm:$0xff]
  %v3642 = vld [vmem:[%s3 + $0x280] sm:$0xff]
  %v3643 = vld [vmem:[%s3 + $0x288] sm:$0xff]
  %v3644 = vld [vmem:[%s3 + $0x290] sm:$0xff]
  %v3645 = vld [vmem:[%s3 + $0x298] sm:$0xff]
  %v3646 = vld [vmem:[%s3 + $0x2a0] sm:$0xff]
  %v3647 = vld [vmem:[%s3 + $0x2a8] sm:$0xff]
  %v3648 = vld [vmem:[%s3 + $0x2b0] sm:$0xff]
  %v3649 = vld [vmem:[%s3 + $0x2b8] sm:$0xff]
  %v3650 = vld [vmem:[%s3 + $0x2c0] sm:$0xff]
  %v3651 = vld [vmem:[%s3 + $0x2c8] sm:$0xff]
  %v3652 = vld [vmem:[%s3 + $0x2d0] sm:$0xff]
  %v3653 = vld [vmem:[%s3 + $0x2d8] sm:$0xff]
  %v3654 = vld [vmem:[%s3 + $0x2e0] sm:$0xff]
  %v3655 = vld [vmem:[%s3 + $0x2e8] sm:$0xff]
  %v3656 = vld [vmem:[%s3 + $0x2f0] sm:$0xff]
  %v3657 = vld [vmem:[%s3 + $0x2f8] sm:$0xff]
  %v3658 = vld [vmem:[%s3 + $0x300] sm:$0xff]
  %v3659 = vld [vmem:[%s3 + $0x308] sm:$0xff]
  %v3660 = vld [vmem:[%s3 + $0x310] sm:$0xff]
  %v3661 = vld [vmem:[%s3 + $0x318] sm:$0xff]
  %v3662 = vld [vmem:[%s3 + $0x320] sm:$0xff]
  %v3663 = vld [vmem:[%s3 + $0x328] sm:$0xff]
  %v3664 = vld [vmem:[%s3 + $0x330] sm:$0xff]
  %v3665 = vld [vmem:[%s3 + $0x338] sm:$0xff]
  %v3666 = vld [vmem:[%s3 + $0x340] sm:$0xff]
  %v3667 = vld [vmem:[%s3 + $0x348] sm:$0xff]
  %v3668 = vld [vmem:[%s3 + $0x350] sm:$0xff]
  %v3669 = vld [vmem:[%s3 + $0x358] sm:$0xff]
  %v3670 = vld [vmem:[%s3 + $0x360] sm:$0xff]
  %v3671 = vld [vmem:[%s3 + $0x368] sm:$0xff]
  %v3672 = vld [vmem:[%s3 + $0x370] sm:$0xff]
  %v3673 = vld [vmem:[%s3 + $0x378] sm:$0xff]
  %v3786 = vunpack.c.l.b16 %v3562
  %v3787 = vunpack.c.h.b16 %v3562
  %v3788 = vunpack.c.l.b16 %v3563
  %v3789 = vunpack.c.h.b16 %v3563
  %v3790 = vunpack.c.l.b16 %v3564
  %v3791 = vunpack.c.h.b16 %v3564
  %v3792 = vunpack.c.l.b16 %v3565
  %v3793 = vunpack.c.h.b16 %v3565
  %v3794 = vunpack.c.l.b16 %v3566
  %v3795 = vunpack.c.h.b16 %v3566
  %v3796 = vunpack.c.l.b16 %v3567
  %v3797 = vunpack.c.h.b16 %v3567
  %v3798 = vunpack.c.l.b16 %v3568
  %v3799 = vunpack.c.h.b16 %v3568
  %v3800 = vunpack.c.l.b16 %v3569
  %v3801 = vunpack.c.h.b16 %v3569
  %v3802 = vunpack.c.l.b16 %v3570
  %v3803 = vunpack.c.h.b16 %v3570
  %v3804 = vunpack.c.l.b16 %v3571
  %v3805 = vunpack.c.h.b16 %v3571
  %v3806 = vunpack.c.l.b16 %v3572
  %v3807 = vunpack.c.h.b16 %v3572
  %v3808 = vunpack.c.l.b16 %v3573
  %v3809 = vunpack.c.h.b16 %v3573
  %v3810 = vunpack.c.l.b16 %v3574
  %v3811 = vunpack.c.h.b16 %v3574
  %v3812 = vunpack.c.l.b16 %v3575
  %v3813 = vunpack.c.h.b16 %v3575
  %v3814 = vunpack.c.l.b16 %v3576
  %v3815 = vunpack.c.h.b16 %v3576
  %v3816 = vunpack.c.l.b16 %v3577
  %v3817 = vunpack.c.h.b16 %v3577
  %v3818 = vunpack.c.l.b16 %v3578
  %v3819 = vunpack.c.h.b16 %v3578
  %v3820 = vunpack.c.l.b16 %v3579
  %v3821 = vunpack.c.h.b16 %v3579
  %v3822 = vunpack.c.l.b16 %v3580
  %v3823 = vunpack.c.h.b16 %v3580
  %v3824 = vunpack.c.l.b16 %v3581
  %v3825 = vunpack.c.h.b16 %v3581
  %v3826 = vunpack.c.l.b16 %v3582
  %v3827 = vunpack.c.h.b16 %v3582
  %v3828 = vunpack.c.l.b16 %v3583
  %v3829 = vunpack.c.h.b16 %v3583
  %v3830 = vunpack.c.l.b16 %v3584
  %v3831 = vunpack.c.h.b16 %v3584
  %v3832 = vunpack.c.l.b16 %v3585
  %v3833 = vunpack.c.h.b16 %v3585
  %v3834 = vunpack.c.l.b16 %v3586
  %v3835 = vunpack.c.h.b16 %v3586
  %v3836 = vunpack.c.l.b16 %v3587
  %v3837 = vunpack.c.h.b16 %v3587
  %v3838 = vunpack.c.l.b16 %v3588
  %v3839 = vunpack.c.h.b16 %v3588
  %v3840 = vunpack.c.l.b16 %v3589
  %v3841 = vunpack.c.h.b16 %v3589
  %v3842 = vunpack.c.l.b16 %v3590
  %v3843 = vunpack.c.h.b16 %v3590
  %v3844 = vunpack.c.l.b16 %v3591
  %v3845 = vunpack.c.h.b16 %v3591
  %v3846 = vunpack.c.l.b16 %v3592
  %v3847 = vunpack.c.h.b16 %v3592
  %v3848 = vunpack.c.l.b16 %v3593
  %v3849 = vunpack.c.h.b16 %v3593
  %v3850 = vunpack.c.l.b16 %v3594
  %v3851 = vunpack.c.h.b16 %v3594
  %v3852 = vunpack.c.l.b16 %v3595
  %v3853 = vunpack.c.h.b16 %v3595
  %v3854 = vunpack.c.l.b16 %v3596
  %v3855 = vunpack.c.h.b16 %v3596
  %v3856 = vunpack.c.l.b16 %v3597
  %v3857 = vunpack.c.h.b16 %v3597
  %v3858 = vunpack.c.l.b16 %v3598
  %v3859 = vunpack.c.h.b16 %v3598
  %v3860 = vunpack.c.l.b16 %v3599
  %v3861 = vunpack.c.h.b16 %v3599
  %v3862 = vunpack.c.l.b16 %v3600
  %v3863 = vunpack.c.h.b16 %v3600
  %v3864 = vunpack.c.l.b16 %v3601
  %v3865 = vunpack.c.h.b16 %v3601
  %v3866 = vunpack.c.l.b16 %v3602
  %v3867 = vunpack.c.h.b16 %v3602
  %v3868 = vunpack.c.l.b16 %v3603
  %v3869 = vunpack.c.h.b16 %v3603
  %v3870 = vunpack.c.l.b16 %v3604
  %v3871 = vunpack.c.h.b16 %v3604
  %v3872 = vunpack.c.l.b16 %v3605
  %v3873 = vunpack.c.h.b16 %v3605
  %v3874 = vunpack.c.l.b16 %v3606
  %v3875 = vunpack.c.h.b16 %v3606
  %v3876 = vunpack.c.l.b16 %v3607
  %v3877 = vunpack.c.h.b16 %v3607
  %v3878 = vunpack.c.l.b16 %v3608
  %v3879 = vunpack.c.h.b16 %v3608
  %v3880 = vunpack.c.l.b16 %v3609
  %v3881 = vunpack.c.h.b16 %v3609
  %v3882 = vunpack.c.l.b16 %v3610
  %v3883 = vunpack.c.h.b16 %v3610
  %v3884 = vunpack.c.l.b16 %v3611
  %v3885 = vunpack.c.h.b16 %v3611
  %v3886 = vunpack.c.l.b16 %v3612
  %v3887 = vunpack.c.h.b16 %v3612
  %v3888 = vunpack.c.l.b16 %v3613
  %v3889 = vunpack.c.h.b16 %v3613
  %v3890 = vunpack.c.l.b16 %v3614
  %v3891 = vunpack.c.h.b16 %v3614
  %v3892 = vunpack.c.l.b16 %v3615
  %v3893 = vunpack.c.h.b16 %v3615
  %v3894 = vunpack.c.l.b16 %v3616
  %v3895 = vunpack.c.h.b16 %v3616
  %v3896 = vunpack.c.l.b16 %v3617
  %v3897 = vunpack.c.h.b16 %v3617
  %v3898 = vunpack.c.l.b16 %v3618
  %v3899 = vunpack.c.h.b16 %v3618
  %v3900 = vunpack.c.l.b16 %v3619
  %v3901 = vunpack.c.h.b16 %v3619
  %v3902 = vunpack.c.l.b16 %v3620
  %v3903 = vunpack.c.h.b16 %v3620
  %v3904 = vunpack.c.l.b16 %v3621
  %v3905 = vunpack.c.h.b16 %v3621
  %v3906 = vunpack.c.l.b16 %v3622
  %v3907 = vunpack.c.h.b16 %v3622
  %v3908 = vunpack.c.l.b16 %v3623
  %v3909 = vunpack.c.h.b16 %v3623
  %v3910 = vunpack.c.l.b16 %v3624
  %v3911 = vunpack.c.h.b16 %v3624
  %v3912 = vunpack.c.l.b16 %v3625
  %v3913 = vunpack.c.h.b16 %v3625
  %v3914 = vunpack.c.l.b16 %v3626
  %v3915 = vunpack.c.h.b16 %v3626
  %v3916 = vunpack.c.l.b16 %v3627
  %v3917 = vunpack.c.h.b16 %v3627
  %v3918 = vunpack.c.l.b16 %v3628
  %v3919 = vunpack.c.h.b16 %v3628
  %v3920 = vunpack.c.l.b16 %v3629
  %v3921 = vunpack.c.h.b16 %v3629
  %v3922 = vunpack.c.l.b16 %v3630
  %v3923 = vunpack.c.h.b16 %v3630
  %v3924 = vunpack.c.l.b16 %v3631
  %v3925 = vunpack.c.h.b16 %v3631
  %v3926 = vunpack.c.l.b16 %v3632
  %v3927 = vunpack.c.h.b16 %v3632
  %v3928 = vunpack.c.l.b16 %v3633
  %v3929 = vunpack.c.h.b16 %v3633
  %v3930 = vunpack.c.l.b16 %v3634
  %v3931 = vunpack.c.h.b16 %v3634
  %v3932 = vunpack.c.l.b16 %v3635
  %v3933 = vunpack.c.h.b16 %v3635
  %v3934 = vunpack.c.l.b16 %v3636
  %v3935 = vunpack.c.h.b16 %v3636
  %v3936 = vunpack.c.l.b16 %v3637
  %v3937 = vunpack.c.h.b16 %v3637
  %v3938 = vunpack.c.l.b16 %v3638
  %v3939 = vunpack.c.h.b16 %v3638
  %v3940 = vunpack.c.l.b16 %v3639
  %v3941 = vunpack.c.h.b16 %v3639
  %v3942 = vunpack.c.l.b16 %v3640
  %v3943 = vunpack.c.h.b16 %v3640
  %v3944 = vunpack.c.l.b16 %v3641
  %v3945 = vunpack.c.h.b16 %v3641
  %v3946 = vunpack.c.l.b16 %v3642
  %v3947 = vunpack.c.h.b16 %v3642
  %v3948 = vunpack.c.l.b16 %v3643
  %v3949 = vunpack.c.h.b16 %v3643
  %v3950 = vunpack.c.l.b16 %v3644
  %v3951 = vunpack.c.h.b16 %v3644
  %v3952 = vunpack.c.l.b16 %v3645
  %v3953 = vunpack.c.h.b16 %v3645
  %v3954 = vunpack.c.l.b16 %v3646
  %v3955 = vunpack.c.h.b16 %v3646
  %v3956 = vunpack.c.l.b16 %v3647
  %v3957 = vunpack.c.h.b16 %v3647
  %v3958 = vunpack.c.l.b16 %v3648
  %v3959 = vunpack.c.h.b16 %v3648
  %v3960 = vunpack.c.l.b16 %v3649
  %v3961 = vunpack.c.h.b16 %v3649
  %v3962 = vunpack.c.l.b16 %v3650
  %v3963 = vunpack.c.h.b16 %v3650
  %v3964 = vunpack.c.l.b16 %v3651
  %v3965 = vunpack.c.h.b16 %v3651
  %v3966 = vunpack.c.l.b16 %v3652
  %v3967 = vunpack.c.h.b16 %v3652
  %v3968 = vunpack.c.l.b16 %v3653
  %v3969 = vunpack.c.h.b16 %v3653
  %v3970 = vunpack.c.l.b16 %v3654
  %v3971 = vunpack.c.h.b16 %v3654
  %v3972 = vunpack.c.l.b16 %v3655
  %v3973 = vunpack.c.h.b16 %v3655
  %v3974 = vunpack.c.l.b16 %v3656
  %v3975 = vunpack.c.h.b16 %v3656
  %v3976 = vunpack.c.l.b16 %v3657
  %v3977 = vunpack.c.h.b16 %v3657
  %v3978 = vunpack.c.l.b16 %v3658
  %v3979 = vunpack.c.h.b16 %v3658
  %v3980 = vunpack.c.l.b16 %v3659
  %v3981 = vunpack.c.h.b16 %v3659
  %v3982 = vunpack.c.l.b16 %v3660
  %v3983 = vunpack.c.h.b16 %v3660
  %v3984 = vunpack.c.l.b16 %v3661
  %v3985 = vunpack.c.h.b16 %v3661
  %v3986 = vunpack.c.l.b16 %v3662
  %v3987 = vunpack.c.h.b16 %v3662
  %v3988 = vunpack.c.l.b16 %v3663
  %v3989 = vunpack.c.h.b16 %v3663
  %v3990 = vunpack.c.l.b16 %v3664
  %v3991 = vunpack.c.h.b16 %v3664
  %v3992 = vunpack.c.l.b16 %v3665
  %v3993 = vunpack.c.h.b16 %v3665
  %v3994 = vunpack.c.l.b16 %v3666
  %v3995 = vunpack.c.h.b16 %v3666
  %v3996 = vunpack.c.l.b16 %v3667
  %v3997 = vunpack.c.h.b16 %v3667
  %v3998 = vunpack.c.l.b16 %v3668
  %v3999 = vunpack.c.h.b16 %v3668
  %v4000 = vunpack.c.l.b16 %v3669
  %v4001 = vunpack.c.h.b16 %v3669
  %v4002 = vunpack.c.l.b16 %v3670
  %v4003 = vunpack.c.h.b16 %v3670
  %v4004 = vunpack.c.l.b16 %v3671
  %v4005 = vunpack.c.h.b16 %v3671
  %v4006 = vunpack.c.l.b16 %v3672
  %v4007 = vunpack.c.h.b16 %v3672
  %v4008 = vunpack.c.l.b16 %v3673
  %v4009 = vunpack.c.h.b16 %v3673
  %v4010 = vpack.c.b16 %v3788, %v3786
  %v4011 = vpack.c.b16 %v3789, %v3787
  %v4012 = vpack.c.b16 %v3792, %v3790
  %v4013 = vpack.c.b16 %v3793, %v3791
  %v4014 = vpack.c.b16 %v3796, %v3794
  %v4015 = vpack.c.b16 %v3797, %v3795
  %v4016 = vpack.c.b16 %v3800, %v3798
  %v4017 = vpack.c.b16 %v3801, %v3799
  %v4018 = vpack.c.b16 %v3804, %v3802
  %v4019 = vpack.c.b16 %v3805, %v3803
  %v4020 = vpack.c.b16 %v3808, %v3806
  %v4021 = vpack.c.b16 %v3809, %v3807
  %v4022 = vpack.c.b16 %v3812, %v3810
  %v4023 = vpack.c.b16 %v3813, %v3811
  %v4024 = vpack.c.b16 %v3816, %v3814
  %v4025 = vpack.c.b16 %v3817, %v3815
  %v4026 = vpack.c.b16 %v3820, %v3818
  %v4027 = vpack.c.b16 %v3821, %v3819
  %v4028 = vpack.c.b16 %v3824, %v3822
  %v4029 = vpack.c.b16 %v3825, %v3823
  %v4030 = vpack.c.b16 %v3828, %v3826
  %v4031 = vpack.c.b16 %v3829, %v3827
  %v4032 = vpack.c.b16 %v3832, %v3830
  %v4033 = vpack.c.b16 %v3833, %v3831
  %v4034 = vpack.c.b16 %v3836, %v3834
  %v4035 = vpack.c.b16 %v3837, %v3835
  %v4036 = vpack.c.b16 %v3840, %v3838
  %v4037 = vpack.c.b16 %v3841, %v3839
  %v4038 = vpack.c.b16 %v3844, %v3842
  %v4039 = vpack.c.b16 %v3845, %v3843
  %v4040 = vpack.c.b16 %v3848, %v3846
  %v4041 = vpack.c.b16 %v3849, %v3847
  %v4042 = vpack.c.b16 %v3852, %v3850
  %v4043 = vpack.c.b16 %v3853, %v3851
  %v4044 = vpack.c.b16 %v3856, %v3854
  %v4045 = vpack.c.b16 %v3857, %v3855
  %v4046 = vpack.c.b16 %v3860, %v3858
  %v4047 = vpack.c.b16 %v3861, %v3859
  %v4048 = vpack.c.b16 %v3864, %v3862
  %v4049 = vpack.c.b16 %v3865, %v3863
  %v4050 = vpack.c.b16 %v3868, %v3866
  %v4051 = vpack.c.b16 %v3869, %v3867
  %v4052 = vpack.c.b16 %v3872, %v3870
  %v4053 = vpack.c.b16 %v3873, %v3871
  %v4054 = vpack.c.b16 %v3876, %v3874
  %v4055 = vpack.c.b16 %v3877, %v3875
  %v4056 = vpack.c.b16 %v3880, %v3878
  %v4057 = vpack.c.b16 %v3881, %v3879
  %v4058 = vpack.c.b16 %v3884, %v3882
  %v4059 = vpack.c.b16 %v3885, %v3883
  %v4060 = vpack.c.b16 %v3888, %v3886
  %v4061 = vpack.c.b16 %v3889, %v3887
  %v4062 = vpack.c.b16 %v3892, %v3890
  %v4063 = vpack.c.b16 %v3893, %v3891
  %v4064 = vpack.c.b16 %v3896, %v3894
  %v4065 = vpack.c.b16 %v3897, %v3895
  %v4066 = vpack.c.b16 %v3900, %v3898
  %v4067 = vpack.c.b16 %v3901, %v3899
  %v4068 = vpack.c.b16 %v3904, %v3902
  %v4069 = vpack.c.b16 %v3905, %v3903
  %v4070 = vpack.c.b16 %v3908, %v3906
  %v4071 = vpack.c.b16 %v3909, %v3907
  %v4072 = vpack.c.b16 %v3912, %v3910
  %v4073 = vpack.c.b16 %v3913, %v3911
  %v4074 = vpack.c.b16 %v3916, %v3914
  %v4075 = vpack.c.b16 %v3917, %v3915
  %v4076 = vpack.c.b16 %v3920, %v3918
  %v4077 = vpack.c.b16 %v3921, %v3919
  %v4078 = vpack.c.b16 %v3924, %v3922
  %v4079 = vpack.c.b16 %v3925, %v3923
  %v4080 = vpack.c.b16 %v3928, %v3926
  %v4081 = vpack.c.b16 %v3929, %v3927
  %v4082 = vpack.c.b16 %v3932, %v3930
  %v4083 = vpack.c.b16 %v3933, %v3931
  %v4084 = vpack.c.b16 %v3936, %v3934
  %v4085 = vpack.c.b16 %v3937, %v3935
  %v4086 = vpack.c.b16 %v3940, %v3938
  %v4087 = vpack.c.b16 %v3941, %v3939
  %v4088 = vpack.c.b16 %v3944, %v3942
  %v4089 = vpack.c.b16 %v3945, %v3943
  %v4090 = vpack.c.b16 %v3948, %v3946
  %v4091 = vpack.c.b16 %v3949, %v3947
  %v4092 = vpack.c.b16 %v3952, %v3950
  %v4093 = vpack.c.b16 %v3953, %v3951
  %v4094 = vpack.c.b16 %v3956, %v3954
  %v4095 = vpack.c.b16 %v3957, %v3955
  %v4096 = vpack.c.b16 %v3960, %v3958
  %v4097 = vpack.c.b16 %v3961, %v3959
  %v4098 = vpack.c.b16 %v3964, %v3962
  %v4099 = vpack.c.b16 %v3965, %v3963
  %v4100 = vpack.c.b16 %v3968, %v3966
  %v4101 = vpack.c.b16 %v3969, %v3967
  %v4102 = vpack.c.b16 %v3972, %v3970
  %v4103 = vpack.c.b16 %v3973, %v3971
  %v4104 = vpack.c.b16 %v3976, %v3974
  %v4105 = vpack.c.b16 %v3977, %v3975
  %v4106 = vpack.c.b16 %v3980, %v3978
  %v4107 = vpack.c.b16 %v3981, %v3979
  %v4108 = vpack.c.b16 %v3984, %v3982
  %v4109 = vpack.c.b16 %v3985, %v3983
  %v4110 = vpack.c.b16 %v3988, %v3986
  %v4111 = vpack.c.b16 %v3989, %v3987
  %v4112 = vpack.c.b16 %v3992, %v3990
  %v4113 = vpack.c.b16 %v3993, %v3991
  %v4114 = vpack.c.b16 %v3996, %v3994
  %v4115 = vpack.c.b16 %v3997, %v3995
  %v4116 = vpack.c.b16 %v4000, %v3998
  %v4117 = vpack.c.b16 %v4001, %v3999
  %v4118 = vpack.c.b16 %v4004, %v4002
  %v4119 = vpack.c.b16 %v4005, %v4003
  %v4120 = vpack.c.b16 %v4008, %v4006
  %v4121 = vpack.c.b16 %v4009, %v4007
  %4234 = vmatpush.bf16.msra.mxu0 %v4024
  %4235 = vmatpush.bf16.msra.mxu0 %v4022
  %4236 = vmatpush.bf16.msra.mxu0 %v4020
  %4237 = vmatpush.bf16.msra.mxu0 %v4018
  %4238 = vmatpush.bf16.msra.mxu0 %v4016
  %4239 = vmatpush.bf16.msra.mxu0 %v4014
  %4240 = vmatpush.bf16.msra.mxu0 %v4012
  %4241 = vmatpush.bf16.msra.mxu0 %v4010
  %4242 = vmatmul.bf16.gmra.mxu0 %v3513
  %v4243 = vpop.f32.mrf.mxu0
  %v4244 = vadd.f32 0.0, %v4243
  %v4245 = vpop.f32.mrf.mxu0
  %v4246 = vadd.f32 0.0, %v4245
  %4247 = vmatmul.bf16.gmra.mxu0 %v3520
  %v4248 = vpop.f32.mrf.mxu0
  %v4249 = vadd.f32 0.0, %v4248
  %v4250 = vpop.f32.mrf.mxu0
  %v4251 = vadd.f32 0.0, %v4250
  %4252 = vmatmul.bf16.gmra.mxu0 %v3527
  %v4253 = vpop.f32.mrf.mxu0
  %v4254 = vadd.f32 0.0, %v4253
  %v4255 = vpop.f32.mrf.mxu0
  %v4256 = vadd.f32 0.0, %v4255
  %4257 = vmatmul.bf16.gmra.mxu0 %v3534
  %v4258 = vpop.f32.mrf.mxu0
  %v4259 = vadd.f32 0.0, %v4258
  %v4260 = vpop.f32.mrf.mxu0
  %v4261 = vadd.f32 0.0, %v4260
  %4262 = vmatmul.bf16.gmra.mxu0 %v3541
  %v4263 = vpop.f32.mrf.mxu0
  %v4264 = vadd.f32 0.0, %v4263
  %v4265 = vpop.f32.mrf.mxu0
  %v4266 = vadd.f32 0.0, %v4265
  %4267 = vmatmul.bf16.gmra.mxu0 %v3548
  %v4268 = vpop.f32.mrf.mxu0
  %v4269 = vadd.f32 0.0, %v4268
  %v4270 = vpop.f32.mrf.mxu0
  %v4271 = vadd.f32 0.0, %v4270
  %4272 = vmatmul.bf16.gmra.mxu0 %v3555
  %v4273 = vpop.f32.mrf.mxu0
  %v4274 = vadd.f32 0.0, %v4273
  %v4275 = vpop.f32.mrf.mxu0
  %v4276 = vadd.f32 0.0, %v4275
  %4277 = vdwg.mxu0
  %4278 = vmatpush.bf16.msra.mxu0 %v4040
  %4279 = vmatpush.bf16.msra.mxu0 %v4038
  %4280 = vmatpush.bf16.msra.mxu0 %v4036
  %4281 = vmatpush.bf16.msra.mxu0 %v4034
  %4282 = vmatpush.bf16.msra.mxu0 %v4032
  %4283 = vmatpush.bf16.msra.mxu0 %v4030
  %4284 = vmatpush.bf16.msra.mxu0 %v4028
  %4285 = vmatpush.bf16.msra.mxu0 %v4026
  %4286 = vmatmul.bf16.gmra.mxu0 %v3514
  %v4287 = vpop.f32.mrf.mxu0
  %v4288 = vadd.f32 %v4244, %v4287
  %v4289 = vpop.f32.mrf.mxu0
  %v4290 = vadd.f32 %v4246, %v4289
  %4291 = vmatmul.bf16.gmra.mxu0 %v3521
  %v4292 = vpop.f32.mrf.mxu0
  %v4293 = vadd.f32 %v4249, %v4292
  %v4294 = vpop.f32.mrf.mxu0
  %v4295 = vadd.f32 %v4251, %v4294
  %4296 = vmatmul.bf16.gmra.mxu0 %v3528
  %v4297 = vpop.f32.mrf.mxu0
  %v4298 = vadd.f32 %v4254, %v4297
  %v4299 = vpop.f32.mrf.mxu0
  %v4300 = vadd.f32 %v4256, %v4299
  %4301 = vmatmul.bf16.gmra.mxu0 %v3535
  %v4302 = vpop.f32.mrf.mxu0
  %v4303 = vadd.f32 %v4259, %v4302
  %v4304 = vpop.f32.mrf.mxu0
  %v4305 = vadd.f32 %v4261, %v4304
  %4306 = vmatmul.bf16.gmra.mxu0 %v3542
  %v4307 = vpop.f32.mrf.mxu0
  %v4308 = vadd.f32 %v4264, %v4307
  %v4309 = vpop.f32.mrf.mxu0
  %v4310 = vadd.f32 %v4266, %v4309
  %4311 = vmatmul.bf16.gmra.mxu0 %v3549
  %v4312 = vpop.f32.mrf.mxu0
  %v4313 = vadd.f32 %v4269, %v4312
  %v4314 = vpop.f32.mrf.mxu0
  %v4315 = vadd.f32 %v4271, %v4314
  %4316 = vmatmul.bf16.gmra.mxu0 %v3556
  %v4317 = vpop.f32.mrf.mxu0
  %v4318 = vadd.f32 %v4274, %v4317
  %v4319 = vpop.f32.mrf.mxu0
  %v4320 = vadd.f32 %v4276, %v4319
  %4321 = vdwg.mxu0
  %4322 = vmatpush.bf16.msra.mxu0 %v4056
  %4323 = vmatpush.bf16.msra.mxu0 %v4054
  %4324 = vmatpush.bf16.msra.mxu0 %v4052
  %4325 = vmatpush.bf16.msra.mxu0 %v4050
  %4326 = vmatpush.bf16.msra.mxu0 %v4048
  %4327 = vmatpush.bf16.msra.mxu0 %v4046
  %4328 = vmatpush.bf16.msra.mxu0 %v4044
  %4329 = vmatpush.bf16.msra.mxu0 %v4042
  %4330 = vmatmul.bf16.gmra.mxu0 %v3515
  %v4331 = vpop.f32.mrf.mxu0
  %v4332 = vadd.f32 %v4288, %v4331
  %v4333 = vpop.f32.mrf.mxu0
  %v4334 = vadd.f32 %v4290, %v4333
  %4335 = vmatmul.bf16.gmra.mxu0 %v3522
  %v4336 = vpop.f32.mrf.mxu0
  %v4337 = vadd.f32 %v4293, %v4336
  %v4338 = vpop.f32.mrf.mxu0
  %v4339 = vadd.f32 %v4295, %v4338
  %4340 = vmatmul.bf16.gmra.mxu0 %v3529
  %v4341 = vpop.f32.mrf.mxu0
  %v4342 = vadd.f32 %v4298, %v4341
  %v4343 = vpop.f32.mrf.mxu0
  %v4344 = vadd.f32 %v4300, %v4343
  %4345 = vmatmul.bf16.gmra.mxu0 %v3536
  %v4346 = vpop.f32.mrf.mxu0
  %v4347 = vadd.f32 %v4303, %v4346
  %v4348 = vpop.f32.mrf.mxu0
  %v4349 = vadd.f32 %v4305, %v4348
  %4350 = vmatmul.bf16.gmra.mxu0 %v3543
  %v4351 = vpop.f32.mrf.mxu0
  %v4352 = vadd.f32 %v4308, %v4351
  %v4353 = vpop.f32.mrf.mxu0
  %v4354 = vadd.f32 %v4310, %v4353
  %4355 = vmatmul.bf16.gmra.mxu0 %v3550
  %v4356 = vpop.f32.mrf.mxu0
  %v4357 = vadd.f32 %v4313, %v4356
  %v4358 = vpop.f32.mrf.mxu0
  %v4359 = vadd.f32 %v4315, %v4358
  %4360 = vmatmul.bf16.gmra.mxu0 %v3557
  %v4361 = vpop.f32.mrf.mxu0
  %v4362 = vadd.f32 %v4318, %v4361
  %v4363 = vpop.f32.mrf.mxu0
  %v4364 = vadd.f32 %v4320, %v4363
  %4365 = vdwg.mxu0
  %4366 = vmatpush.bf16.msra.mxu0 %v4072
  %4367 = vmatpush.bf16.msra.mxu0 %v4070
  %4368 = vmatpush.bf16.msra.mxu0 %v4068
  %4369 = vmatpush.bf16.msra.mxu0 %v4066
  %4370 = vmatpush.bf16.msra.mxu0 %v4064
  %4371 = vmatpush.bf16.msra.mxu0 %v4062
  %4372 = vmatpush.bf16.msra.mxu0 %v4060
  %4373 = vmatpush.bf16.msra.mxu0 %v4058
  %4374 = vmatmul.bf16.gmra.mxu0 %v3516
  %v4375 = vpop.f32.mrf.mxu0
  %v4376 = vadd.f32 %v4332, %v4375
  %v4377 = vpop.f32.mrf.mxu0
  %v4378 = vadd.f32 %v4334, %v4377
  %4379 = vmatmul.bf16.gmra.mxu0 %v3523
  %v4380 = vpop.f32.mrf.mxu0
  %v4381 = vadd.f32 %v4337, %v4380
  %v4382 = vpop.f32.mrf.mxu0
  %v4383 = vadd.f32 %v4339, %v4382
  %4384 = vmatmul.bf16.gmra.mxu0 %v3530
  %v4385 = vpop.f32.mrf.mxu0
  %v4386 = vadd.f32 %v4342, %v4385
  %v4387 = vpop.f32.mrf.mxu0
  %v4388 = vadd.f32 %v4344, %v4387
  %4389 = vmatmul.bf16.gmra.mxu0 %v3537
  %v4390 = vpop.f32.mrf.mxu0
  %v4391 = vadd.f32 %v4347, %v4390
  %v4392 = vpop.f32.mrf.mxu0
  %v4393 = vadd.f32 %v4349, %v4392
  %4394 = vmatmul.bf16.gmra.mxu0 %v3544
  %v4395 = vpop.f32.mrf.mxu0
  %v4396 = vadd.f32 %v4352, %v4395
  %v4397 = vpop.f32.mrf.mxu0
  %v4398 = vadd.f32 %v4354, %v4397
  %4399 = vmatmul.bf16.gmra.mxu0 %v3551
  %v4400 = vpop.f32.mrf.mxu0
  %v4401 = vadd.f32 %v4357, %v4400
  %v4402 = vpop.f32.mrf.mxu0
  %v4403 = vadd.f32 %v4359, %v4402
  %4404 = vmatmul.bf16.gmra.mxu0 %v3558
  %v4405 = vpop.f32.mrf.mxu0
  %v4406 = vadd.f32 %v4362, %v4405
  %v4407 = vpop.f32.mrf.mxu0
  %v4408 = vadd.f32 %v4364, %v4407
  %4409 = vdwg.mxu0
  %4410 = vmatpush.bf16.msra.mxu0 %v4088
  %4411 = vmatpush.bf16.msra.mxu0 %v4086
  %4412 = vmatpush.bf16.msra.mxu0 %v4084
  %4413 = vmatpush.bf16.msra.mxu0 %v4082
  %4414 = vmatpush.bf16.msra.mxu0 %v4080
  %4415 = vmatpush.bf16.msra.mxu0 %v4078
  %4416 = vmatpush.bf16.msra.mxu0 %v4076
  %4417 = vmatpush.bf16.msra.mxu0 %v4074
  %4418 = vmatmul.bf16.gmra.mxu0 %v3517
  %v4419 = vpop.f32.mrf.mxu0
  %v4420 = vadd.f32 %v4376, %v4419
  %v4421 = vpop.f32.mrf.mxu0
  %v4422 = vadd.f32 %v4378, %v4421
  %4423 = vmatmul.bf16.gmra.mxu0 %v3524
  %v4424 = vpop.f32.mrf.mxu0
  %v4425 = vadd.f32 %v4381, %v4424
  %v4426 = vpop.f32.mrf.mxu0
  %v4427 = vadd.f32 %v4383, %v4426
  %4428 = vmatmul.bf16.gmra.mxu0 %v3531
  %v4429 = vpop.f32.mrf.mxu0
  %v4430 = vadd.f32 %v4386, %v4429
  %v4431 = vpop.f32.mrf.mxu0
  %v4432 = vadd.f32 %v4388, %v4431
  %4433 = vmatmul.bf16.gmra.mxu0 %v3538
  %v4434 = vpop.f32.mrf.mxu0
  %v4435 = vadd.f32 %v4391, %v4434
  %v4436 = vpop.f32.mrf.mxu0
  %v4437 = vadd.f32 %v4393, %v4436
  %4438 = vmatmul.bf16.gmra.mxu0 %v3545
  %v4439 = vpop.f32.mrf.mxu0
  %v4440 = vadd.f32 %v4396, %v4439
  %v4441 = vpop.f32.mrf.mxu0
  %v4442 = vadd.f32 %v4398, %v4441
  %4443 = vmatmul.bf16.gmra.mxu0 %v3552
  %v4444 = vpop.f32.mrf.mxu0
  %v4445 = vadd.f32 %v4401, %v4444
  %v4446 = vpop.f32.mrf.mxu0
  %v4447 = vadd.f32 %v4403, %v4446
  %4448 = vmatmul.bf16.gmra.mxu0 %v3559
  %v4449 = vpop.f32.mrf.mxu0
  %v4450 = vadd.f32 %v4406, %v4449
  %v4451 = vpop.f32.mrf.mxu0
  %v4452 = vadd.f32 %v4408, %v4451
  %4453 = vdwg.mxu0
  %4454 = vmatpush.bf16.msra.mxu0 %v4104
  %4455 = vmatpush.bf16.msra.mxu0 %v4102
  %4456 = vmatpush.bf16.msra.mxu0 %v4100
  %4457 = vmatpush.bf16.msra.mxu0 %v4098
  %4458 = vmatpush.bf16.msra.mxu0 %v4096
  %4459 = vmatpush.bf16.msra.mxu0 %v4094
  %4460 = vmatpush.bf16.msra.mxu0 %v4092
  %4461 = vmatpush.bf16.msra.mxu0 %v4090
  %4462 = vmatmul.bf16.gmra.mxu0 %v3518
  %v4463 = vpop.f32.mrf.mxu0
  %v4464 = vadd.f32 %v4420, %v4463
  %v4465 = vpop.f32.mrf.mxu0
  %v4466 = vadd.f32 %v4422, %v4465
  %4467 = vmatmul.bf16.gmra.mxu0 %v3525
  %v4468 = vpop.f32.mrf.mxu0
  %v4469 = vadd.f32 %v4425, %v4468
  %v4470 = vpop.f32.mrf.mxu0
  %v4471 = vadd.f32 %v4427, %v4470
  %4472 = vmatmul.bf16.gmra.mxu0 %v3532
  %v4473 = vpop.f32.mrf.mxu0
  %v4474 = vadd.f32 %v4430, %v4473
  %v4475 = vpop.f32.mrf.mxu0
  %v4476 = vadd.f32 %v4432, %v4475
  %4477 = vmatmul.bf16.gmra.mxu0 %v3539
  %v4478 = vpop.f32.mrf.mxu0
  %v4479 = vadd.f32 %v4435, %v4478
  %v4480 = vpop.f32.mrf.mxu0
  %v4481 = vadd.f32 %v4437, %v4480
  %4482 = vmatmul.bf16.gmra.mxu0 %v3546
  %v4483 = vpop.f32.mrf.mxu0
  %v4484 = vadd.f32 %v4440, %v4483
  %v4485 = vpop.f32.mrf.mxu0
  %v4486 = vadd.f32 %v4442, %v4485
  %4487 = vmatmul.bf16.gmra.mxu0 %v3553
  %v4488 = vpop.f32.mrf.mxu0
  %v4489 = vadd.f32 %v4445, %v4488
  %v4490 = vpop.f32.mrf.mxu0
  %v4491 = vadd.f32 %v4447, %v4490
  %4492 = vmatmul.bf16.gmra.mxu0 %v3560
  %v4493 = vpop.f32.mrf.mxu0
  %v4494 = vadd.f32 %v4450, %v4493
  %v4495 = vpop.f32.mrf.mxu0
  %v4496 = vadd.f32 %v4452, %v4495
  %4497 = vdwg.mxu0
  %4498 = vmatpush.bf16.msra.mxu0 %v4120
  %4499 = vmatpush.bf16.msra.mxu0 %v4118
  %4500 = vmatpush.bf16.msra.mxu0 %v4116
  %4501 = vmatpush.bf16.msra.mxu0 %v4114
  %4502 = vmatpush.bf16.msra.mxu0 %v4112
  %4503 = vmatpush.bf16.msra.mxu0 %v4110
  %4504 = vmatpush.bf16.msra.mxu0 %v4108
  %4505 = vmatpush.bf16.msra.mxu0 %v4106
  %4506 = vmatmul.bf16.gmra.mxu0 %v3519
  %v4507 = vpop.f32.mrf.mxu0
  %v4508 = vadd.f32 %v4464, %v4507
  %v4509 = vpop.f32.mrf.mxu0
  %v4510 = vadd.f32 %v4466, %v4509
  %4511 = vmatmul.bf16.gmra.mxu0 %v3526
  %v4512 = vpop.f32.mrf.mxu0
  %v4513 = vadd.f32 %v4469, %v4512
  %v4514 = vpop.f32.mrf.mxu0
  %v4515 = vadd.f32 %v4471, %v4514
  %4516 = vmatmul.bf16.gmra.mxu0 %v3533
  %v4517 = vpop.f32.mrf.mxu0
  %v4518 = vadd.f32 %v4474, %v4517
  %v4519 = vpop.f32.mrf.mxu0
  %v4520 = vadd.f32 %v4476, %v4519
  %4521 = vmatmul.bf16.gmra.mxu0 %v3540
  %v4522 = vpop.f32.mrf.mxu0
  %v4523 = vadd.f32 %v4479, %v4522
  %v4524 = vpop.f32.mrf.mxu0
  %v4525 = vadd.f32 %v4481, %v4524
  %4526 = vmatmul.bf16.gmra.mxu0 %v3547
  %v4527 = vpop.f32.mrf.mxu0
  %v4528 = vadd.f32 %v4484, %v4527
  %v4529 = vpop.f32.mrf.mxu0
  %v4530 = vadd.f32 %v4486, %v4529
  %4531 = vmatmul.bf16.gmra.mxu0 %v3554
  %v4532 = vpop.f32.mrf.mxu0
  %v4533 = vadd.f32 %v4489, %v4532
  %v4534 = vpop.f32.mrf.mxu0
  %v4535 = vadd.f32 %v4491, %v4534
  %4536 = vmatmul.bf16.gmra.mxu0 %v3561
  %v4537 = vpop.f32.mrf.mxu0
  %v4538 = vadd.f32 %v4494, %v4537
  %v4539 = vpop.f32.mrf.mxu0
  %v4540 = vadd.f32 %v4496, %v4539
  %4541 = vdwg.mxu0
  %4542 = vmatpush.bf16.msra.mxu0 %v4025
  %4543 = vmatpush.bf16.msra.mxu0 %v4023
  %4544 = vmatpush.bf16.msra.mxu0 %v4021
  %4545 = vmatpush.bf16.msra.mxu0 %v4019
  %4546 = vmatpush.bf16.msra.mxu0 %v4017
  %4547 = vmatpush.bf16.msra.mxu0 %v4015
  %4548 = vmatpush.bf16.msra.mxu0 %v4013
  %4549 = vmatpush.bf16.msra.mxu0 %v4011
  %4550 = vmatmul.bf16.gmra.mxu0 %v3513
  %v4551 = vpop.f32.mrf.mxu0
  %v4552 = vadd.f32 0.0, %v4551
  %v4553 = vpop.f32.mrf.mxu0
  %v4554 = vadd.f32 0.0, %v4553
  %4555 = vmatmul.bf16.gmra.mxu0 %v3520
  %v4556 = vpop.f32.mrf.mxu0
  %v4557 = vadd.f32 0.0, %v4556
  %v4558 = vpop.f32.mrf.mxu0
  %v4559 = vadd.f32 0.0, %v4558
  %4560 = vmatmul.bf16.gmra.mxu0 %v3527
  %v4561 = vpop.f32.mrf.mxu0
  %v4562 = vadd.f32 0.0, %v4561
  %v4563 = vpop.f32.mrf.mxu0
  %v4564 = vadd.f32 0.0, %v4563
  %4565 = vmatmul.bf16.gmra.mxu0 %v3534
  %v4566 = vpop.f32.mrf.mxu0
  %v4567 = vadd.f32 0.0, %v4566
  %v4568 = vpop.f32.mrf.mxu0
  %v4569 = vadd.f32 0.0, %v4568
  %4570 = vmatmul.bf16.gmra.mxu0 %v3541
  %v4571 = vpop.f32.mrf.mxu0
  %v4572 = vadd.f32 0.0, %v4571
  %v4573 = vpop.f32.mrf.mxu0
  %v4574 = vadd.f32 0.0, %v4573
  %4575 = vmatmul.bf16.gmra.mxu0 %v3548
  %v4576 = vpop.f32.mrf.mxu0
  %v4577 = vadd.f32 0.0, %v4576
  %v4578 = vpop.f32.mrf.mxu0
  %v4579 = vadd.f32 0.0, %v4578
  %4580 = vmatmul.bf16.gmra.mxu0 %v3555
  %v4581 = vpop.f32.mrf.mxu0
  %v4582 = vadd.f32 0.0, %v4581
  %v4583 = vpop.f32.mrf.mxu0
  %v4584 = vadd.f32 0.0, %v4583
  %4585 = vdwg.mxu0
  %4586 = vmatpush.bf16.msra.mxu0 %v4041
  %4587 = vmatpush.bf16.msra.mxu0 %v4039
  %4588 = vmatpush.bf16.msra.mxu0 %v4037
  %4589 = vmatpush.bf16.msra.mxu0 %v4035
  %4590 = vmatpush.bf16.msra.mxu0 %v4033
  %4591 = vmatpush.bf16.msra.mxu0 %v4031
  %4592 = vmatpush.bf16.msra.mxu0 %v4029
  %4593 = vmatpush.bf16.msra.mxu0 %v4027
  %4594 = vmatmul.bf16.gmra.mxu0 %v3514
  %v4595 = vpop.f32.mrf.mxu0
  %v4596 = vadd.f32 %v4552, %v4595
  %v4597 = vpop.f32.mrf.mxu0
  %v4598 = vadd.f32 %v4554, %v4597
  %4599 = vmatmul.bf16.gmra.mxu0 %v3521
  %v4600 = vpop.f32.mrf.mxu0
  %v4601 = vadd.f32 %v4557, %v4600
  %v4602 = vpop.f32.mrf.mxu0
  %v4603 = vadd.f32 %v4559, %v4602
  %4604 = vmatmul.bf16.gmra.mxu0 %v3528
  %v4605 = vpop.f32.mrf.mxu0
  %v4606 = vadd.f32 %v4562, %v4605
  %v4607 = vpop.f32.mrf.mxu0
  %v4608 = vadd.f32 %v4564, %v4607
  %4609 = vmatmul.bf16.gmra.mxu0 %v3535
  %v4610 = vpop.f32.mrf.mxu0
  %v4611 = vadd.f32 %v4567, %v4610
  %v4612 = vpop.f32.mrf.mxu0
  %v4613 = vadd.f32 %v4569, %v4612
  %4614 = vmatmul.bf16.gmra.mxu0 %v3542
  %v4615 = vpop.f32.mrf.mxu0
  %v4616 = vadd.f32 %v4572, %v4615
  %v4617 = vpop.f32.mrf.mxu0
  %v4618 = vadd.f32 %v4574, %v4617
  %4619 = vmatmul.bf16.gmra.mxu0 %v3549
  %v4620 = vpop.f32.mrf.mxu0
  %v4621 = vadd.f32 %v4577, %v4620
  %v4622 = vpop.f32.mrf.mxu0
  %v4623 = vadd.f32 %v4579, %v4622
  %4624 = vmatmul.bf16.gmra.mxu0 %v3556
  %v4625 = vpop.f32.mrf.mxu0
  %v4626 = vadd.f32 %v4582, %v4625
  %v4627 = vpop.f32.mrf.mxu0
  %v4628 = vadd.f32 %v4584, %v4627
  %4629 = vdwg.mxu0
  %4630 = vmatpush.bf16.msra.mxu0 %v4057
  %4631 = vmatpush.bf16.msra.mxu0 %v4055
  %4632 = vmatpush.bf16.msra.mxu0 %v4053
  %4633 = vmatpush.bf16.msra.mxu0 %v4051
  %4634 = vmatpush.bf16.msra.mxu0 %v4049
  %4635 = vmatpush.bf16.msra.mxu0 %v4047
  %4636 = vmatpush.bf16.msra.mxu0 %v4045
  %4637 = vmatpush.bf16.msra.mxu0 %v4043
  %4638 = vmatmul.bf16.gmra.mxu0 %v3515
  %v4639 = vpop.f32.mrf.mxu0
  %v4640 = vadd.f32 %v4596, %v4639
  %v4641 = vpop.f32.mrf.mxu0
  %v4642 = vadd.f32 %v4598, %v4641
  %4643 = vmatmul.bf16.gmra.mxu0 %v3522
  %v4644 = vpop.f32.mrf.mxu0
  %v4645 = vadd.f32 %v4601, %v4644
  %v4646 = vpop.f32.mrf.mxu0
  %v4647 = vadd.f32 %v4603, %v4646
  %4648 = vmatmul.bf16.gmra.mxu0 %v3529
  %v4649 = vpop.f32.mrf.mxu0
  %v4650 = vadd.f32 %v4606, %v4649
  %v4651 = vpop.f32.mrf.mxu0
  %v4652 = vadd.f32 %v4608, %v4651
  %4653 = vmatmul.bf16.gmra.mxu0 %v3536
  %v4654 = vpop.f32.mrf.mxu0
  %v4655 = vadd.f32 %v4611, %v4654
  %v4656 = vpop.f32.mrf.mxu0
  %v4657 = vadd.f32 %v4613, %v4656
  %4658 = vmatmul.bf16.gmra.mxu0 %v3543
  %v4659 = vpop.f32.mrf.mxu0
  %v4660 = vadd.f32 %v4616, %v4659
  %v4661 = vpop.f32.mrf.mxu0
  %v4662 = vadd.f32 %v4618, %v4661
  %4663 = vmatmul.bf16.gmra.mxu0 %v3550
  %v4664 = vpop.f32.mrf.mxu0
  %v4665 = vadd.f32 %v4621, %v4664
  %v4666 = vpop.f32.mrf.mxu0
  %v4667 = vadd.f32 %v4623, %v4666
  %4668 = vmatmul.bf16.gmra.mxu0 %v3557
  %v4669 = vpop.f32.mrf.mxu0
  %v4670 = vadd.f32 %v4626, %v4669
  %v4671 = vpop.f32.mrf.mxu0
  %v4672 = vadd.f32 %v4628, %v4671
  %4673 = vdwg.mxu0
  %4674 = vmatpush.bf16.msra.mxu0 %v4073
  %4675 = vmatpush.bf16.msra.mxu0 %v4071
  %4676 = vmatpush.bf16.msra.mxu0 %v4069
  %4677 = vmatpush.bf16.msra.mxu0 %v4067
  %4678 = vmatpush.bf16.msra.mxu0 %v4065
  %4679 = vmatpush.bf16.msra.mxu0 %v4063
  %4680 = vmatpush.bf16.msra.mxu0 %v4061
  %4681 = vmatpush.bf16.msra.mxu0 %v4059
  %4682 = vmatmul.bf16.gmra.mxu0 %v3516
  %v4683 = vpop.f32.mrf.mxu0
  %v4684 = vadd.f32 %v4640, %v4683
  %v4685 = vpop.f32.mrf.mxu0
  %v4686 = vadd.f32 %v4642, %v4685
  %4687 = vmatmul.bf16.gmra.mxu0 %v3523
  %v4688 = vpop.f32.mrf.mxu0
  %v4689 = vadd.f32 %v4645, %v4688
  %v4690 = vpop.f32.mrf.mxu0
  %v4691 = vadd.f32 %v4647, %v4690
  %4692 = vmatmul.bf16.gmra.mxu0 %v3530
  %v4693 = vpop.f32.mrf.mxu0
  %v4694 = vadd.f32 %v4650, %v4693
  %v4695 = vpop.f32.mrf.mxu0
  %v4696 = vadd.f32 %v4652, %v4695
  %4697 = vmatmul.bf16.gmra.mxu0 %v3537
  %v4698 = vpop.f32.mrf.mxu0
  %v4699 = vadd.f32 %v4655, %v4698
  %v4700 = vpop.f32.mrf.mxu0
  %v4701 = vadd.f32 %v4657, %v4700
  %4702 = vmatmul.bf16.gmra.mxu0 %v3544
  %v4703 = vpop.f32.mrf.mxu0
  %v4704 = vadd.f32 %v4660, %v4703
  %v4705 = vpop.f32.mrf.mxu0
  %v4706 = vadd.f32 %v4662, %v4705
  %4707 = vmatmul.bf16.gmra.mxu0 %v3551
  %v4708 = vpop.f32.mrf.mxu0
  %v4709 = vadd.f32 %v4665, %v4708
  %v4710 = vpop.f32.mrf.mxu0
  %v4711 = vadd.f32 %v4667, %v4710
  %4712 = vmatmul.bf16.gmra.mxu0 %v3558
  %v4713 = vpop.f32.mrf.mxu0
  %v4714 = vadd.f32 %v4670, %v4713
  %v4715 = vpop.f32.mrf.mxu0
  %v4716 = vadd.f32 %v4672, %v4715
  %4717 = vdwg.mxu0
  %4718 = vmatpush.bf16.msra.mxu0 %v4089
  %4719 = vmatpush.bf16.msra.mxu0 %v4087
  %4720 = vmatpush.bf16.msra.mxu0 %v4085
  %4721 = vmatpush.bf16.msra.mxu0 %v4083
  %4722 = vmatpush.bf16.msra.mxu0 %v4081
  %4723 = vmatpush.bf16.msra.mxu0 %v4079
  %4724 = vmatpush.bf16.msra.mxu0 %v4077
  %4725 = vmatpush.bf16.msra.mxu0 %v4075
  %4726 = vmatmul.bf16.gmra.mxu0 %v3517
  %v4727 = vpop.f32.mrf.mxu0
  %v4728 = vadd.f32 %v4684, %v4727
  %v4729 = vpop.f32.mrf.mxu0
  %v4730 = vadd.f32 %v4686, %v4729
  %4731 = vmatmul.bf16.gmra.mxu0 %v3524
  %v4732 = vpop.f32.mrf.mxu0
  %v4733 = vadd.f32 %v4689, %v4732
  %v4734 = vpop.f32.mrf.mxu0
  %v4735 = vadd.f32 %v4691, %v4734
  %4736 = vmatmul.bf16.gmra.mxu0 %v3531
  %v4737 = vpop.f32.mrf.mxu0
  %v4738 = vadd.f32 %v4694, %v4737
  %v4739 = vpop.f32.mrf.mxu0
  %v4740 = vadd.f32 %v4696, %v4739
  %4741 = vmatmul.bf16.gmra.mxu0 %v3538
  %v4742 = vpop.f32.mrf.mxu0
  %v4743 = vadd.f32 %v4699, %v4742
  %v4744 = vpop.f32.mrf.mxu0
  %v4745 = vadd.f32 %v4701, %v4744
  %4746 = vmatmul.bf16.gmra.mxu0 %v3545
  %v4747 = vpop.f32.mrf.mxu0
  %v4748 = vadd.f32 %v4704, %v4747
  %v4749 = vpop.f32.mrf.mxu0
  %v4750 = vadd.f32 %v4706, %v4749
  %4751 = vmatmul.bf16.gmra.mxu0 %v3552
  %v4752 = vpop.f32.mrf.mxu0
  %v4753 = vadd.f32 %v4709, %v4752
  %v4754 = vpop.f32.mrf.mxu0
  %v4755 = vadd.f32 %v4711, %v4754
  %4756 = vmatmul.bf16.gmra.mxu0 %v3559
  %v4757 = vpop.f32.mrf.mxu0
  %v4758 = vadd.f32 %v4714, %v4757
  %v4759 = vpop.f32.mrf.mxu0
  %v4760 = vadd.f32 %v4716, %v4759
  %4761 = vdwg.mxu0
  %4762 = vmatpush.bf16.msra.mxu0 %v4105
  %4763 = vmatpush.bf16.msra.mxu0 %v4103
  %4764 = vmatpush.bf16.msra.mxu0 %v4101
  %4765 = vmatpush.bf16.msra.mxu0 %v4099
  %4766 = vmatpush.bf16.msra.mxu0 %v4097
  %4767 = vmatpush.bf16.msra.mxu0 %v4095
  %4768 = vmatpush.bf16.msra.mxu0 %v4093
  %4769 = vmatpush.bf16.msra.mxu0 %v4091
  %4770 = vmatmul.bf16.gmra.mxu0 %v3518
  %v4771 = vpop.f32.mrf.mxu0
  %v4772 = vadd.f32 %v4728, %v4771
  %v4773 = vpop.f32.mrf.mxu0
  %v4774 = vadd.f32 %v4730, %v4773
  %4775 = vmatmul.bf16.gmra.mxu0 %v3525
  %v4776 = vpop.f32.mrf.mxu0
  %v4777 = vadd.f32 %v4733, %v4776
  %v4778 = vpop.f32.mrf.mxu0
  %v4779 = vadd.f32 %v4735, %v4778
  %4780 = vmatmul.bf16.gmra.mxu0 %v3532
  %v4781 = vpop.f32.mrf.mxu0
  %v4782 = vadd.f32 %v4738, %v4781
  %v4783 = vpop.f32.mrf.mxu0
  %v4784 = vadd.f32 %v4740, %v4783
  %4785 = vmatmul.bf16.gmra.mxu0 %v3539
  %v4786 = vpop.f32.mrf.mxu0
  %v4787 = vadd.f32 %v4743, %v4786
  %v4788 = vpop.f32.mrf.mxu0
  %v4789 = vadd.f32 %v4745, %v4788
  %4790 = vmatmul.bf16.gmra.mxu0 %v3546
  %v4791 = vpop.f32.mrf.mxu0
  %v4792 = vadd.f32 %v4748, %v4791
  %v4793 = vpop.f32.mrf.mxu0
  %v4794 = vadd.f32 %v4750, %v4793
  %4795 = vmatmul.bf16.gmra.mxu0 %v3553
  %v4796 = vpop.f32.mrf.mxu0
  %v4797 = vadd.f32 %v4753, %v4796
  %v4798 = vpop.f32.mrf.mxu0
  %v4799 = vadd.f32 %v4755, %v4798
  %4800 = vmatmul.bf16.gmra.mxu0 %v3560
  %v4801 = vpop.f32.mrf.mxu0
  %v4802 = vadd.f32 %v4758, %v4801
  %v4803 = vpop.f32.mrf.mxu0
  %v4804 = vadd.f32 %v4760, %v4803
  %4805 = vdwg.mxu0
  %4806 = vmatpush.bf16.msra.mxu0 %v4121
  %4807 = vmatpush.bf16.msra.mxu0 %v4119
  %4808 = vmatpush.bf16.msra.mxu0 %v4117
  %4809 = vmatpush.bf16.msra.mxu0 %v4115
  %4810 = vmatpush.bf16.msra.mxu0 %v4113
  %4811 = vmatpush.bf16.msra.mxu0 %v4111
  %4812 = vmatpush.bf16.msra.mxu0 %v4109
  %4813 = vmatpush.bf16.msra.mxu0 %v4107
  %4814 = vmatmul.bf16.gmra.mxu0 %v3519
  %v4815 = vpop.f32.mrf.mxu0
  %v4816 = vadd.f32 %v4772, %v4815
  %v4817 = vpop.f32.mrf.mxu0
  %v4818 = vadd.f32 %v4774, %v4817
  %4819 = vmatmul.bf16.gmra.mxu0 %v3526
  %v4820 = vpop.f32.mrf.mxu0
  %v4821 = vadd.f32 %v4777, %v4820
  %v4822 = vpop.f32.mrf.mxu0
  %v4823 = vadd.f32 %v4779, %v4822
  %4824 = vmatmul.bf16.gmra.mxu0 %v3533
  %v4825 = vpop.f32.mrf.mxu0
  %v4826 = vadd.f32 %v4782, %v4825
  %v4827 = vpop.f32.mrf.mxu0
  %v4828 = vadd.f32 %v4784, %v4827
  %4829 = vmatmul.bf16.gmra.mxu0 %v3540
  %v4830 = vpop.f32.mrf.mxu0
  %v4831 = vadd.f32 %v4787, %v4830
  %v4832 = vpop.f32.mrf.mxu0
  %v4833 = vadd.f32 %v4789, %v4832
  %4834 = vmatmul.bf16.gmra.mxu0 %v3547
  %v4835 = vpop.f32.mrf.mxu0
  %v4836 = vadd.f32 %v4792, %v4835
  %v4837 = vpop.f32.mrf.mxu0
  %v4838 = vadd.f32 %v4794, %v4837
  %4839 = vmatmul.bf16.gmra.mxu0 %v3554
  %v4840 = vpop.f32.mrf.mxu0
  %v4841 = vadd.f32 %v4797, %v4840
  %v4842 = vpop.f32.mrf.mxu0
  %v4843 = vadd.f32 %v4799, %v4842
  %4844 = vmatmul.bf16.gmra.mxu0 %v3561
  %v4845 = vpop.f32.mrf.mxu0
  %v4846 = vadd.f32 %v4802, %v4845
  %v4847 = vpop.f32.mrf.mxu0
  %v4848 = vadd.f32 %v4804, %v4847
  %4849 = vdwg.mxu0
  %s4850 = scalar_lea.vmem %s3, 896
  %v4851 = vld [vmem:[%s4850] sm:$0xff]
  %v4852 = vld [vmem:[%s4850 + $0x8] sm:$0xff]
  %v4853 = vld [vmem:[%s4850 + $0x10] sm:$0xff]
  %v4854 = vld [vmem:[%s4850 + $0x18] sm:$0xff]
  %v4855 = vld [vmem:[%s4850 + $0x20] sm:$0xff]
  %v4856 = vld [vmem:[%s4850 + $0x28] sm:$0xff]
  %v4857 = vld [vmem:[%s4850 + $0x30] sm:$0xff]
  %v4858 = vld [vmem:[%s4850 + $0x38] sm:$0xff]
  %v4859 = vld [vmem:[%s4850 + $0x40] sm:$0xff]
  %v4860 = vld [vmem:[%s4850 + $0x48] sm:$0xff]
  %v4861 = vld [vmem:[%s4850 + $0x50] sm:$0xff]
  %v4862 = vld [vmem:[%s4850 + $0x58] sm:$0xff]
  %v4863 = vld [vmem:[%s4850 + $0x60] sm:$0xff]
  %v4864 = vld [vmem:[%s4850 + $0x68] sm:$0xff]
  %v4865 = vld [vmem:[%s4850 + $0x70] sm:$0xff]
  %v4866 = vld [vmem:[%s4850 + $0x78] sm:$0xff]
  %v4867 = vld [vmem:[%s4850 + $0x80] sm:$0xff]
  %v4868 = vld [vmem:[%s4850 + $0x88] sm:$0xff]
  %v4869 = vld [vmem:[%s4850 + $0x90] sm:$0xff]
  %v4870 = vld [vmem:[%s4850 + $0x98] sm:$0xff]
  %v4871 = vld [vmem:[%s4850 + $0xa0] sm:$0xff]
  %v4872 = vld [vmem:[%s4850 + $0xa8] sm:$0xff]
  %v4873 = vld [vmem:[%s4850 + $0xb0] sm:$0xff]
  %v4874 = vld [vmem:[%s4850 + $0xb8] sm:$0xff]
  %v4875 = vld [vmem:[%s4850 + $0xc0] sm:$0xff]
  %v4876 = vld [vmem:[%s4850 + $0xc8] sm:$0xff]
  %v4877 = vld [vmem:[%s4850 + $0xd0] sm:$0xff]
  %v4878 = vld [vmem:[%s4850 + $0xd8] sm:$0xff]
  %v4879 = vld [vmem:[%s4850 + $0xe0] sm:$0xff]
  %v4880 = vld [vmem:[%s4850 + $0xe8] sm:$0xff]
  %v4881 = vld [vmem:[%s4850 + $0xf0] sm:$0xff]
  %v4882 = vld [vmem:[%s4850 + $0xf8] sm:$0xff]
  %v4883 = vld [vmem:[%s4850 + $0x100] sm:$0xff]
  %v4884 = vld [vmem:[%s4850 + $0x108] sm:$0xff]
  %v4885 = vld [vmem:[%s4850 + $0x110] sm:$0xff]
  %v4886 = vld [vmem:[%s4850 + $0x118] sm:$0xff]
  %v4887 = vld [vmem:[%s4850 + $0x120] sm:$0xff]
  %v4888 = vld [vmem:[%s4850 + $0x128] sm:$0xff]
  %v4889 = vld [vmem:[%s4850 + $0x130] sm:$0xff]
  %v4890 = vld [vmem:[%s4850 + $0x138] sm:$0xff]
  %v4891 = vld [vmem:[%s4850 + $0x140] sm:$0xff]
  %v4892 = vld [vmem:[%s4850 + $0x148] sm:$0xff]
  %v4893 = vld [vmem:[%s4850 + $0x150] sm:$0xff]
  %v4894 = vld [vmem:[%s4850 + $0x158] sm:$0xff]
  %v4895 = vld [vmem:[%s4850 + $0x160] sm:$0xff]
  %v4896 = vld [vmem:[%s4850 + $0x168] sm:$0xff]
  %v4897 = vld [vmem:[%s4850 + $0x170] sm:$0xff]
  %v4898 = vld [vmem:[%s4850 + $0x178] sm:$0xff]
  %v4899 = vld [vmem:[%s4850 + $0x180] sm:$0xff]
  %v4900 = vld [vmem:[%s4850 + $0x188] sm:$0xff]
  %v4901 = vld [vmem:[%s4850 + $0x190] sm:$0xff]
  %v4902 = vld [vmem:[%s4850 + $0x198] sm:$0xff]
  %v4903 = vld [vmem:[%s4850 + $0x1a0] sm:$0xff]
  %v4904 = vld [vmem:[%s4850 + $0x1a8] sm:$0xff]
  %v4905 = vld [vmem:[%s4850 + $0x1b0] sm:$0xff]
  %v4906 = vld [vmem:[%s4850 + $0x1b8] sm:$0xff]
  %v4907 = vld [vmem:[%s4850 + $0x1c0] sm:$0xff]
  %v4908 = vld [vmem:[%s4850 + $0x1c8] sm:$0xff]
  %v4909 = vld [vmem:[%s4850 + $0x1d0] sm:$0xff]
  %v4910 = vld [vmem:[%s4850 + $0x1d8] sm:$0xff]
  %v4911 = vld [vmem:[%s4850 + $0x1e0] sm:$0xff]
  %v4912 = vld [vmem:[%s4850 + $0x1e8] sm:$0xff]
  %v4913 = vld [vmem:[%s4850 + $0x1f0] sm:$0xff]
  %v4914 = vld [vmem:[%s4850 + $0x1f8] sm:$0xff]
  %v4915 = vld [vmem:[%s4850 + $0x200] sm:$0xff]
  %v4916 = vld [vmem:[%s4850 + $0x208] sm:$0xff]
  %v4917 = vld [vmem:[%s4850 + $0x210] sm:$0xff]
  %v4918 = vld [vmem:[%s4850 + $0x218] sm:$0xff]
  %v4919 = vld [vmem:[%s4850 + $0x220] sm:$0xff]
  %v4920 = vld [vmem:[%s4850 + $0x228] sm:$0xff]
  %v4921 = vld [vmem:[%s4850 + $0x230] sm:$0xff]
  %v4922 = vld [vmem:[%s4850 + $0x238] sm:$0xff]
  %v4923 = vld [vmem:[%s4850 + $0x240] sm:$0xff]
  %v4924 = vld [vmem:[%s4850 + $0x248] sm:$0xff]
  %v4925 = vld [vmem:[%s4850 + $0x250] sm:$0xff]
  %v4926 = vld [vmem:[%s4850 + $0x258] sm:$0xff]
  %v4927 = vld [vmem:[%s4850 + $0x260] sm:$0xff]
  %v4928 = vld [vmem:[%s4850 + $0x268] sm:$0xff]
  %v4929 = vld [vmem:[%s4850 + $0x270] sm:$0xff]
  %v4930 = vld [vmem:[%s4850 + $0x278] sm:$0xff]
  %v4931 = vld [vmem:[%s4850 + $0x280] sm:$0xff]
  %v4932 = vld [vmem:[%s4850 + $0x288] sm:$0xff]
  %v4933 = vld [vmem:[%s4850 + $0x290] sm:$0xff]
  %v4934 = vld [vmem:[%s4850 + $0x298] sm:$0xff]
  %v4935 = vld [vmem:[%s4850 + $0x2a0] sm:$0xff]
  %v4936 = vld [vmem:[%s4850 + $0x2a8] sm:$0xff]
  %v4937 = vld [vmem:[%s4850 + $0x2b0] sm:$0xff]
  %v4938 = vld [vmem:[%s4850 + $0x2b8] sm:$0xff]
  %v4939 = vld [vmem:[%s4850 + $0x2c0] sm:$0xff]
  %v4940 = vld [vmem:[%s4850 + $0x2c8] sm:$0xff]
  %v4941 = vld [vmem:[%s4850 + $0x2d0] sm:$0xff]
  %v4942 = vld [vmem:[%s4850 + $0x2d8] sm:$0xff]
  %v4943 = vld [vmem:[%s4850 + $0x2e0] sm:$0xff]
  %v4944 = vld [vmem:[%s4850 + $0x2e8] sm:$0xff]
  %v4945 = vld [vmem:[%s4850 + $0x2f0] sm:$0xff]
  %v4946 = vld [vmem:[%s4850 + $0x2f8] sm:$0xff]
  %v4947 = vld [vmem:[%s4850 + $0x300] sm:$0xff]
  %v4948 = vld [vmem:[%s4850 + $0x308] sm:$0xff]
  %v4949 = vld [vmem:[%s4850 + $0x310] sm:$0xff]
  %v4950 = vld [vmem:[%s4850 + $0x318] sm:$0xff]
  %v4951 = vld [vmem:[%s4850 + $0x320] sm:$0xff]
  %v4952 = vld [vmem:[%s4850 + $0x328] sm:$0xff]
  %v4953 = vld [vmem:[%s4850 + $0x330] sm:$0xff]
  %v4954 = vld [vmem:[%s4850 + $0x338] sm:$0xff]
  %v4955 = vld [vmem:[%s4850 + $0x340] sm:$0xff]
  %v4956 = vld [vmem:[%s4850 + $0x348] sm:$0xff]
  %v4957 = vld [vmem:[%s4850 + $0x350] sm:$0xff]
  %v4958 = vld [vmem:[%s4850 + $0x358] sm:$0xff]
  %v4959 = vld [vmem:[%s4850 + $0x360] sm:$0xff]
  %v4960 = vld [vmem:[%s4850 + $0x368] sm:$0xff]
  %v4961 = vld [vmem:[%s4850 + $0x370] sm:$0xff]
  %v4962 = vld [vmem:[%s4850 + $0x378] sm:$0xff]
  %v5075 = vunpack.c.l.b16 %v4851
  %v5076 = vunpack.c.h.b16 %v4851
  %v5077 = vunpack.c.l.b16 %v4852
  %v5078 = vunpack.c.h.b16 %v4852
  %v5079 = vunpack.c.l.b16 %v4853
  %v5080 = vunpack.c.h.b16 %v4853
  %v5081 = vunpack.c.l.b16 %v4854
  %v5082 = vunpack.c.h.b16 %v4854
  %v5083 = vunpack.c.l.b16 %v4855
  %v5084 = vunpack.c.h.b16 %v4855
  %v5085 = vunpack.c.l.b16 %v4856
  %v5086 = vunpack.c.h.b16 %v4856
  %v5087 = vunpack.c.l.b16 %v4857
  %v5088 = vunpack.c.h.b16 %v4857
  %v5089 = vunpack.c.l.b16 %v4858
  %v5090 = vunpack.c.h.b16 %v4858
  %v5091 = vunpack.c.l.b16 %v4859
  %v5092 = vunpack.c.h.b16 %v4859
  %v5093 = vunpack.c.l.b16 %v4860
  %v5094 = vunpack.c.h.b16 %v4860
  %v5095 = vunpack.c.l.b16 %v4861
  %v5096 = vunpack.c.h.b16 %v4861
  %v5097 = vunpack.c.l.b16 %v4862
  %v5098 = vunpack.c.h.b16 %v4862
  %v5099 = vunpack.c.l.b16 %v4863
  %v5100 = vunpack.c.h.b16 %v4863
  %v5101 = vunpack.c.l.b16 %v4864
  %v5102 = vunpack.c.h.b16 %v4864
  %v5103 = vunpack.c.l.b16 %v4865
  %v5104 = vunpack.c.h.b16 %v4865
  %v5105 = vunpack.c.l.b16 %v4866
  %v5106 = vunpack.c.h.b16 %v4866
  %v5107 = vunpack.c.l.b16 %v4867
  %v5108 = vunpack.c.h.b16 %v4867
  %v5109 = vunpack.c.l.b16 %v4868
  %v5110 = vunpack.c.h.b16 %v4868
  %v5111 = vunpack.c.l.b16 %v4869
  %v5112 = vunpack.c.h.b16 %v4869
  %v5113 = vunpack.c.l.b16 %v4870
  %v5114 = vunpack.c.h.b16 %v4870
  %v5115 = vunpack.c.l.b16 %v4871
  %v5116 = vunpack.c.h.b16 %v4871
  %v5117 = vunpack.c.l.b16 %v4872
  %v5118 = vunpack.c.h.b16 %v4872
  %v5119 = vunpack.c.l.b16 %v4873
  %v5120 = vunpack.c.h.b16 %v4873
  %v5121 = vunpack.c.l.b16 %v4874
  %v5122 = vunpack.c.h.b16 %v4874
  %v5123 = vunpack.c.l.b16 %v4875
  %v5124 = vunpack.c.h.b16 %v4875
  %v5125 = vunpack.c.l.b16 %v4876
  %v5126 = vunpack.c.h.b16 %v4876
  %v5127 = vunpack.c.l.b16 %v4877
  %v5128 = vunpack.c.h.b16 %v4877
  %v5129 = vunpack.c.l.b16 %v4878
  %v5130 = vunpack.c.h.b16 %v4878
  %v5131 = vunpack.c.l.b16 %v4879
  %v5132 = vunpack.c.h.b16 %v4879
  %v5133 = vunpack.c.l.b16 %v4880
  %v5134 = vunpack.c.h.b16 %v4880
  %v5135 = vunpack.c.l.b16 %v4881
  %v5136 = vunpack.c.h.b16 %v4881
  %v5137 = vunpack.c.l.b16 %v4882
  %v5138 = vunpack.c.h.b16 %v4882
  %v5139 = vunpack.c.l.b16 %v4883
  %v5140 = vunpack.c.h.b16 %v4883
  %v5141 = vunpack.c.l.b16 %v4884
  %v5142 = vunpack.c.h.b16 %v4884
  %v5143 = vunpack.c.l.b16 %v4885
  %v5144 = vunpack.c.h.b16 %v4885
  %v5145 = vunpack.c.l.b16 %v4886
  %v5146 = vunpack.c.h.b16 %v4886
  %v5147 = vunpack.c.l.b16 %v4887
  %v5148 = vunpack.c.h.b16 %v4887
  %v5149 = vunpack.c.l.b16 %v4888
  %v5150 = vunpack.c.h.b16 %v4888
  %v5151 = vunpack.c.l.b16 %v4889
  %v5152 = vunpack.c.h.b16 %v4889
  %v5153 = vunpack.c.l.b16 %v4890
  %v5154 = vunpack.c.h.b16 %v4890
  %v5155 = vunpack.c.l.b16 %v4891
  %v5156 = vunpack.c.h.b16 %v4891
  %v5157 = vunpack.c.l.b16 %v4892
  %v5158 = vunpack.c.h.b16 %v4892
  %v5159 = vunpack.c.l.b16 %v4893
  %v5160 = vunpack.c.h.b16 %v4893
  %v5161 = vunpack.c.l.b16 %v4894
  %v5162 = vunpack.c.h.b16 %v4894
  %v5163 = vunpack.c.l.b16 %v4895
  %v5164 = vunpack.c.h.b16 %v4895
  %v5165 = vunpack.c.l.b16 %v4896
  %v5166 = vunpack.c.h.b16 %v4896
  %v5167 = vunpack.c.l.b16 %v4897
  %v5168 = vunpack.c.h.b16 %v4897
  %v5169 = vunpack.c.l.b16 %v4898
  %v5170 = vunpack.c.h.b16 %v4898
  %v5171 = vunpack.c.l.b16 %v4899
  %v5172 = vunpack.c.h.b16 %v4899
  %v5173 = vunpack.c.l.b16 %v4900
  %v5174 = vunpack.c.h.b16 %v4900
  %v5175 = vunpack.c.l.b16 %v4901
  %v5176 = vunpack.c.h.b16 %v4901
  %v5177 = vunpack.c.l.b16 %v4902
  %v5178 = vunpack.c.h.b16 %v4902
  %v5179 = vunpack.c.l.b16 %v4903
  %v5180 = vunpack.c.h.b16 %v4903
  %v5181 = vunpack.c.l.b16 %v4904
  %v5182 = vunpack.c.h.b16 %v4904
  %v5183 = vunpack.c.l.b16 %v4905
  %v5184 = vunpack.c.h.b16 %v4905
  %v5185 = vunpack.c.l.b16 %v4906
  %v5186 = vunpack.c.h.b16 %v4906
  %v5187 = vunpack.c.l.b16 %v4907
  %v5188 = vunpack.c.h.b16 %v4907
  %v5189 = vunpack.c.l.b16 %v4908
  %v5190 = vunpack.c.h.b16 %v4908
  %v5191 = vunpack.c.l.b16 %v4909
  %v5192 = vunpack.c.h.b16 %v4909
  %v5193 = vunpack.c.l.b16 %v4910
  %v5194 = vunpack.c.h.b16 %v4910
  %v5195 = vunpack.c.l.b16 %v4911
  %v5196 = vunpack.c.h.b16 %v4911
  %v5197 = vunpack.c.l.b16 %v4912
  %v5198 = vunpack.c.h.b16 %v4912
  %v5199 = vunpack.c.l.b16 %v4913
  %v5200 = vunpack.c.h.b16 %v4913
  %v5201 = vunpack.c.l.b16 %v4914
  %v5202 = vunpack.c.h.b16 %v4914
  %v5203 = vunpack.c.l.b16 %v4915
  %v5204 = vunpack.c.h.b16 %v4915
  %v5205 = vunpack.c.l.b16 %v4916
  %v5206 = vunpack.c.h.b16 %v4916
  %v5207 = vunpack.c.l.b16 %v4917
  %v5208 = vunpack.c.h.b16 %v4917
  %v5209 = vunpack.c.l.b16 %v4918
  %v5210 = vunpack.c.h.b16 %v4918
  %v5211 = vunpack.c.l.b16 %v4919
  %v5212 = vunpack.c.h.b16 %v4919
  %v5213 = vunpack.c.l.b16 %v4920
  %v5214 = vunpack.c.h.b16 %v4920
  %v5215 = vunpack.c.l.b16 %v4921
  %v5216 = vunpack.c.h.b16 %v4921
  %v5217 = vunpack.c.l.b16 %v4922
  %v5218 = vunpack.c.h.b16 %v4922
  %v5219 = vunpack.c.l.b16 %v4923
  %v5220 = vunpack.c.h.b16 %v4923
  %v5221 = vunpack.c.l.b16 %v4924
  %v5222 = vunpack.c.h.b16 %v4924
  %v5223 = vunpack.c.l.b16 %v4925
  %v5224 = vunpack.c.h.b16 %v4925
  %v5225 = vunpack.c.l.b16 %v4926
  %v5226 = vunpack.c.h.b16 %v4926
  %v5227 = vunpack.c.l.b16 %v4927
  %v5228 = vunpack.c.h.b16 %v4927
  %v5229 = vunpack.c.l.b16 %v4928
  %v5230 = vunpack.c.h.b16 %v4928
  %v5231 = vunpack.c.l.b16 %v4929
  %v5232 = vunpack.c.h.b16 %v4929
  %v5233 = vunpack.c.l.b16 %v4930
  %v5234 = vunpack.c.h.b16 %v4930
  %v5235 = vunpack.c.l.b16 %v4931
  %v5236 = vunpack.c.h.b16 %v4931
  %v5237 = vunpack.c.l.b16 %v4932
  %v5238 = vunpack.c.h.b16 %v4932
  %v5239 = vunpack.c.l.b16 %v4933
  %v5240 = vunpack.c.h.b16 %v4933
  %v5241 = vunpack.c.l.b16 %v4934
  %v5242 = vunpack.c.h.b16 %v4934
  %v5243 = vunpack.c.l.b16 %v4935
  %v5244 = vunpack.c.h.b16 %v4935
  %v5245 = vunpack.c.l.b16 %v4936
  %v5246 = vunpack.c.h.b16 %v4936
  %v5247 = vunpack.c.l.b16 %v4937
  %v5248 = vunpack.c.h.b16 %v4937
  %v5249 = vunpack.c.l.b16 %v4938
  %v5250 = vunpack.c.h.b16 %v4938
  %v5251 = vunpack.c.l.b16 %v4939
  %v5252 = vunpack.c.h.b16 %v4939
  %v5253 = vunpack.c.l.b16 %v4940
  %v5254 = vunpack.c.h.b16 %v4940
  %v5255 = vunpack.c.l.b16 %v4941
  %v5256 = vunpack.c.h.b16 %v4941
  %v5257 = vunpack.c.l.b16 %v4942
  %v5258 = vunpack.c.h.b16 %v4942
  %v5259 = vunpack.c.l.b16 %v4943
  %v5260 = vunpack.c.h.b16 %v4943
  %v5261 = vunpack.c.l.b16 %v4944
  %v5262 = vunpack.c.h.b16 %v4944
  %v5263 = vunpack.c.l.b16 %v4945
  %v5264 = vunpack.c.h.b16 %v4945
  %v5265 = vunpack.c.l.b16 %v4946
  %v5266 = vunpack.c.h.b16 %v4946
  %v5267 = vunpack.c.l.b16 %v4947
  %v5268 = vunpack.c.h.b16 %v4947
  %v5269 = vunpack.c.l.b16 %v4948
  %v5270 = vunpack.c.h.b16 %v4948
  %v5271 = vunpack.c.l.b16 %v4949
  %v5272 = vunpack.c.h.b16 %v4949
  %v5273 = vunpack.c.l.b16 %v4950
  %v5274 = vunpack.c.h.b16 %v4950
  %v5275 = vunpack.c.l.b16 %v4951
  %v5276 = vunpack.c.h.b16 %v4951
  %v5277 = vunpack.c.l.b16 %v4952
  %v5278 = vunpack.c.h.b16 %v4952
  %v5279 = vunpack.c.l.b16 %v4953
  %v5280 = vunpack.c.h.b16 %v4953
  %v5281 = vunpack.c.l.b16 %v4954
  %v5282 = vunpack.c.h.b16 %v4954
  %v5283 = vunpack.c.l.b16 %v4955
  %v5284 = vunpack.c.h.b16 %v4955
  %v5285 = vunpack.c.l.b16 %v4956
  %v5286 = vunpack.c.h.b16 %v4956
  %v5287 = vunpack.c.l.b16 %v4957
  %v5288 = vunpack.c.h.b16 %v4957
  %v5289 = vunpack.c.l.b16 %v4958
  %v5290 = vunpack.c.h.b16 %v4958
  %v5291 = vunpack.c.l.b16 %v4959
  %v5292 = vunpack.c.h.b16 %v4959
  %v5293 = vunpack.c.l.b16 %v4960
  %v5294 = vunpack.c.h.b16 %v4960
  %v5295 = vunpack.c.l.b16 %v4961
  %v5296 = vunpack.c.h.b16 %v4961
  %v5297 = vunpack.c.l.b16 %v4962
  %v5298 = vunpack.c.h.b16 %v4962
  %v5299 = vpack.c.b16 %v5077, %v5075
  %v5300 = vpack.c.b16 %v5078, %v5076
  %v5301 = vpack.c.b16 %v5081, %v5079
  %v5302 = vpack.c.b16 %v5082, %v5080
  %v5303 = vpack.c.b16 %v5085, %v5083
  %v5304 = vpack.c.b16 %v5086, %v5084
  %v5305 = vpack.c.b16 %v5089, %v5087
  %v5306 = vpack.c.b16 %v5090, %v5088
  %v5307 = vpack.c.b16 %v5093, %v5091
  %v5308 = vpack.c.b16 %v5094, %v5092
  %v5309 = vpack.c.b16 %v5097, %v5095
  %v5310 = vpack.c.b16 %v5098, %v5096
  %v5311 = vpack.c.b16 %v5101, %v5099
  %v5312 = vpack.c.b16 %v5102, %v5100
  %v5313 = vpack.c.b16 %v5105, %v5103
  %v5314 = vpack.c.b16 %v5106, %v5104
  %v5315 = vpack.c.b16 %v5109, %v5107
  %v5316 = vpack.c.b16 %v5110, %v5108
  %v5317 = vpack.c.b16 %v5113, %v5111
  %v5318 = vpack.c.b16 %v5114, %v5112
  %v5319 = vpack.c.b16 %v5117, %v5115
  %v5320 = vpack.c.b16 %v5118, %v5116
  %v5321 = vpack.c.b16 %v5121, %v5119
  %v5322 = vpack.c.b16 %v5122, %v5120
  %v5323 = vpack.c.b16 %v5125, %v5123
  %v5324 = vpack.c.b16 %v5126, %v5124
  %v5325 = vpack.c.b16 %v5129, %v5127
  %v5326 = vpack.c.b16 %v5130, %v5128
  %v5327 = vpack.c.b16 %v5133, %v5131
  %v5328 = vpack.c.b16 %v5134, %v5132
  %v5329 = vpack.c.b16 %v5137, %v5135
  %v5330 = vpack.c.b16 %v5138, %v5136
  %v5331 = vpack.c.b16 %v5141, %v5139
  %v5332 = vpack.c.b16 %v5142, %v5140
  %v5333 = vpack.c.b16 %v5145, %v5143
  %v5334 = vpack.c.b16 %v5146, %v5144
  %v5335 = vpack.c.b16 %v5149, %v5147
  %v5336 = vpack.c.b16 %v5150, %v5148
  %v5337 = vpack.c.b16 %v5153, %v5151
  %v5338 = vpack.c.b16 %v5154, %v5152
  %v5339 = vpack.c.b16 %v5157, %v5155
  %v5340 = vpack.c.b16 %v5158, %v5156
  %v5341 = vpack.c.b16 %v5161, %v5159
  %v5342 = vpack.c.b16 %v5162, %v5160
  %v5343 = vpack.c.b16 %v5165, %v5163
  %v5344 = vpack.c.b16 %v5166, %v5164
  %v5345 = vpack.c.b16 %v5169, %v5167
  %v5346 = vpack.c.b16 %v5170, %v5168
  %v5347 = vpack.c.b16 %v5173, %v5171
  %v5348 = vpack.c.b16 %v5174, %v5172
  %v5349 = vpack.c.b16 %v5177, %v5175
  %v5350 = vpack.c.b16 %v5178, %v5176
  %v5351 = vpack.c.b16 %v5181, %v5179
  %v5352 = vpack.c.b16 %v5182, %v5180
  %v5353 = vpack.c.b16 %v5185, %v5183
  %v5354 = vpack.c.b16 %v5186, %v5184
  %v5355 = vpack.c.b16 %v5189, %v5187
  %v5356 = vpack.c.b16 %v5190, %v5188
  %v5357 = vpack.c.b16 %v5193, %v5191
  %v5358 = vpack.c.b16 %v5194, %v5192
  %v5359 = vpack.c.b16 %v5197, %v5195
  %v5360 = vpack.c.b16 %v5198, %v5196
  %v5361 = vpack.c.b16 %v5201, %v5199
  %v5362 = vpack.c.b16 %v5202, %v5200
  %v5363 = vpack.c.b16 %v5205, %v5203
  %v5364 = vpack.c.b16 %v5206, %v5204
  %v5365 = vpack.c.b16 %v5209, %v5207
  %v5366 = vpack.c.b16 %v5210, %v5208
  %v5367 = vpack.c.b16 %v5213, %v5211
  %v5368 = vpack.c.b16 %v5214, %v5212
  %v5369 = vpack.c.b16 %v5217, %v5215
  %v5370 = vpack.c.b16 %v5218, %v5216
  %v5371 = vpack.c.b16 %v5221, %v5219
  %v5372 = vpack.c.b16 %v5222, %v5220
  %v5373 = vpack.c.b16 %v5225, %v5223
  %v5374 = vpack.c.b16 %v5226, %v5224
  %v5375 = vpack.c.b16 %v5229, %v5227
  %v5376 = vpack.c.b16 %v5230, %v5228
  %v5377 = vpack.c.b16 %v5233, %v5231
  %v5378 = vpack.c.b16 %v5234, %v5232
  %v5379 = vpack.c.b16 %v5237, %v5235
  %v5380 = vpack.c.b16 %v5238, %v5236
  %v5381 = vpack.c.b16 %v5241, %v5239
  %v5382 = vpack.c.b16 %v5242, %v5240
  %v5383 = vpack.c.b16 %v5245, %v5243
  %v5384 = vpack.c.b16 %v5246, %v5244
  %v5385 = vpack.c.b16 %v5249, %v5247
  %v5386 = vpack.c.b16 %v5250, %v5248
  %v5387 = vpack.c.b16 %v5253, %v5251
  %v5388 = vpack.c.b16 %v5254, %v5252
  %v5389 = vpack.c.b16 %v5257, %v5255
  %v5390 = vpack.c.b16 %v5258, %v5256
  %v5391 = vpack.c.b16 %v5261, %v5259
  %v5392 = vpack.c.b16 %v5262, %v5260
  %v5393 = vpack.c.b16 %v5265, %v5263
  %v5394 = vpack.c.b16 %v5266, %v5264
  %v5395 = vpack.c.b16 %v5269, %v5267
  %v5396 = vpack.c.b16 %v5270, %v5268
  %v5397 = vpack.c.b16 %v5273, %v5271
  %v5398 = vpack.c.b16 %v5274, %v5272
  %v5399 = vpack.c.b16 %v5277, %v5275
  %v5400 = vpack.c.b16 %v5278, %v5276
  %v5401 = vpack.c.b16 %v5281, %v5279
  %v5402 = vpack.c.b16 %v5282, %v5280
  %v5403 = vpack.c.b16 %v5285, %v5283
  %v5404 = vpack.c.b16 %v5286, %v5284
  %v5405 = vpack.c.b16 %v5289, %v5287
  %v5406 = vpack.c.b16 %v5290, %v5288
  %v5407 = vpack.c.b16 %v5293, %v5291
  %v5408 = vpack.c.b16 %v5294, %v5292
  %v5409 = vpack.c.b16 %v5297, %v5295
  %v5410 = vpack.c.b16 %v5298, %v5296
  %5523 = vmatpush.bf16.msra.mxu0 %v5313
  %5524 = vmatpush.bf16.msra.mxu0 %v5311
  %5525 = vmatpush.bf16.msra.mxu0 %v5309
  %5526 = vmatpush.bf16.msra.mxu0 %v5307
  %5527 = vmatpush.bf16.msra.mxu0 %v5305
  %5528 = vmatpush.bf16.msra.mxu0 %v5303
  %5529 = vmatpush.bf16.msra.mxu0 %v5301
  %5530 = vmatpush.bf16.msra.mxu0 %v5299
  %5531 = vmatmul.bf16.gmra.mxu0 %v3513
  %v5532 = vpop.f32.mrf.mxu0
  %v5533 = vadd.f32 0.0, %v5532
  %v5534 = vpop.f32.mrf.mxu0
  %v5535 = vadd.f32 0.0, %v5534
  %5536 = vmatmul.bf16.gmra.mxu0 %v3520
  %v5537 = vpop.f32.mrf.mxu0
  %v5538 = vadd.f32 0.0, %v5537
  %v5539 = vpop.f32.mrf.mxu0
  %v5540 = vadd.f32 0.0, %v5539
  %5541 = vmatmul.bf16.gmra.mxu0 %v3527
  %v5542 = vpop.f32.mrf.mxu0
  %v5543 = vadd.f32 0.0, %v5542
  %v5544 = vpop.f32.mrf.mxu0
  %v5545 = vadd.f32 0.0, %v5544
  %5546 = vmatmul.bf16.gmra.mxu0 %v3534
  %v5547 = vpop.f32.mrf.mxu0
  %v5548 = vadd.f32 0.0, %v5547
  %v5549 = vpop.f32.mrf.mxu0
  %v5550 = vadd.f32 0.0, %v5549
  %5551 = vmatmul.bf16.gmra.mxu0 %v3541
  %v5552 = vpop.f32.mrf.mxu0
  %v5553 = vadd.f32 0.0, %v5552
  %v5554 = vpop.f32.mrf.mxu0
  %v5555 = vadd.f32 0.0, %v5554
  %5556 = vmatmul.bf16.gmra.mxu0 %v3548
  %v5557 = vpop.f32.mrf.mxu0
  %v5558 = vadd.f32 0.0, %v5557
  %v5559 = vpop.f32.mrf.mxu0
  %v5560 = vadd.f32 0.0, %v5559
  %5561 = vmatmul.bf16.gmra.mxu0 %v3555
  %v5562 = vpop.f32.mrf.mxu0
  %v5563 = vadd.f32 0.0, %v5562
  %v5564 = vpop.f32.mrf.mxu0
  %v5565 = vadd.f32 0.0, %v5564
  %5566 = vdwg.mxu0
  %5567 = vmatpush.bf16.msra.mxu0 %v5329
  %5568 = vmatpush.bf16.msra.mxu0 %v5327
  %5569 = vmatpush.bf16.msra.mxu0 %v5325
  %5570 = vmatpush.bf16.msra.mxu0 %v5323
  %5571 = vmatpush.bf16.msra.mxu0 %v5321
  %5572 = vmatpush.bf16.msra.mxu0 %v5319
  %5573 = vmatpush.bf16.msra.mxu0 %v5317
  %5574 = vmatpush.bf16.msra.mxu0 %v5315
  %5575 = vmatmul.bf16.gmra.mxu0 %v3514
  %v5576 = vpop.f32.mrf.mxu0
  %v5577 = vadd.f32 %v5533, %v5576
  %v5578 = vpop.f32.mrf.mxu0
  %v5579 = vadd.f32 %v5535, %v5578
  %5580 = vmatmul.bf16.gmra.mxu0 %v3521
  %v5581 = vpop.f32.mrf.mxu0
  %v5582 = vadd.f32 %v5538, %v5581
  %v5583 = vpop.f32.mrf.mxu0
  %v5584 = vadd.f32 %v5540, %v5583
  %5585 = vmatmul.bf16.gmra.mxu0 %v3528
  %v5586 = vpop.f32.mrf.mxu0
  %v5587 = vadd.f32 %v5543, %v5586
  %v5588 = vpop.f32.mrf.mxu0
  %v5589 = vadd.f32 %v5545, %v5588
  %5590 = vmatmul.bf16.gmra.mxu0 %v3535
  %v5591 = vpop.f32.mrf.mxu0
  %v5592 = vadd.f32 %v5548, %v5591
  %v5593 = vpop.f32.mrf.mxu0
  %v5594 = vadd.f32 %v5550, %v5593
  %5595 = vmatmul.bf16.gmra.mxu0 %v3542
  %v5596 = vpop.f32.mrf.mxu0
  %v5597 = vadd.f32 %v5553, %v5596
  %v5598 = vpop.f32.mrf.mxu0
  %v5599 = vadd.f32 %v5555, %v5598
  %5600 = vmatmul.bf16.gmra.mxu0 %v3549
  %v5601 = vpop.f32.mrf.mxu0
  %v5602 = vadd.f32 %v5558, %v5601
  %v5603 = vpop.f32.mrf.mxu0
  %v5604 = vadd.f32 %v5560, %v5603
  %5605 = vmatmul.bf16.gmra.mxu0 %v3556
  %v5606 = vpop.f32.mrf.mxu0
  %v5607 = vadd.f32 %v5563, %v5606
  %v5608 = vpop.f32.mrf.mxu0
  %v5609 = vadd.f32 %v5565, %v5608
  %5610 = vdwg.mxu0
  %5611 = vmatpush.bf16.msra.mxu0 %v5345
  %5612 = vmatpush.bf16.msra.mxu0 %v5343
  %5613 = vmatpush.bf16.msra.mxu0 %v5341
  %5614 = vmatpush.bf16.msra.mxu0 %v5339
  %5615 = vmatpush.bf16.msra.mxu0 %v5337
  %5616 = vmatpush.bf16.msra.mxu0 %v5335
  %5617 = vmatpush.bf16.msra.mxu0 %v5333
  %5618 = vmatpush.bf16.msra.mxu0 %v5331
  %5619 = vmatmul.bf16.gmra.mxu0 %v3515
  %v5620 = vpop.f32.mrf.mxu0
  %v5621 = vadd.f32 %v5577, %v5620
  %v5622 = vpop.f32.mrf.mxu0
  %v5623 = vadd.f32 %v5579, %v5622
  %5624 = vmatmul.bf16.gmra.mxu0 %v3522
  %v5625 = vpop.f32.mrf.mxu0
  %v5626 = vadd.f32 %v5582, %v5625
  %v5627 = vpop.f32.mrf.mxu0
  %v5628 = vadd.f32 %v5584, %v5627
  %5629 = vmatmul.bf16.gmra.mxu0 %v3529
  %v5630 = vpop.f32.mrf.mxu0
  %v5631 = vadd.f32 %v5587, %v5630
  %v5632 = vpop.f32.mrf.mxu0
  %v5633 = vadd.f32 %v5589, %v5632
  %5634 = vmatmul.bf16.gmra.mxu0 %v3536
  %v5635 = vpop.f32.mrf.mxu0
  %v5636 = vadd.f32 %v5592, %v5635
  %v5637 = vpop.f32.mrf.mxu0
  %v5638 = vadd.f32 %v5594, %v5637
  %5639 = vmatmul.bf16.gmra.mxu0 %v3543
  %v5640 = vpop.f32.mrf.mxu0
  %v5641 = vadd.f32 %v5597, %v5640
  %v5642 = vpop.f32.mrf.mxu0
  %v5643 = vadd.f32 %v5599, %v5642
  %5644 = vmatmul.bf16.gmra.mxu0 %v3550
  %v5645 = vpop.f32.mrf.mxu0
  %v5646 = vadd.f32 %v5602, %v5645
  %v5647 = vpop.f32.mrf.mxu0
  %v5648 = vadd.f32 %v5604, %v5647
  %5649 = vmatmul.bf16.gmra.mxu0 %v3557
  %v5650 = vpop.f32.mrf.mxu0
  %v5651 = vadd.f32 %v5607, %v5650
  %v5652 = vpop.f32.mrf.mxu0
  %v5653 = vadd.f32 %v5609, %v5652
  %5654 = vdwg.mxu0
  %5655 = vmatpush.bf16.msra.mxu0 %v5361
  %5656 = vmatpush.bf16.msra.mxu0 %v5359
  %5657 = vmatpush.bf16.msra.mxu0 %v5357
  %5658 = vmatpush.bf16.msra.mxu0 %v5355
  %5659 = vmatpush.bf16.msra.mxu0 %v5353
  %5660 = vmatpush.bf16.msra.mxu0 %v5351
  %5661 = vmatpush.bf16.msra.mxu0 %v5349
  %5662 = vmatpush.bf16.msra.mxu0 %v5347
  %5663 = vmatmul.bf16.gmra.mxu0 %v3516
  %v5664 = vpop.f32.mrf.mxu0
  %v5665 = vadd.f32 %v5621, %v5664
  %v5666 = vpop.f32.mrf.mxu0
  %v5667 = vadd.f32 %v5623, %v5666
  %5668 = vmatmul.bf16.gmra.mxu0 %v3523
  %v5669 = vpop.f32.mrf.mxu0
  %v5670 = vadd.f32 %v5626, %v5669
  %v5671 = vpop.f32.mrf.mxu0
  %v5672 = vadd.f32 %v5628, %v5671
  %5673 = vmatmul.bf16.gmra.mxu0 %v3530
  %v5674 = vpop.f32.mrf.mxu0
  %v5675 = vadd.f32 %v5631, %v5674
  %v5676 = vpop.f32.mrf.mxu0
  %v5677 = vadd.f32 %v5633, %v5676
  %5678 = vmatmul.bf16.gmra.mxu0 %v3537
  %v5679 = vpop.f32.mrf.mxu0
  %v5680 = vadd.f32 %v5636, %v5679
  %v5681 = vpop.f32.mrf.mxu0
  %v5682 = vadd.f32 %v5638, %v5681
  %5683 = vmatmul.bf16.gmra.mxu0 %v3544
  %v5684 = vpop.f32.mrf.mxu0
  %v5685 = vadd.f32 %v5641, %v5684
  %v5686 = vpop.f32.mrf.mxu0
  %v5687 = vadd.f32 %v5643, %v5686
  %5688 = vmatmul.bf16.gmra.mxu0 %v3551
  %v5689 = vpop.f32.mrf.mxu0
  %v5690 = vadd.f32 %v5646, %v5689
  %v5691 = vpop.f32.mrf.mxu0
  %v5692 = vadd.f32 %v5648, %v5691
  %5693 = vmatmul.bf16.gmra.mxu0 %v3558
  %v5694 = vpop.f32.mrf.mxu0
  %v5695 = vadd.f32 %v5651, %v5694
  %v5696 = vpop.f32.mrf.mxu0
  %v5697 = vadd.f32 %v5653, %v5696
  %5698 = vdwg.mxu0
  %5699 = vmatpush.bf16.msra.mxu0 %v5377
  %5700 = vmatpush.bf16.msra.mxu0 %v5375
  %5701 = vmatpush.bf16.msra.mxu0 %v5373
  %5702 = vmatpush.bf16.msra.mxu0 %v5371
  %5703 = vmatpush.bf16.msra.mxu0 %v5369
  %5704 = vmatpush.bf16.msra.mxu0 %v5367
  %5705 = vmatpush.bf16.msra.mxu0 %v5365
  %5706 = vmatpush.bf16.msra.mxu0 %v5363
  %5707 = vmatmul.bf16.gmra.mxu0 %v3517
  %v5708 = vpop.f32.mrf.mxu0
  %v5709 = vadd.f32 %v5665, %v5708
  %v5710 = vpop.f32.mrf.mxu0
  %v5711 = vadd.f32 %v5667, %v5710
  %5712 = vmatmul.bf16.gmra.mxu0 %v3524
  %v5713 = vpop.f32.mrf.mxu0
  %v5714 = vadd.f32 %v5670, %v5713
  %v5715 = vpop.f32.mrf.mxu0
  %v5716 = vadd.f32 %v5672, %v5715
  %5717 = vmatmul.bf16.gmra.mxu0 %v3531
  %v5718 = vpop.f32.mrf.mxu0
  %v5719 = vadd.f32 %v5675, %v5718
  %v5720 = vpop.f32.mrf.mxu0
  %v5721 = vadd.f32 %v5677, %v5720
  %5722 = vmatmul.bf16.gmra.mxu0 %v3538
  %v5723 = vpop.f32.mrf.mxu0
  %v5724 = vadd.f32 %v5680, %v5723
  %v5725 = vpop.f32.mrf.mxu0
  %v5726 = vadd.f32 %v5682, %v5725
  %5727 = vmatmul.bf16.gmra.mxu0 %v3545
  %v5728 = vpop.f32.mrf.mxu0
  %v5729 = vadd.f32 %v5685, %v5728
  %v5730 = vpop.f32.mrf.mxu0
  %v5731 = vadd.f32 %v5687, %v5730
  %5732 = vmatmul.bf16.gmra.mxu0 %v3552
  %v5733 = vpop.f32.mrf.mxu0
  %v5734 = vadd.f32 %v5690, %v5733
  %v5735 = vpop.f32.mrf.mxu0
  %v5736 = vadd.f32 %v5692, %v5735
  %5737 = vmatmul.bf16.gmra.mxu0 %v3559
  %v5738 = vpop.f32.mrf.mxu0
  %v5739 = vadd.f32 %v5695, %v5738
  %v5740 = vpop.f32.mrf.mxu0
  %v5741 = vadd.f32 %v5697, %v5740
  %5742 = vdwg.mxu0
  %5743 = vmatpush.bf16.msra.mxu0 %v5393
  %5744 = vmatpush.bf16.msra.mxu0 %v5391
  %5745 = vmatpush.bf16.msra.mxu0 %v5389
  %5746 = vmatpush.bf16.msra.mxu0 %v5387
  %5747 = vmatpush.bf16.msra.mxu0 %v5385
  %5748 = vmatpush.bf16.msra.mxu0 %v5383
  %5749 = vmatpush.bf16.msra.mxu0 %v5381
  %5750 = vmatpush.bf16.msra.mxu0 %v5379
  %5751 = vmatmul.bf16.gmra.mxu0 %v3518
  %v5752 = vpop.f32.mrf.mxu0
  %v5753 = vadd.f32 %v5709, %v5752
  %v5754 = vpop.f32.mrf.mxu0
  %v5755 = vadd.f32 %v5711, %v5754
  %5756 = vmatmul.bf16.gmra.mxu0 %v3525
  %v5757 = vpop.f32.mrf.mxu0
  %v5758 = vadd.f32 %v5714, %v5757
  %v5759 = vpop.f32.mrf.mxu0
  %v5760 = vadd.f32 %v5716, %v5759
  %5761 = vmatmul.bf16.gmra.mxu0 %v3532
  %v5762 = vpop.f32.mrf.mxu0
  %v5763 = vadd.f32 %v5719, %v5762
  %v5764 = vpop.f32.mrf.mxu0
  %v5765 = vadd.f32 %v5721, %v5764
  %5766 = vmatmul.bf16.gmra.mxu0 %v3539
  %v5767 = vpop.f32.mrf.mxu0
  %v5768 = vadd.f32 %v5724, %v5767
  %v5769 = vpop.f32.mrf.mxu0
  %v5770 = vadd.f32 %v5726, %v5769
  %5771 = vmatmul.bf16.gmra.mxu0 %v3546
  %v5772 = vpop.f32.mrf.mxu0
  %v5773 = vadd.f32 %v5729, %v5772
  %v5774 = vpop.f32.mrf.mxu0
  %v5775 = vadd.f32 %v5731, %v5774
  %5776 = vmatmul.bf16.gmra.mxu0 %v3553
  %v5777 = vpop.f32.mrf.mxu0
  %v5778 = vadd.f32 %v5734, %v5777
  %v5779 = vpop.f32.mrf.mxu0
  %v5780 = vadd.f32 %v5736, %v5779
  %5781 = vmatmul.bf16.gmra.mxu0 %v3560
  %v5782 = vpop.f32.mrf.mxu0
  %v5783 = vadd.f32 %v5739, %v5782
  %v5784 = vpop.f32.mrf.mxu0
  %v5785 = vadd.f32 %v5741, %v5784
  %5786 = vdwg.mxu0
  %5787 = vmatpush.bf16.msra.mxu0 %v5409
  %5788 = vmatpush.bf16.msra.mxu0 %v5407
  %5789 = vmatpush.bf16.msra.mxu0 %v5405
  %5790 = vmatpush.bf16.msra.mxu0 %v5403
  %5791 = vmatpush.bf16.msra.mxu0 %v5401
  %5792 = vmatpush.bf16.msra.mxu0 %v5399
  %5793 = vmatpush.bf16.msra.mxu0 %v5397
  %5794 = vmatpush.bf16.msra.mxu0 %v5395
  %5795 = vmatmul.bf16.gmra.mxu0 %v3519
  %v5796 = vpop.f32.mrf.mxu0
  %v5797 = vadd.f32 %v5753, %v5796
  %v5798 = vpop.f32.mrf.mxu0
  %v5799 = vadd.f32 %v5755, %v5798
  %5800 = vmatmul.bf16.gmra.mxu0 %v3526
  %v5801 = vpop.f32.mrf.mxu0
  %v5802 = vadd.f32 %v5758, %v5801
  %v5803 = vpop.f32.mrf.mxu0
  %v5804 = vadd.f32 %v5760, %v5803
  %5805 = vmatmul.bf16.gmra.mxu0 %v3533
  %v5806 = vpop.f32.mrf.mxu0
  %v5807 = vadd.f32 %v5763, %v5806
  %v5808 = vpop.f32.mrf.mxu0
  %v5809 = vadd.f32 %v5765, %v5808
  %5810 = vmatmul.bf16.gmra.mxu0 %v3540
  %v5811 = vpop.f32.mrf.mxu0
  %v5812 = vadd.f32 %v5768, %v5811
  %v5813 = vpop.f32.mrf.mxu0
  %v5814 = vadd.f32 %v5770, %v5813
  %5815 = vmatmul.bf16.gmra.mxu0 %v3547
  %v5816 = vpop.f32.mrf.mxu0
  %v5817 = vadd.f32 %v5773, %v5816
  %v5818 = vpop.f32.mrf.mxu0
  %v5819 = vadd.f32 %v5775, %v5818
  %5820 = vmatmul.bf16.gmra.mxu0 %v3554
  %v5821 = vpop.f32.mrf.mxu0
  %v5822 = vadd.f32 %v5778, %v5821
  %v5823 = vpop.f32.mrf.mxu0
  %v5824 = vadd.f32 %v5780, %v5823
  %5825 = vmatmul.bf16.gmra.mxu0 %v3561
  %v5826 = vpop.f32.mrf.mxu0
  %v5827 = vadd.f32 %v5783, %v5826
  %v5828 = vpop.f32.mrf.mxu0
  %v5829 = vadd.f32 %v5785, %v5828
  %5830 = vdwg.mxu0
  %5831 = vmatpush.bf16.msra.mxu0 %v5314
  %5832 = vmatpush.bf16.msra.mxu0 %v5312
  %5833 = vmatpush.bf16.msra.mxu0 %v5310
  %5834 = vmatpush.bf16.msra.mxu0 %v5308
  %5835 = vmatpush.bf16.msra.mxu0 %v5306
  %5836 = vmatpush.bf16.msra.mxu0 %v5304
  %5837 = vmatpush.bf16.msra.mxu0 %v5302
  %5838 = vmatpush.bf16.msra.mxu0 %v5300
  %5839 = vmatmul.bf16.gmra.mxu0 %v3513
  %v5840 = vpop.f32.mrf.mxu0
  %v5841 = vadd.f32 0.0, %v5840
  %v5842 = vpop.f32.mrf.mxu0
  %v5843 = vadd.f32 0.0, %v5842
  %5844 = vmatmul.bf16.gmra.mxu0 %v3520
  %v5845 = vpop.f32.mrf.mxu0
  %v5846 = vadd.f32 0.0, %v5845
  %v5847 = vpop.f32.mrf.mxu0
  %v5848 = vadd.f32 0.0, %v5847
  %5849 = vmatmul.bf16.gmra.mxu0 %v3527
  %v5850 = vpop.f32.mrf.mxu0
  %v5851 = vadd.f32 0.0, %v5850
  %v5852 = vpop.f32.mrf.mxu0
  %v5853 = vadd.f32 0.0, %v5852
  %5854 = vmatmul.bf16.gmra.mxu0 %v3534
  %v5855 = vpop.f32.mrf.mxu0
  %v5856 = vadd.f32 0.0, %v5855
  %v5857 = vpop.f32.mrf.mxu0
  %v5858 = vadd.f32 0.0, %v5857
  %5859 = vmatmul.bf16.gmra.mxu0 %v3541
  %v5860 = vpop.f32.mrf.mxu0
  %v5861 = vadd.f32 0.0, %v5860
  %v5862 = vpop.f32.mrf.mxu0
  %v5863 = vadd.f32 0.0, %v5862
  %5864 = vmatmul.bf16.gmra.mxu0 %v3548
  %v5865 = vpop.f32.mrf.mxu0
  %v5866 = vadd.f32 0.0, %v5865
  %v5867 = vpop.f32.mrf.mxu0
  %v5868 = vadd.f32 0.0, %v5867
  %5869 = vmatmul.bf16.gmra.mxu0 %v3555
  %v5870 = vpop.f32.mrf.mxu0
  %v5871 = vadd.f32 0.0, %v5870
  %v5872 = vpop.f32.mrf.mxu0
  %v5873 = vadd.f32 0.0, %v5872
  %5874 = vdwg.mxu0
  %5875 = vmatpush.bf16.msra.mxu0 %v5330
  %5876 = vmatpush.bf16.msra.mxu0 %v5328
  %5877 = vmatpush.bf16.msra.mxu0 %v5326
  %5878 = vmatpush.bf16.msra.mxu0 %v5324
  %5879 = vmatpush.bf16.msra.mxu0 %v5322
  %5880 = vmatpush.bf16.msra.mxu0 %v5320
  %5881 = vmatpush.bf16.msra.mxu0 %v5318
  %5882 = vmatpush.bf16.msra.mxu0 %v5316
  %5883 = vmatmul.bf16.gmra.mxu0 %v3514
  %v5884 = vpop.f32.mrf.mxu0
  %v5885 = vadd.f32 %v5841, %v5884
  %v5886 = vpop.f32.mrf.mxu0
  %v5887 = vadd.f32 %v5843, %v5886
  %5888 = vmatmul.bf16.gmra.mxu0 %v3521
  %v5889 = vpop.f32.mrf.mxu0
  %v5890 = vadd.f32 %v5846, %v5889
  %v5891 = vpop.f32.mrf.mxu0
  %v5892 = vadd.f32 %v5848, %v5891
  %5893 = vmatmul.bf16.gmra.mxu0 %v3528
  %v5894 = vpop.f32.mrf.mxu0
  %v5895 = vadd.f32 %v5851, %v5894
  %v5896 = vpop.f32.mrf.mxu0
  %v5897 = vadd.f32 %v5853, %v5896
  %5898 = vmatmul.bf16.gmra.mxu0 %v3535
  %v5899 = vpop.f32.mrf.mxu0
  %v5900 = vadd.f32 %v5856, %v5899
  %v5901 = vpop.f32.mrf.mxu0
  %v5902 = vadd.f32 %v5858, %v5901
  %5903 = vmatmul.bf16.gmra.mxu0 %v3542
  %v5904 = vpop.f32.mrf.mxu0
  %v5905 = vadd.f32 %v5861, %v5904
  %v5906 = vpop.f32.mrf.mxu0
  %v5907 = vadd.f32 %v5863, %v5906
  %5908 = vmatmul.bf16.gmra.mxu0 %v3549
  %v5909 = vpop.f32.mrf.mxu0
  %v5910 = vadd.f32 %v5866, %v5909
  %v5911 = vpop.f32.mrf.mxu0
  %v5912 = vadd.f32 %v5868, %v5911
  %5913 = vmatmul.bf16.gmra.mxu0 %v3556
  %v5914 = vpop.f32.mrf.mxu0
  %v5915 = vadd.f32 %v5871, %v5914
  %v5916 = vpop.f32.mrf.mxu0
  %v5917 = vadd.f32 %v5873, %v5916
  %5918 = vdwg.mxu0
  %5919 = vmatpush.bf16.msra.mxu0 %v5346
  %5920 = vmatpush.bf16.msra.mxu0 %v5344
  %5921 = vmatpush.bf16.msra.mxu0 %v5342
  %5922 = vmatpush.bf16.msra.mxu0 %v5340
  %5923 = vmatpush.bf16.msra.mxu0 %v5338
  %5924 = vmatpush.bf16.msra.mxu0 %v5336
  %5925 = vmatpush.bf16.msra.mxu0 %v5334
  %5926 = vmatpush.bf16.msra.mxu0 %v5332
  %5927 = vmatmul.bf16.gmra.mxu0 %v3515
  %v5928 = vpop.f32.mrf.mxu0
  %v5929 = vadd.f32 %v5885, %v5928
  %v5930 = vpop.f32.mrf.mxu0
  %v5931 = vadd.f32 %v5887, %v5930
  %5932 = vmatmul.bf16.gmra.mxu0 %v3522
  %v5933 = vpop.f32.mrf.mxu0
  %v5934 = vadd.f32 %v5890, %v5933
  %v5935 = vpop.f32.mrf.mxu0
  %v5936 = vadd.f32 %v5892, %v5935
  %5937 = vmatmul.bf16.gmra.mxu0 %v3529
  %v5938 = vpop.f32.mrf.mxu0
  %v5939 = vadd.f32 %v5895, %v5938
  %v5940 = vpop.f32.mrf.mxu0
  %v5941 = vadd.f32 %v5897, %v5940
  %5942 = vmatmul.bf16.gmra.mxu0 %v3536
  %v5943 = vpop.f32.mrf.mxu0
  %v5944 = vadd.f32 %v5900, %v5943
  %v5945 = vpop.f32.mrf.mxu0
  %v5946 = vadd.f32 %v5902, %v5945
  %5947 = vmatmul.bf16.gmra.mxu0 %v3543
  %v5948 = vpop.f32.mrf.mxu0
  %v5949 = vadd.f32 %v5905, %v5948
  %v5950 = vpop.f32.mrf.mxu0
  %v5951 = vadd.f32 %v5907, %v5950
  %5952 = vmatmul.bf16.gmra.mxu0 %v3550
  %v5953 = vpop.f32.mrf.mxu0
  %v5954 = vadd.f32 %v5910, %v5953
  %v5955 = vpop.f32.mrf.mxu0
  %v5956 = vadd.f32 %v5912, %v5955
  %5957 = vmatmul.bf16.gmra.mxu0 %v3557
  %v5958 = vpop.f32.mrf.mxu0
  %v5959 = vadd.f32 %v5915, %v5958
  %v5960 = vpop.f32.mrf.mxu0
  %v5961 = vadd.f32 %v5917, %v5960
  %5962 = vdwg.mxu0
  %5963 = vmatpush.bf16.msra.mxu0 %v5362
  %5964 = vmatpush.bf16.msra.mxu0 %v5360
  %5965 = vmatpush.bf16.msra.mxu0 %v5358
  %5966 = vmatpush.bf16.msra.mxu0 %v5356
  %5967 = vmatpush.bf16.msra.mxu0 %v5354
  %5968 = vmatpush.bf16.msra.mxu0 %v5352
  %5969 = vmatpush.bf16.msra.mxu0 %v5350
  %5970 = vmatpush.bf16.msra.mxu0 %v5348
  %5971 = vmatmul.bf16.gmra.mxu0 %v3516
  %v5972 = vpop.f32.mrf.mxu0
  %v5973 = vadd.f32 %v5929, %v5972
  %v5974 = vpop.f32.mrf.mxu0
  %v5975 = vadd.f32 %v5931, %v5974
  %5976 = vmatmul.bf16.gmra.mxu0 %v3523
  %v5977 = vpop.f32.mrf.mxu0
  %v5978 = vadd.f32 %v5934, %v5977
  %v5979 = vpop.f32.mrf.mxu0
  %v5980 = vadd.f32 %v5936, %v5979
  %5981 = vmatmul.bf16.gmra.mxu0 %v3530
  %v5982 = vpop.f32.mrf.mxu0
  %v5983 = vadd.f32 %v5939, %v5982
  %v5984 = vpop.f32.mrf.mxu0
  %v5985 = vadd.f32 %v5941, %v5984
  %5986 = vmatmul.bf16.gmra.mxu0 %v3537
  %v5987 = vpop.f32.mrf.mxu0
  %v5988 = vadd.f32 %v5944, %v5987
  %v5989 = vpop.f32.mrf.mxu0
  %v5990 = vadd.f32 %v5946, %v5989
  %5991 = vmatmul.bf16.gmra.mxu0 %v3544
  %v5992 = vpop.f32.mrf.mxu0
  %v5993 = vadd.f32 %v5949, %v5992
  %v5994 = vpop.f32.mrf.mxu0
  %v5995 = vadd.f32 %v5951, %v5994
  %5996 = vmatmul.bf16.gmra.mxu0 %v3551
  %v5997 = vpop.f32.mrf.mxu0
  %v5998 = vadd.f32 %v5954, %v5997
  %v5999 = vpop.f32.mrf.mxu0
  %v6000 = vadd.f32 %v5956, %v5999
  %6001 = vmatmul.bf16.gmra.mxu0 %v3558
  %v6002 = vpop.f32.mrf.mxu0
  %v6003 = vadd.f32 %v5959, %v6002
  %v6004 = vpop.f32.mrf.mxu0
  %v6005 = vadd.f32 %v5961, %v6004
  %6006 = vdwg.mxu0
  %6007 = vmatpush.bf16.msra.mxu0 %v5378
  %6008 = vmatpush.bf16.msra.mxu0 %v5376
  %6009 = vmatpush.bf16.msra.mxu0 %v5374
  %6010 = vmatpush.bf16.msra.mxu0 %v5372
  %6011 = vmatpush.bf16.msra.mxu0 %v5370
  %6012 = vmatpush.bf16.msra.mxu0 %v5368
  %6013 = vmatpush.bf16.msra.mxu0 %v5366
  %6014 = vmatpush.bf16.msra.mxu0 %v5364
  %6015 = vmatmul.bf16.gmra.mxu0 %v3517
  %v6016 = vpop.f32.mrf.mxu0
  %v6017 = vadd.f32 %v5973, %v6016
  %v6018 = vpop.f32.mrf.mxu0
  %v6019 = vadd.f32 %v5975, %v6018
  %6020 = vmatmul.bf16.gmra.mxu0 %v3524
  %v6021 = vpop.f32.mrf.mxu0
  %v6022 = vadd.f32 %v5978, %v6021
  %v6023 = vpop.f32.mrf.mxu0
  %v6024 = vadd.f32 %v5980, %v6023
  %6025 = vmatmul.bf16.gmra.mxu0 %v3531
  %v6026 = vpop.f32.mrf.mxu0
  %v6027 = vadd.f32 %v5983, %v6026
  %v6028 = vpop.f32.mrf.mxu0
  %v6029 = vadd.f32 %v5985, %v6028
  %6030 = vmatmul.bf16.gmra.mxu0 %v3538
  %v6031 = vpop.f32.mrf.mxu0
  %v6032 = vadd.f32 %v5988, %v6031
  %v6033 = vpop.f32.mrf.mxu0
  %v6034 = vadd.f32 %v5990, %v6033
  %6035 = vmatmul.bf16.gmra.mxu0 %v3545
  %v6036 = vpop.f32.mrf.mxu0
  %v6037 = vadd.f32 %v5993, %v6036
  %v6038 = vpop.f32.mrf.mxu0
  %v6039 = vadd.f32 %v5995, %v6038
  %6040 = vmatmul.bf16.gmra.mxu0 %v3552
  %v6041 = vpop.f32.mrf.mxu0
  %v6042 = vadd.f32 %v5998, %v6041
  %v6043 = vpop.f32.mrf.mxu0
  %v6044 = vadd.f32 %v6000, %v6043
  %6045 = vmatmul.bf16.gmra.mxu0 %v3559
  %v6046 = vpop.f32.mrf.mxu0
  %v6047 = vadd.f32 %v6003, %v6046
  %v6048 = vpop.f32.mrf.mxu0
  %v6049 = vadd.f32 %v6005, %v6048
  %6050 = vdwg.mxu0
  %6051 = vmatpush.bf16.msra.mxu0 %v5394
  %6052 = vmatpush.bf16.msra.mxu0 %v5392
  %6053 = vmatpush.bf16.msra.mxu0 %v5390
  %6054 = vmatpush.bf16.msra.mxu0 %v5388
  %6055 = vmatpush.bf16.msra.mxu0 %v5386
  %6056 = vmatpush.bf16.msra.mxu0 %v5384
  %6057 = vmatpush.bf16.msra.mxu0 %v5382
  %6058 = vmatpush.bf16.msra.mxu0 %v5380
  %6059 = vmatmul.bf16.gmra.mxu0 %v3518
  %v6060 = vpop.f32.mrf.mxu0
  %v6061 = vadd.f32 %v6017, %v6060
  %v6062 = vpop.f32.mrf.mxu0
  %v6063 = vadd.f32 %v6019, %v6062
  %6064 = vmatmul.bf16.gmra.mxu0 %v3525
  %v6065 = vpop.f32.mrf.mxu0
  %v6066 = vadd.f32 %v6022, %v6065
  %v6067 = vpop.f32.mrf.mxu0
  %v6068 = vadd.f32 %v6024, %v6067
  %6069 = vmatmul.bf16.gmra.mxu0 %v3532
  %v6070 = vpop.f32.mrf.mxu0
  %v6071 = vadd.f32 %v6027, %v6070
  %v6072 = vpop.f32.mrf.mxu0
  %v6073 = vadd.f32 %v6029, %v6072
  %6074 = vmatmul.bf16.gmra.mxu0 %v3539
  %v6075 = vpop.f32.mrf.mxu0
  %v6076 = vadd.f32 %v6032, %v6075
  %v6077 = vpop.f32.mrf.mxu0
  %v6078 = vadd.f32 %v6034, %v6077
  %6079 = vmatmul.bf16.gmra.mxu0 %v3546
  %v6080 = vpop.f32.mrf.mxu0
  %v6081 = vadd.f32 %v6037, %v6080
  %v6082 = vpop.f32.mrf.mxu0
  %v6083 = vadd.f32 %v6039, %v6082
  %6084 = vmatmul.bf16.gmra.mxu0 %v3553
  %v6085 = vpop.f32.mrf.mxu0
  %v6086 = vadd.f32 %v6042, %v6085
  %v6087 = vpop.f32.mrf.mxu0
  %v6088 = vadd.f32 %v6044, %v6087
  %6089 = vmatmul.bf16.gmra.mxu0 %v3560
  %v6090 = vpop.f32.mrf.mxu0
  %v6091 = vadd.f32 %v6047, %v6090
  %v6092 = vpop.f32.mrf.mxu0
  %v6093 = vadd.f32 %v6049, %v6092
  %6094 = vdwg.mxu0
  %6095 = vmatpush.bf16.msra.mxu0 %v5410
  %6096 = vmatpush.bf16.msra.mxu0 %v5408
  %6097 = vmatpush.bf16.msra.mxu0 %v5406
  %6098 = vmatpush.bf16.msra.mxu0 %v5404
  %6099 = vmatpush.bf16.msra.mxu0 %v5402
  %6100 = vmatpush.bf16.msra.mxu0 %v5400
  %6101 = vmatpush.bf16.msra.mxu0 %v5398
  %6102 = vmatpush.bf16.msra.mxu0 %v5396
  %6103 = vmatmul.bf16.gmra.mxu0 %v3519
  %v6104 = vpop.f32.mrf.mxu0
  %v6105 = vadd.f32 %v6061, %v6104
  %v6106 = vpop.f32.mrf.mxu0
  %v6107 = vadd.f32 %v6063, %v6106
  %6108 = vmatmul.bf16.gmra.mxu0 %v3526
  %v6109 = vpop.f32.mrf.mxu0
  %v6110 = vadd.f32 %v6066, %v6109
  %v6111 = vpop.f32.mrf.mxu0
  %v6112 = vadd.f32 %v6068, %v6111
  %6113 = vmatmul.bf16.gmra.mxu0 %v3533
  %v6114 = vpop.f32.mrf.mxu0
  %v6115 = vadd.f32 %v6071, %v6114
  %v6116 = vpop.f32.mrf.mxu0
  %v6117 = vadd.f32 %v6073, %v6116
  %6118 = vmatmul.bf16.gmra.mxu0 %v3540
  %v6119 = vpop.f32.mrf.mxu0
  %v6120 = vadd.f32 %v6076, %v6119
  %v6121 = vpop.f32.mrf.mxu0
  %v6122 = vadd.f32 %v6078, %v6121
  %6123 = vmatmul.bf16.gmra.mxu0 %v3547
  %v6124 = vpop.f32.mrf.mxu0
  %v6125 = vadd.f32 %v6081, %v6124
  %v6126 = vpop.f32.mrf.mxu0
  %v6127 = vadd.f32 %v6083, %v6126
  %6128 = vmatmul.bf16.gmra.mxu0 %v3554
  %v6129 = vpop.f32.mrf.mxu0
  %v6130 = vadd.f32 %v6086, %v6129
  %v6131 = vpop.f32.mrf.mxu0
  %v6132 = vadd.f32 %v6088, %v6131
  %6133 = vmatmul.bf16.gmra.mxu0 %v3561
  %v6134 = vpop.f32.mrf.mxu0
  %v6135 = vadd.f32 %v6091, %v6134
  %v6136 = vpop.f32.mrf.mxu0
  %v6137 = vadd.f32 %v6093, %v6136
  %6138 = vdwg.mxu0
  %v6139 = vmax.f32 %v4508, %v5797
  %v6140 = vmax.f32 %v4816, %v6105
  %v6141 = vmax.f32 %v4510, %v5799
  %v6142 = vmax.f32 %v4818, %v6107
  %v6143 = vmax.f32 %v4513, %v5802
  %v6144 = vmax.f32 %v4821, %v6110
  %v6145 = vmax.f32 %v4515, %v5804
  %v6146 = vmax.f32 %v4823, %v6112
  %v6147 = vmax.f32 %v4518, %v5807
  %v6148 = vmax.f32 %v4826, %v6115
  %v6149 = vmax.f32 %v4520, %v5809
  %v6150 = vmax.f32 %v4828, %v6117
  %v6151 = vmax.f32 %v4523, %v5812
  %v6152 = vmax.f32 %v4831, %v6120
  %v6153 = vmax.f32 %v4525, %v5814
  %v6154 = vmax.f32 %v4833, %v6122
  %v6155 = vmax.f32 %v4528, %v5817
  %v6156 = vmax.f32 %v4836, %v6125
  %v6157 = vmax.f32 %v4530, %v5819
  %v6158 = vmax.f32 %v4838, %v6127
  %v6159 = vmax.f32 %v4533, %v5822
  %v6160 = vmax.f32 %v4841, %v6130
  %v6161 = vmax.f32 %v4535, %v5824
  %v6162 = vmax.f32 %v4843, %v6132
  %v6163 = vmax.f32 %v4538, %v5827
  %v6164 = vmax.f32 %v4846, %v6135
  %v6165 = vmax.f32 %v4540, %v5829
  %v6166 = vmax.f32 %v4848, %v6137
  %s6167 = scalar_lea.vmem %s3, 1792
  %v6168 = vld [vmem:[%s6167] sm:$0xff]
  %v6169 = vld [vmem:[%s6167 + $0x8] sm:$0xff]
  %v6170 = vld [vmem:[%s6167 + $0x10] sm:$0xff]
  %v6171 = vld [vmem:[%s6167 + $0x18] sm:$0xff]
  %v6172 = vld [vmem:[%s6167 + $0x20] sm:$0xff]
  %v6173 = vld [vmem:[%s6167 + $0x28] sm:$0xff]
  %v6174 = vld [vmem:[%s6167 + $0x30] sm:$0xff]
  %v6175 = vld [vmem:[%s6167 + $0x38] sm:$0xff]
  %v6176 = vld [vmem:[%s6167 + $0x40] sm:$0xff]
  %v6177 = vld [vmem:[%s6167 + $0x48] sm:$0xff]
  %v6178 = vld [vmem:[%s6167 + $0x50] sm:$0xff]
  %v6179 = vld [vmem:[%s6167 + $0x58] sm:$0xff]
  %v6180 = vld [vmem:[%s6167 + $0x60] sm:$0xff]
  %v6181 = vld [vmem:[%s6167 + $0x68] sm:$0xff]
  %v6182 = vld [vmem:[%s6167 + $0x70] sm:$0xff]
  %v6183 = vld [vmem:[%s6167 + $0x78] sm:$0xff]
  %v6184 = vld [vmem:[%s6167 + $0x80] sm:$0xff]
  %v6185 = vld [vmem:[%s6167 + $0x88] sm:$0xff]
  %v6186 = vld [vmem:[%s6167 + $0x90] sm:$0xff]
  %v6187 = vld [vmem:[%s6167 + $0x98] sm:$0xff]
  %v6188 = vld [vmem:[%s6167 + $0xa0] sm:$0xff]
  %v6189 = vld [vmem:[%s6167 + $0xa8] sm:$0xff]
  %v6190 = vld [vmem:[%s6167 + $0xb0] sm:$0xff]
  %v6191 = vld [vmem:[%s6167 + $0xb8] sm:$0xff]
  %v6192 = vld [vmem:[%s6167 + $0xc0] sm:$0xff]
  %v6193 = vld [vmem:[%s6167 + $0xc8] sm:$0xff]
  %v6194 = vld [vmem:[%s6167 + $0xd0] sm:$0xff]
  %v6195 = vld [vmem:[%s6167 + $0xd8] sm:$0xff]
  %v6196 = vld [vmem:[%s6167 + $0xe0] sm:$0xff]
  %v6197 = vld [vmem:[%s6167 + $0xe8] sm:$0xff]
  %v6198 = vld [vmem:[%s6167 + $0xf0] sm:$0xff]
  %v6199 = vld [vmem:[%s6167 + $0xf8] sm:$0xff]
  %v6200 = vld [vmem:[%s6167 + $0x100] sm:$0xff]
  %v6201 = vld [vmem:[%s6167 + $0x108] sm:$0xff]
  %v6202 = vld [vmem:[%s6167 + $0x110] sm:$0xff]
  %v6203 = vld [vmem:[%s6167 + $0x118] sm:$0xff]
  %v6204 = vld [vmem:[%s6167 + $0x120] sm:$0xff]
  %v6205 = vld [vmem:[%s6167 + $0x128] sm:$0xff]
  %v6206 = vld [vmem:[%s6167 + $0x130] sm:$0xff]
  %v6207 = vld [vmem:[%s6167 + $0x138] sm:$0xff]
  %v6208 = vld [vmem:[%s6167 + $0x140] sm:$0xff]
  %v6209 = vld [vmem:[%s6167 + $0x148] sm:$0xff]
  %v6210 = vld [vmem:[%s6167 + $0x150] sm:$0xff]
  %v6211 = vld [vmem:[%s6167 + $0x158] sm:$0xff]
  %v6212 = vld [vmem:[%s6167 + $0x160] sm:$0xff]
  %v6213 = vld [vmem:[%s6167 + $0x168] sm:$0xff]
  %v6214 = vld [vmem:[%s6167 + $0x170] sm:$0xff]
  %v6215 = vld [vmem:[%s6167 + $0x178] sm:$0xff]
  %v6216 = vld [vmem:[%s6167 + $0x180] sm:$0xff]
  %v6217 = vld [vmem:[%s6167 + $0x188] sm:$0xff]
  %v6218 = vld [vmem:[%s6167 + $0x190] sm:$0xff]
  %v6219 = vld [vmem:[%s6167 + $0x198] sm:$0xff]
  %v6220 = vld [vmem:[%s6167 + $0x1a0] sm:$0xff]
  %v6221 = vld [vmem:[%s6167 + $0x1a8] sm:$0xff]
  %v6222 = vld [vmem:[%s6167 + $0x1b0] sm:$0xff]
  %v6223 = vld [vmem:[%s6167 + $0x1b8] sm:$0xff]
  %v6224 = vld [vmem:[%s6167 + $0x1c0] sm:$0xff]
  %v6225 = vld [vmem:[%s6167 + $0x1c8] sm:$0xff]
  %v6226 = vld [vmem:[%s6167 + $0x1d0] sm:$0xff]
  %v6227 = vld [vmem:[%s6167 + $0x1d8] sm:$0xff]
  %v6228 = vld [vmem:[%s6167 + $0x1e0] sm:$0xff]
  %v6229 = vld [vmem:[%s6167 + $0x1e8] sm:$0xff]
  %v6230 = vld [vmem:[%s6167 + $0x1f0] sm:$0xff]
  %v6231 = vld [vmem:[%s6167 + $0x1f8] sm:$0xff]
  %v6232 = vld [vmem:[%s6167 + $0x200] sm:$0xff]
  %v6233 = vld [vmem:[%s6167 + $0x208] sm:$0xff]
  %v6234 = vld [vmem:[%s6167 + $0x210] sm:$0xff]
  %v6235 = vld [vmem:[%s6167 + $0x218] sm:$0xff]
  %v6236 = vld [vmem:[%s6167 + $0x220] sm:$0xff]
  %v6237 = vld [vmem:[%s6167 + $0x228] sm:$0xff]
  %v6238 = vld [vmem:[%s6167 + $0x230] sm:$0xff]
  %v6239 = vld [vmem:[%s6167 + $0x238] sm:$0xff]
  %v6240 = vld [vmem:[%s6167 + $0x240] sm:$0xff]
  %v6241 = vld [vmem:[%s6167 + $0x248] sm:$0xff]
  %v6242 = vld [vmem:[%s6167 + $0x250] sm:$0xff]
  %v6243 = vld [vmem:[%s6167 + $0x258] sm:$0xff]
  %v6244 = vld [vmem:[%s6167 + $0x260] sm:$0xff]
  %v6245 = vld [vmem:[%s6167 + $0x268] sm:$0xff]
  %v6246 = vld [vmem:[%s6167 + $0x270] sm:$0xff]
  %v6247 = vld [vmem:[%s6167 + $0x278] sm:$0xff]
  %v6248 = vld [vmem:[%s6167 + $0x280] sm:$0xff]
  %v6249 = vld [vmem:[%s6167 + $0x288] sm:$0xff]
  %v6250 = vld [vmem:[%s6167 + $0x290] sm:$0xff]
  %v6251 = vld [vmem:[%s6167 + $0x298] sm:$0xff]
  %v6252 = vld [vmem:[%s6167 + $0x2a0] sm:$0xff]
  %v6253 = vld [vmem:[%s6167 + $0x2a8] sm:$0xff]
  %v6254 = vld [vmem:[%s6167 + $0x2b0] sm:$0xff]
  %v6255 = vld [vmem:[%s6167 + $0x2b8] sm:$0xff]
  %v6256 = vld [vmem:[%s6167 + $0x2c0] sm:$0xff]
  %v6257 = vld [vmem:[%s6167 + $0x2c8] sm:$0xff]
  %v6258 = vld [vmem:[%s6167 + $0x2d0] sm:$0xff]
  %v6259 = vld [vmem:[%s6167 + $0x2d8] sm:$0xff]
  %v6260 = vld [vmem:[%s6167 + $0x2e0] sm:$0xff]
  %v6261 = vld [vmem:[%s6167 + $0x2e8] sm:$0xff]
  %v6262 = vld [vmem:[%s6167 + $0x2f0] sm:$0xff]
  %v6263 = vld [vmem:[%s6167 + $0x2f8] sm:$0xff]
  %v6264 = vld [vmem:[%s6167 + $0x300] sm:$0xff]
  %v6265 = vld [vmem:[%s6167 + $0x308] sm:$0xff]
  %v6266 = vld [vmem:[%s6167 + $0x310] sm:$0xff]
  %v6267 = vld [vmem:[%s6167 + $0x318] sm:$0xff]
  %v6268 = vld [vmem:[%s6167 + $0x320] sm:$0xff]
  %v6269 = vld [vmem:[%s6167 + $0x328] sm:$0xff]
  %v6270 = vld [vmem:[%s6167 + $0x330] sm:$0xff]
  %v6271 = vld [vmem:[%s6167 + $0x338] sm:$0xff]
  %v6272 = vld [vmem:[%s6167 + $0x340] sm:$0xff]
  %v6273 = vld [vmem:[%s6167 + $0x348] sm:$0xff]
  %v6274 = vld [vmem:[%s6167 + $0x350] sm:$0xff]
  %v6275 = vld [vmem:[%s6167 + $0x358] sm:$0xff]
  %v6276 = vld [vmem:[%s6167 + $0x360] sm:$0xff]
  %v6277 = vld [vmem:[%s6167 + $0x368] sm:$0xff]
  %v6278 = vld [vmem:[%s6167 + $0x370] sm:$0xff]
  %v6279 = vld [vmem:[%s6167 + $0x378] sm:$0xff]
  %v6392 = vunpack.c.l.b16 %v6168
  %v6393 = vunpack.c.h.b16 %v6168
  %v6394 = vunpack.c.l.b16 %v6169
  %v6395 = vunpack.c.h.b16 %v6169
  %v6396 = vunpack.c.l.b16 %v6170
  %v6397 = vunpack.c.h.b16 %v6170
  %v6398 = vunpack.c.l.b16 %v6171
  %v6399 = vunpack.c.h.b16 %v6171
  %v6400 = vunpack.c.l.b16 %v6172
  %v6401 = vunpack.c.h.b16 %v6172
  %v6402 = vunpack.c.l.b16 %v6173
  %v6403 = vunpack.c.h.b16 %v6173
  %v6404 = vunpack.c.l.b16 %v6174
  %v6405 = vunpack.c.h.b16 %v6174
  %v6406 = vunpack.c.l.b16 %v6175
  %v6407 = vunpack.c.h.b16 %v6175
  %v6408 = vunpack.c.l.b16 %v6176
  %v6409 = vunpack.c.h.b16 %v6176
  %v6410 = vunpack.c.l.b16 %v6177
  %v6411 = vunpack.c.h.b16 %v6177
  %v6412 = vunpack.c.l.b16 %v6178
  %v6413 = vunpack.c.h.b16 %v6178
  %v6414 = vunpack.c.l.b16 %v6179
  %v6415 = vunpack.c.h.b16 %v6179
  %v6416 = vunpack.c.l.b16 %v6180
  %v6417 = vunpack.c.h.b16 %v6180
  %v6418 = vunpack.c.l.b16 %v6181
  %v6419 = vunpack.c.h.b16 %v6181
  %v6420 = vunpack.c.l.b16 %v6182
  %v6421 = vunpack.c.h.b16 %v6182
  %v6422 = vunpack.c.l.b16 %v6183
  %v6423 = vunpack.c.h.b16 %v6183
  %v6424 = vunpack.c.l.b16 %v6184
  %v6425 = vunpack.c.h.b16 %v6184
  %v6426 = vunpack.c.l.b16 %v6185
  %v6427 = vunpack.c.h.b16 %v6185
  %v6428 = vunpack.c.l.b16 %v6186
  %v6429 = vunpack.c.h.b16 %v6186
  %v6430 = vunpack.c.l.b16 %v6187
  %v6431 = vunpack.c.h.b16 %v6187
  %v6432 = vunpack.c.l.b16 %v6188
  %v6433 = vunpack.c.h.b16 %v6188
  %v6434 = vunpack.c.l.b16 %v6189
  %v6435 = vunpack.c.h.b16 %v6189
  %v6436 = vunpack.c.l.b16 %v6190
  %v6437 = vunpack.c.h.b16 %v6190
  %v6438 = vunpack.c.l.b16 %v6191
  %v6439 = vunpack.c.h.b16 %v6191
  %v6440 = vunpack.c.l.b16 %v6192
  %v6441 = vunpack.c.h.b16 %v6192
  %v6442 = vunpack.c.l.b16 %v6193
  %v6443 = vunpack.c.h.b16 %v6193
  %v6444 = vunpack.c.l.b16 %v6194
  %v6445 = vunpack.c.h.b16 %v6194
  %v6446 = vunpack.c.l.b16 %v6195
  %v6447 = vunpack.c.h.b16 %v6195
  %v6448 = vunpack.c.l.b16 %v6196
  %v6449 = vunpack.c.h.b16 %v6196
  %v6450 = vunpack.c.l.b16 %v6197
  %v6451 = vunpack.c.h.b16 %v6197
  %v6452 = vunpack.c.l.b16 %v6198
  %v6453 = vunpack.c.h.b16 %v6198
  %v6454 = vunpack.c.l.b16 %v6199
  %v6455 = vunpack.c.h.b16 %v6199
  %v6456 = vunpack.c.l.b16 %v6200
  %v6457 = vunpack.c.h.b16 %v6200
  %v6458 = vunpack.c.l.b16 %v6201
  %v6459 = vunpack.c.h.b16 %v6201
  %v6460 = vunpack.c.l.b16 %v6202
  %v6461 = vunpack.c.h.b16 %v6202
  %v6462 = vunpack.c.l.b16 %v6203
  %v6463 = vunpack.c.h.b16 %v6203
  %v6464 = vunpack.c.l.b16 %v6204
  %v6465 = vunpack.c.h.b16 %v6204
  %v6466 = vunpack.c.l.b16 %v6205
  %v6467 = vunpack.c.h.b16 %v6205
  %v6468 = vunpack.c.l.b16 %v6206
  %v6469 = vunpack.c.h.b16 %v6206
  %v6470 = vunpack.c.l.b16 %v6207
  %v6471 = vunpack.c.h.b16 %v6207
  %v6472 = vunpack.c.l.b16 %v6208
  %v6473 = vunpack.c.h.b16 %v6208
  %v6474 = vunpack.c.l.b16 %v6209
  %v6475 = vunpack.c.h.b16 %v6209
  %v6476 = vunpack.c.l.b16 %v6210
  %v6477 = vunpack.c.h.b16 %v6210
  %v6478 = vunpack.c.l.b16 %v6211
  %v6479 = vunpack.c.h.b16 %v6211
  %v6480 = vunpack.c.l.b16 %v6212
  %v6481 = vunpack.c.h.b16 %v6212
  %v6482 = vunpack.c.l.b16 %v6213
  %v6483 = vunpack.c.h.b16 %v6213
  %v6484 = vunpack.c.l.b16 %v6214
  %v6485 = vunpack.c.h.b16 %v6214
  %v6486 = vunpack.c.l.b16 %v6215
  %v6487 = vunpack.c.h.b16 %v6215
  %v6488 = vunpack.c.l.b16 %v6216
  %v6489 = vunpack.c.h.b16 %v6216
  %v6490 = vunpack.c.l.b16 %v6217
  %v6491 = vunpack.c.h.b16 %v6217
  %v6492 = vunpack.c.l.b16 %v6218
  %v6493 = vunpack.c.h.b16 %v6218
  %v6494 = vunpack.c.l.b16 %v6219
  %v6495 = vunpack.c.h.b16 %v6219
  %v6496 = vunpack.c.l.b16 %v6220
  %v6497 = vunpack.c.h.b16 %v6220
  %v6498 = vunpack.c.l.b16 %v6221
  %v6499 = vunpack.c.h.b16 %v6221
  %v6500 = vunpack.c.l.b16 %v6222
  %v6501 = vunpack.c.h.b16 %v6222
  %v6502 = vunpack.c.l.b16 %v6223
  %v6503 = vunpack.c.h.b16 %v6223
  %v6504 = vunpack.c.l.b16 %v6224
  %v6505 = vunpack.c.h.b16 %v6224
  %v6506 = vunpack.c.l.b16 %v6225
  %v6507 = vunpack.c.h.b16 %v6225
  %v6508 = vunpack.c.l.b16 %v6226
  %v6509 = vunpack.c.h.b16 %v6226
  %v6510 = vunpack.c.l.b16 %v6227
  %v6511 = vunpack.c.h.b16 %v6227
  %v6512 = vunpack.c.l.b16 %v6228
  %v6513 = vunpack.c.h.b16 %v6228
  %v6514 = vunpack.c.l.b16 %v6229
  %v6515 = vunpack.c.h.b16 %v6229
  %v6516 = vunpack.c.l.b16 %v6230
  %v6517 = vunpack.c.h.b16 %v6230
  %v6518 = vunpack.c.l.b16 %v6231
  %v6519 = vunpack.c.h.b16 %v6231
  %v6520 = vunpack.c.l.b16 %v6232
  %v6521 = vunpack.c.h.b16 %v6232
  %v6522 = vunpack.c.l.b16 %v6233
  %v6523 = vunpack.c.h.b16 %v6233
  %v6524 = vunpack.c.l.b16 %v6234
  %v6525 = vunpack.c.h.b16 %v6234
  %v6526 = vunpack.c.l.b16 %v6235
  %v6527 = vunpack.c.h.b16 %v6235
  %v6528 = vunpack.c.l.b16 %v6236
  %v6529 = vunpack.c.h.b16 %v6236
  %v6530 = vunpack.c.l.b16 %v6237
  %v6531 = vunpack.c.h.b16 %v6237
  %v6532 = vunpack.c.l.b16 %v6238
  %v6533 = vunpack.c.h.b16 %v6238
  %v6534 = vunpack.c.l.b16 %v6239
  %v6535 = vunpack.c.h.b16 %v6239
  %v6536 = vunpack.c.l.b16 %v6240
  %v6537 = vunpack.c.h.b16 %v6240
  %v6538 = vunpack.c.l.b16 %v6241
  %v6539 = vunpack.c.h.b16 %v6241
  %v6540 = vunpack.c.l.b16 %v6242
  %v6541 = vunpack.c.h.b16 %v6242
  %v6542 = vunpack.c.l.b16 %v6243
  %v6543 = vunpack.c.h.b16 %v6243
  %v6544 = vunpack.c.l.b16 %v6244
  %v6545 = vunpack.c.h.b16 %v6244
  %v6546 = vunpack.c.l.b16 %v6245
  %v6547 = vunpack.c.h.b16 %v6245
  %v6548 = vunpack.c.l.b16 %v6246
  %v6549 = vunpack.c.h.b16 %v6246
  %v6550 = vunpack.c.l.b16 %v6247
  %v6551 = vunpack.c.h.b16 %v6247
  %v6552 = vunpack.c.l.b16 %v6248
  %v6553 = vunpack.c.h.b16 %v6248
  %v6554 = vunpack.c.l.b16 %v6249
  %v6555 = vunpack.c.h.b16 %v6249
  %v6556 = vunpack.c.l.b16 %v6250
  %v6557 = vunpack.c.h.b16 %v6250
  %v6558 = vunpack.c.l.b16 %v6251
  %v6559 = vunpack.c.h.b16 %v6251
  %v6560 = vunpack.c.l.b16 %v6252
  %v6561 = vunpack.c.h.b16 %v6252
  %v6562 = vunpack.c.l.b16 %v6253
  %v6563 = vunpack.c.h.b16 %v6253
  %v6564 = vunpack.c.l.b16 %v6254
  %v6565 = vunpack.c.h.b16 %v6254
  %v6566 = vunpack.c.l.b16 %v6255
  %v6567 = vunpack.c.h.b16 %v6255
  %v6568 = vunpack.c.l.b16 %v6256
  %v6569 = vunpack.c.h.b16 %v6256
  %v6570 = vunpack.c.l.b16 %v6257
  %v6571 = vunpack.c.h.b16 %v6257
  %v6572 = vunpack.c.l.b16 %v6258
  %v6573 = vunpack.c.h.b16 %v6258
  %v6574 = vunpack.c.l.b16 %v6259
  %v6575 = vunpack.c.h.b16 %v6259
  %v6576 = vunpack.c.l.b16 %v6260
  %v6577 = vunpack.c.h.b16 %v6260
  %v6578 = vunpack.c.l.b16 %v6261
  %v6579 = vunpack.c.h.b16 %v6261
  %v6580 = vunpack.c.l.b16 %v6262
  %v6581 = vunpack.c.h.b16 %v6262
  %v6582 = vunpack.c.l.b16 %v6263
  %v6583 = vunpack.c.h.b16 %v6263
  %v6584 = vunpack.c.l.b16 %v6264
  %v6585 = vunpack.c.h.b16 %v6264
  %v6586 = vunpack.c.l.b16 %v6265
  %v6587 = vunpack.c.h.b16 %v6265
  %v6588 = vunpack.c.l.b16 %v6266
  %v6589 = vunpack.c.h.b16 %v6266
  %v6590 = vunpack.c.l.b16 %v6267
  %v6591 = vunpack.c.h.b16 %v6267
  %v6592 = vunpack.c.l.b16 %v6268
  %v6593 = vunpack.c.h.b16 %v6268
  %v6594 = vunpack.c.l.b16 %v6269
  %v6595 = vunpack.c.h.b16 %v6269
  %v6596 = vunpack.c.l.b16 %v6270
  %v6597 = vunpack.c.h.b16 %v6270
  %v6598 = vunpack.c.l.b16 %v6271
  %v6599 = vunpack.c.h.b16 %v6271
  %v6600 = vunpack.c.l.b16 %v6272
  %v6601 = vunpack.c.h.b16 %v6272
  %v6602 = vunpack.c.l.b16 %v6273
  %v6603 = vunpack.c.h.b16 %v6273
  %v6604 = vunpack.c.l.b16 %v6274
  %v6605 = vunpack.c.h.b16 %v6274
  %v6606 = vunpack.c.l.b16 %v6275
  %v6607 = vunpack.c.h.b16 %v6275
  %v6608 = vunpack.c.l.b16 %v6276
  %v6609 = vunpack.c.h.b16 %v6276
  %v6610 = vunpack.c.l.b16 %v6277
  %v6611 = vunpack.c.h.b16 %v6277
  %v6612 = vunpack.c.l.b16 %v6278
  %v6613 = vunpack.c.h.b16 %v6278
  %v6614 = vunpack.c.l.b16 %v6279
  %v6615 = vunpack.c.h.b16 %v6279
  %v6616 = vpack.c.b16 %v6394, %v6392
  %v6617 = vpack.c.b16 %v6395, %v6393
  %v6618 = vpack.c.b16 %v6398, %v6396
  %v6619 = vpack.c.b16 %v6399, %v6397
  %v6620 = vpack.c.b16 %v6402, %v6400
  %v6621 = vpack.c.b16 %v6403, %v6401
  %v6622 = vpack.c.b16 %v6406, %v6404
  %v6623 = vpack.c.b16 %v6407, %v6405
  %v6624 = vpack.c.b16 %v6410, %v6408
  %v6625 = vpack.c.b16 %v6411, %v6409
  %v6626 = vpack.c.b16 %v6414, %v6412
  %v6627 = vpack.c.b16 %v6415, %v6413
  %v6628 = vpack.c.b16 %v6418, %v6416
  %v6629 = vpack.c.b16 %v6419, %v6417
  %v6630 = vpack.c.b16 %v6422, %v6420
  %v6631 = vpack.c.b16 %v6423, %v6421
  %v6632 = vpack.c.b16 %v6426, %v6424
  %v6633 = vpack.c.b16 %v6427, %v6425
  %v6634 = vpack.c.b16 %v6430, %v6428
  %v6635 = vpack.c.b16 %v6431, %v6429
  %v6636 = vpack.c.b16 %v6434, %v6432
  %v6637 = vpack.c.b16 %v6435, %v6433
  %v6638 = vpack.c.b16 %v6438, %v6436
  %v6639 = vpack.c.b16 %v6439, %v6437
  %v6640 = vpack.c.b16 %v6442, %v6440
  %v6641 = vpack.c.b16 %v6443, %v6441
  %v6642 = vpack.c.b16 %v6446, %v6444
  %v6643 = vpack.c.b16 %v6447, %v6445
  %v6644 = vpack.c.b16 %v6450, %v6448
  %v6645 = vpack.c.b16 %v6451, %v6449
  %v6646 = vpack.c.b16 %v6454, %v6452
  %v6647 = vpack.c.b16 %v6455, %v6453
  %v6648 = vpack.c.b16 %v6458, %v6456
  %v6649 = vpack.c.b16 %v6459, %v6457
  %v6650 = vpack.c.b16 %v6462, %v6460
  %v6651 = vpack.c.b16 %v6463, %v6461
  %v6652 = vpack.c.b16 %v6466, %v6464
  %v6653 = vpack.c.b16 %v6467, %v6465
  %v6654 = vpack.c.b16 %v6470, %v6468
  %v6655 = vpack.c.b16 %v6471, %v6469
  %v6656 = vpack.c.b16 %v6474, %v6472
  %v6657 = vpack.c.b16 %v6475, %v6473
  %v6658 = vpack.c.b16 %v6478, %v6476
  %v6659 = vpack.c.b16 %v6479, %v6477
  %v6660 = vpack.c.b16 %v6482, %v6480
  %v6661 = vpack.c.b16 %v6483, %v6481
  %v6662 = vpack.c.b16 %v6486, %v6484
  %v6663 = vpack.c.b16 %v6487, %v6485
  %v6664 = vpack.c.b16 %v6490, %v6488
  %v6665 = vpack.c.b16 %v6491, %v6489
  %v6666 = vpack.c.b16 %v6494, %v6492
  %v6667 = vpack.c.b16 %v6495, %v6493
  %v6668 = vpack.c.b16 %v6498, %v6496
  %v6669 = vpack.c.b16 %v6499, %v6497
  %v6670 = vpack.c.b16 %v6502, %v6500
  %v6671 = vpack.c.b16 %v6503, %v6501
  %v6672 = vpack.c.b16 %v6506, %v6504
  %v6673 = vpack.c.b16 %v6507, %v6505
  %v6674 = vpack.c.b16 %v6510, %v6508
  %v6675 = vpack.c.b16 %v6511, %v6509
  %v6676 = vpack.c.b16 %v6514, %v6512
  %v6677 = vpack.c.b16 %v6515, %v6513
  %v6678 = vpack.c.b16 %v6518, %v6516
  %v6679 = vpack.c.b16 %v6519, %v6517
  %v6680 = vpack.c.b16 %v6522, %v6520
  %v6681 = vpack.c.b16 %v6523, %v6521
  %v6682 = vpack.c.b16 %v6526, %v6524
  %v6683 = vpack.c.b16 %v6527, %v6525
  %v6684 = vpack.c.b16 %v6530, %v6528
  %v6685 = vpack.c.b16 %v6531, %v6529
  %v6686 = vpack.c.b16 %v6534, %v6532
  %v6687 = vpack.c.b16 %v6535, %v6533
  %v6688 = vpack.c.b16 %v6538, %v6536
  %v6689 = vpack.c.b16 %v6539, %v6537
  %v6690 = vpack.c.b16 %v6542, %v6540
  %v6691 = vpack.c.b16 %v6543, %v6541
  %v6692 = vpack.c.b16 %v6546, %v6544
  %v6693 = vpack.c.b16 %v6547, %v6545
  %v6694 = vpack.c.b16 %v6550, %v6548
  %v6695 = vpack.c.b16 %v6551, %v6549
  %v6696 = vpack.c.b16 %v6554, %v6552
  %v6697 = vpack.c.b16 %v6555, %v6553
  %v6698 = vpack.c.b16 %v6558, %v6556
  %v6699 = vpack.c.b16 %v6559, %v6557
  %v6700 = vpack.c.b16 %v6562, %v6560
  %v6701 = vpack.c.b16 %v6563, %v6561
  %v6702 = vpack.c.b16 %v6566, %v6564
  %v6703 = vpack.c.b16 %v6567, %v6565
  %v6704 = vpack.c.b16 %v6570, %v6568
  %v6705 = vpack.c.b16 %v6571, %v6569
  %v6706 = vpack.c.b16 %v6574, %v6572
  %v6707 = vpack.c.b16 %v6575, %v6573
  %v6708 = vpack.c.b16 %v6578, %v6576
  %v6709 = vpack.c.b16 %v6579, %v6577
  %v6710 = vpack.c.b16 %v6582, %v6580
  %v6711 = vpack.c.b16 %v6583, %v6581
  %v6712 = vpack.c.b16 %v6586, %v6584
  %v6713 = vpack.c.b16 %v6587, %v6585
  %v6714 = vpack.c.b16 %v6590, %v6588
  %v6715 = vpack.c.b16 %v6591, %v6589
  %v6716 = vpack.c.b16 %v6594, %v6592
  %v6717 = vpack.c.b16 %v6595, %v6593
  %v6718 = vpack.c.b16 %v6598, %v6596
  %v6719 = vpack.c.b16 %v6599, %v6597
  %v6720 = vpack.c.b16 %v6602, %v6600
  %v6721 = vpack.c.b16 %v6603, %v6601
  %v6722 = vpack.c.b16 %v6606, %v6604
  %v6723 = vpack.c.b16 %v6607, %v6605
  %v6724 = vpack.c.b16 %v6610, %v6608
  %v6725 = vpack.c.b16 %v6611, %v6609
  %v6726 = vpack.c.b16 %v6614, %v6612
  %v6727 = vpack.c.b16 %v6615, %v6613
  %6840 = vmatpush.bf16.msra.mxu0 %v6630
  %6841 = vmatpush.bf16.msra.mxu0 %v6628
  %6842 = vmatpush.bf16.msra.mxu0 %v6626
  %6843 = vmatpush.bf16.msra.mxu0 %v6624
  %6844 = vmatpush.bf16.msra.mxu0 %v6622
  %6845 = vmatpush.bf16.msra.mxu0 %v6620
  %6846 = vmatpush.bf16.msra.mxu0 %v6618
  %6847 = vmatpush.bf16.msra.mxu0 %v6616
  %6848 = vmatmul.bf16.gmra.mxu0 %v3513
  %v6849 = vpop.f32.mrf.mxu0
  %v6850 = vadd.f32 0.0, %v6849
  %v6851 = vpop.f32.mrf.mxu0
  %v6852 = vadd.f32 0.0, %v6851
  %6853 = vmatmul.bf16.gmra.mxu0 %v3520
  %v6854 = vpop.f32.mrf.mxu0
  %v6855 = vadd.f32 0.0, %v6854
  %v6856 = vpop.f32.mrf.mxu0
  %v6857 = vadd.f32 0.0, %v6856
  %6858 = vmatmul.bf16.gmra.mxu0 %v3527
  %v6859 = vpop.f32.mrf.mxu0
  %v6860 = vadd.f32 0.0, %v6859
  %v6861 = vpop.f32.mrf.mxu0
  %v6862 = vadd.f32 0.0, %v6861
  %6863 = vmatmul.bf16.gmra.mxu0 %v3534
  %v6864 = vpop.f32.mrf.mxu0
  %v6865 = vadd.f32 0.0, %v6864
  %v6866 = vpop.f32.mrf.mxu0
  %v6867 = vadd.f32 0.0, %v6866
  %6868 = vmatmul.bf16.gmra.mxu0 %v3541
  %v6869 = vpop.f32.mrf.mxu0
  %v6870 = vadd.f32 0.0, %v6869
  %v6871 = vpop.f32.mrf.mxu0
  %v6872 = vadd.f32 0.0, %v6871
  %6873 = vmatmul.bf16.gmra.mxu0 %v3548
  %v6874 = vpop.f32.mrf.mxu0
  %v6875 = vadd.f32 0.0, %v6874
  %v6876 = vpop.f32.mrf.mxu0
  %v6877 = vadd.f32 0.0, %v6876
  %6878 = vmatmul.bf16.gmra.mxu0 %v3555
  %v6879 = vpop.f32.mrf.mxu0
  %v6880 = vadd.f32 0.0, %v6879
  %v6881 = vpop.f32.mrf.mxu0
  %v6882 = vadd.f32 0.0, %v6881
  %6883 = vdwg.mxu0
  %6884 = vmatpush.bf16.msra.mxu0 %v6646
  %6885 = vmatpush.bf16.msra.mxu0 %v6644
  %6886 = vmatpush.bf16.msra.mxu0 %v6642
  %6887 = vmatpush.bf16.msra.mxu0 %v6640
  %6888 = vmatpush.bf16.msra.mxu0 %v6638
  %6889 = vmatpush.bf16.msra.mxu0 %v6636
  %6890 = vmatpush.bf16.msra.mxu0 %v6634
  %6891 = vmatpush.bf16.msra.mxu0 %v6632
  %6892 = vmatmul.bf16.gmra.mxu0 %v3514
  %v6893 = vpop.f32.mrf.mxu0
  %v6894 = vadd.f32 %v6850, %v6893
  %v6895 = vpop.f32.mrf.mxu0
  %v6896 = vadd.f32 %v6852, %v6895
  %6897 = vmatmul.bf16.gmra.mxu0 %v3521
  %v6898 = vpop.f32.mrf.mxu0
  %v6899 = vadd.f32 %v6855, %v6898
  %v6900 = vpop.f32.mrf.mxu0
  %v6901 = vadd.f32 %v6857, %v6900
  %6902 = vmatmul.bf16.gmra.mxu0 %v3528
  %v6903 = vpop.f32.mrf.mxu0
  %v6904 = vadd.f32 %v6860, %v6903
  %v6905 = vpop.f32.mrf.mxu0
  %v6906 = vadd.f32 %v6862, %v6905
  %6907 = vmatmul.bf16.gmra.mxu0 %v3535
  %v6908 = vpop.f32.mrf.mxu0
  %v6909 = vadd.f32 %v6865, %v6908
  %v6910 = vpop.f32.mrf.mxu0
  %v6911 = vadd.f32 %v6867, %v6910
  %6912 = vmatmul.bf16.gmra.mxu0 %v3542
  %v6913 = vpop.f32.mrf.mxu0
  %v6914 = vadd.f32 %v6870, %v6913
  %v6915 = vpop.f32.mrf.mxu0
  %v6916 = vadd.f32 %v6872, %v6915
  %6917 = vmatmul.bf16.gmra.mxu0 %v3549
  %v6918 = vpop.f32.mrf.mxu0
  %v6919 = vadd.f32 %v6875, %v6918
  %v6920 = vpop.f32.mrf.mxu0
  %v6921 = vadd.f32 %v6877, %v6920
  %6922 = vmatmul.bf16.gmra.mxu0 %v3556
  %v6923 = vpop.f32.mrf.mxu0
  %v6924 = vadd.f32 %v6880, %v6923
  %v6925 = vpop.f32.mrf.mxu0
  %v6926 = vadd.f32 %v6882, %v6925
  %6927 = vdwg.mxu0
  %6928 = vmatpush.bf16.msra.mxu0 %v6662
  %6929 = vmatpush.bf16.msra.mxu0 %v6660
  %6930 = vmatpush.bf16.msra.mxu0 %v6658
  %6931 = vmatpush.bf16.msra.mxu0 %v6656
  %6932 = vmatpush.bf16.msra.mxu0 %v6654
  %6933 = vmatpush.bf16.msra.mxu0 %v6652
  %6934 = vmatpush.bf16.msra.mxu0 %v6650
  %6935 = vmatpush.bf16.msra.mxu0 %v6648
  %6936 = vmatmul.bf16.gmra.mxu0 %v3515
  %v6937 = vpop.f32.mrf.mxu0
  %v6938 = vadd.f32 %v6894, %v6937
  %v6939 = vpop.f32.mrf.mxu0
  %v6940 = vadd.f32 %v6896, %v6939
  %6941 = vmatmul.bf16.gmra.mxu0 %v3522
  %v6942 = vpop.f32.mrf.mxu0
  %v6943 = vadd.f32 %v6899, %v6942
  %v6944 = vpop.f32.mrf.mxu0
  %v6945 = vadd.f32 %v6901, %v6944
  %6946 = vmatmul.bf16.gmra.mxu0 %v3529
  %v6947 = vpop.f32.mrf.mxu0
  %v6948 = vadd.f32 %v6904, %v6947
  %v6949 = vpop.f32.mrf.mxu0
  %v6950 = vadd.f32 %v6906, %v6949
  %6951 = vmatmul.bf16.gmra.mxu0 %v3536
  %v6952 = vpop.f32.mrf.mxu0
  %v6953 = vadd.f32 %v6909, %v6952
  %v6954 = vpop.f32.mrf.mxu0
  %v6955 = vadd.f32 %v6911, %v6954
  %6956 = vmatmul.bf16.gmra.mxu0 %v3543
  %v6957 = vpop.f32.mrf.mxu0
  %v6958 = vadd.f32 %v6914, %v6957
  %v6959 = vpop.f32.mrf.mxu0
  %v6960 = vadd.f32 %v6916, %v6959
  %6961 = vmatmul.bf16.gmra.mxu0 %v3550
  %v6962 = vpop.f32.mrf.mxu0
  %v6963 = vadd.f32 %v6919, %v6962
  %v6964 = vpop.f32.mrf.mxu0
  %v6965 = vadd.f32 %v6921, %v6964
  %6966 = vmatmul.bf16.gmra.mxu0 %v3557
  %v6967 = vpop.f32.mrf.mxu0
  %v6968 = vadd.f32 %v6924, %v6967
  %v6969 = vpop.f32.mrf.mxu0
  %v6970 = vadd.f32 %v6926, %v6969
  %6971 = vdwg.mxu0
  %6972 = vmatpush.bf16.msra.mxu0 %v6678
  %6973 = vmatpush.bf16.msra.mxu0 %v6676
  %6974 = vmatpush.bf16.msra.mxu0 %v6674
  %6975 = vmatpush.bf16.msra.mxu0 %v6672
  %6976 = vmatpush.bf16.msra.mxu0 %v6670
  %6977 = vmatpush.bf16.msra.mxu0 %v6668
  %6978 = vmatpush.bf16.msra.mxu0 %v6666
  %6979 = vmatpush.bf16.msra.mxu0 %v6664
  %6980 = vmatmul.bf16.gmra.mxu0 %v3516
  %v6981 = vpop.f32.mrf.mxu0
  %v6982 = vadd.f32 %v6938, %v6981
  %v6983 = vpop.f32.mrf.mxu0
  %v6984 = vadd.f32 %v6940, %v6983
  %6985 = vmatmul.bf16.gmra.mxu0 %v3523
  %v6986 = vpop.f32.mrf.mxu0
  %v6987 = vadd.f32 %v6943, %v6986
  %v6988 = vpop.f32.mrf.mxu0
  %v6989 = vadd.f32 %v6945, %v6988
  %6990 = vmatmul.bf16.gmra.mxu0 %v3530
  %v6991 = vpop.f32.mrf.mxu0
  %v6992 = vadd.f32 %v6948, %v6991
  %v6993 = vpop.f32.mrf.mxu0
  %v6994 = vadd.f32 %v6950, %v6993
  %6995 = vmatmul.bf16.gmra.mxu0 %v3537
  %v6996 = vpop.f32.mrf.mxu0
  %v6997 = vadd.f32 %v6953, %v6996
  %v6998 = vpop.f32.mrf.mxu0
  %v6999 = vadd.f32 %v6955, %v6998
  %7000 = vmatmul.bf16.gmra.mxu0 %v3544
  %v7001 = vpop.f32.mrf.mxu0
  %v7002 = vadd.f32 %v6958, %v7001
  %v7003 = vpop.f32.mrf.mxu0
  %v7004 = vadd.f32 %v6960, %v7003
  %7005 = vmatmul.bf16.gmra.mxu0 %v3551
  %v7006 = vpop.f32.mrf.mxu0
  %v7007 = vadd.f32 %v6963, %v7006
  %v7008 = vpop.f32.mrf.mxu0
  %v7009 = vadd.f32 %v6965, %v7008
  %7010 = vmatmul.bf16.gmra.mxu0 %v3558
  %v7011 = vpop.f32.mrf.mxu0
  %v7012 = vadd.f32 %v6968, %v7011
  %v7013 = vpop.f32.mrf.mxu0
  %v7014 = vadd.f32 %v6970, %v7013
  %7015 = vdwg.mxu0
  %7016 = vmatpush.bf16.msra.mxu0 %v6694
  %7017 = vmatpush.bf16.msra.mxu0 %v6692
  %7018 = vmatpush.bf16.msra.mxu0 %v6690
  %7019 = vmatpush.bf16.msra.mxu0 %v6688
  %7020 = vmatpush.bf16.msra.mxu0 %v6686
  %7021 = vmatpush.bf16.msra.mxu0 %v6684
  %7022 = vmatpush.bf16.msra.mxu0 %v6682
  %7023 = vmatpush.bf16.msra.mxu0 %v6680
  %7024 = vmatmul.bf16.gmra.mxu0 %v3517
  %v7025 = vpop.f32.mrf.mxu0
  %v7026 = vadd.f32 %v6982, %v7025
  %v7027 = vpop.f32.mrf.mxu0
  %v7028 = vadd.f32 %v6984, %v7027
  %7029 = vmatmul.bf16.gmra.mxu0 %v3524
  %v7030 = vpop.f32.mrf.mxu0
  %v7031 = vadd.f32 %v6987, %v7030
  %v7032 = vpop.f32.mrf.mxu0
  %v7033 = vadd.f32 %v6989, %v7032
  %7034 = vmatmul.bf16.gmra.mxu0 %v3531
  %v7035 = vpop.f32.mrf.mxu0
  %v7036 = vadd.f32 %v6992, %v7035
  %v7037 = vpop.f32.mrf.mxu0
  %v7038 = vadd.f32 %v6994, %v7037
  %7039 = vmatmul.bf16.gmra.mxu0 %v3538
  %v7040 = vpop.f32.mrf.mxu0
  %v7041 = vadd.f32 %v6997, %v7040
  %v7042 = vpop.f32.mrf.mxu0
  %v7043 = vadd.f32 %v6999, %v7042
  %7044 = vmatmul.bf16.gmra.mxu0 %v3545
  %v7045 = vpop.f32.mrf.mxu0
  %v7046 = vadd.f32 %v7002, %v7045
  %v7047 = vpop.f32.mrf.mxu0
  %v7048 = vadd.f32 %v7004, %v7047
  %7049 = vmatmul.bf16.gmra.mxu0 %v3552
  %v7050 = vpop.f32.mrf.mxu0
  %v7051 = vadd.f32 %v7007, %v7050
  %v7052 = vpop.f32.mrf.mxu0
  %v7053 = vadd.f32 %v7009, %v7052
  %7054 = vmatmul.bf16.gmra.mxu0 %v3559
  %v7055 = vpop.f32.mrf.mxu0
  %v7056 = vadd.f32 %v7012, %v7055
  %v7057 = vpop.f32.mrf.mxu0
  %v7058 = vadd.f32 %v7014, %v7057
  %7059 = vdwg.mxu0
  %7060 = vmatpush.bf16.msra.mxu0 %v6710
  %7061 = vmatpush.bf16.msra.mxu0 %v6708
  %7062 = vmatpush.bf16.msra.mxu0 %v6706
  %7063 = vmatpush.bf16.msra.mxu0 %v6704
  %7064 = vmatpush.bf16.msra.mxu0 %v6702
  %7065 = vmatpush.bf16.msra.mxu0 %v6700
  %7066 = vmatpush.bf16.msra.mxu0 %v6698
  %7067 = vmatpush.bf16.msra.mxu0 %v6696
  %7068 = vmatmul.bf16.gmra.mxu0 %v3518
  %v7069 = vpop.f32.mrf.mxu0
  %v7070 = vadd.f32 %v7026, %v7069
  %v7071 = vpop.f32.mrf.mxu0
  %v7072 = vadd.f32 %v7028, %v7071
  %7073 = vmatmul.bf16.gmra.mxu0 %v3525
  %v7074 = vpop.f32.mrf.mxu0
  %v7075 = vadd.f32 %v7031, %v7074
  %v7076 = vpop.f32.mrf.mxu0
  %v7077 = vadd.f32 %v7033, %v7076
  %7078 = vmatmul.bf16.gmra.mxu0 %v3532
  %v7079 = vpop.f32.mrf.mxu0
  %v7080 = vadd.f32 %v7036, %v7079
  %v7081 = vpop.f32.mrf.mxu0
  %v7082 = vadd.f32 %v7038, %v7081
  %7083 = vmatmul.bf16.gmra.mxu0 %v3539
  %v7084 = vpop.f32.mrf.mxu0
  %v7085 = vadd.f32 %v7041, %v7084
  %v7086 = vpop.f32.mrf.mxu0
  %v7087 = vadd.f32 %v7043, %v7086
  %7088 = vmatmul.bf16.gmra.mxu0 %v3546
  %v7089 = vpop.f32.mrf.mxu0
  %v7090 = vadd.f32 %v7046, %v7089
  %v7091 = vpop.f32.mrf.mxu0
  %v7092 = vadd.f32 %v7048, %v7091
  %7093 = vmatmul.bf16.gmra.mxu0 %v3553
  %v7094 = vpop.f32.mrf.mxu0
  %v7095 = vadd.f32 %v7051, %v7094
  %v7096 = vpop.f32.mrf.mxu0
  %v7097 = vadd.f32 %v7053, %v7096
  %7098 = vmatmul.bf16.gmra.mxu0 %v3560
  %v7099 = vpop.f32.mrf.mxu0
  %v7100 = vadd.f32 %v7056, %v7099
  %v7101 = vpop.f32.mrf.mxu0
  %v7102 = vadd.f32 %v7058, %v7101
  %7103 = vdwg.mxu0
  %7104 = vmatpush.bf16.msra.mxu0 %v6726
  %7105 = vmatpush.bf16.msra.mxu0 %v6724
  %7106 = vmatpush.bf16.msra.mxu0 %v6722
  %7107 = vmatpush.bf16.msra.mxu0 %v6720
  %7108 = vmatpush.bf16.msra.mxu0 %v6718
  %7109 = vmatpush.bf16.msra.mxu0 %v6716
  %7110 = vmatpush.bf16.msra.mxu0 %v6714
  %7111 = vmatpush.bf16.msra.mxu0 %v6712
  %7112 = vmatmul.bf16.gmra.mxu0 %v3519
  %v7113 = vpop.f32.mrf.mxu0
  %v7114 = vadd.f32 %v7070, %v7113
  %v7115 = vpop.f32.mrf.mxu0
  %v7116 = vadd.f32 %v7072, %v7115
  %7117 = vmatmul.bf16.gmra.mxu0 %v3526
  %v7118 = vpop.f32.mrf.mxu0
  %v7119 = vadd.f32 %v7075, %v7118
  %v7120 = vpop.f32.mrf.mxu0
  %v7121 = vadd.f32 %v7077, %v7120
  %7122 = vmatmul.bf16.gmra.mxu0 %v3533
  %v7123 = vpop.f32.mrf.mxu0
  %v7124 = vadd.f32 %v7080, %v7123
  %v7125 = vpop.f32.mrf.mxu0
  %v7126 = vadd.f32 %v7082, %v7125
  %7127 = vmatmul.bf16.gmra.mxu0 %v3540
  %v7128 = vpop.f32.mrf.mxu0
  %v7129 = vadd.f32 %v7085, %v7128
  %v7130 = vpop.f32.mrf.mxu0
  %v7131 = vadd.f32 %v7087, %v7130
  %7132 = vmatmul.bf16.gmra.mxu0 %v3547
  %v7133 = vpop.f32.mrf.mxu0
  %v7134 = vadd.f32 %v7090, %v7133
  %v7135 = vpop.f32.mrf.mxu0
  %v7136 = vadd.f32 %v7092, %v7135
  %7137 = vmatmul.bf16.gmra.mxu0 %v3554
  %v7138 = vpop.f32.mrf.mxu0
  %v7139 = vadd.f32 %v7095, %v7138
  %v7140 = vpop.f32.mrf.mxu0
  %v7141 = vadd.f32 %v7097, %v7140
  %7142 = vmatmul.bf16.gmra.mxu0 %v3561
  %v7143 = vpop.f32.mrf.mxu0
  %v7144 = vadd.f32 %v7100, %v7143
  %v7145 = vpop.f32.mrf.mxu0
  %v7146 = vadd.f32 %v7102, %v7145
  %7147 = vdwg.mxu0
  %7148 = vmatpush.bf16.msra.mxu0 %v6631
  %7149 = vmatpush.bf16.msra.mxu0 %v6629
  %7150 = vmatpush.bf16.msra.mxu0 %v6627
  %7151 = vmatpush.bf16.msra.mxu0 %v6625
  %7152 = vmatpush.bf16.msra.mxu0 %v6623
  %7153 = vmatpush.bf16.msra.mxu0 %v6621
  %7154 = vmatpush.bf16.msra.mxu0 %v6619
  %7155 = vmatpush.bf16.msra.mxu0 %v6617
  %7156 = vmatmul.bf16.gmra.mxu0 %v3513
  %v7157 = vpop.f32.mrf.mxu0
  %v7158 = vadd.f32 0.0, %v7157
  %v7159 = vpop.f32.mrf.mxu0
  %v7160 = vadd.f32 0.0, %v7159
  %7161 = vmatmul.bf16.gmra.mxu0 %v3520
  %v7162 = vpop.f32.mrf.mxu0
  %v7163 = vadd.f32 0.0, %v7162
  %v7164 = vpop.f32.mrf.mxu0
  %v7165 = vadd.f32 0.0, %v7164
  %7166 = vmatmul.bf16.gmra.mxu0 %v3527
  %v7167 = vpop.f32.mrf.mxu0
  %v7168 = vadd.f32 0.0, %v7167
  %v7169 = vpop.f32.mrf.mxu0
  %v7170 = vadd.f32 0.0, %v7169
  %7171 = vmatmul.bf16.gmra.mxu0 %v3534
  %v7172 = vpop.f32.mrf.mxu0
  %v7173 = vadd.f32 0.0, %v7172
  %v7174 = vpop.f32.mrf.mxu0
  %v7175 = vadd.f32 0.0, %v7174
  %7176 = vmatmul.bf16.gmra.mxu0 %v3541
  %v7177 = vpop.f32.mrf.mxu0
  %v7178 = vadd.f32 0.0, %v7177
  %v7179 = vpop.f32.mrf.mxu0
  %v7180 = vadd.f32 0.0, %v7179
  %7181 = vmatmul.bf16.gmra.mxu0 %v3548
  %v7182 = vpop.f32.mrf.mxu0
  %v7183 = vadd.f32 0.0, %v7182
  %v7184 = vpop.f32.mrf.mxu0
  %v7185 = vadd.f32 0.0, %v7184
  %7186 = vmatmul.bf16.gmra.mxu0 %v3555
  %v7187 = vpop.f32.mrf.mxu0
  %v7188 = vadd.f32 0.0, %v7187
  %v7189 = vpop.f32.mrf.mxu0
  %v7190 = vadd.f32 0.0, %v7189
  %7191 = vdwg.mxu0
  %7192 = vmatpush.bf16.msra.mxu0 %v6647
  %7193 = vmatpush.bf16.msra.mxu0 %v6645
  %7194 = vmatpush.bf16.msra.mxu0 %v6643
  %7195 = vmatpush.bf16.msra.mxu0 %v6641
  %7196 = vmatpush.bf16.msra.mxu0 %v6639
  %7197 = vmatpush.bf16.msra.mxu0 %v6637
  %7198 = vmatpush.bf16.msra.mxu0 %v6635
  %7199 = vmatpush.bf16.msra.mxu0 %v6633
  %7200 = vmatmul.bf16.gmra.mxu0 %v3514
  %v7201 = vpop.f32.mrf.mxu0
  %v7202 = vadd.f32 %v7158, %v7201
  %v7203 = vpop.f32.mrf.mxu0
  %v7204 = vadd.f32 %v7160, %v7203
  %7205 = vmatmul.bf16.gmra.mxu0 %v3521
  %v7206 = vpop.f32.mrf.mxu0
  %v7207 = vadd.f32 %v7163, %v7206
  %v7208 = vpop.f32.mrf.mxu0
  %v7209 = vadd.f32 %v7165, %v7208
  %7210 = vmatmul.bf16.gmra.mxu0 %v3528
  %v7211 = vpop.f32.mrf.mxu0
  %v7212 = vadd.f32 %v7168, %v7211
  %v7213 = vpop.f32.mrf.mxu0
  %v7214 = vadd.f32 %v7170, %v7213
  %7215 = vmatmul.bf16.gmra.mxu0 %v3535
  %v7216 = vpop.f32.mrf.mxu0
  %v7217 = vadd.f32 %v7173, %v7216
  %v7218 = vpop.f32.mrf.mxu0
  %v7219 = vadd.f32 %v7175, %v7218
  %7220 = vmatmul.bf16.gmra.mxu0 %v3542
  %v7221 = vpop.f32.mrf.mxu0
  %v7222 = vadd.f32 %v7178, %v7221
  %v7223 = vpop.f32.mrf.mxu0
  %v7224 = vadd.f32 %v7180, %v7223
  %7225 = vmatmul.bf16.gmra.mxu0 %v3549
  %v7226 = vpop.f32.mrf.mxu0
  %v7227 = vadd.f32 %v7183, %v7226
  %v7228 = vpop.f32.mrf.mxu0
  %v7229 = vadd.f32 %v7185, %v7228
  %7230 = vmatmul.bf16.gmra.mxu0 %v3556
  %v7231 = vpop.f32.mrf.mxu0
  %v7232 = vadd.f32 %v7188, %v7231
  %v7233 = vpop.f32.mrf.mxu0
  %v7234 = vadd.f32 %v7190, %v7233
  %7235 = vdwg.mxu0
  %7236 = vmatpush.bf16.msra.mxu0 %v6663
  %7237 = vmatpush.bf16.msra.mxu0 %v6661
  %7238 = vmatpush.bf16.msra.mxu0 %v6659
  %7239 = vmatpush.bf16.msra.mxu0 %v6657
  %7240 = vmatpush.bf16.msra.mxu0 %v6655
  %7241 = vmatpush.bf16.msra.mxu0 %v6653
  %7242 = vmatpush.bf16.msra.mxu0 %v6651
  %7243 = vmatpush.bf16.msra.mxu0 %v6649
  %7244 = vmatmul.bf16.gmra.mxu0 %v3515
  %v7245 = vpop.f32.mrf.mxu0
  %v7246 = vadd.f32 %v7202, %v7245
  %v7247 = vpop.f32.mrf.mxu0
  %v7248 = vadd.f32 %v7204, %v7247
  %7249 = vmatmul.bf16.gmra.mxu0 %v3522
  %v7250 = vpop.f32.mrf.mxu0
  %v7251 = vadd.f32 %v7207, %v7250
  %v7252 = vpop.f32.mrf.mxu0
  %v7253 = vadd.f32 %v7209, %v7252
  %7254 = vmatmul.bf16.gmra.mxu0 %v3529
  %v7255 = vpop.f32.mrf.mxu0
  %v7256 = vadd.f32 %v7212, %v7255
  %v7257 = vpop.f32.mrf.mxu0
  %v7258 = vadd.f32 %v7214, %v7257
  %7259 = vmatmul.bf16.gmra.mxu0 %v3536
  %v7260 = vpop.f32.mrf.mxu0
  %v7261 = vadd.f32 %v7217, %v7260
  %v7262 = vpop.f32.mrf.mxu0
  %v7263 = vadd.f32 %v7219, %v7262
  %7264 = vmatmul.bf16.gmra.mxu0 %v3543
  %v7265 = vpop.f32.mrf.mxu0
  %v7266 = vadd.f32 %v7222, %v7265
  %v7267 = vpop.f32.mrf.mxu0
  %v7268 = vadd.f32 %v7224, %v7267
  %7269 = vmatmul.bf16.gmra.mxu0 %v3550
  %v7270 = vpop.f32.mrf.mxu0
  %v7271 = vadd.f32 %v7227, %v7270
  %v7272 = vpop.f32.mrf.mxu0
  %v7273 = vadd.f32 %v7229, %v7272
  %7274 = vmatmul.bf16.gmra.mxu0 %v3557
  %v7275 = vpop.f32.mrf.mxu0
  %v7276 = vadd.f32 %v7232, %v7275
  %v7277 = vpop.f32.mrf.mxu0
  %v7278 = vadd.f32 %v7234, %v7277
  %7279 = vdwg.mxu0
  %7280 = vmatpush.bf16.msra.mxu0 %v6679
  %7281 = vmatpush.bf16.msra.mxu0 %v6677
  %7282 = vmatpush.bf16.msra.mxu0 %v6675
  %7283 = vmatpush.bf16.msra.mxu0 %v6673
  %7284 = vmatpush.bf16.msra.mxu0 %v6671
  %7285 = vmatpush.bf16.msra.mxu0 %v6669
  %7286 = vmatpush.bf16.msra.mxu0 %v6667
  %7287 = vmatpush.bf16.msra.mxu0 %v6665
  %7288 = vmatmul.bf16.gmra.mxu0 %v3516
  %v7289 = vpop.f32.mrf.mxu0
  %v7290 = vadd.f32 %v7246, %v7289
  %v7291 = vpop.f32.mrf.mxu0
  %v7292 = vadd.f32 %v7248, %v7291
  %7293 = vmatmul.bf16.gmra.mxu0 %v3523
  %v7294 = vpop.f32.mrf.mxu0
  %v7295 = vadd.f32 %v7251, %v7294
  %v7296 = vpop.f32.mrf.mxu0
  %v7297 = vadd.f32 %v7253, %v7296
  %7298 = vmatmul.bf16.gmra.mxu0 %v3530
  %v7299 = vpop.f32.mrf.mxu0
  %v7300 = vadd.f32 %v7256, %v7299
  %v7301 = vpop.f32.mrf.mxu0
  %v7302 = vadd.f32 %v7258, %v7301
  %7303 = vmatmul.bf16.gmra.mxu0 %v3537
  %v7304 = vpop.f32.mrf.mxu0
  %v7305 = vadd.f32 %v7261, %v7304
  %v7306 = vpop.f32.mrf.mxu0
  %v7307 = vadd.f32 %v7263, %v7306
  %7308 = vmatmul.bf16.gmra.mxu0 %v3544
  %v7309 = vpop.f32.mrf.mxu0
  %v7310 = vadd.f32 %v7266, %v7309
  %v7311 = vpop.f32.mrf.mxu0
  %v7312 = vadd.f32 %v7268, %v7311
  %7313 = vmatmul.bf16.gmra.mxu0 %v3551
  %v7314 = vpop.f32.mrf.mxu0
  %v7315 = vadd.f32 %v7271, %v7314
  %v7316 = vpop.f32.mrf.mxu0
  %v7317 = vadd.f32 %v7273, %v7316
  %7318 = vmatmul.bf16.gmra.mxu0 %v3558
  %v7319 = vpop.f32.mrf.mxu0
  %v7320 = vadd.f32 %v7276, %v7319
  %v7321 = vpop.f32.mrf.mxu0
  %v7322 = vadd.f32 %v7278, %v7321
  %7323 = vdwg.mxu0
  %7324 = vmatpush.bf16.msra.mxu0 %v6695
  %7325 = vmatpush.bf16.msra.mxu0 %v6693
  %7326 = vmatpush.bf16.msra.mxu0 %v6691
  %7327 = vmatpush.bf16.msra.mxu0 %v6689
  %7328 = vmatpush.bf16.msra.mxu0 %v6687
  %7329 = vmatpush.bf16.msra.mxu0 %v6685
  %7330 = vmatpush.bf16.msra.mxu0 %v6683
  %7331 = vmatpush.bf16.msra.mxu0 %v6681
  %7332 = vmatmul.bf16.gmra.mxu0 %v3517
  %v7333 = vpop.f32.mrf.mxu0
  %v7334 = vadd.f32 %v7290, %v7333
  %v7335 = vpop.f32.mrf.mxu0
  %v7336 = vadd.f32 %v7292, %v7335
  %7337 = vmatmul.bf16.gmra.mxu0 %v3524
  %v7338 = vpop.f32.mrf.mxu0
  %v7339 = vadd.f32 %v7295, %v7338
  %v7340 = vpop.f32.mrf.mxu0
  %v7341 = vadd.f32 %v7297, %v7340
  %7342 = vmatmul.bf16.gmra.mxu0 %v3531
  %v7343 = vpop.f32.mrf.mxu0
  %v7344 = vadd.f32 %v7300, %v7343
  %v7345 = vpop.f32.mrf.mxu0
  %v7346 = vadd.f32 %v7302, %v7345
  %7347 = vmatmul.bf16.gmra.mxu0 %v3538
  %v7348 = vpop.f32.mrf.mxu0
  %v7349 = vadd.f32 %v7305, %v7348
  %v7350 = vpop.f32.mrf.mxu0
  %v7351 = vadd.f32 %v7307, %v7350
  %7352 = vmatmul.bf16.gmra.mxu0 %v3545
  %v7353 = vpop.f32.mrf.mxu0
  %v7354 = vadd.f32 %v7310, %v7353
  %v7355 = vpop.f32.mrf.mxu0
  %v7356 = vadd.f32 %v7312, %v7355
  %7357 = vmatmul.bf16.gmra.mxu0 %v3552
  %v7358 = vpop.f32.mrf.mxu0
  %v7359 = vadd.f32 %v7315, %v7358
  %v7360 = vpop.f32.mrf.mxu0
  %v7361 = vadd.f32 %v7317, %v7360
  %7362 = vmatmul.bf16.gmra.mxu0 %v3559
  %v7363 = vpop.f32.mrf.mxu0
  %v7364 = vadd.f32 %v7320, %v7363
  %v7365 = vpop.f32.mrf.mxu0
  %v7366 = vadd.f32 %v7322, %v7365
  %7367 = vdwg.mxu0
  %7368 = vmatpush.bf16.msra.mxu0 %v6711
  %7369 = vmatpush.bf16.msra.mxu0 %v6709
  %7370 = vmatpush.bf16.msra.mxu0 %v6707
  %7371 = vmatpush.bf16.msra.mxu0 %v6705
  %7372 = vmatpush.bf16.msra.mxu0 %v6703
  %7373 = vmatpush.bf16.msra.mxu0 %v6701
  %7374 = vmatpush.bf16.msra.mxu0 %v6699
  %7375 = vmatpush.bf16.msra.mxu0 %v6697
  %7376 = vmatmul.bf16.gmra.mxu0 %v3518
  %v7377 = vpop.f32.mrf.mxu0
  %v7378 = vadd.f32 %v7334, %v7377
  %v7379 = vpop.f32.mrf.mxu0
  %v7380 = vadd.f32 %v7336, %v7379
  %7381 = vmatmul.bf16.gmra.mxu0 %v3525
  %v7382 = vpop.f32.mrf.mxu0
  %v7383 = vadd.f32 %v7339, %v7382
  %v7384 = vpop.f32.mrf.mxu0
  %v7385 = vadd.f32 %v7341, %v7384
  %7386 = vmatmul.bf16.gmra.mxu0 %v3532
  %v7387 = vpop.f32.mrf.mxu0
  %v7388 = vadd.f32 %v7344, %v7387
  %v7389 = vpop.f32.mrf.mxu0
  %v7390 = vadd.f32 %v7346, %v7389
  %7391 = vmatmul.bf16.gmra.mxu0 %v3539
  %v7392 = vpop.f32.mrf.mxu0
  %v7393 = vadd.f32 %v7349, %v7392
  %v7394 = vpop.f32.mrf.mxu0
  %v7395 = vadd.f32 %v7351, %v7394
  %7396 = vmatmul.bf16.gmra.mxu0 %v3546
  %v7397 = vpop.f32.mrf.mxu0
  %v7398 = vadd.f32 %v7354, %v7397
  %v7399 = vpop.f32.mrf.mxu0
  %v7400 = vadd.f32 %v7356, %v7399
  %7401 = vmatmul.bf16.gmra.mxu0 %v3553
  %v7402 = vpop.f32.mrf.mxu0
  %v7403 = vadd.f32 %v7359, %v7402
  %v7404 = vpop.f32.mrf.mxu0
  %v7405 = vadd.f32 %v7361, %v7404
  %7406 = vmatmul.bf16.gmra.mxu0 %v3560
  %v7407 = vpop.f32.mrf.mxu0
  %v7408 = vadd.f32 %v7364, %v7407
  %v7409 = vpop.f32.mrf.mxu0
  %v7410 = vadd.f32 %v7366, %v7409
  %7411 = vdwg.mxu0
  %7412 = vmatpush.bf16.msra.mxu0 %v6727
  %7413 = vmatpush.bf16.msra.mxu0 %v6725
  %7414 = vmatpush.bf16.msra.mxu0 %v6723
  %7415 = vmatpush.bf16.msra.mxu0 %v6721
  %7416 = vmatpush.bf16.msra.mxu0 %v6719
  %7417 = vmatpush.bf16.msra.mxu0 %v6717
  %7418 = vmatpush.bf16.msra.mxu0 %v6715
  %7419 = vmatpush.bf16.msra.mxu0 %v6713
  %7420 = vmatmul.bf16.gmra.mxu0 %v3519
  %v7421 = vpop.f32.mrf.mxu0
  %v7422 = vadd.f32 %v7378, %v7421
  %v7423 = vpop.f32.mrf.mxu0
  %v7424 = vadd.f32 %v7380, %v7423
  %7425 = vmatmul.bf16.gmra.mxu0 %v3526
  %v7426 = vpop.f32.mrf.mxu0
  %v7427 = vadd.f32 %v7383, %v7426
  %v7428 = vpop.f32.mrf.mxu0
  %v7429 = vadd.f32 %v7385, %v7428
  %7430 = vmatmul.bf16.gmra.mxu0 %v3533
  %v7431 = vpop.f32.mrf.mxu0
  %v7432 = vadd.f32 %v7388, %v7431
  %v7433 = vpop.f32.mrf.mxu0
  %v7434 = vadd.f32 %v7390, %v7433
  %7435 = vmatmul.bf16.gmra.mxu0 %v3540
  %v7436 = vpop.f32.mrf.mxu0
  %v7437 = vadd.f32 %v7393, %v7436
  %v7438 = vpop.f32.mrf.mxu0
  %v7439 = vadd.f32 %v7395, %v7438
  %7440 = vmatmul.bf16.gmra.mxu0 %v3547
  %v7441 = vpop.f32.mrf.mxu0
  %v7442 = vadd.f32 %v7398, %v7441
  %v7443 = vpop.f32.mrf.mxu0
  %v7444 = vadd.f32 %v7400, %v7443
  %7445 = vmatmul.bf16.gmra.mxu0 %v3554
  %v7446 = vpop.f32.mrf.mxu0
  %v7447 = vadd.f32 %v7403, %v7446
  %v7448 = vpop.f32.mrf.mxu0
  %v7449 = vadd.f32 %v7405, %v7448
  %7450 = vmatmul.bf16.gmra.mxu0 %v3561
  %v7451 = vpop.f32.mrf.mxu0
  %v7452 = vadd.f32 %v7408, %v7451
  %v7453 = vpop.f32.mrf.mxu0
  %v7454 = vadd.f32 %v7410, %v7453
  %7455 = vdwg.mxu0
  %v7456 = vmax.f32 %v6139, %v7114
  %v7457 = vmax.f32 %v6140, %v7422
  %v7458 = vmax.f32 %v6141, %v7116
  %v7459 = vmax.f32 %v6142, %v7424
  %v7460 = vmax.f32 %v6143, %v7119
  %v7461 = vmax.f32 %v6144, %v7427
  %v7462 = vmax.f32 %v6145, %v7121
  %v7463 = vmax.f32 %v6146, %v7429
  %v7464 = vmax.f32 %v6147, %v7124
  %v7465 = vmax.f32 %v6148, %v7432
  %v7466 = vmax.f32 %v6149, %v7126
  %v7467 = vmax.f32 %v6150, %v7434
  %v7468 = vmax.f32 %v6151, %v7129
  %v7469 = vmax.f32 %v6152, %v7437
  %v7470 = vmax.f32 %v6153, %v7131
  %v7471 = vmax.f32 %v6154, %v7439
  %v7472 = vmax.f32 %v6155, %v7134
  %v7473 = vmax.f32 %v6156, %v7442
  %v7474 = vmax.f32 %v6157, %v7136
  %v7475 = vmax.f32 %v6158, %v7444
  %v7476 = vmax.f32 %v6159, %v7139
  %v7477 = vmax.f32 %v6160, %v7447
  %v7478 = vmax.f32 %v6161, %v7141
  %v7479 = vmax.f32 %v6162, %v7449
  %v7480 = vmax.f32 %v6163, %v7144
  %v7481 = vmax.f32 %v6164, %v7452
  %v7482 = vmax.f32 %v6165, %v7146
  %v7483 = vmax.f32 %v6166, %v7454
  %s7484 = scalar_lea.vmem %s3, 2688
  %v7485 = vld [vmem:[%s7484] sm:$0xff]
  %v7486 = vld [vmem:[%s7484 + $0x8] sm:$0xff]
  %v7487 = vld [vmem:[%s7484 + $0x10] sm:$0xff]
  %v7488 = vld [vmem:[%s7484 + $0x18] sm:$0xff]
  %v7489 = vld [vmem:[%s7484 + $0x20] sm:$0xff]
  %v7490 = vld [vmem:[%s7484 + $0x28] sm:$0xff]
  %v7491 = vld [vmem:[%s7484 + $0x30] sm:$0xff]
  %v7492 = vld [vmem:[%s7484 + $0x38] sm:$0xff]
  %v7493 = vld [vmem:[%s7484 + $0x40] sm:$0xff]
  %v7494 = vld [vmem:[%s7484 + $0x48] sm:$0xff]
  %v7495 = vld [vmem:[%s7484 + $0x50] sm:$0xff]
  %v7496 = vld [vmem:[%s7484 + $0x58] sm:$0xff]
  %v7497 = vld [vmem:[%s7484 + $0x60] sm:$0xff]
  %v7498 = vld [vmem:[%s7484 + $0x68] sm:$0xff]
  %v7499 = vld [vmem:[%s7484 + $0x70] sm:$0xff]
  %v7500 = vld [vmem:[%s7484 + $0x78] sm:$0xff]
  %v7501 = vld [vmem:[%s7484 + $0x80] sm:$0xff]
  %v7502 = vld [vmem:[%s7484 + $0x88] sm:$0xff]
  %v7503 = vld [vmem:[%s7484 + $0x90] sm:$0xff]
  %v7504 = vld [vmem:[%s7484 + $0x98] sm:$0xff]
  %v7505 = vld [vmem:[%s7484 + $0xa0] sm:$0xff]
  %v7506 = vld [vmem:[%s7484 + $0xa8] sm:$0xff]
  %v7507 = vld [vmem:[%s7484 + $0xb0] sm:$0xff]
  %v7508 = vld [vmem:[%s7484 + $0xb8] sm:$0xff]
  %v7509 = vld [vmem:[%s7484 + $0xc0] sm:$0xff]
  %v7510 = vld [vmem:[%s7484 + $0xc8] sm:$0xff]
  %v7511 = vld [vmem:[%s7484 + $0xd0] sm:$0xff]
  %v7512 = vld [vmem:[%s7484 + $0xd8] sm:$0xff]
  %v7513 = vld [vmem:[%s7484 + $0xe0] sm:$0xff]
  %v7514 = vld [vmem:[%s7484 + $0xe8] sm:$0xff]
  %v7515 = vld [vmem:[%s7484 + $0xf0] sm:$0xff]
  %v7516 = vld [vmem:[%s7484 + $0xf8] sm:$0xff]
  %v7517 = vld [vmem:[%s7484 + $0x100] sm:$0xff]
  %v7518 = vld [vmem:[%s7484 + $0x108] sm:$0xff]
  %v7519 = vld [vmem:[%s7484 + $0x110] sm:$0xff]
  %v7520 = vld [vmem:[%s7484 + $0x118] sm:$0xff]
  %v7521 = vld [vmem:[%s7484 + $0x120] sm:$0xff]
  %v7522 = vld [vmem:[%s7484 + $0x128] sm:$0xff]
  %v7523 = vld [vmem:[%s7484 + $0x130] sm:$0xff]
  %v7524 = vld [vmem:[%s7484 + $0x138] sm:$0xff]
  %v7525 = vld [vmem:[%s7484 + $0x140] sm:$0xff]
  %v7526 = vld [vmem:[%s7484 + $0x148] sm:$0xff]
  %v7527 = vld [vmem:[%s7484 + $0x150] sm:$0xff]
  %v7528 = vld [vmem:[%s7484 + $0x158] sm:$0xff]
  %v7529 = vld [vmem:[%s7484 + $0x160] sm:$0xff]
  %v7530 = vld [vmem:[%s7484 + $0x168] sm:$0xff]
  %v7531 = vld [vmem:[%s7484 + $0x170] sm:$0xff]
  %v7532 = vld [vmem:[%s7484 + $0x178] sm:$0xff]
  %v7533 = vld [vmem:[%s7484 + $0x180] sm:$0xff]
  %v7534 = vld [vmem:[%s7484 + $0x188] sm:$0xff]
  %v7535 = vld [vmem:[%s7484 + $0x190] sm:$0xff]
  %v7536 = vld [vmem:[%s7484 + $0x198] sm:$0xff]
  %v7537 = vld [vmem:[%s7484 + $0x1a0] sm:$0xff]
  %v7538 = vld [vmem:[%s7484 + $0x1a8] sm:$0xff]
  %v7539 = vld [vmem:[%s7484 + $0x1b0] sm:$0xff]
  %v7540 = vld [vmem:[%s7484 + $0x1b8] sm:$0xff]
  %v7541 = vld [vmem:[%s7484 + $0x1c0] sm:$0xff]
  %v7542 = vld [vmem:[%s7484 + $0x1c8] sm:$0xff]
  %v7543 = vld [vmem:[%s7484 + $0x1d0] sm:$0xff]
  %v7544 = vld [vmem:[%s7484 + $0x1d8] sm:$0xff]
  %v7545 = vld [vmem:[%s7484 + $0x1e0] sm:$0xff]
  %v7546 = vld [vmem:[%s7484 + $0x1e8] sm:$0xff]
  %v7547 = vld [vmem:[%s7484 + $0x1f0] sm:$0xff]
  %v7548 = vld [vmem:[%s7484 + $0x1f8] sm:$0xff]
  %v7549 = vld [vmem:[%s7484 + $0x200] sm:$0xff]
  %v7550 = vld [vmem:[%s7484 + $0x208] sm:$0xff]
  %v7551 = vld [vmem:[%s7484 + $0x210] sm:$0xff]
  %v7552 = vld [vmem:[%s7484 + $0x218] sm:$0xff]
  %v7553 = vld [vmem:[%s7484 + $0x220] sm:$0xff]
  %v7554 = vld [vmem:[%s7484 + $0x228] sm:$0xff]
  %v7555 = vld [vmem:[%s7484 + $0x230] sm:$0xff]
  %v7556 = vld [vmem:[%s7484 + $0x238] sm:$0xff]
  %v7557 = vld [vmem:[%s7484 + $0x240] sm:$0xff]
  %v7558 = vld [vmem:[%s7484 + $0x248] sm:$0xff]
  %v7559 = vld [vmem:[%s7484 + $0x250] sm:$0xff]
  %v7560 = vld [vmem:[%s7484 + $0x258] sm:$0xff]
  %v7561 = vld [vmem:[%s7484 + $0x260] sm:$0xff]
  %v7562 = vld [vmem:[%s7484 + $0x268] sm:$0xff]
  %v7563 = vld [vmem:[%s7484 + $0x270] sm:$0xff]
  %v7564 = vld [vmem:[%s7484 + $0x278] sm:$0xff]
  %v7565 = vld [vmem:[%s7484 + $0x280] sm:$0xff]
  %v7566 = vld [vmem:[%s7484 + $0x288] sm:$0xff]
  %v7567 = vld [vmem:[%s7484 + $0x290] sm:$0xff]
  %v7568 = vld [vmem:[%s7484 + $0x298] sm:$0xff]
  %v7569 = vld [vmem:[%s7484 + $0x2a0] sm:$0xff]
  %v7570 = vld [vmem:[%s7484 + $0x2a8] sm:$0xff]
  %v7571 = vld [vmem:[%s7484 + $0x2b0] sm:$0xff]
  %v7572 = vld [vmem:[%s7484 + $0x2b8] sm:$0xff]
  %v7573 = vld [vmem:[%s7484 + $0x2c0] sm:$0xff]
  %v7574 = vld [vmem:[%s7484 + $0x2c8] sm:$0xff]
  %v7575 = vld [vmem:[%s7484 + $0x2d0] sm:$0xff]
  %v7576 = vld [vmem:[%s7484 + $0x2d8] sm:$0xff]
  %v7577 = vld [vmem:[%s7484 + $0x2e0] sm:$0xff]
  %v7578 = vld [vmem:[%s7484 + $0x2e8] sm:$0xff]
  %v7579 = vld [vmem:[%s7484 + $0x2f0] sm:$0xff]
  %v7580 = vld [vmem:[%s7484 + $0x2f8] sm:$0xff]
  %v7581 = vld [vmem:[%s7484 + $0x300] sm:$0xff]
  %v7582 = vld [vmem:[%s7484 + $0x308] sm:$0xff]
  %v7583 = vld [vmem:[%s7484 + $0x310] sm:$0xff]
  %v7584 = vld [vmem:[%s7484 + $0x318] sm:$0xff]
  %v7585 = vld [vmem:[%s7484 + $0x320] sm:$0xff]
  %v7586 = vld [vmem:[%s7484 + $0x328] sm:$0xff]
  %v7587 = vld [vmem:[%s7484 + $0x330] sm:$0xff]
  %v7588 = vld [vmem:[%s7484 + $0x338] sm:$0xff]
  %v7589 = vld [vmem:[%s7484 + $0x340] sm:$0xff]
  %v7590 = vld [vmem:[%s7484 + $0x348] sm:$0xff]
  %v7591 = vld [vmem:[%s7484 + $0x350] sm:$0xff]
  %v7592 = vld [vmem:[%s7484 + $0x358] sm:$0xff]
  %v7593 = vld [vmem:[%s7484 + $0x360] sm:$0xff]
  %v7594 = vld [vmem:[%s7484 + $0x368] sm:$0xff]
  %v7595 = vld [vmem:[%s7484 + $0x370] sm:$0xff]
  %v7596 = vld [vmem:[%s7484 + $0x378] sm:$0xff]
  %v7709 = vunpack.c.l.b16 %v7485
  %v7710 = vunpack.c.h.b16 %v7485
  %v7711 = vunpack.c.l.b16 %v7486
  %v7712 = vunpack.c.h.b16 %v7486
  %v7713 = vunpack.c.l.b16 %v7487
  %v7714 = vunpack.c.h.b16 %v7487
  %v7715 = vunpack.c.l.b16 %v7488
  %v7716 = vunpack.c.h.b16 %v7488
  %v7717 = vunpack.c.l.b16 %v7489
  %v7718 = vunpack.c.h.b16 %v7489
  %v7719 = vunpack.c.l.b16 %v7490
  %v7720 = vunpack.c.h.b16 %v7490
  %v7721 = vunpack.c.l.b16 %v7491
  %v7722 = vunpack.c.h.b16 %v7491
  %v7723 = vunpack.c.l.b16 %v7492
  %v7724 = vunpack.c.h.b16 %v7492
  %v7725 = vunpack.c.l.b16 %v7493
  %v7726 = vunpack.c.h.b16 %v7493
  %v7727 = vunpack.c.l.b16 %v7494
  %v7728 = vunpack.c.h.b16 %v7494
  %v7729 = vunpack.c.l.b16 %v7495
  %v7730 = vunpack.c.h.b16 %v7495
  %v7731 = vunpack.c.l.b16 %v7496
  %v7732 = vunpack.c.h.b16 %v7496
  %v7733 = vunpack.c.l.b16 %v7497
  %v7734 = vunpack.c.h.b16 %v7497
  %v7735 = vunpack.c.l.b16 %v7498
  %v7736 = vunpack.c.h.b16 %v7498
  %v7737 = vunpack.c.l.b16 %v7499
  %v7738 = vunpack.c.h.b16 %v7499
  %v7739 = vunpack.c.l.b16 %v7500
  %v7740 = vunpack.c.h.b16 %v7500
  %v7741 = vunpack.c.l.b16 %v7501
  %v7742 = vunpack.c.h.b16 %v7501
  %v7743 = vunpack.c.l.b16 %v7502
  %v7744 = vunpack.c.h.b16 %v7502
  %v7745 = vunpack.c.l.b16 %v7503
  %v7746 = vunpack.c.h.b16 %v7503
  %v7747 = vunpack.c.l.b16 %v7504
  %v7748 = vunpack.c.h.b16 %v7504
  %v7749 = vunpack.c.l.b16 %v7505
  %v7750 = vunpack.c.h.b16 %v7505
  %v7751 = vunpack.c.l.b16 %v7506
  %v7752 = vunpack.c.h.b16 %v7506
  %v7753 = vunpack.c.l.b16 %v7507
  %v7754 = vunpack.c.h.b16 %v7507
  %v7755 = vunpack.c.l.b16 %v7508
  %v7756 = vunpack.c.h.b16 %v7508
  %v7757 = vunpack.c.l.b16 %v7509
  %v7758 = vunpack.c.h.b16 %v7509
  %v7759 = vunpack.c.l.b16 %v7510
  %v7760 = vunpack.c.h.b16 %v7510
  %v7761 = vunpack.c.l.b16 %v7511
  %v7762 = vunpack.c.h.b16 %v7511
  %v7763 = vunpack.c.l.b16 %v7512
  %v7764 = vunpack.c.h.b16 %v7512
  %v7765 = vunpack.c.l.b16 %v7513
  %v7766 = vunpack.c.h.b16 %v7513
  %v7767 = vunpack.c.l.b16 %v7514
  %v7768 = vunpack.c.h.b16 %v7514
  %v7769 = vunpack.c.l.b16 %v7515
  %v7770 = vunpack.c.h.b16 %v7515
  %v7771 = vunpack.c.l.b16 %v7516
  %v7772 = vunpack.c.h.b16 %v7516
  %v7773 = vunpack.c.l.b16 %v7517
  %v7774 = vunpack.c.h.b16 %v7517
  %v7775 = vunpack.c.l.b16 %v7518
  %v7776 = vunpack.c.h.b16 %v7518
  %v7777 = vunpack.c.l.b16 %v7519
  %v7778 = vunpack.c.h.b16 %v7519
  %v7779 = vunpack.c.l.b16 %v7520
  %v7780 = vunpack.c.h.b16 %v7520
  %v7781 = vunpack.c.l.b16 %v7521
  %v7782 = vunpack.c.h.b16 %v7521
  %v7783 = vunpack.c.l.b16 %v7522
  %v7784 = vunpack.c.h.b16 %v7522
  %v7785 = vunpack.c.l.b16 %v7523
  %v7786 = vunpack.c.h.b16 %v7523
  %v7787 = vunpack.c.l.b16 %v7524
  %v7788 = vunpack.c.h.b16 %v7524
  %v7789 = vunpack.c.l.b16 %v7525
  %v7790 = vunpack.c.h.b16 %v7525
  %v7791 = vunpack.c.l.b16 %v7526
  %v7792 = vunpack.c.h.b16 %v7526
  %v7793 = vunpack.c.l.b16 %v7527
  %v7794 = vunpack.c.h.b16 %v7527
  %v7795 = vunpack.c.l.b16 %v7528
  %v7796 = vunpack.c.h.b16 %v7528
  %v7797 = vunpack.c.l.b16 %v7529
  %v7798 = vunpack.c.h.b16 %v7529
  %v7799 = vunpack.c.l.b16 %v7530
  %v7800 = vunpack.c.h.b16 %v7530
  %v7801 = vunpack.c.l.b16 %v7531
  %v7802 = vunpack.c.h.b16 %v7531
  %v7803 = vunpack.c.l.b16 %v7532
  %v7804 = vunpack.c.h.b16 %v7532
  %v7805 = vunpack.c.l.b16 %v7533
  %v7806 = vunpack.c.h.b16 %v7533
  %v7807 = vunpack.c.l.b16 %v7534
  %v7808 = vunpack.c.h.b16 %v7534
  %v7809 = vunpack.c.l.b16 %v7535
  %v7810 = vunpack.c.h.b16 %v7535
  %v7811 = vunpack.c.l.b16 %v7536
  %v7812 = vunpack.c.h.b16 %v7536
  %v7813 = vunpack.c.l.b16 %v7537
  %v7814 = vunpack.c.h.b16 %v7537
  %v7815 = vunpack.c.l.b16 %v7538
  %v7816 = vunpack.c.h.b16 %v7538
  %v7817 = vunpack.c.l.b16 %v7539
  %v7818 = vunpack.c.h.b16 %v7539
  %v7819 = vunpack.c.l.b16 %v7540
  %v7820 = vunpack.c.h.b16 %v7540
  %v7821 = vunpack.c.l.b16 %v7541
  %v7822 = vunpack.c.h.b16 %v7541
  %v7823 = vunpack.c.l.b16 %v7542
  %v7824 = vunpack.c.h.b16 %v7542
  %v7825 = vunpack.c.l.b16 %v7543
  %v7826 = vunpack.c.h.b16 %v7543
  %v7827 = vunpack.c.l.b16 %v7544
  %v7828 = vunpack.c.h.b16 %v7544
  %v7829 = vunpack.c.l.b16 %v7545
  %v7830 = vunpack.c.h.b16 %v7545
  %v7831 = vunpack.c.l.b16 %v7546
  %v7832 = vunpack.c.h.b16 %v7546
  %v7833 = vunpack.c.l.b16 %v7547
  %v7834 = vunpack.c.h.b16 %v7547
  %v7835 = vunpack.c.l.b16 %v7548
  %v7836 = vunpack.c.h.b16 %v7548
  %v7837 = vunpack.c.l.b16 %v7549
  %v7838 = vunpack.c.h.b16 %v7549
  %v7839 = vunpack.c.l.b16 %v7550
  %v7840 = vunpack.c.h.b16 %v7550
  %v7841 = vunpack.c.l.b16 %v7551
  %v7842 = vunpack.c.h.b16 %v7551
  %v7843 = vunpack.c.l.b16 %v7552
  %v7844 = vunpack.c.h.b16 %v7552
  %v7845 = vunpack.c.l.b16 %v7553
  %v7846 = vunpack.c.h.b16 %v7553
  %v7847 = vunpack.c.l.b16 %v7554
  %v7848 = vunpack.c.h.b16 %v7554
  %v7849 = vunpack.c.l.b16 %v7555
  %v7850 = vunpack.c.h.b16 %v7555
  %v7851 = vunpack.c.l.b16 %v7556
  %v7852 = vunpack.c.h.b16 %v7556
  %v7853 = vunpack.c.l.b16 %v7557
  %v7854 = vunpack.c.h.b16 %v7557
  %v7855 = vunpack.c.l.b16 %v7558
  %v7856 = vunpack.c.h.b16 %v7558
  %v7857 = vunpack.c.l.b16 %v7559
  %v7858 = vunpack.c.h.b16 %v7559
  %v7859 = vunpack.c.l.b16 %v7560
  %v7860 = vunpack.c.h.b16 %v7560
  %v7861 = vunpack.c.l.b16 %v7561
  %v7862 = vunpack.c.h.b16 %v7561
  %v7863 = vunpack.c.l.b16 %v7562
  %v7864 = vunpack.c.h.b16 %v7562
  %v7865 = vunpack.c.l.b16 %v7563
  %v7866 = vunpack.c.h.b16 %v7563
  %v7867 = vunpack.c.l.b16 %v7564
  %v7868 = vunpack.c.h.b16 %v7564
  %v7869 = vunpack.c.l.b16 %v7565
  %v7870 = vunpack.c.h.b16 %v7565
  %v7871 = vunpack.c.l.b16 %v7566
  %v7872 = vunpack.c.h.b16 %v7566
  %v7873 = vunpack.c.l.b16 %v7567
  %v7874 = vunpack.c.h.b16 %v7567
  %v7875 = vunpack.c.l.b16 %v7568
  %v7876 = vunpack.c.h.b16 %v7568
  %v7877 = vunpack.c.l.b16 %v7569
  %v7878 = vunpack.c.h.b16 %v7569
  %v7879 = vunpack.c.l.b16 %v7570
  %v7880 = vunpack.c.h.b16 %v7570
  %v7881 = vunpack.c.l.b16 %v7571
  %v7882 = vunpack.c.h.b16 %v7571
  %v7883 = vunpack.c.l.b16 %v7572
  %v7884 = vunpack.c.h.b16 %v7572
  %v7885 = vunpack.c.l.b16 %v7573
  %v7886 = vunpack.c.h.b16 %v7573
  %v7887 = vunpack.c.l.b16 %v7574
  %v7888 = vunpack.c.h.b16 %v7574
  %v7889 = vunpack.c.l.b16 %v7575
  %v7890 = vunpack.c.h.b16 %v7575
  %v7891 = vunpack.c.l.b16 %v7576
  %v7892 = vunpack.c.h.b16 %v7576
  %v7893 = vunpack.c.l.b16 %v7577
  %v7894 = vunpack.c.h.b16 %v7577
  %v7895 = vunpack.c.l.b16 %v7578
  %v7896 = vunpack.c.h.b16 %v7578
  %v7897 = vunpack.c.l.b16 %v7579
  %v7898 = vunpack.c.h.b16 %v7579
  %v7899 = vunpack.c.l.b16 %v7580
  %v7900 = vunpack.c.h.b16 %v7580
  %v7901 = vunpack.c.l.b16 %v7581
  %v7902 = vunpack.c.h.b16 %v7581
  %v7903 = vunpack.c.l.b16 %v7582
  %v7904 = vunpack.c.h.b16 %v7582
  %v7905 = vunpack.c.l.b16 %v7583
  %v7906 = vunpack.c.h.b16 %v7583
  %v7907 = vunpack.c.l.b16 %v7584
  %v7908 = vunpack.c.h.b16 %v7584
  %v7909 = vunpack.c.l.b16 %v7585
  %v7910 = vunpack.c.h.b16 %v7585
  %v7911 = vunpack.c.l.b16 %v7586
  %v7912 = vunpack.c.h.b16 %v7586
  %v7913 = vunpack.c.l.b16 %v7587
  %v7914 = vunpack.c.h.b16 %v7587
  %v7915 = vunpack.c.l.b16 %v7588
  %v7916 = vunpack.c.h.b16 %v7588
  %v7917 = vunpack.c.l.b16 %v7589
  %v7918 = vunpack.c.h.b16 %v7589
  %v7919 = vunpack.c.l.b16 %v7590
  %v7920 = vunpack.c.h.b16 %v7590
  %v7921 = vunpack.c.l.b16 %v7591
  %v7922 = vunpack.c.h.b16 %v7591
  %v7923 = vunpack.c.l.b16 %v7592
  %v7924 = vunpack.c.h.b16 %v7592
  %v7925 = vunpack.c.l.b16 %v7593
  %v7926 = vunpack.c.h.b16 %v7593
  %v7927 = vunpack.c.l.b16 %v7594
  %v7928 = vunpack.c.h.b16 %v7594
  %v7929 = vunpack.c.l.b16 %v7595
  %v7930 = vunpack.c.h.b16 %v7595
  %v7931 = vunpack.c.l.b16 %v7596
  %v7932 = vunpack.c.h.b16 %v7596
  %v7933 = vpack.c.b16 %v7711, %v7709
  %v7934 = vpack.c.b16 %v7712, %v7710
  %v7935 = vpack.c.b16 %v7715, %v7713
  %v7936 = vpack.c.b16 %v7716, %v7714
  %v7937 = vpack.c.b16 %v7719, %v7717
  %v7938 = vpack.c.b16 %v7720, %v7718
  %v7939 = vpack.c.b16 %v7723, %v7721
  %v7940 = vpack.c.b16 %v7724, %v7722
  %v7941 = vpack.c.b16 %v7727, %v7725
  %v7942 = vpack.c.b16 %v7728, %v7726
  %v7943 = vpack.c.b16 %v7731, %v7729
  %v7944 = vpack.c.b16 %v7732, %v7730
  %v7945 = vpack.c.b16 %v7735, %v7733
  %v7946 = vpack.c.b16 %v7736, %v7734
  %v7947 = vpack.c.b16 %v7739, %v7737
  %v7948 = vpack.c.b16 %v7740, %v7738
  %v7949 = vpack.c.b16 %v7743, %v7741
  %v7950 = vpack.c.b16 %v7744, %v7742
  %v7951 = vpack.c.b16 %v7747, %v7745
  %v7952 = vpack.c.b16 %v7748, %v7746
  %v7953 = vpack.c.b16 %v7751, %v7749
  %v7954 = vpack.c.b16 %v7752, %v7750
  %v7955 = vpack.c.b16 %v7755, %v7753
  %v7956 = vpack.c.b16 %v7756, %v7754
  %v7957 = vpack.c.b16 %v7759, %v7757
  %v7958 = vpack.c.b16 %v7760, %v7758
  %v7959 = vpack.c.b16 %v7763, %v7761
  %v7960 = vpack.c.b16 %v7764, %v7762
  %v7961 = vpack.c.b16 %v7767, %v7765
  %v7962 = vpack.c.b16 %v7768, %v7766
  %v7963 = vpack.c.b16 %v7771, %v7769
  %v7964 = vpack.c.b16 %v7772, %v7770
  %v7965 = vpack.c.b16 %v7775, %v7773
  %v7966 = vpack.c.b16 %v7776, %v7774
  %v7967 = vpack.c.b16 %v7779, %v7777
  %v7968 = vpack.c.b16 %v7780, %v7778
  %v7969 = vpack.c.b16 %v7783, %v7781
  %v7970 = vpack.c.b16 %v7784, %v7782
  %v7971 = vpack.c.b16 %v7787, %v7785
  %v7972 = vpack.c.b16 %v7788, %v7786
  %v7973 = vpack.c.b16 %v7791, %v7789
  %v7974 = vpack.c.b16 %v7792, %v7790
  %v7975 = vpack.c.b16 %v7795, %v7793
  %v7976 = vpack.c.b16 %v7796, %v7794
  %v7977 = vpack.c.b16 %v7799, %v7797
  %v7978 = vpack.c.b16 %v7800, %v7798
  %v7979 = vpack.c.b16 %v7803, %v7801
  %v7980 = vpack.c.b16 %v7804, %v7802
  %v7981 = vpack.c.b16 %v7807, %v7805
  %v7982 = vpack.c.b16 %v7808, %v7806
  %v7983 = vpack.c.b16 %v7811, %v7809
  %v7984 = vpack.c.b16 %v7812, %v7810
  %v7985 = vpack.c.b16 %v7815, %v7813
  %v7986 = vpack.c.b16 %v7816, %v7814
  %v7987 = vpack.c.b16 %v7819, %v7817
  %v7988 = vpack.c.b16 %v7820, %v7818
  %v7989 = vpack.c.b16 %v7823, %v7821
  %v7990 = vpack.c.b16 %v7824, %v7822
  %v7991 = vpack.c.b16 %v7827, %v7825
  %v7992 = vpack.c.b16 %v7828, %v7826
  %v7993 = vpack.c.b16 %v7831, %v7829
  %v7994 = vpack.c.b16 %v7832, %v7830
  %v7995 = vpack.c.b16 %v7835, %v7833
  %v7996 = vpack.c.b16 %v7836, %v7834
  %v7997 = vpack.c.b16 %v7839, %v7837
  %v7998 = vpack.c.b16 %v7840, %v7838
  %v7999 = vpack.c.b16 %v7843, %v7841
  %v8000 = vpack.c.b16 %v7844, %v7842
  %v8001 = vpack.c.b16 %v7847, %v7845
  %v8002 = vpack.c.b16 %v7848, %v7846
  %v8003 = vpack.c.b16 %v7851, %v7849
  %v8004 = vpack.c.b16 %v7852, %v7850
  %v8005 = vpack.c.b16 %v7855, %v7853
  %v8006 = vpack.c.b16 %v7856, %v7854
  %v8007 = vpack.c.b16 %v7859, %v7857
  %v8008 = vpack.c.b16 %v7860, %v7858
  %v8009 = vpack.c.b16 %v7863, %v7861
  %v8010 = vpack.c.b16 %v7864, %v7862
  %v8011 = vpack.c.b16 %v7867, %v7865
  %v8012 = vpack.c.b16 %v7868, %v7866
  %v8013 = vpack.c.b16 %v7871, %v7869
  %v8014 = vpack.c.b16 %v7872, %v7870
  %v8015 = vpack.c.b16 %v7875, %v7873
  %v8016 = vpack.c.b16 %v7876, %v7874
  %v8017 = vpack.c.b16 %v7879, %v7877
  %v8018 = vpack.c.b16 %v7880, %v7878
  %v8019 = vpack.c.b16 %v7883, %v7881
  %v8020 = vpack.c.b16 %v7884, %v7882
  %v8021 = vpack.c.b16 %v7887, %v7885
  %v8022 = vpack.c.b16 %v7888, %v7886
  %v8023 = vpack.c.b16 %v7891, %v7889
  %v8024 = vpack.c.b16 %v7892, %v7890
  %v8025 = vpack.c.b16 %v7895, %v7893
  %v8026 = vpack.c.b16 %v7896, %v7894
  %v8027 = vpack.c.b16 %v7899, %v7897
  %v8028 = vpack.c.b16 %v7900, %v7898
  %v8029 = vpack.c.b16 %v7903, %v7901
  %v8030 = vpack.c.b16 %v7904, %v7902
  %v8031 = vpack.c.b16 %v7907, %v7905
  %v8032 = vpack.c.b16 %v7908, %v7906
  %v8033 = vpack.c.b16 %v7911, %v7909
  %v8034 = vpack.c.b16 %v7912, %v7910
  %v8035 = vpack.c.b16 %v7915, %v7913
  %v8036 = vpack.c.b16 %v7916, %v7914
  %v8037 = vpack.c.b16 %v7919, %v7917
  %v8038 = vpack.c.b16 %v7920, %v7918
  %v8039 = vpack.c.b16 %v7923, %v7921
  %v8040 = vpack.c.b16 %v7924, %v7922
  %v8041 = vpack.c.b16 %v7927, %v7925
  %v8042 = vpack.c.b16 %v7928, %v7926
  %v8043 = vpack.c.b16 %v7931, %v7929
  %v8044 = vpack.c.b16 %v7932, %v7930
  %8157 = vmatpush.bf16.msra.mxu0 %v7947
  %8158 = vmatpush.bf16.msra.mxu0 %v7945
  %8159 = vmatpush.bf16.msra.mxu0 %v7943
  %8160 = vmatpush.bf16.msra.mxu0 %v7941
  %8161 = vmatpush.bf16.msra.mxu0 %v7939
  %8162 = vmatpush.bf16.msra.mxu0 %v7937
  %8163 = vmatpush.bf16.msra.mxu0 %v7935
  %8164 = vmatpush.bf16.msra.mxu0 %v7933
  %8165 = vmatmul.bf16.gmra.mxu0 %v3513
  %v8166 = vpop.f32.mrf.mxu0
  %v8167 = vadd.f32 0.0, %v8166
  %v8168 = vpop.f32.mrf.mxu0
  %v8169 = vadd.f32 0.0, %v8168
  %8170 = vmatmul.bf16.gmra.mxu0 %v3520
  %v8171 = vpop.f32.mrf.mxu0
  %v8172 = vadd.f32 0.0, %v8171
  %v8173 = vpop.f32.mrf.mxu0
  %v8174 = vadd.f32 0.0, %v8173
  %8175 = vmatmul.bf16.gmra.mxu0 %v3527
  %v8176 = vpop.f32.mrf.mxu0
  %v8177 = vadd.f32 0.0, %v8176
  %v8178 = vpop.f32.mrf.mxu0
  %v8179 = vadd.f32 0.0, %v8178
  %8180 = vmatmul.bf16.gmra.mxu0 %v3534
  %v8181 = vpop.f32.mrf.mxu0
  %v8182 = vadd.f32 0.0, %v8181
  %v8183 = vpop.f32.mrf.mxu0
  %v8184 = vadd.f32 0.0, %v8183
  %8185 = vmatmul.bf16.gmra.mxu0 %v3541
  %v8186 = vpop.f32.mrf.mxu0
  %v8187 = vadd.f32 0.0, %v8186
  %v8188 = vpop.f32.mrf.mxu0
  %v8189 = vadd.f32 0.0, %v8188
  %8190 = vmatmul.bf16.gmra.mxu0 %v3548
  %v8191 = vpop.f32.mrf.mxu0
  %v8192 = vadd.f32 0.0, %v8191
  %v8193 = vpop.f32.mrf.mxu0
  %v8194 = vadd.f32 0.0, %v8193
  %8195 = vmatmul.bf16.gmra.mxu0 %v3555
  %v8196 = vpop.f32.mrf.mxu0
  %v8197 = vadd.f32 0.0, %v8196
  %v8198 = vpop.f32.mrf.mxu0
  %v8199 = vadd.f32 0.0, %v8198
  %8200 = vdwg.mxu0
  %8201 = vmatpush.bf16.msra.mxu0 %v7963
  %8202 = vmatpush.bf16.msra.mxu0 %v7961
  %8203 = vmatpush.bf16.msra.mxu0 %v7959
  %8204 = vmatpush.bf16.msra.mxu0 %v7957
  %8205 = vmatpush.bf16.msra.mxu0 %v7955
  %8206 = vmatpush.bf16.msra.mxu0 %v7953
  %8207 = vmatpush.bf16.msra.mxu0 %v7951
  %8208 = vmatpush.bf16.msra.mxu0 %v7949
  %8209 = vmatmul.bf16.gmra.mxu0 %v3514
  %v8210 = vpop.f32.mrf.mxu0
  %v8211 = vadd.f32 %v8167, %v8210
  %v8212 = vpop.f32.mrf.mxu0
  %v8213 = vadd.f32 %v8169, %v8212
  %8214 = vmatmul.bf16.gmra.mxu0 %v3521
  %v8215 = vpop.f32.mrf.mxu0
  %v8216 = vadd.f32 %v8172, %v8215
  %v8217 = vpop.f32.mrf.mxu0
  %v8218 = vadd.f32 %v8174, %v8217
  %8219 = vmatmul.bf16.gmra.mxu0 %v3528
  %v8220 = vpop.f32.mrf.mxu0
  %v8221 = vadd.f32 %v8177, %v8220
  %v8222 = vpop.f32.mrf.mxu0
  %v8223 = vadd.f32 %v8179, %v8222
  %8224 = vmatmul.bf16.gmra.mxu0 %v3535
  %v8225 = vpop.f32.mrf.mxu0
  %v8226 = vadd.f32 %v8182, %v8225
  %v8227 = vpop.f32.mrf.mxu0
  %v8228 = vadd.f32 %v8184, %v8227
  %8229 = vmatmul.bf16.gmra.mxu0 %v3542
  %v8230 = vpop.f32.mrf.mxu0
  %v8231 = vadd.f32 %v8187, %v8230
  %v8232 = vpop.f32.mrf.mxu0
  %v8233 = vadd.f32 %v8189, %v8232
  %8234 = vmatmul.bf16.gmra.mxu0 %v3549
  %v8235 = vpop.f32.mrf.mxu0
  %v8236 = vadd.f32 %v8192, %v8235
  %v8237 = vpop.f32.mrf.mxu0
  %v8238 = vadd.f32 %v8194, %v8237
  %8239 = vmatmul.bf16.gmra.mxu0 %v3556
  %v8240 = vpop.f32.mrf.mxu0
  %v8241 = vadd.f32 %v8197, %v8240
  %v8242 = vpop.f32.mrf.mxu0
  %v8243 = vadd.f32 %v8199, %v8242
  %8244 = vdwg.mxu0
  %8245 = vmatpush.bf16.msra.mxu0 %v7979
  %8246 = vmatpush.bf16.msra.mxu0 %v7977
  %8247 = vmatpush.bf16.msra.mxu0 %v7975
  %8248 = vmatpush.bf16.msra.mxu0 %v7973
  %8249 = vmatpush.bf16.msra.mxu0 %v7971
  %8250 = vmatpush.bf16.msra.mxu0 %v7969
  %8251 = vmatpush.bf16.msra.mxu0 %v7967
  %8252 = vmatpush.bf16.msra.mxu0 %v7965
  %8253 = vmatmul.bf16.gmra.mxu0 %v3515
  %v8254 = vpop.f32.mrf.mxu0
  %v8255 = vadd.f32 %v8211, %v8254
  %v8256 = vpop.f32.mrf.mxu0
  %v8257 = vadd.f32 %v8213, %v8256
  %8258 = vmatmul.bf16.gmra.mxu0 %v3522
  %v8259 = vpop.f32.mrf.mxu0
  %v8260 = vadd.f32 %v8216, %v8259
  %v8261 = vpop.f32.mrf.mxu0
  %v8262 = vadd.f32 %v8218, %v8261
  %8263 = vmatmul.bf16.gmra.mxu0 %v3529
  %v8264 = vpop.f32.mrf.mxu0
  %v8265 = vadd.f32 %v8221, %v8264
  %v8266 = vpop.f32.mrf.mxu0
  %v8267 = vadd.f32 %v8223, %v8266
  %8268 = vmatmul.bf16.gmra.mxu0 %v3536
  %v8269 = vpop.f32.mrf.mxu0
  %v8270 = vadd.f32 %v8226, %v8269
  %v8271 = vpop.f32.mrf.mxu0
  %v8272 = vadd.f32 %v8228, %v8271
  %8273 = vmatmul.bf16.gmra.mxu0 %v3543
  %v8274 = vpop.f32.mrf.mxu0
  %v8275 = vadd.f32 %v8231, %v8274
  %v8276 = vpop.f32.mrf.mxu0
  %v8277 = vadd.f32 %v8233, %v8276
  %8278 = vmatmul.bf16.gmra.mxu0 %v3550
  %v8279 = vpop.f32.mrf.mxu0
  %v8280 = vadd.f32 %v8236, %v8279
  %v8281 = vpop.f32.mrf.mxu0
  %v8282 = vadd.f32 %v8238, %v8281
  %8283 = vmatmul.bf16.gmra.mxu0 %v3557
  %v8284 = vpop.f32.mrf.mxu0
  %v8285 = vadd.f32 %v8241, %v8284
  %v8286 = vpop.f32.mrf.mxu0
  %v8287 = vadd.f32 %v8243, %v8286
  %8288 = vdwg.mxu0
  %8289 = vmatpush.bf16.msra.mxu0 %v7995
  %8290 = vmatpush.bf16.msra.mxu0 %v7993
  %8291 = vmatpush.bf16.msra.mxu0 %v7991
  %8292 = vmatpush.bf16.msra.mxu0 %v7989
  %8293 = vmatpush.bf16.msra.mxu0 %v7987
  %8294 = vmatpush.bf16.msra.mxu0 %v7985
  %8295 = vmatpush.bf16.msra.mxu0 %v7983
  %8296 = vmatpush.bf16.msra.mxu0 %v7981
  %8297 = vmatmul.bf16.gmra.mxu0 %v3516
  %v8298 = vpop.f32.mrf.mxu0
  %v8299 = vadd.f32 %v8255, %v8298
  %v8300 = vpop.f32.mrf.mxu0
  %v8301 = vadd.f32 %v8257, %v8300
  %8302 = vmatmul.bf16.gmra.mxu0 %v3523
  %v8303 = vpop.f32.mrf.mxu0
  %v8304 = vadd.f32 %v8260, %v8303
  %v8305 = vpop.f32.mrf.mxu0
  %v8306 = vadd.f32 %v8262, %v8305
  %8307 = vmatmul.bf16.gmra.mxu0 %v3530
  %v8308 = vpop.f32.mrf.mxu0
  %v8309 = vadd.f32 %v8265, %v8308
  %v8310 = vpop.f32.mrf.mxu0
  %v8311 = vadd.f32 %v8267, %v8310
  %8312 = vmatmul.bf16.gmra.mxu0 %v3537
  %v8313 = vpop.f32.mrf.mxu0
  %v8314 = vadd.f32 %v8270, %v8313
  %v8315 = vpop.f32.mrf.mxu0
  %v8316 = vadd.f32 %v8272, %v8315
  %8317 = vmatmul.bf16.gmra.mxu0 %v3544
  %v8318 = vpop.f32.mrf.mxu0
  %v8319 = vadd.f32 %v8275, %v8318
  %v8320 = vpop.f32.mrf.mxu0
  %v8321 = vadd.f32 %v8277, %v8320
  %8322 = vmatmul.bf16.gmra.mxu0 %v3551
  %v8323 = vpop.f32.mrf.mxu0
  %v8324 = vadd.f32 %v8280, %v8323
  %v8325 = vpop.f32.mrf.mxu0
  %v8326 = vadd.f32 %v8282, %v8325
  %8327 = vmatmul.bf16.gmra.mxu0 %v3558
  %v8328 = vpop.f32.mrf.mxu0
  %v8329 = vadd.f32 %v8285, %v8328
  %v8330 = vpop.f32.mrf.mxu0
  %v8331 = vadd.f32 %v8287, %v8330
  %8332 = vdwg.mxu0
  %8333 = vmatpush.bf16.msra.mxu0 %v8011
  %8334 = vmatpush.bf16.msra.mxu0 %v8009
  %8335 = vmatpush.bf16.msra.mxu0 %v8007
  %8336 = vmatpush.bf16.msra.mxu0 %v8005
  %8337 = vmatpush.bf16.msra.mxu0 %v8003
  %8338 = vmatpush.bf16.msra.mxu0 %v8001
  %8339 = vmatpush.bf16.msra.mxu0 %v7999
  %8340 = vmatpush.bf16.msra.mxu0 %v7997
  %8341 = vmatmul.bf16.gmra.mxu0 %v3517
  %v8342 = vpop.f32.mrf.mxu0
  %v8343 = vadd.f32 %v8299, %v8342
  %v8344 = vpop.f32.mrf.mxu0
  %v8345 = vadd.f32 %v8301, %v8344
  %8346 = vmatmul.bf16.gmra.mxu0 %v3524
  %v8347 = vpop.f32.mrf.mxu0
  %v8348 = vadd.f32 %v8304, %v8347
  %v8349 = vpop.f32.mrf.mxu0
  %v8350 = vadd.f32 %v8306, %v8349
  %8351 = vmatmul.bf16.gmra.mxu0 %v3531
  %v8352 = vpop.f32.mrf.mxu0
  %v8353 = vadd.f32 %v8309, %v8352
  %v8354 = vpop.f32.mrf.mxu0
  %v8355 = vadd.f32 %v8311, %v8354
  %8356 = vmatmul.bf16.gmra.mxu0 %v3538
  %v8357 = vpop.f32.mrf.mxu0
  %v8358 = vadd.f32 %v8314, %v8357
  %v8359 = vpop.f32.mrf.mxu0
  %v8360 = vadd.f32 %v8316, %v8359
  %8361 = vmatmul.bf16.gmra.mxu0 %v3545
  %v8362 = vpop.f32.mrf.mxu0
  %v8363 = vadd.f32 %v8319, %v8362
  %v8364 = vpop.f32.mrf.mxu0
  %v8365 = vadd.f32 %v8321, %v8364
  %8366 = vmatmul.bf16.gmra.mxu0 %v3552
  %v8367 = vpop.f32.mrf.mxu0
  %v8368 = vadd.f32 %v8324, %v8367
  %v8369 = vpop.f32.mrf.mxu0
  %v8370 = vadd.f32 %v8326, %v8369
  %8371 = vmatmul.bf16.gmra.mxu0 %v3559
  %v8372 = vpop.f32.mrf.mxu0
  %v8373 = vadd.f32 %v8329, %v8372
  %v8374 = vpop.f32.mrf.mxu0
  %v8375 = vadd.f32 %v8331, %v8374
  %8376 = vdwg.mxu0
  %8377 = vmatpush.bf16.msra.mxu0 %v8027
  %8378 = vmatpush.bf16.msra.mxu0 %v8025
  %8379 = vmatpush.bf16.msra.mxu0 %v8023
  %8380 = vmatpush.bf16.msra.mxu0 %v8021
  %8381 = vmatpush.bf16.msra.mxu0 %v8019
  %8382 = vmatpush.bf16.msra.mxu0 %v8017
  %8383 = vmatpush.bf16.msra.mxu0 %v8015
  %8384 = vmatpush.bf16.msra.mxu0 %v8013
  %8385 = vmatmul.bf16.gmra.mxu0 %v3518
  %v8386 = vpop.f32.mrf.mxu0
  %v8387 = vadd.f32 %v8343, %v8386
  %v8388 = vpop.f32.mrf.mxu0
  %v8389 = vadd.f32 %v8345, %v8388
  %8390 = vmatmul.bf16.gmra.mxu0 %v3525
  %v8391 = vpop.f32.mrf.mxu0
  %v8392 = vadd.f32 %v8348, %v8391
  %v8393 = vpop.f32.mrf.mxu0
  %v8394 = vadd.f32 %v8350, %v8393
  %8395 = vmatmul.bf16.gmra.mxu0 %v3532
  %v8396 = vpop.f32.mrf.mxu0
  %v8397 = vadd.f32 %v8353, %v8396
  %v8398 = vpop.f32.mrf.mxu0
  %v8399 = vadd.f32 %v8355, %v8398
  %8400 = vmatmul.bf16.gmra.mxu0 %v3539
  %v8401 = vpop.f32.mrf.mxu0
  %v8402 = vadd.f32 %v8358, %v8401
  %v8403 = vpop.f32.mrf.mxu0
  %v8404 = vadd.f32 %v8360, %v8403
  %8405 = vmatmul.bf16.gmra.mxu0 %v3546
  %v8406 = vpop.f32.mrf.mxu0
  %v8407 = vadd.f32 %v8363, %v8406
  %v8408 = vpop.f32.mrf.mxu0
  %v8409 = vadd.f32 %v8365, %v8408
  %8410 = vmatmul.bf16.gmra.mxu0 %v3553
  %v8411 = vpop.f32.mrf.mxu0
  %v8412 = vadd.f32 %v8368, %v8411
  %v8413 = vpop.f32.mrf.mxu0
  %v8414 = vadd.f32 %v8370, %v8413
  %8415 = vmatmul.bf16.gmra.mxu0 %v3560
  %v8416 = vpop.f32.mrf.mxu0
  %v8417 = vadd.f32 %v8373, %v8416
  %v8418 = vpop.f32.mrf.mxu0
  %v8419 = vadd.f32 %v8375, %v8418
  %8420 = vdwg.mxu0
  %8421 = vmatpush.bf16.msra.mxu0 %v8043
  %8422 = vmatpush.bf16.msra.mxu0 %v8041
  %8423 = vmatpush.bf16.msra.mxu0 %v8039
  %8424 = vmatpush.bf16.msra.mxu0 %v8037
  %8425 = vmatpush.bf16.msra.mxu0 %v8035
  %8426 = vmatpush.bf16.msra.mxu0 %v8033
  %8427 = vmatpush.bf16.msra.mxu0 %v8031
  %8428 = vmatpush.bf16.msra.mxu0 %v8029
  %8429 = vmatmul.bf16.gmra.mxu0 %v3519
  %v8430 = vpop.f32.mrf.mxu0
  %v8431 = vadd.f32 %v8387, %v8430
  %v8432 = vpop.f32.mrf.mxu0
  %v8433 = vadd.f32 %v8389, %v8432
  %8434 = vmatmul.bf16.gmra.mxu0 %v3526
  %v8435 = vpop.f32.mrf.mxu0
  %v8436 = vadd.f32 %v8392, %v8435
  %v8437 = vpop.f32.mrf.mxu0
  %v8438 = vadd.f32 %v8394, %v8437
  %8439 = vmatmul.bf16.gmra.mxu0 %v3533
  %v8440 = vpop.f32.mrf.mxu0
  %v8441 = vadd.f32 %v8397, %v8440
  %v8442 = vpop.f32.mrf.mxu0
  %v8443 = vadd.f32 %v8399, %v8442
  %8444 = vmatmul.bf16.gmra.mxu0 %v3540
  %v8445 = vpop.f32.mrf.mxu0
  %v8446 = vadd.f32 %v8402, %v8445
  %v8447 = vpop.f32.mrf.mxu0
  %v8448 = vadd.f32 %v8404, %v8447
  %8449 = vmatmul.bf16.gmra.mxu0 %v3547
  %v8450 = vpop.f32.mrf.mxu0
  %v8451 = vadd.f32 %v8407, %v8450
  %v8452 = vpop.f32.mrf.mxu0
  %v8453 = vadd.f32 %v8409, %v8452
  %8454 = vmatmul.bf16.gmra.mxu0 %v3554
  %v8455 = vpop.f32.mrf.mxu0
  %v8456 = vadd.f32 %v8412, %v8455
  %v8457 = vpop.f32.mrf.mxu0
  %v8458 = vadd.f32 %v8414, %v8457
  %8459 = vmatmul.bf16.gmra.mxu0 %v3561
  %v8460 = vpop.f32.mrf.mxu0
  %v8461 = vadd.f32 %v8417, %v8460
  %v8462 = vpop.f32.mrf.mxu0
  %v8463 = vadd.f32 %v8419, %v8462
  %8464 = vdwg.mxu0
  %8465 = vmatpush.bf16.msra.mxu0 %v7948
  %8466 = vmatpush.bf16.msra.mxu0 %v7946
  %8467 = vmatpush.bf16.msra.mxu0 %v7944
  %8468 = vmatpush.bf16.msra.mxu0 %v7942
  %8469 = vmatpush.bf16.msra.mxu0 %v7940
  %8470 = vmatpush.bf16.msra.mxu0 %v7938
  %8471 = vmatpush.bf16.msra.mxu0 %v7936
  %8472 = vmatpush.bf16.msra.mxu0 %v7934
  %8473 = vmatmul.bf16.gmra.mxu0 %v3513
  %v8474 = vpop.f32.mrf.mxu0
  %v8475 = vadd.f32 0.0, %v8474
  %v8476 = vpop.f32.mrf.mxu0
  %v8477 = vadd.f32 0.0, %v8476
  %8478 = vmatmul.bf16.gmra.mxu0 %v3520
  %v8479 = vpop.f32.mrf.mxu0
  %v8480 = vadd.f32 0.0, %v8479
  %v8481 = vpop.f32.mrf.mxu0
  %v8482 = vadd.f32 0.0, %v8481
  %8483 = vmatmul.bf16.gmra.mxu0 %v3527
  %v8484 = vpop.f32.mrf.mxu0
  %v8485 = vadd.f32 0.0, %v8484
  %v8486 = vpop.f32.mrf.mxu0
  %v8487 = vadd.f32 0.0, %v8486
  %8488 = vmatmul.bf16.gmra.mxu0 %v3534
  %v8489 = vpop.f32.mrf.mxu0
  %v8490 = vadd.f32 0.0, %v8489
  %v8491 = vpop.f32.mrf.mxu0
  %v8492 = vadd.f32 0.0, %v8491
  %8493 = vmatmul.bf16.gmra.mxu0 %v3541
  %v8494 = vpop.f32.mrf.mxu0
  %v8495 = vadd.f32 0.0, %v8494
  %v8496 = vpop.f32.mrf.mxu0
  %v8497 = vadd.f32 0.0, %v8496
  %8498 = vmatmul.bf16.gmra.mxu0 %v3548
  %v8499 = vpop.f32.mrf.mxu0
  %v8500 = vadd.f32 0.0, %v8499
  %v8501 = vpop.f32.mrf.mxu0
  %v8502 = vadd.f32 0.0, %v8501
  %8503 = vmatmul.bf16.gmra.mxu0 %v3555
  %v8504 = vpop.f32.mrf.mxu0
  %v8505 = vadd.f32 0.0, %v8504
  %v8506 = vpop.f32.mrf.mxu0
  %v8507 = vadd.f32 0.0, %v8506
  %8508 = vdwg.mxu0
  %8509 = vmatpush.bf16.msra.mxu0 %v7964
  %8510 = vmatpush.bf16.msra.mxu0 %v7962
  %8511 = vmatpush.bf16.msra.mxu0 %v7960
  %8512 = vmatpush.bf16.msra.mxu0 %v7958
  %8513 = vmatpush.bf16.msra.mxu0 %v7956
  %8514 = vmatpush.bf16.msra.mxu0 %v7954
  %8515 = vmatpush.bf16.msra.mxu0 %v7952
  %8516 = vmatpush.bf16.msra.mxu0 %v7950
  %8517 = vmatmul.bf16.gmra.mxu0 %v3514
  %v8518 = vpop.f32.mrf.mxu0
  %v8519 = vadd.f32 %v8475, %v8518
  %v8520 = vpop.f32.mrf.mxu0
  %v8521 = vadd.f32 %v8477, %v8520
  %8522 = vmatmul.bf16.gmra.mxu0 %v3521
  %v8523 = vpop.f32.mrf.mxu0
  %v8524 = vadd.f32 %v8480, %v8523
  %v8525 = vpop.f32.mrf.mxu0
  %v8526 = vadd.f32 %v8482, %v8525
  %8527 = vmatmul.bf16.gmra.mxu0 %v3528
  %v8528 = vpop.f32.mrf.mxu0
  %v8529 = vadd.f32 %v8485, %v8528
  %v8530 = vpop.f32.mrf.mxu0
  %v8531 = vadd.f32 %v8487, %v8530
  %8532 = vmatmul.bf16.gmra.mxu0 %v3535
  %v8533 = vpop.f32.mrf.mxu0
  %v8534 = vadd.f32 %v8490, %v8533
  %v8535 = vpop.f32.mrf.mxu0
  %v8536 = vadd.f32 %v8492, %v8535
  %8537 = vmatmul.bf16.gmra.mxu0 %v3542
  %v8538 = vpop.f32.mrf.mxu0
  %v8539 = vadd.f32 %v8495, %v8538
  %v8540 = vpop.f32.mrf.mxu0
  %v8541 = vadd.f32 %v8497, %v8540
  %8542 = vmatmul.bf16.gmra.mxu0 %v3549
  %v8543 = vpop.f32.mrf.mxu0
  %v8544 = vadd.f32 %v8500, %v8543
  %v8545 = vpop.f32.mrf.mxu0
  %v8546 = vadd.f32 %v8502, %v8545
  %8547 = vmatmul.bf16.gmra.mxu0 %v3556
  %v8548 = vpop.f32.mrf.mxu0
  %v8549 = vadd.f32 %v8505, %v8548
  %v8550 = vpop.f32.mrf.mxu0
  %v8551 = vadd.f32 %v8507, %v8550
  %8552 = vdwg.mxu0
  %8553 = vmatpush.bf16.msra.mxu0 %v7980
  %8554 = vmatpush.bf16.msra.mxu0 %v7978
  %8555 = vmatpush.bf16.msra.mxu0 %v7976
  %8556 = vmatpush.bf16.msra.mxu0 %v7974
  %8557 = vmatpush.bf16.msra.mxu0 %v7972
  %8558 = vmatpush.bf16.msra.mxu0 %v7970
  %8559 = vmatpush.bf16.msra.mxu0 %v7968
  %8560 = vmatpush.bf16.msra.mxu0 %v7966
  %8561 = vmatmul.bf16.gmra.mxu0 %v3515
  %v8562 = vpop.f32.mrf.mxu0
  %v8563 = vadd.f32 %v8519, %v8562
  %v8564 = vpop.f32.mrf.mxu0
  %v8565 = vadd.f32 %v8521, %v8564
  %8566 = vmatmul.bf16.gmra.mxu0 %v3522
  %v8567 = vpop.f32.mrf.mxu0
  %v8568 = vadd.f32 %v8524, %v8567
  %v8569 = vpop.f32.mrf.mxu0
  %v8570 = vadd.f32 %v8526, %v8569
  %8571 = vmatmul.bf16.gmra.mxu0 %v3529
  %v8572 = vpop.f32.mrf.mxu0
  %v8573 = vadd.f32 %v8529, %v8572
  %v8574 = vpop.f32.mrf.mxu0
  %v8575 = vadd.f32 %v8531, %v8574
  %8576 = vmatmul.bf16.gmra.mxu0 %v3536
  %v8577 = vpop.f32.mrf.mxu0
  %v8578 = vadd.f32 %v8534, %v8577
  %v8579 = vpop.f32.mrf.mxu0
  %v8580 = vadd.f32 %v8536, %v8579
  %8581 = vmatmul.bf16.gmra.mxu0 %v3543
  %v8582 = vpop.f32.mrf.mxu0
  %v8583 = vadd.f32 %v8539, %v8582
  %v8584 = vpop.f32.mrf.mxu0
  %v8585 = vadd.f32 %v8541, %v8584
  %8586 = vmatmul.bf16.gmra.mxu0 %v3550
  %v8587 = vpop.f32.mrf.mxu0
  %v8588 = vadd.f32 %v8544, %v8587
  %v8589 = vpop.f32.mrf.mxu0
  %v8590 = vadd.f32 %v8546, %v8589
  %8591 = vmatmul.bf16.gmra.mxu0 %v3557
  %v8592 = vpop.f32.mrf.mxu0
  %v8593 = vadd.f32 %v8549, %v8592
  %v8594 = vpop.f32.mrf.mxu0
  %v8595 = vadd.f32 %v8551, %v8594
  %8596 = vdwg.mxu0
  %8597 = vmatpush.bf16.msra.mxu0 %v7996
  %8598 = vmatpush.bf16.msra.mxu0 %v7994
  %8599 = vmatpush.bf16.msra.mxu0 %v7992
  %8600 = vmatpush.bf16.msra.mxu0 %v7990
  %8601 = vmatpush.bf16.msra.mxu0 %v7988
  %8602 = vmatpush.bf16.msra.mxu0 %v7986
  %8603 = vmatpush.bf16.msra.mxu0 %v7984
  %8604 = vmatpush.bf16.msra.mxu0 %v7982
  %8605 = vmatmul.bf16.gmra.mxu0 %v3516
  %v8606 = vpop.f32.mrf.mxu0
  %v8607 = vadd.f32 %v8563, %v8606
  %v8608 = vpop.f32.mrf.mxu0
  %v8609 = vadd.f32 %v8565, %v8608
  %8610 = vmatmul.bf16.gmra.mxu0 %v3523
  %v8611 = vpop.f32.mrf.mxu0
  %v8612 = vadd.f32 %v8568, %v8611
  %v8613 = vpop.f32.mrf.mxu0
  %v8614 = vadd.f32 %v8570, %v8613
  %8615 = vmatmul.bf16.gmra.mxu0 %v3530
  %v8616 = vpop.f32.mrf.mxu0
  %v8617 = vadd.f32 %v8573, %v8616
  %v8618 = vpop.f32.mrf.mxu0
  %v8619 = vadd.f32 %v8575, %v8618
  %8620 = vmatmul.bf16.gmra.mxu0 %v3537
  %v8621 = vpop.f32.mrf.mxu0
  %v8622 = vadd.f32 %v8578, %v8621
  %v8623 = vpop.f32.mrf.mxu0
  %v8624 = vadd.f32 %v8580, %v8623
  %8625 = vmatmul.bf16.gmra.mxu0 %v3544
  %v8626 = vpop.f32.mrf.mxu0
  %v8627 = vadd.f32 %v8583, %v8626
  %v8628 = vpop.f32.mrf.mxu0
  %v8629 = vadd.f32 %v8585, %v8628
  %8630 = vmatmul.bf16.gmra.mxu0 %v3551
  %v8631 = vpop.f32.mrf.mxu0
  %v8632 = vadd.f32 %v8588, %v8631
  %v8633 = vpop.f32.mrf.mxu0
  %v8634 = vadd.f32 %v8590, %v8633
  %8635 = vmatmul.bf16.gmra.mxu0 %v3558
  %v8636 = vpop.f32.mrf.mxu0
  %v8637 = vadd.f32 %v8593, %v8636
  %v8638 = vpop.f32.mrf.mxu0
  %v8639 = vadd.f32 %v8595, %v8638
  %8640 = vdwg.mxu0
  %8641 = vmatpush.bf16.msra.mxu0 %v8012
  %8642 = vmatpush.bf16.msra.mxu0 %v8010
  %8643 = vmatpush.bf16.msra.mxu0 %v8008
  %8644 = vmatpush.bf16.msra.mxu0 %v8006
  %8645 = vmatpush.bf16.msra.mxu0 %v8004
  %8646 = vmatpush.bf16.msra.mxu0 %v8002
  %8647 = vmatpush.bf16.msra.mxu0 %v8000
  %8648 = vmatpush.bf16.msra.mxu0 %v7998
  %8649 = vmatmul.bf16.gmra.mxu0 %v3517
  %v8650 = vpop.f32.mrf.mxu0
  %v8651 = vadd.f32 %v8607, %v8650
  %v8652 = vpop.f32.mrf.mxu0
  %v8653 = vadd.f32 %v8609, %v8652
  %8654 = vmatmul.bf16.gmra.mxu0 %v3524
  %v8655 = vpop.f32.mrf.mxu0
  %v8656 = vadd.f32 %v8612, %v8655
  %v8657 = vpop.f32.mrf.mxu0
  %v8658 = vadd.f32 %v8614, %v8657
  %8659 = vmatmul.bf16.gmra.mxu0 %v3531
  %v8660 = vpop.f32.mrf.mxu0
  %v8661 = vadd.f32 %v8617, %v8660
  %v8662 = vpop.f32.mrf.mxu0
  %v8663 = vadd.f32 %v8619, %v8662
  %8664 = vmatmul.bf16.gmra.mxu0 %v3538
  %v8665 = vpop.f32.mrf.mxu0
  %v8666 = vadd.f32 %v8622, %v8665
  %v8667 = vpop.f32.mrf.mxu0
  %v8668 = vadd.f32 %v8624, %v8667
  %8669 = vmatmul.bf16.gmra.mxu0 %v3545
  %v8670 = vpop.f32.mrf.mxu0
  %v8671 = vadd.f32 %v8627, %v8670
  %v8672 = vpop.f32.mrf.mxu0
  %v8673 = vadd.f32 %v8629, %v8672
  %8674 = vmatmul.bf16.gmra.mxu0 %v3552
  %v8675 = vpop.f32.mrf.mxu0
  %v8676 = vadd.f32 %v8632, %v8675
  %v8677 = vpop.f32.mrf.mxu0
  %v8678 = vadd.f32 %v8634, %v8677
  %8679 = vmatmul.bf16.gmra.mxu0 %v3559
  %v8680 = vpop.f32.mrf.mxu0
  %v8681 = vadd.f32 %v8637, %v8680
  %v8682 = vpop.f32.mrf.mxu0
  %v8683 = vadd.f32 %v8639, %v8682
  %8684 = vdwg.mxu0
  %8685 = vmatpush.bf16.msra.mxu0 %v8028
  %8686 = vmatpush.bf16.msra.mxu0 %v8026
  %8687 = vmatpush.bf16.msra.mxu0 %v8024
  %8688 = vmatpush.bf16.msra.mxu0 %v8022
  %8689 = vmatpush.bf16.msra.mxu0 %v8020
  %8690 = vmatpush.bf16.msra.mxu0 %v8018
  %8691 = vmatpush.bf16.msra.mxu0 %v8016
  %8692 = vmatpush.bf16.msra.mxu0 %v8014
  %8693 = vmatmul.bf16.gmra.mxu0 %v3518
  %v8694 = vpop.f32.mrf.mxu0
  %v8695 = vadd.f32 %v8651, %v8694
  %v8696 = vpop.f32.mrf.mxu0
  %v8697 = vadd.f32 %v8653, %v8696
  %8698 = vmatmul.bf16.gmra.mxu0 %v3525
  %v8699 = vpop.f32.mrf.mxu0
  %v8700 = vadd.f32 %v8656, %v8699
  %v8701 = vpop.f32.mrf.mxu0
  %v8702 = vadd.f32 %v8658, %v8701
  %8703 = vmatmul.bf16.gmra.mxu0 %v3532
  %v8704 = vpop.f32.mrf.mxu0
  %v8705 = vadd.f32 %v8661, %v8704
  %v8706 = vpop.f32.mrf.mxu0
  %v8707 = vadd.f32 %v8663, %v8706
  %8708 = vmatmul.bf16.gmra.mxu0 %v3539
  %v8709 = vpop.f32.mrf.mxu0
  %v8710 = vadd.f32 %v8666, %v8709
  %v8711 = vpop.f32.mrf.mxu0
  %v8712 = vadd.f32 %v8668, %v8711
  %8713 = vmatmul.bf16.gmra.mxu0 %v3546
  %v8714 = vpop.f32.mrf.mxu0
  %v8715 = vadd.f32 %v8671, %v8714
  %v8716 = vpop.f32.mrf.mxu0
  %v8717 = vadd.f32 %v8673, %v8716
  %8718 = vmatmul.bf16.gmra.mxu0 %v3553
  %v8719 = vpop.f32.mrf.mxu0
  %v8720 = vadd.f32 %v8676, %v8719
  %v8721 = vpop.f32.mrf.mxu0
  %v8722 = vadd.f32 %v8678, %v8721
  %8723 = vmatmul.bf16.gmra.mxu0 %v3560
  %v8724 = vpop.f32.mrf.mxu0
  %v8725 = vadd.f32 %v8681, %v8724
  %v8726 = vpop.f32.mrf.mxu0
  %v8727 = vadd.f32 %v8683, %v8726
  %8728 = vdwg.mxu0
  %8729 = vmatpush.bf16.msra.mxu0 %v8044
  %8730 = vmatpush.bf16.msra.mxu0 %v8042
  %8731 = vmatpush.bf16.msra.mxu0 %v8040
  %8732 = vmatpush.bf16.msra.mxu0 %v8038
  %8733 = vmatpush.bf16.msra.mxu0 %v8036
  %8734 = vmatpush.bf16.msra.mxu0 %v8034
  %8735 = vmatpush.bf16.msra.mxu0 %v8032
  %8736 = vmatpush.bf16.msra.mxu0 %v8030
  %8737 = vmatmul.bf16.gmra.mxu0 %v3519
  %v8738 = vpop.f32.mrf.mxu0
  %v8739 = vadd.f32 %v8695, %v8738
  %v8740 = vpop.f32.mrf.mxu0
  %v8741 = vadd.f32 %v8697, %v8740
  %8742 = vmatmul.bf16.gmra.mxu0 %v3526
  %v8743 = vpop.f32.mrf.mxu0
  %v8744 = vadd.f32 %v8700, %v8743
  %v8745 = vpop.f32.mrf.mxu0
  %v8746 = vadd.f32 %v8702, %v8745
  %8747 = vmatmul.bf16.gmra.mxu0 %v3533
  %v8748 = vpop.f32.mrf.mxu0
  %v8749 = vadd.f32 %v8705, %v8748
  %v8750 = vpop.f32.mrf.mxu0
  %v8751 = vadd.f32 %v8707, %v8750
  %8752 = vmatmul.bf16.gmra.mxu0 %v3540
  %v8753 = vpop.f32.mrf.mxu0
  %v8754 = vadd.f32 %v8710, %v8753
  %v8755 = vpop.f32.mrf.mxu0
  %v8756 = vadd.f32 %v8712, %v8755
  %8757 = vmatmul.bf16.gmra.mxu0 %v3547
  %v8758 = vpop.f32.mrf.mxu0
  %v8759 = vadd.f32 %v8715, %v8758
  %v8760 = vpop.f32.mrf.mxu0
  %v8761 = vadd.f32 %v8717, %v8760
  %8762 = vmatmul.bf16.gmra.mxu0 %v3554
  %v8763 = vpop.f32.mrf.mxu0
  %v8764 = vadd.f32 %v8720, %v8763
  %v8765 = vpop.f32.mrf.mxu0
  %v8766 = vadd.f32 %v8722, %v8765
  %8767 = vmatmul.bf16.gmra.mxu0 %v3561
  %v8768 = vpop.f32.mrf.mxu0
  %v8769 = vadd.f32 %v8725, %v8768
  %v8770 = vpop.f32.mrf.mxu0
  %v8771 = vadd.f32 %v8727, %v8770
  %8772 = vdwg.mxu0
  %v8773 = vmax.f32 %v7456, %v8431
  %v8774 = vmax.f32 %v7457, %v8739
  %v8775 = vmax.f32 %v7458, %v8433
  %v8776 = vmax.f32 %v7459, %v8741
  %v8777 = vmax.f32 %v7460, %v8436
  %v8778 = vmax.f32 %v7461, %v8744
  %v8779 = vmax.f32 %v7462, %v8438
  %v8780 = vmax.f32 %v7463, %v8746
  %v8781 = vmax.f32 %v7464, %v8441
  %v8782 = vmax.f32 %v7465, %v8749
  %v8783 = vmax.f32 %v7466, %v8443
  %v8784 = vmax.f32 %v7467, %v8751
  %v8785 = vmax.f32 %v7468, %v8446
  %v8786 = vmax.f32 %v7469, %v8754
  %v8787 = vmax.f32 %v7470, %v8448
  %v8788 = vmax.f32 %v7471, %v8756
  %v8789 = vmax.f32 %v7472, %v8451
  %v8790 = vmax.f32 %v7473, %v8759
  %v8791 = vmax.f32 %v7474, %v8453
  %v8792 = vmax.f32 %v7475, %v8761
  %v8793 = vmax.f32 %v7476, %v8456
  %v8794 = vmax.f32 %v7477, %v8764
  %v8795 = vmax.f32 %v7478, %v8458
  %v8796 = vmax.f32 %v7479, %v8766
  %v8797 = vmax.f32 %v7480, %v8461
  %v8798 = vmax.f32 %v7481, %v8769
  %v8799 = vmax.f32 %v7482, %v8463
  %v8800 = vmax.f32 %v7483, %v8771
  %v8801 = vld [vmem:[%s4] sm:$0x3]
  %v8803 = vperm.slane %v8801, 0
  %v8804 = vperm.slane %v8801, 1
  %v8807 = vadd.f32 %v8773, %v8803
  %v8808 = vadd.f32 %v8774, %v8804
  %v8809 = vadd.f32 %v8775, %v8803
  %v8810 = vadd.f32 %v8776, %v8804
  %v8811 = vadd.f32 %v8777, %v8803
  %v8812 = vadd.f32 %v8778, %v8804
  %v8813 = vadd.f32 %v8779, %v8803
  %v8814 = vadd.f32 %v8780, %v8804
  %v8815 = vadd.f32 %v8781, %v8803
  %v8816 = vadd.f32 %v8782, %v8804
  %v8817 = vadd.f32 %v8783, %v8803
  %v8818 = vadd.f32 %v8784, %v8804
  %v8819 = vadd.f32 %v8785, %v8803
  %v8820 = vadd.f32 %v8786, %v8804
  %v8821 = vadd.f32 %v8787, %v8803
  %v8822 = vadd.f32 %v8788, %v8804
  %v8823 = vadd.f32 %v8789, %v8803
  %v8824 = vadd.f32 %v8790, %v8804
  %v8825 = vadd.f32 %v8791, %v8803
  %v8826 = vadd.f32 %v8792, %v8804
  %v8827 = vadd.f32 %v8793, %v8803
  %v8828 = vadd.f32 %v8794, %v8804
  %v8829 = vadd.f32 %v8795, %v8803
  %v8830 = vadd.f32 %v8796, %v8804
  %v8831 = vadd.f32 %v8797, %v8803
  %v8832 = vadd.f32 %v8798, %v8804
  %v8833 = vadd.f32 %v8799, %v8803
  %v8834 = vadd.f32 %v8800, %v8804
  %v8835 = vmax.f32 %v8807, 0.0
  %v8836 = vmax.f32 %v8808, 0.0
  %v8837 = vmax.f32 %v8809, 0.0
  %v8838 = vmax.f32 %v8810, 0.0
  %v8839 = vmax.f32 %v8811, 0.0
  %v8840 = vmax.f32 %v8812, 0.0
  %v8841 = vmax.f32 %v8813, 0.0
  %v8842 = vmax.f32 %v8814, 0.0
  %v8843 = vmax.f32 %v8815, 0.0
  %v8844 = vmax.f32 %v8816, 0.0
  %v8845 = vmax.f32 %v8817, 0.0
  %v8846 = vmax.f32 %v8818, 0.0
  %v8847 = vmax.f32 %v8819, 0.0
  %v8848 = vmax.f32 %v8820, 0.0
  %v8849 = vmax.f32 %v8821, 0.0
  %v8850 = vmax.f32 %v8822, 0.0
  %v8851 = vmax.f32 %v8823, 0.0
  %v8852 = vmax.f32 %v8824, 0.0
  %v8853 = vmax.f32 %v8825, 0.0
  %v8854 = vmax.f32 %v8826, 0.0
  %v8855 = vmax.f32 %v8827, 0.0
  %v8856 = vmax.f32 %v8828, 0.0
  %v8857 = vmax.f32 %v8829, 0.0
  %v8858 = vmax.f32 %v8830, 0.0
  %v8859 = vmax.f32 %v8831, 0.0
  %v8860 = vmax.f32 %v8832, 0.0
  %v8861 = vmax.f32 %v8833, 0.0
  %v8862 = vmax.f32 %v8834, 0.0
  %v8863 = vpack.c.bf16 %v8837, %v8835
  %v8864 = vpack.c.bf16 %v8838, %v8836
  %v8865 = vld [vmem:[%s5] sm:$0xf]
  %v8866 = vld [vmem:[%s5 + $0x4] sm:$0xf]
  %v8867 = vld [vmem:[%s5 + $0x8] sm:$0xf]
  %v8868 = vld [vmem:[%s5 + $0xc] sm:$0xf]
  %v8869 = vld [vmem:[%s5 + $0x10] sm:$0xf]
  %v8870 = vld [vmem:[%s5 + $0x14] sm:$0xf]
  %v8871 = vld [vmem:[%s5 + $0x18] sm:$0xf]
  %v8872 = vld [vmem:[%s5 + $0x1c] sm:$0xf]
  %v8873 = vld [vmem:[%s5 + $0x20] sm:$0xf]
  %v8874 = vld [vmem:[%s5 + $0x24] sm:$0xf]
  %v8875 = vld [vmem:[%s5 + $0x28] sm:$0xf]
  %v8876 = vld [vmem:[%s5 + $0x2c] sm:$0xf]
  %v8877 = vld [vmem:[%s5 + $0x30] sm:$0xf]
  %v8878 = vld [vmem:[%s5 + $0x34] sm:$0xf]
  %v8879 = vld [vmem:[%s5 + $0x38] sm:$0xf]
  %v8880 = vld [vmem:[%s5 + $0x3c] sm:$0xf]
  %v8881 = vld [vmem:[%s5 + $0x40] sm:$0xf]
  %v8882 = vld [vmem:[%s5 + $0x44] sm:$0xf]
  %v8883 = vld [vmem:[%s5 + $0x48] sm:$0xf]
  %v8884 = vld [vmem:[%s5 + $0x4c] sm:$0xf]
  %v8885 = vld [vmem:[%s5 + $0x50] sm:$0xf]
  %v8886 = vld [vmem:[%s5 + $0x54] sm:$0xf]
  %v8887 = vld [vmem:[%s5 + $0x58] sm:$0xf]
  %v8888 = vld [vmem:[%s5 + $0x5c] sm:$0xf]
  %v8889 = vld [vmem:[%s5 + $0x60] sm:$0xf]
  %v8890 = vld [vmem:[%s5 + $0x64] sm:$0xf]
  %v8891 = vld [vmem:[%s5 + $0x68] sm:$0xf]
  %v8892 = vld [vmem:[%s5 + $0x6c] sm:$0xf]
  %v8893 = vpack.c.bf16 %v8841, %v8839
  %v8894 = vpack.c.bf16 %v8842, %v8840
  %s8895 = scalar_lea.vmem %s5, 112
  %v8896 = vld [vmem:[%s8895] sm:$0xf]
  %v8897 = vld [vmem:[%s8895 + $0x4] sm:$0xf]
  %v8898 = vld [vmem:[%s8895 + $0x8] sm:$0xf]
  %v8899 = vld [vmem:[%s8895 + $0xc] sm:$0xf]
  %v8900 = vld [vmem:[%s8895 + $0x10] sm:$0xf]
  %v8901 = vld [vmem:[%s8895 + $0x14] sm:$0xf]
  %v8902 = vld [vmem:[%s8895 + $0x18] sm:$0xf]
  %v8903 = vld [vmem:[%s8895 + $0x1c] sm:$0xf]
  %v8904 = vld [vmem:[%s8895 + $0x20] sm:$0xf]
  %v8905 = vld [vmem:[%s8895 + $0x24] sm:$0xf]
  %v8906 = vld [vmem:[%s8895 + $0x28] sm:$0xf]
  %v8907 = vld [vmem:[%s8895 + $0x2c] sm:$0xf]
  %v8908 = vld [vmem:[%s8895 + $0x30] sm:$0xf]
  %v8909 = vld [vmem:[%s8895 + $0x34] sm:$0xf]
  %v8910 = vld [vmem:[%s8895 + $0x38] sm:$0xf]
  %v8911 = vld [vmem:[%s8895 + $0x3c] sm:$0xf]
  %v8912 = vld [vmem:[%s8895 + $0x40] sm:$0xf]
  %v8913 = vld [vmem:[%s8895 + $0x44] sm:$0xf]
  %v8914 = vld [vmem:[%s8895 + $0x48] sm:$0xf]
  %v8915 = vld [vmem:[%s8895 + $0x4c] sm:$0xf]
  %v8916 = vld [vmem:[%s8895 + $0x50] sm:$0xf]
  %v8917 = vld [vmem:[%s8895 + $0x54] sm:$0xf]
  %v8918 = vld [vmem:[%s8895 + $0x58] sm:$0xf]
  %v8919 = vld [vmem:[%s8895 + $0x5c] sm:$0xf]
  %v8920 = vld [vmem:[%s8895 + $0x60] sm:$0xf]
  %v8921 = vld [vmem:[%s8895 + $0x64] sm:$0xf]
  %v8922 = vld [vmem:[%s8895 + $0x68] sm:$0xf]
  %v8923 = vld [vmem:[%s8895 + $0x6c] sm:$0xf]
  %v8952 = vunpack.c.l.b16 %v8896
  %v8953 = vunpack.c.l.b16 %v8897
  %v8954 = vunpack.c.l.b16 %v8898
  %v8955 = vunpack.c.l.b16 %v8899
  %v8956 = vunpack.c.l.b16 %v8900
  %v8957 = vunpack.c.l.b16 %v8901
  %v8958 = vunpack.c.l.b16 %v8902
  %v8959 = vunpack.c.l.b16 %v8903
  %v8960 = vunpack.c.l.b16 %v8904
  %v8961 = vunpack.c.l.b16 %v8905
  %v8962 = vunpack.c.l.b16 %v8906
  %v8963 = vunpack.c.l.b16 %v8907
  %v8964 = vunpack.c.l.b16 %v8908
  %v8965 = vunpack.c.l.b16 %v8909
  %v8966 = vunpack.c.l.b16 %v8910
  %v8967 = vunpack.c.l.b16 %v8911
  %v8968 = vunpack.c.l.b16 %v8912
  %v8969 = vunpack.c.l.b16 %v8913
  %v8970 = vunpack.c.l.b16 %v8914
  %v8971 = vunpack.c.l.b16 %v8915
  %v8972 = vunpack.c.l.b16 %v8916
  %v8973 = vunpack.c.l.b16 %v8917
  %v8974 = vunpack.c.l.b16 %v8918
  %v8975 = vunpack.c.l.b16 %v8919
  %v8976 = vunpack.c.l.b16 %v8920
  %v8977 = vunpack.c.l.b16 %v8921
  %v8978 = vunpack.c.l.b16 %v8922
  %v8979 = vunpack.c.l.b16 %v8923
  %v8980 = vpack.c.b16 %v8953, %v8952
  %v8981 = vpack.c.b16 %v8955, %v8954
  %v8982 = vpack.c.b16 %v8957, %v8956
  %v8983 = vpack.c.b16 %v8959, %v8958
  %v8984 = vpack.c.b16 %v8961, %v8960
  %v8985 = vpack.c.b16 %v8963, %v8962
  %v8986 = vpack.c.b16 %v8965, %v8964
  %v8987 = vpack.c.b16 %v8967, %v8966
  %v8988 = vpack.c.b16 %v8969, %v8968
  %v8989 = vpack.c.b16 %v8971, %v8970
  %v8990 = vpack.c.b16 %v8973, %v8972
  %v8991 = vpack.c.b16 %v8975, %v8974
  %v8992 = vpack.c.b16 %v8977, %v8976
  %v8993 = vpack.c.b16 %v8979, %v8978
  %v9009 = vsel %vm3215, %v8894, 0
  %9011 = vmatpush.bf16.msra.mxu0 %v8987
  %9012 = vmatpush.bf16.msra.mxu0 %v8986
  %9013 = vmatpush.bf16.msra.mxu0 %v8985
  %9014 = vmatpush.bf16.msra.mxu0 %v8984
  %9015 = vmatpush.bf16.msra.mxu0 %v8983
  %9016 = vmatpush.bf16.msra.mxu0 %v8982
  %9017 = vmatpush.bf16.msra.mxu0 %v8981
  %9018 = vmatpush.bf16.msra.mxu0 %v8980
  %9019 = vmatmul.bf16.gmra.mxu0 %v8893
  %v9020 = vpop.f32.mrf.mxu0
  %v9021 = vadd.f32 0.0, %v9020
  %v9022 = vpop.f32.mrf.mxu0
  %v9023 = vadd.f32 0.0, %v9022
  %9024 = vdwg.mxu0
  %9025 = vmatpush.bf16.msra.mxu0 0
  %9026 = vmatpush.bf16.msra.mxu0 0
  %9027 = vmatpush.bf16.msra.mxu0 %v8993
  %9028 = vmatpush.bf16.msra.mxu0 %v8992
  %9029 = vmatpush.bf16.msra.mxu0 %v8991
  %9030 = vmatpush.bf16.msra.mxu0 %v8990
  %9031 = vmatpush.bf16.msra.mxu0 %v8989
  %9032 = vmatpush.bf16.msra.mxu0 %v8988
  %9033 = vmatmul.bf16.gmra.mxu0 %v9009
  %v9034 = vpop.f32.mrf.mxu0
  %v9035 = vadd.f32 %v9021, %v9034
  %v9036 = vpop.f32.mrf.mxu0
  %v9037 = vadd.f32 %v9023, %v9036
  %9038 = vdwg.mxu0
  %v9067 = vunpack.c.l.b16 %v8865
  %v9068 = vunpack.c.l.b16 %v8866
  %v9069 = vunpack.c.l.b16 %v8867
  %v9070 = vunpack.c.l.b16 %v8868
  %v9071 = vunpack.c.l.b16 %v8869
  %v9072 = vunpack.c.l.b16 %v8870
  %v9073 = vunpack.c.l.b16 %v8871
  %v9074 = vunpack.c.l.b16 %v8872
  %v9075 = vunpack.c.l.b16 %v8873
  %v9076 = vunpack.c.l.b16 %v8874
  %v9077 = vunpack.c.l.b16 %v8875
  %v9078 = vunpack.c.l.b16 %v8876
  %v9079 = vunpack.c.l.b16 %v8877
  %v9080 = vunpack.c.l.b16 %v8878
  %v9081 = vunpack.c.l.b16 %v8879
  %v9082 = vunpack.c.l.b16 %v8880
  %v9083 = vunpack.c.l.b16 %v8881
  %v9084 = vunpack.c.l.b16 %v8882
  %v9085 = vunpack.c.l.b16 %v8883
  %v9086 = vunpack.c.l.b16 %v8884
  %v9087 = vunpack.c.l.b16 %v8885
  %v9088 = vunpack.c.l.b16 %v8886
  %v9089 = vunpack.c.l.b16 %v8887
  %v9090 = vunpack.c.l.b16 %v8888
  %v9091 = vunpack.c.l.b16 %v8889
  %v9092 = vunpack.c.l.b16 %v8890
  %v9093 = vunpack.c.l.b16 %v8891
  %v9094 = vunpack.c.l.b16 %v8892
  %v9095 = vpack.c.b16 %v9068, %v9067
  %v9096 = vpack.c.b16 %v9070, %v9069
  %v9097 = vpack.c.b16 %v9072, %v9071
  %v9098 = vpack.c.b16 %v9074, %v9073
  %v9099 = vpack.c.b16 %v9076, %v9075
  %v9100 = vpack.c.b16 %v9078, %v9077
  %v9101 = vpack.c.b16 %v9080, %v9079
  %v9102 = vpack.c.b16 %v9082, %v9081
  %v9103 = vpack.c.b16 %v9084, %v9083
  %v9104 = vpack.c.b16 %v9086, %v9085
  %v9105 = vpack.c.b16 %v9088, %v9087
  %v9106 = vpack.c.b16 %v9090, %v9089
  %v9107 = vpack.c.b16 %v9092, %v9091
  %v9108 = vpack.c.b16 %v9094, %v9093
  %v9124 = vsel %vm3215, %v8864, 0
  %9126 = vmatpush.bf16.msra.mxu0 %v9102
  %9127 = vmatpush.bf16.msra.mxu0 %v9101
  %9128 = vmatpush.bf16.msra.mxu0 %v9100
  %9129 = vmatpush.bf16.msra.mxu0 %v9099
  %9130 = vmatpush.bf16.msra.mxu0 %v9098
  %9131 = vmatpush.bf16.msra.mxu0 %v9097
  %9132 = vmatpush.bf16.msra.mxu0 %v9096
  %9133 = vmatpush.bf16.msra.mxu0 %v9095
  %9134 = vmatmul.bf16.gmra.mxu0 %v8863
  %v9135 = vpop.f32.mrf.mxu0
  %v9136 = vadd.f32 %v9035, %v9135
  %v9137 = vpop.f32.mrf.mxu0
  %v9138 = vadd.f32 %v9037, %v9137
  %9139 = vdwg.mxu0
  %9140 = vmatpush.bf16.msra.mxu0 0
  %9141 = vmatpush.bf16.msra.mxu0 0
  %9142 = vmatpush.bf16.msra.mxu0 %v9108
  %9143 = vmatpush.bf16.msra.mxu0 %v9107
  %9144 = vmatpush.bf16.msra.mxu0 %v9106
  %9145 = vmatpush.bf16.msra.mxu0 %v9105
  %9146 = vmatpush.bf16.msra.mxu0 %v9104
  %9147 = vmatpush.bf16.msra.mxu0 %v9103
  %9148 = vmatmul.bf16.gmra.mxu0 %v9124
  %v9149 = vpop.f32.mrf.mxu0
  %v9150 = vadd.f32 %v9136, %v9149
  %v9151 = vpop.f32.mrf.mxu0
  %v9152 = vadd.f32 %v9138, %v9151
  %9153 = vdwg.mxu0
  %v9154 = vpack.c.bf16 %v8845, %v8843
  %v9155 = vpack.c.bf16 %v8846, %v8844
  %s9156 = scalar_lea.vmem %s5, 224
  %v9157 = vld [vmem:[%s9156] sm:$0xf]
  %v9158 = vld [vmem:[%s9156 + $0x4] sm:$0xf]
  %v9159 = vld [vmem:[%s9156 + $0x8] sm:$0xf]
  %v9160 = vld [vmem:[%s9156 + $0xc] sm:$0xf]
  %v9161 = vld [vmem:[%s9156 + $0x10] sm:$0xf]
  %v9162 = vld [vmem:[%s9156 + $0x14] sm:$0xf]
  %v9163 = vld [vmem:[%s9156 + $0x18] sm:$0xf]
  %v9164 = vld [vmem:[%s9156 + $0x1c] sm:$0xf]
  %v9165 = vld [vmem:[%s9156 + $0x20] sm:$0xf]
  %v9166 = vld [vmem:[%s9156 + $0x24] sm:$0xf]
  %v9167 = vld [vmem:[%s9156 + $0x28] sm:$0xf]
  %v9168 = vld [vmem:[%s9156 + $0x2c] sm:$0xf]
  %v9169 = vld [vmem:[%s9156 + $0x30] sm:$0xf]
  %v9170 = vld [vmem:[%s9156 + $0x34] sm:$0xf]
  %v9171 = vld [vmem:[%s9156 + $0x38] sm:$0xf]
  %v9172 = vld [vmem:[%s9156 + $0x3c] sm:$0xf]
  %v9173 = vld [vmem:[%s9156 + $0x40] sm:$0xf]
  %v9174 = vld [vmem:[%s9156 + $0x44] sm:$0xf]
  %v9175 = vld [vmem:[%s9156 + $0x48] sm:$0xf]
  %v9176 = vld [vmem:[%s9156 + $0x4c] sm:$0xf]
  %v9177 = vld [vmem:[%s9156 + $0x50] sm:$0xf]
  %v9178 = vld [vmem:[%s9156 + $0x54] sm:$0xf]
  %v9179 = vld [vmem:[%s9156 + $0x58] sm:$0xf]
  %v9180 = vld [vmem:[%s9156 + $0x5c] sm:$0xf]
  %v9181 = vld [vmem:[%s9156 + $0x60] sm:$0xf]
  %v9182 = vld [vmem:[%s9156 + $0x64] sm:$0xf]
  %v9183 = vld [vmem:[%s9156 + $0x68] sm:$0xf]
  %v9184 = vld [vmem:[%s9156 + $0x6c] sm:$0xf]
  %v9213 = vunpack.c.l.b16 %v9157
  %v9214 = vunpack.c.l.b16 %v9158
  %v9215 = vunpack.c.l.b16 %v9159
  %v9216 = vunpack.c.l.b16 %v9160
  %v9217 = vunpack.c.l.b16 %v9161
  %v9218 = vunpack.c.l.b16 %v9162
  %v9219 = vunpack.c.l.b16 %v9163
  %v9220 = vunpack.c.l.b16 %v9164
  %v9221 = vunpack.c.l.b16 %v9165
  %v9222 = vunpack.c.l.b16 %v9166
  %v9223 = vunpack.c.l.b16 %v9167
  %v9224 = vunpack.c.l.b16 %v9168
  %v9225 = vunpack.c.l.b16 %v9169
  %v9226 = vunpack.c.l.b16 %v9170
  %v9227 = vunpack.c.l.b16 %v9171
  %v9228 = vunpack.c.l.b16 %v9172
  %v9229 = vunpack.c.l.b16 %v9173
  %v9230 = vunpack.c.l.b16 %v9174
  %v9231 = vunpack.c.l.b16 %v9175
  %v9232 = vunpack.c.l.b16 %v9176
  %v9233 = vunpack.c.l.b16 %v9177
  %v9234 = vunpack.c.l.b16 %v9178
  %v9235 = vunpack.c.l.b16 %v9179
  %v9236 = vunpack.c.l.b16 %v9180
  %v9237 = vunpack.c.l.b16 %v9181
  %v9238 = vunpack.c.l.b16 %v9182
  %v9239 = vunpack.c.l.b16 %v9183
  %v9240 = vunpack.c.l.b16 %v9184
  %v9241 = vpack.c.b16 %v9214, %v9213
  %v9242 = vpack.c.b16 %v9216, %v9215
  %v9243 = vpack.c.b16 %v9218, %v9217
  %v9244 = vpack.c.b16 %v9220, %v9219
  %v9245 = vpack.c.b16 %v9222, %v9221
  %v9246 = vpack.c.b16 %v9224, %v9223
  %v9247 = vpack.c.b16 %v9226, %v9225
  %v9248 = vpack.c.b16 %v9228, %v9227
  %v9249 = vpack.c.b16 %v9230, %v9229
  %v9250 = vpack.c.b16 %v9232, %v9231
  %v9251 = vpack.c.b16 %v9234, %v9233
  %v9252 = vpack.c.b16 %v9236, %v9235
  %v9253 = vpack.c.b16 %v9238, %v9237
  %v9254 = vpack.c.b16 %v9240, %v9239
  %v9270 = vsel %vm3215, %v9155, 0
  %9272 = vmatpush.bf16.msra.mxu0 %v9248
  %9273 = vmatpush.bf16.msra.mxu0 %v9247
  %9274 = vmatpush.bf16.msra.mxu0 %v9246
  %9275 = vmatpush.bf16.msra.mxu0 %v9245
  %9276 = vmatpush.bf16.msra.mxu0 %v9244
  %9277 = vmatpush.bf16.msra.mxu0 %v9243
  %9278 = vmatpush.bf16.msra.mxu0 %v9242
  %9279 = vmatpush.bf16.msra.mxu0 %v9241
  %9280 = vmatmul.bf16.gmra.mxu0 %v9154
  %v9281 = vpop.f32.mrf.mxu0
  %v9282 = vadd.f32 0.0, %v9281
  %v9283 = vpop.f32.mrf.mxu0
  %v9284 = vadd.f32 0.0, %v9283
  %9285 = vdwg.mxu0
  %9286 = vmatpush.bf16.msra.mxu0 0
  %9287 = vmatpush.bf16.msra.mxu0 0
  %9288 = vmatpush.bf16.msra.mxu0 %v9254
  %9289 = vmatpush.bf16.msra.mxu0 %v9253
  %9290 = vmatpush.bf16.msra.mxu0 %v9252
  %9291 = vmatpush.bf16.msra.mxu0 %v9251
  %9292 = vmatpush.bf16.msra.mxu0 %v9250
  %9293 = vmatpush.bf16.msra.mxu0 %v9249
  %9294 = vmatmul.bf16.gmra.mxu0 %v9270
  %v9295 = vpop.f32.mrf.mxu0
  %v9296 = vadd.f32 %v9282, %v9295
  %v9297 = vpop.f32.mrf.mxu0
  %v9298 = vadd.f32 %v9284, %v9297
  %9299 = vdwg.mxu0
  %v9300 = vadd.f32 %v9150, %v9296
  %v9301 = vadd.f32 %v9152, %v9298
  %v9302 = vpack.c.bf16 %v8849, %v8847
  %v9303 = vpack.c.bf16 %v8850, %v8848
  %s9304 = scalar_lea.vmem %s5, 336
  %v9305 = vld [vmem:[%s9304] sm:$0xf]
  %v9306 = vld [vmem:[%s9304 + $0x4] sm:$0xf]
  %v9307 = vld [vmem:[%s9304 + $0x8] sm:$0xf]
  %v9308 = vld [vmem:[%s9304 + $0xc] sm:$0xf]
  %v9309 = vld [vmem:[%s9304 + $0x10] sm:$0xf]
  %v9310 = vld [vmem:[%s9304 + $0x14] sm:$0xf]
  %v9311 = vld [vmem:[%s9304 + $0x18] sm:$0xf]
  %v9312 = vld [vmem:[%s9304 + $0x1c] sm:$0xf]
  %v9313 = vld [vmem:[%s9304 + $0x20] sm:$0xf]
  %v9314 = vld [vmem:[%s9304 + $0x24] sm:$0xf]
  %v9315 = vld [vmem:[%s9304 + $0x28] sm:$0xf]
  %v9316 = vld [vmem:[%s9304 + $0x2c] sm:$0xf]
  %v9317 = vld [vmem:[%s9304 + $0x30] sm:$0xf]
  %v9318 = vld [vmem:[%s9304 + $0x34] sm:$0xf]
  %v9319 = vld [vmem:[%s9304 + $0x38] sm:$0xf]
  %v9320 = vld [vmem:[%s9304 + $0x3c] sm:$0xf]
  %v9321 = vld [vmem:[%s9304 + $0x40] sm:$0xf]
  %v9322 = vld [vmem:[%s9304 + $0x44] sm:$0xf]
  %v9323 = vld [vmem:[%s9304 + $0x48] sm:$0xf]
  %v9324 = vld [vmem:[%s9304 + $0x4c] sm:$0xf]
  %v9325 = vld [vmem:[%s9304 + $0x50] sm:$0xf]
  %v9326 = vld [vmem:[%s9304 + $0x54] sm:$0xf]
  %v9327 = vld [vmem:[%s9304 + $0x58] sm:$0xf]
  %v9328 = vld [vmem:[%s9304 + $0x5c] sm:$0xf]
  %v9329 = vld [vmem:[%s9304 + $0x60] sm:$0xf]
  %v9330 = vld [vmem:[%s9304 + $0x64] sm:$0xf]
  %v9331 = vld [vmem:[%s9304 + $0x68] sm:$0xf]
  %v9332 = vld [vmem:[%s9304 + $0x6c] sm:$0xf]
  %v9361 = vunpack.c.l.b16 %v9305
  %v9362 = vunpack.c.l.b16 %v9306
  %v9363 = vunpack.c.l.b16 %v9307
  %v9364 = vunpack.c.l.b16 %v9308
  %v9365 = vunpack.c.l.b16 %v9309
  %v9366 = vunpack.c.l.b16 %v9310
  %v9367 = vunpack.c.l.b16 %v9311
  %v9368 = vunpack.c.l.b16 %v9312
  %v9369 = vunpack.c.l.b16 %v9313
  %v9370 = vunpack.c.l.b16 %v9314
  %v9371 = vunpack.c.l.b16 %v9315
  %v9372 = vunpack.c.l.b16 %v9316
  %v9373 = vunpack.c.l.b16 %v9317
  %v9374 = vunpack.c.l.b16 %v9318
  %v9375 = vunpack.c.l.b16 %v9319
  %v9376 = vunpack.c.l.b16 %v9320
  %v9377 = vunpack.c.l.b16 %v9321
  %v9378 = vunpack.c.l.b16 %v9322
  %v9379 = vunpack.c.l.b16 %v9323
  %v9380 = vunpack.c.l.b16 %v9324
  %v9381 = vunpack.c.l.b16 %v9325
  %v9382 = vunpack.c.l.b16 %v9326
  %v9383 = vunpack.c.l.b16 %v9327
  %v9384 = vunpack.c.l.b16 %v9328
  %v9385 = vunpack.c.l.b16 %v9329
  %v9386 = vunpack.c.l.b16 %v9330
  %v9387 = vunpack.c.l.b16 %v9331
  %v9388 = vunpack.c.l.b16 %v9332
  %v9389 = vpack.c.b16 %v9362, %v9361
  %v9390 = vpack.c.b16 %v9364, %v9363
  %v9391 = vpack.c.b16 %v9366, %v9365
  %v9392 = vpack.c.b16 %v9368, %v9367
  %v9393 = vpack.c.b16 %v9370, %v9369
  %v9394 = vpack.c.b16 %v9372, %v9371
  %v9395 = vpack.c.b16 %v9374, %v9373
  %v9396 = vpack.c.b16 %v9376, %v9375
  %v9397 = vpack.c.b16 %v9378, %v9377
  %v9398 = vpack.c.b16 %v9380, %v9379
  %v9399 = vpack.c.b16 %v9382, %v9381
  %v9400 = vpack.c.b16 %v9384, %v9383
  %v9401 = vpack.c.b16 %v9386, %v9385
  %v9402 = vpack.c.b16 %v9388, %v9387
  %v9418 = vsel %vm3215, %v9303, 0
  %9420 = vmatpush.bf16.msra.mxu0 %v9396
  %9421 = vmatpush.bf16.msra.mxu0 %v9395
  %9422 = vmatpush.bf16.msra.mxu0 %v9394
  %9423 = vmatpush.bf16.msra.mxu0 %v9393
  %9424 = vmatpush.bf16.msra.mxu0 %v9392
  %9425 = vmatpush.bf16.msra.mxu0 %v9391
  %9426 = vmatpush.bf16.msra.mxu0 %v9390
  %9427 = vmatpush.bf16.msra.mxu0 %v9389
  %9428 = vmatmul.bf16.gmra.mxu0 %v9302
  %v9429 = vpop.f32.mrf.mxu0
  %v9430 = vadd.f32 0.0, %v9429
  %v9431 = vpop.f32.mrf.mxu0
  %v9432 = vadd.f32 0.0, %v9431
  %9433 = vdwg.mxu0
  %9434 = vmatpush.bf16.msra.mxu0 0
  %9435 = vmatpush.bf16.msra.mxu0 0
  %9436 = vmatpush.bf16.msra.mxu0 %v9402
  %9437 = vmatpush.bf16.msra.mxu0 %v9401
  %9438 = vmatpush.bf16.msra.mxu0 %v9400
  %9439 = vmatpush.bf16.msra.mxu0 %v9399
  %9440 = vmatpush.bf16.msra.mxu0 %v9398
  %9441 = vmatpush.bf16.msra.mxu0 %v9397
  %9442 = vmatmul.bf16.gmra.mxu0 %v9418
  %v9443 = vpop.f32.mrf.mxu0
  %v9444 = vadd.f32 %v9430, %v9443
  %v9445 = vpop.f32.mrf.mxu0
  %v9446 = vadd.f32 %v9432, %v9445
  %9447 = vdwg.mxu0
  %v9448 = vadd.f32 %v9300, %v9444
  %v9449 = vadd.f32 %v9301, %v9446
  %v9450 = vpack.c.bf16 %v8853, %v8851
  %v9451 = vpack.c.bf16 %v8854, %v8852
  %s9452 = scalar_lea.vmem %s5, 448
  %v9453 = vld [vmem:[%s9452] sm:$0xf]
  %v9454 = vld [vmem:[%s9452 + $0x4] sm:$0xf]
  %v9455 = vld [vmem:[%s9452 + $0x8] sm:$0xf]
  %v9456 = vld [vmem:[%s9452 + $0xc] sm:$0xf]
  %v9457 = vld [vmem:[%s9452 + $0x10] sm:$0xf]
  %v9458 = vld [vmem:[%s9452 + $0x14] sm:$0xf]
  %v9459 = vld [vmem:[%s9452 + $0x18] sm:$0xf]
  %v9460 = vld [vmem:[%s9452 + $0x1c] sm:$0xf]
  %v9461 = vld [vmem:[%s9452 + $0x20] sm:$0xf]
  %v9462 = vld [vmem:[%s9452 + $0x24] sm:$0xf]
  %v9463 = vld [vmem:[%s9452 + $0x28] sm:$0xf]
  %v9464 = vld [vmem:[%s9452 + $0x2c] sm:$0xf]
  %v9465 = vld [vmem:[%s9452 + $0x30] sm:$0xf]
  %v9466 = vld [vmem:[%s9452 + $0x34] sm:$0xf]
  %v9467 = vld [vmem:[%s9452 + $0x38] sm:$0xf]
  %v9468 = vld [vmem:[%s9452 + $0x3c] sm:$0xf]
  %v9469 = vld [vmem:[%s9452 + $0x40] sm:$0xf]
  %v9470 = vld [vmem:[%s9452 + $0x44] sm:$0xf]
  %v9471 = vld [vmem:[%s9452 + $0x48] sm:$0xf]
  %v9472 = vld [vmem:[%s9452 + $0x4c] sm:$0xf]
  %v9473 = vld [vmem:[%s9452 + $0x50] sm:$0xf]
  %v9474 = vld [vmem:[%s9452 + $0x54] sm:$0xf]
  %v9475 = vld [vmem:[%s9452 + $0x58] sm:$0xf]
  %v9476 = vld [vmem:[%s9452 + $0x5c] sm:$0xf]
  %v9477 = vld [vmem:[%s9452 + $0x60] sm:$0xf]
  %v9478 = vld [vmem:[%s9452 + $0x64] sm:$0xf]
  %v9479 = vld [vmem:[%s9452 + $0x68] sm:$0xf]
  %v9480 = vld [vmem:[%s9452 + $0x6c] sm:$0xf]
  %v9509 = vunpack.c.l.b16 %v9453
  %v9510 = vunpack.c.l.b16 %v9454
  %v9511 = vunpack.c.l.b16 %v9455
  %v9512 = vunpack.c.l.b16 %v9456
  %v9513 = vunpack.c.l.b16 %v9457
  %v9514 = vunpack.c.l.b16 %v9458
  %v9515 = vunpack.c.l.b16 %v9459
  %v9516 = vunpack.c.l.b16 %v9460
  %v9517 = vunpack.c.l.b16 %v9461
  %v9518 = vunpack.c.l.b16 %v9462
  %v9519 = vunpack.c.l.b16 %v9463
  %v9520 = vunpack.c.l.b16 %v9464
  %v9521 = vunpack.c.l.b16 %v9465
  %v9522 = vunpack.c.l.b16 %v9466
  %v9523 = vunpack.c.l.b16 %v9467
  %v9524 = vunpack.c.l.b16 %v9468
  %v9525 = vunpack.c.l.b16 %v9469
  %v9526 = vunpack.c.l.b16 %v9470
  %v9527 = vunpack.c.l.b16 %v9471
  %v9528 = vunpack.c.l.b16 %v9472
  %v9529 = vunpack.c.l.b16 %v9473
  %v9530 = vunpack.c.l.b16 %v9474
  %v9531 = vunpack.c.l.b16 %v9475
  %v9532 = vunpack.c.l.b16 %v9476
  %v9533 = vunpack.c.l.b16 %v9477
  %v9534 = vunpack.c.l.b16 %v9478
  %v9535 = vunpack.c.l.b16 %v9479
  %v9536 = vunpack.c.l.b16 %v9480
  %v9537 = vpack.c.b16 %v9510, %v9509
  %v9538 = vpack.c.b16 %v9512, %v9511
  %v9539 = vpack.c.b16 %v9514, %v9513
  %v9540 = vpack.c.b16 %v9516, %v9515
  %v9541 = vpack.c.b16 %v9518, %v9517
  %v9542 = vpack.c.b16 %v9520, %v9519
  %v9543 = vpack.c.b16 %v9522, %v9521
  %v9544 = vpack.c.b16 %v9524, %v9523
  %v9545 = vpack.c.b16 %v9526, %v9525
  %v9546 = vpack.c.b16 %v9528, %v9527
  %v9547 = vpack.c.b16 %v9530, %v9529
  %v9548 = vpack.c.b16 %v9532, %v9531
  %v9549 = vpack.c.b16 %v9534, %v9533
  %v9550 = vpack.c.b16 %v9536, %v9535
  %v9566 = vsel %vm3215, %v9451, 0
  %9568 = vmatpush.bf16.msra.mxu0 %v9544
  %9569 = vmatpush.bf16.msra.mxu0 %v9543
  %9570 = vmatpush.bf16.msra.mxu0 %v9542
  %9571 = vmatpush.bf16.msra.mxu0 %v9541
  %9572 = vmatpush.bf16.msra.mxu0 %v9540
  %9573 = vmatpush.bf16.msra.mxu0 %v9539
  %9574 = vmatpush.bf16.msra.mxu0 %v9538
  %9575 = vmatpush.bf16.msra.mxu0 %v9537
  %9576 = vmatmul.bf16.gmra.mxu0 %v9450
  %v9577 = vpop.f32.mrf.mxu0
  %v9578 = vadd.f32 0.0, %v9577
  %v9579 = vpop.f32.mrf.mxu0
  %v9580 = vadd.f32 0.0, %v9579
  %9581 = vdwg.mxu0
  %9582 = vmatpush.bf16.msra.mxu0 0
  %9583 = vmatpush.bf16.msra.mxu0 0
  %9584 = vmatpush.bf16.msra.mxu0 %v9550
  %9585 = vmatpush.bf16.msra.mxu0 %v9549
  %9586 = vmatpush.bf16.msra.mxu0 %v9548
  %9587 = vmatpush.bf16.msra.mxu0 %v9547
  %9588 = vmatpush.bf16.msra.mxu0 %v9546
  %9589 = vmatpush.bf16.msra.mxu0 %v9545
  %9590 = vmatmul.bf16.gmra.mxu0 %v9566
  %v9591 = vpop.f32.mrf.mxu0
  %v9592 = vadd.f32 %v9578, %v9591
  %v9593 = vpop.f32.mrf.mxu0
  %v9594 = vadd.f32 %v9580, %v9593
  %9595 = vdwg.mxu0
  %v9596 = vadd.f32 %v9448, %v9592
  %v9597 = vadd.f32 %v9449, %v9594
  %v9598 = vpack.c.bf16 %v8857, %v8855
  %v9599 = vpack.c.bf16 %v8858, %v8856
  %s9600 = scalar_lea.vmem %s5, 560
  %v9601 = vld [vmem:[%s9600] sm:$0xf]
  %v9602 = vld [vmem:[%s9600 + $0x4] sm:$0xf]
  %v9603 = vld [vmem:[%s9600 + $0x8] sm:$0xf]
  %v9604 = vld [vmem:[%s9600 + $0xc] sm:$0xf]
  %v9605 = vld [vmem:[%s9600 + $0x10] sm:$0xf]
  %v9606 = vld [vmem:[%s9600 + $0x14] sm:$0xf]
  %v9607 = vld [vmem:[%s9600 + $0x18] sm:$0xf]
  %v9608 = vld [vmem:[%s9600 + $0x1c] sm:$0xf]
  %v9609 = vld [vmem:[%s9600 + $0x20] sm:$0xf]
  %v9610 = vld [vmem:[%s9600 + $0x24] sm:$0xf]
  %v9611 = vld [vmem:[%s9600 + $0x28] sm:$0xf]
  %v9612 = vld [vmem:[%s9600 + $0x2c] sm:$0xf]
  %v9613 = vld [vmem:[%s9600 + $0x30] sm:$0xf]
  %v9614 = vld [vmem:[%s9600 + $0x34] sm:$0xf]
  %v9615 = vld [vmem:[%s9600 + $0x38] sm:$0xf]
  %v9616 = vld [vmem:[%s9600 + $0x3c] sm:$0xf]
  %v9617 = vld [vmem:[%s9600 + $0x40] sm:$0xf]
  %v9618 = vld [vmem:[%s9600 + $0x44] sm:$0xf]
  %v9619 = vld [vmem:[%s9600 + $0x48] sm:$0xf]
  %v9620 = vld [vmem:[%s9600 + $0x4c] sm:$0xf]
  %v9621 = vld [vmem:[%s9600 + $0x50] sm:$0xf]
  %v9622 = vld [vmem:[%s9600 + $0x54] sm:$0xf]
  %v9623 = vld [vmem:[%s9600 + $0x58] sm:$0xf]
  %v9624 = vld [vmem:[%s9600 + $0x5c] sm:$0xf]
  %v9625 = vld [vmem:[%s9600 + $0x60] sm:$0xf]
  %v9626 = vld [vmem:[%s9600 + $0x64] sm:$0xf]
  %v9627 = vld [vmem:[%s9600 + $0x68] sm:$0xf]
  %v9628 = vld [vmem:[%s9600 + $0x6c] sm:$0xf]
  %v9657 = vunpack.c.l.b16 %v9601
  %v9658 = vunpack.c.l.b16 %v9602
  %v9659 = vunpack.c.l.b16 %v9603
  %v9660 = vunpack.c.l.b16 %v9604
  %v9661 = vunpack.c.l.b16 %v9605
  %v9662 = vunpack.c.l.b16 %v9606
  %v9663 = vunpack.c.l.b16 %v9607
  %v9664 = vunpack.c.l.b16 %v9608
  %v9665 = vunpack.c.l.b16 %v9609
  %v9666 = vunpack.c.l.b16 %v9610
  %v9667 = vunpack.c.l.b16 %v9611
  %v9668 = vunpack.c.l.b16 %v9612
  %v9669 = vunpack.c.l.b16 %v9613
  %v9670 = vunpack.c.l.b16 %v9614
  %v9671 = vunpack.c.l.b16 %v9615
  %v9672 = vunpack.c.l.b16 %v9616
  %v9673 = vunpack.c.l.b16 %v9617
  %v9674 = vunpack.c.l.b16 %v9618
  %v9675 = vunpack.c.l.b16 %v9619
  %v9676 = vunpack.c.l.b16 %v9620
  %v9677 = vunpack.c.l.b16 %v9621
  %v9678 = vunpack.c.l.b16 %v9622
  %v9679 = vunpack.c.l.b16 %v9623
  %v9680 = vunpack.c.l.b16 %v9624
  %v9681 = vunpack.c.l.b16 %v9625
  %v9682 = vunpack.c.l.b16 %v9626
  %v9683 = vunpack.c.l.b16 %v9627
  %v9684 = vunpack.c.l.b16 %v9628
  %v9685 = vpack.c.b16 %v9658, %v9657
  %v9686 = vpack.c.b16 %v9660, %v9659
  %v9687 = vpack.c.b16 %v9662, %v9661
  %v9688 = vpack.c.b16 %v9664, %v9663
  %v9689 = vpack.c.b16 %v9666, %v9665
  %v9690 = vpack.c.b16 %v9668, %v9667
  %v9691 = vpack.c.b16 %v9670, %v9669
  %v9692 = vpack.c.b16 %v9672, %v9671
  %v9693 = vpack.c.b16 %v9674, %v9673
  %v9694 = vpack.c.b16 %v9676, %v9675
  %v9695 = vpack.c.b16 %v9678, %v9677
  %v9696 = vpack.c.b16 %v9680, %v9679
  %v9697 = vpack.c.b16 %v9682, %v9681
  %v9698 = vpack.c.b16 %v9684, %v9683
  %v9714 = vsel %vm3215, %v9599, 0
  %9716 = vmatpush.bf16.msra.mxu0 %v9692
  %9717 = vmatpush.bf16.msra.mxu0 %v9691
  %9718 = vmatpush.bf16.msra.mxu0 %v9690
  %9719 = vmatpush.bf16.msra.mxu0 %v9689
  %9720 = vmatpush.bf16.msra.mxu0 %v9688
  %9721 = vmatpush.bf16.msra.mxu0 %v9687
  %9722 = vmatpush.bf16.msra.mxu0 %v9686
  %9723 = vmatpush.bf16.msra.mxu0 %v9685
  %9724 = vmatmul.bf16.gmra.mxu0 %v9598
  %v9725 = vpop.f32.mrf.mxu0
  %v9726 = vadd.f32 0.0, %v9725
  %v9727 = vpop.f32.mrf.mxu0
  %v9728 = vadd.f32 0.0, %v9727
  %9729 = vdwg.mxu0
  %9730 = vmatpush.bf16.msra.mxu0 0
  %9731 = vmatpush.bf16.msra.mxu0 0
  %9732 = vmatpush.bf16.msra.mxu0 %v9698
  %9733 = vmatpush.bf16.msra.mxu0 %v9697
  %9734 = vmatpush.bf16.msra.mxu0 %v9696
  %9735 = vmatpush.bf16.msra.mxu0 %v9695
  %9736 = vmatpush.bf16.msra.mxu0 %v9694
  %9737 = vmatpush.bf16.msra.mxu0 %v9693
  %9738 = vmatmul.bf16.gmra.mxu0 %v9714
  %v9739 = vpop.f32.mrf.mxu0
  %v9740 = vadd.f32 %v9726, %v9739
  %v9741 = vpop.f32.mrf.mxu0
  %v9742 = vadd.f32 %v9728, %v9741
  %9743 = vdwg.mxu0
  %v9744 = vadd.f32 %v9596, %v9740
  %v9745 = vadd.f32 %v9597, %v9742
  %v9746 = vpack.c.bf16 %v8861, %v8859
  %v9747 = vpack.c.bf16 %v8862, %v8860
  %s9748 = scalar_lea.vmem %s5, 672
  %v9749 = vld [vmem:[%s9748] sm:$0xf]
  %v9750 = vld [vmem:[%s9748 + $0x4] sm:$0xf]
  %v9751 = vld [vmem:[%s9748 + $0x8] sm:$0xf]
  %v9752 = vld [vmem:[%s9748 + $0xc] sm:$0xf]
  %v9753 = vld [vmem:[%s9748 + $0x10] sm:$0xf]
  %v9754 = vld [vmem:[%s9748 + $0x14] sm:$0xf]
  %v9755 = vld [vmem:[%s9748 + $0x18] sm:$0xf]
  %v9756 = vld [vmem:[%s9748 + $0x1c] sm:$0xf]
  %v9757 = vld [vmem:[%s9748 + $0x20] sm:$0xf]
  %v9758 = vld [vmem:[%s9748 + $0x24] sm:$0xf]
  %v9759 = vld [vmem:[%s9748 + $0x28] sm:$0xf]
  %v9760 = vld [vmem:[%s9748 + $0x2c] sm:$0xf]
  %v9761 = vld [vmem:[%s9748 + $0x30] sm:$0xf]
  %v9762 = vld [vmem:[%s9748 + $0x34] sm:$0xf]
  %v9763 = vld [vmem:[%s9748 + $0x38] sm:$0xf]
  %v9764 = vld [vmem:[%s9748 + $0x3c] sm:$0xf]
  %v9765 = vld [vmem:[%s9748 + $0x40] sm:$0xf]
  %v9766 = vld [vmem:[%s9748 + $0x44] sm:$0xf]
  %v9767 = vld [vmem:[%s9748 + $0x48] sm:$0xf]
  %v9768 = vld [vmem:[%s9748 + $0x4c] sm:$0xf]
  %v9769 = vld [vmem:[%s9748 + $0x50] sm:$0xf]
  %v9770 = vld [vmem:[%s9748 + $0x54] sm:$0xf]
  %v9771 = vld [vmem:[%s9748 + $0x58] sm:$0xf]
  %v9772 = vld [vmem:[%s9748 + $0x5c] sm:$0xf]
  %v9773 = vld [vmem:[%s9748 + $0x60] sm:$0xf]
  %v9774 = vld [vmem:[%s9748 + $0x64] sm:$0xf]
  %v9775 = vld [vmem:[%s9748 + $0x68] sm:$0xf]
  %v9776 = vld [vmem:[%s9748 + $0x6c] sm:$0xf]
  %v9805 = vunpack.c.l.b16 %v9749
  %v9806 = vunpack.c.l.b16 %v9750
  %v9807 = vunpack.c.l.b16 %v9751
  %v9808 = vunpack.c.l.b16 %v9752
  %v9809 = vunpack.c.l.b16 %v9753
  %v9810 = vunpack.c.l.b16 %v9754
  %v9811 = vunpack.c.l.b16 %v9755
  %v9812 = vunpack.c.l.b16 %v9756
  %v9813 = vunpack.c.l.b16 %v9757
  %v9814 = vunpack.c.l.b16 %v9758
  %v9815 = vunpack.c.l.b16 %v9759
  %v9816 = vunpack.c.l.b16 %v9760
  %v9817 = vunpack.c.l.b16 %v9761
  %v9818 = vunpack.c.l.b16 %v9762
  %v9819 = vunpack.c.l.b16 %v9763
  %v9820 = vunpack.c.l.b16 %v9764
  %v9821 = vunpack.c.l.b16 %v9765
  %v9822 = vunpack.c.l.b16 %v9766
  %v9823 = vunpack.c.l.b16 %v9767
  %v9824 = vunpack.c.l.b16 %v9768
  %v9825 = vunpack.c.l.b16 %v9769
  %v9826 = vunpack.c.l.b16 %v9770
  %v9827 = vunpack.c.l.b16 %v9771
  %v9828 = vunpack.c.l.b16 %v9772
  %v9829 = vunpack.c.l.b16 %v9773
  %v9830 = vunpack.c.l.b16 %v9774
  %v9831 = vunpack.c.l.b16 %v9775
  %v9832 = vunpack.c.l.b16 %v9776
  %v9833 = vpack.c.b16 %v9806, %v9805
  %v9834 = vpack.c.b16 %v9808, %v9807
  %v9835 = vpack.c.b16 %v9810, %v9809
  %v9836 = vpack.c.b16 %v9812, %v9811
  %v9837 = vpack.c.b16 %v9814, %v9813
  %v9838 = vpack.c.b16 %v9816, %v9815
  %v9839 = vpack.c.b16 %v9818, %v9817
  %v9840 = vpack.c.b16 %v9820, %v9819
  %v9841 = vpack.c.b16 %v9822, %v9821
  %v9842 = vpack.c.b16 %v9824, %v9823
  %v9843 = vpack.c.b16 %v9826, %v9825
  %v9844 = vpack.c.b16 %v9828, %v9827
  %v9845 = vpack.c.b16 %v9830, %v9829
  %v9846 = vpack.c.b16 %v9832, %v9831
  %v9862 = vsel %vm3215, %v9747, 0
  %9864 = vmatpush.bf16.msra.mxu0 %v9840
  %9865 = vmatpush.bf16.msra.mxu0 %v9839
  %9866 = vmatpush.bf16.msra.mxu0 %v9838
  %9867 = vmatpush.bf16.msra.mxu0 %v9837
  %9868 = vmatpush.bf16.msra.mxu0 %v9836
  %9869 = vmatpush.bf16.msra.mxu0 %v9835
  %9870 = vmatpush.bf16.msra.mxu0 %v9834
  %9871 = vmatpush.bf16.msra.mxu0 %v9833
  %9872 = vmatmul.bf16.gmra.mxu0 %v9746
  %v9873 = vpop.f32.mrf.mxu0
  %v9874 = vadd.f32 0.0, %v9873
  %v9875 = vpop.f32.mrf.mxu0
  %v9876 = vadd.f32 0.0, %v9875
  %9877 = vdwg.mxu0
  %9878 = vmatpush.bf16.msra.mxu0 0
  %9879 = vmatpush.bf16.msra.mxu0 0
  %9880 = vmatpush.bf16.msra.mxu0 %v9846
  %9881 = vmatpush.bf16.msra.mxu0 %v9845
  %9882 = vmatpush.bf16.msra.mxu0 %v9844
  %9883 = vmatpush.bf16.msra.mxu0 %v9843
  %9884 = vmatpush.bf16.msra.mxu0 %v9842
  %9885 = vmatpush.bf16.msra.mxu0 %v9841
  %9886 = vmatmul.bf16.gmra.mxu0 %v9862
  %v9887 = vpop.f32.mrf.mxu0
  %v9888 = vadd.f32 %v9874, %v9887
  %v9889 = vpop.f32.mrf.mxu0
  %v9890 = vadd.f32 %v9876, %v9889
  %9891 = vdwg.mxu0
  %v9892 = vadd.f32 %v9744, %v9888
  %v9893 = vadd.f32 %v9745, %v9890
  %v9894 = vld [vmem:[%s6] sm:$0x1]
  %v9896 = vperm.slane %v9894, 0
  %v9898 = vadd.f32 %v9892, %v9896
  %v9899 = vadd.f32 %v9893, %v9896
  %v9900 = vmax.f32 %v9898, 0.0
  %v9901 = vmax.f32 %v9899, 0.0
  %v9902 = vpack.c.bf16 %v9901, %v9900
  %v9903 = vld [vmem:[%s7] sm:$0xf]
  %v9904 = vld [vmem:[%s7 + $0x4] sm:$0xf]
  %v9905 = vld [vmem:[%s7 + $0x8] sm:$0xf]
  %v9906 = vld [vmem:[%s7 + $0xc] sm:$0xf]
  %v9907 = vld [vmem:[%s7 + $0x10] sm:$0xf]
  %v9908 = vld [vmem:[%s7 + $0x14] sm:$0xf]
  %v9909 = vld [vmem:[%s7 + $0x18] sm:$0xf]
  %v9910 = vld [vmem:[%s7 + $0x1c] sm:$0xf]
  %v9911 = vld [vmem:[%s7 + $0x20] sm:$0xf]
  %v9912 = vld [vmem:[%s7 + $0x24] sm:$0xf]
  %v9913 = vld [vmem:[%s7 + $0x28] sm:$0xf]
  %v9914 = vld [vmem:[%s7 + $0x2c] sm:$0xf]
  %v9915 = vld [vmem:[%s7 + $0x30] sm:$0xf]
  %v9916 = vld [vmem:[%s7 + $0x34] sm:$0xf]
  %v9917 = vld [vmem:[%s7 + $0x38] sm:$0xf]
  %v9918 = vld [vmem:[%s7 + $0x3c] sm:$0xf]
  %v9919 = vld [vmem:[%s8] sm:$0x1]
  %v9921 = vperm.slane %v9919, 0
  %v9939 = vunpack.c.l.b16 %v9903
  %v9940 = vunpack.c.l.b16 %v9904
  %v9941 = vunpack.c.l.b16 %v9905
  %v9942 = vunpack.c.l.b16 %v9906
  %v9943 = vunpack.c.l.b16 %v9907
  %v9944 = vunpack.c.l.b16 %v9908
  %v9945 = vunpack.c.l.b16 %v9909
  %v9946 = vunpack.c.l.b16 %v9910
  %v9947 = vunpack.c.l.b16 %v9911
  %v9948 = vunpack.c.l.b16 %v9912
  %v9949 = vunpack.c.l.b16 %v9913
  %v9950 = vunpack.c.l.b16 %v9914
  %v9951 = vunpack.c.l.b16 %v9915
  %v9952 = vunpack.c.l.b16 %v9916
  %v9953 = vunpack.c.l.b16 %v9917
  %v9954 = vunpack.c.l.b16 %v9918
  %v9955 = vpack.c.b16 %v9940, %v9939
  %v9956 = vpack.c.b16 %v9942, %v9941
  %v9957 = vpack.c.b16 %v9944, %v9943
  %v9958 = vpack.c.b16 %v9946, %v9945
  %v9959 = vpack.c.b16 %v9948, %v9947
  %v9960 = vpack.c.b16 %v9950, %v9949
  %v9961 = vpack.c.b16 %v9952, %v9951
  %v9962 = vpack.c.b16 %v9954, %v9953
  %9971 = vmatpush.bf16.msra.mxu0 %v9962
  %9972 = vmatpush.bf16.msra.mxu0 %v9961
  %9973 = vmatpush.bf16.msra.mxu0 %v9960
  %9974 = vmatpush.bf16.msra.mxu0 %v9959
  %9975 = vmatpush.bf16.msra.mxu0 %v9958
  %9976 = vmatpush.bf16.msra.mxu0 %v9957
  %9977 = vmatpush.bf16.msra.mxu0 %v9956
  %9978 = vmatpush.bf16.msra.mxu0 %v9955
  %9979 = vmatmul.bf16.gmra.mxu0 %v9902
  %v9980 = vpop.f32.mrf.mxu0
  %v9981 = vadd.f32 %v9921, %v9980
  %v9982 = vpop.f32.mrf.mxu0
  %v9983 = vadd.f32 %v9921, %v9982
  %9984 = vdwg.mxu0
  %9985 = vst [vmem:[%s9] sm:$0xff] %v9981
  %9986 = vst [vmem:[%s9 + $0x8] sm:$0xff] %v9983
  // Predicated region
  $region38: #{simple_cnn_forward.1} parent=0 // pred_check
    _
  $region39: #{simple_cnn_forward.1} parent=0 // pred_check_branch
    %9988 = sbr.rel (0) target = $region41
  $region40: #{simple_cnn_forward.1} parent=0 // pred_region
    _
  $region41: #{simple_cnn_forward.1} parent=0 // pred_fallthru
    _
  // Predicated region
  $region42: #{simple_cnn_forward.1} parent=0 // pred_check
    _
  $region43: #{simple_cnn_forward.1} parent=0 // pred_check_branch
    %9990 = sbr.rel (0) target = $region45
  $region44: #{simple_cnn_forward.1} parent=0 // pred_region
    _
  $region45: #{simple_cnn_forward.1} parent=0 // pred_fallthru
    _

</llo_original>
